<compile_context>
chip_gen: v5e
topology: v5e:2x2
jax: 0.10.0
libtpu: 0.0.40
codegen_flags: <defaults>
</compile_context>

<pallas_src>
import functools

import jax
import jax.numpy as jnp
from jax.experimental import pallas as pl
from jax.experimental.pallas import tpu as pltpu


def _default_vmem_limit():
    """Generation-aware scoped-VMEM limit (<=~48 MiB on v7x, ~96 MiB on v5e/v6e)."""
    try:
        cap = int(pltpu.get_tpu_info().vmem_capacity_bytes)
    except Exception:
        cap = 128 * 1024 * 1024
    return max(32 * 1024 * 1024, min(100 * 1024 * 1024, (cap * 3) // 4))


_VMEM_LIMIT = _default_vmem_limit()


# ----------------------------- Pallas kernels -----------------------------

def _conv3x3_bn_relu_kernel(xp_ref, w_ref, b_ref, o_ref, *, offsets, lv):
    """3x3 conv (BN folded) + bias + ReLU on the padded-flat layout.

    xp_ref: (1, C_in, Pp)    zero-padded input flattened over the (H+3, W+2) grid (bf16)
    w_ref : (9, C_out, C_in) per-tap folded weights (bf16)
    b_ref : (C_out, 1)       folded bias (f32)
    o_ref : (1, C_out, Lv)   Lv = H*(W+2); the last 2 columns of each row are don't-care
    """
    x = xp_ref[0]                                    # (C_in, Pp), stays in VMEM
    acc = None
    for t, off in enumerate(offsets):                # 9 static taps, unrolled
        xs = x[:, off:off + lv]                      # shifted in-VMEM view (no HBM im2col)
        d = jnp.dot(w_ref[t], xs, preferred_element_type=jnp.float32)
        acc = d if acc is None else acc + d
    y = jnp.maximum(acc + b_ref[...], 0.0)
    o_ref[0] = y.astype(o_ref.dtype)


def _upsample_skip_kernel(y_ref, ah_ref, awt_ref, skip_ref, o_ref, *, w_valid, n_ch):
    """Separable bilinear x2 upsample (align_corners=True) + skip add.

    y_ref   : (1, C, H, W+2)  conv output on the padded-stride grid (bf16)
    ah_ref  : (2H, H)         H-direction interpolation matrix (f32)
    awt_ref : (W, 2W)         W-direction interpolation matrix (transposed, f32)
    skip_ref: (1, C, 2H, 2W)
    o_ref   : (1, C, 2H, 2W)  f32
    """
    ah = ah_ref[...]
    awt = awt_ref[...]
    for c in range(n_ch):                            # static unroll, C <= 4*init_filters
        yc = y_ref[0, c, :, :w_valid].astype(jnp.float32)             # (H, W)
        t = jnp.dot(ah, yc, preferred_element_type=jnp.float32)       # (2H, W)
        u = jnp.dot(t, awt, preferred_element_type=jnp.float32)       # (2H, 2W)
        o_ref[0, c] = (u + skip_ref[0, c].astype(jnp.float32)).astype(o_ref.dtype)


def _up1_kernel(x_ref, w_ref, b_ref, ah_ref, awt_ref, o_ref, *, c_in):
    """conv1x1 applied BEFORE the upsample (exact: both linear), then separable
    bilinear x2, bias, and L2 channel-normalize (rsqrt).

    x_ref : (1, C_in, Hh, Wh) f32,  w_ref: (2, C_in) SMEM,  b_ref: (2,) SMEM
    ah_ref: (2Hh, Hh),  awt_ref: (Wh, 2Wh),  o_ref: (1, 2, 2Hh, 2Wh)
    """
    ah = ah_ref[...]
    awt = awt_ref[...]
    xs = [x_ref[0, c].astype(jnp.float32) for c in range(c_in)]       # (Hh, Wh) each
    outs = []
    for j in range(2):
        z = w_ref[j, 0] * xs[0]                                       # 1x1 conv at low res
        for c in range(1, c_in):
            z = z + w_ref[j, c] * xs[c]
        t = jnp.dot(ah, z, preferred_element_type=jnp.float32)        # (2Hh, Wh)
        u = jnp.dot(t, awt, preferred_element_type=jnp.float32)       # (2Hh, 2Wh)
        outs.append(u + b_ref[j])                                     # bias after upsample
    ss = outs[0] * outs[0] + outs[1] * outs[1]
    inv = jax.lax.rsqrt(jnp.maximum(ss, 1e-24))      # == 1/max(||v||2, 1e-12) (F.normalize)
    o_ref[0, 0] = (outs[0] * inv).astype(o_ref.dtype)
    o_ref[0, 1] = (outs[1] * inv).astype(o_ref.dtype)


# ----------------------------- glue helpers --------------------------------

def _maxpool2x2(x):
    # TODO(synk): kept in XLA glue (see header note).
    n, c, h, w = x.shape
    return jnp.max(x.reshape(n, c, h // 2, 2, w // 2, 2), axis=(3, 5))


def _bilinear_matrix(n_in, n_out):
    """1-D bilinear resize matrix (n_out, n_in), align_corners=True, f32."""
    dst = jnp.arange(n_out, dtype=jnp.float32)
    if n_out == 1 or n_in == 1:
        src = jnp.zeros((n_out,), jnp.float32)
    else:
        src = dst * (n_in - 1) / (n_out - 1)
    i0 = jnp.clip(jnp.floor(src).astype(jnp.int32), 0, n_in - 1)
    i1 = jnp.clip(i0 + 1, 0, n_in - 1)
    frac = src - i0.astype(jnp.float32)
    return ((1.0 - frac)[:, None] * jax.nn.one_hot(i0, n_in, dtype=jnp.float32)
            + frac[:, None] * jax.nn.one_hot(i1, n_in, dtype=jnp.float32))


# ----------------------------- pallas_call wrappers -------------------------

def conv3x3_bn_relu_flat(x_nchw, w9, b):
    """x: (N,C_in,H,W) -> flat conv output (N, C_out, H*(W+2)) (bf16) + geometry."""
    n, c_in, h, w = x_nchw.shape
    c_out = w9.shape[1]
    wp = w + 2
    lv = h * wp
    raw = (h + 3) * wp                               # 1-top / 2-bottom / 1-left / 1-right pad
    pp = ((raw + 127) // 128) * 128                  # lane-align the flat block
    xp = jnp.pad(x_nchw.astype(jnp.bfloat16), ((0, 0), (0, 0), (1, 2), (1, 1)))
    xpf = xp.reshape(n, c_in, raw)
    if pp > raw:
        xpf = jnp.pad(xpf, ((0, 0), (0, 0), (0, pp - raw)))
    offsets = tuple(dh * wp + dw for dh in range(3) for dw in range(3))
    kernel = functools.partial(_conv3x3_bn_relu_kernel, offsets=offsets, lv=lv)

    out = pl.pallas_call(
        kernel,
        out_shape=jax.ShapeDtypeStruct((n, c_out, lv), jnp.bfloat16),
        grid_spec=pltpu.PrefetchScalarGridSpec(
            num_scalar_prefetch=0,
            grid=(n,),
            in_specs=[pl.BlockSpec((1, c_in, pp), lambda i: (i, 0, 0)),
                      pl.BlockSpec((9, c_out, c_in), lambda i: (0, 0, 0)),
                      pl.BlockSpec((c_out, 1), lambda i: (0, 0))],
            out_specs=pl.BlockSpec((1, c_out, lv), lambda i: (i, 0, 0)),
        ),
        compiler_params=pltpu.CompilerParams(
            dimension_semantics=("parallel",),
            vmem_limit_bytes=_VMEM_LIMIT),
    )(xpf, w9, b)
    return out, (h, w, wp)


def encoder_stage(x, w9, b):
    """Conv3x3+BN+ReLU (Pallas) then 2x2 maxpool (XLA glue)."""
    yflat, (h, w, wp) = conv3x3_bn_relu_flat(x, w9, b)
    n, c_out = yflat.shape[0], yflat.shape[1]
    y = yflat.reshape(n, c_out, h, wp)[:, :, :, :w]  # drop the 2 don't-care columns (free-ish)
    return _maxpool2x2(y)


def decoder_stage(x, w9, b, skip, ah, awt):
    """Conv3x3+BN+ReLU (Pallas), then separable bilinear up x2 + skip add (Pallas)."""
    yflat, (h, w, wp) = conv3x3_bn_relu_flat(x, w9, b)
    n, c_out = yflat.shape[0], yflat.shape[1]
    y4 = yflat.reshape(n, c_out, h, wp)              # free view reshape in HBM
    h2, w2 = 2 * h, 2 * w
    kernel = functools.partial(_upsample_skip_kernel, w_valid=w, n_ch=c_out)

    out = pl.pallas_call(
        kernel,
        out_shape=jax.ShapeDtypeStruct((n, c_out, h2, w2), jnp.float32),
        grid_spec=pltpu.PrefetchScalarGridSpec(
            num_scalar_prefetch=0,
            grid=(n,),
            in_specs=[pl.BlockSpec((1, c_out, h, wp), lambda i: (i, 0, 0, 0)),
                      pl.BlockSpec((h2, h), lambda i: (0, 0)),
                      pl.BlockSpec((w, w2), lambda i: (0, 0)),
                      pl.BlockSpec((1, c_out, h2, w2), lambda i: (i, 0, 0, 0))],
            out_specs=pl.BlockSpec((1, c_out, h2, w2), lambda i: (i, 0, 0, 0)),
        ),
        compiler_params=pltpu.CompilerParams(
            dimension_semantics=("parallel",),
            vmem_limit_bytes=_VMEM_LIMIT),
    )(y4, ah, awt, skip)
    return out


def up1_stage(x, w1, b1, ah, awt):
    """conv1x1 (first) + bilinear up x2 + L2 channel-normalize, fused in one kernel."""
    n, c_in, hh, wh = x.shape
    h2, w2 = 2 * hh, 2 * wh
    kernel = functools.partial(_up1_kernel, c_in=c_in)

    out = pl.pallas_call(
        kernel,
        out_shape=jax.ShapeDtypeStruct((n, 2, h2, w2), jnp.float32),
        grid_spec=pltpu.PrefetchScalarGridSpec(
            num_scalar_prefetch=0,
            grid=(n,),
            in_specs=[pl.BlockSpec((1, c_in, hh, wh), lambda i: (i, 0, 0, 0)),
                      pl.BlockSpec(memory_space=pltpu.MemorySpace.SMEM),
                      pl.BlockSpec(memory_space=pltpu.MemorySpace.SMEM),
                      pl.BlockSpec((h2, hh), lambda i: (0, 0)),
                      pl.BlockSpec((wh, w2), lambda i: (0, 0))],
            out_specs=pl.BlockSpec((1, 2, h2, w2), lambda i: (i, 0, 0, 0)),
        ),
        compiler_params=pltpu.CompilerParams(
            dimension_semantics=("parallel",),
            vmem_limit_bytes=_VMEM_LIMIT),
    )(x, w1, b1, ah, awt)
    return out


# ----------------------------- module ---------------------------------------

def _conv_init(key, c_out, c_in, k):
    kw, kb = jax.random.split(key)
    bound = 1.0 / float((c_in * k * k) ** 0.5)       # torch Conv2d default init
    w = jax.random.uniform(kw, (c_out, c_in, k, k), jnp.float32, -bound, bound)
    b = jax.random.uniform(kb, (c_out,), jnp.float32, -bound, bound)
    return w, b


def _make_conv3x3_bn(key, c_in, c_out, eps=1e-5):
    """Conv3x3 + BatchNorm (eval mode, default stats) folded into per-tap weights."""
    w, b = _conv_init(key, c_out, c_in, 3)
    gamma = jnp.ones((c_out,), jnp.float32)
    beta = jnp.zeros((c_out,), jnp.float32)
    mean = jnp.zeros((c_out,), jnp.float32)
    var = jnp.ones((c_out,), jnp.float32)
    scale = gamma / jnp.sqrt(var + eps)
    w_eff = w * scale[:, None, None, None]
    b_eff = (b - mean) * scale + beta
    w9 = jnp.transpose(w_eff, (2, 3, 0, 1)).reshape(9, c_out, c_in).astype(jnp.bfloat16)
    return w9, b_eff.reshape(c_out, 1)


class RefineBlockPallas:
    """JAX/Pallas counterpart of Refine_Block (forward only, eval-mode BN)."""

    def __init__(self, in_channels, init_filters, key=None):
        if key is None:
            key = jax.random.PRNGKey(0)
        ks = jax.random.split(key, 8)
        f = init_filters
        self.enc1_w, self.enc1_b = _make_conv3x3_bn(ks[0], in_channels, f)
        self.enc2_w, self.enc2_b = _make_conv3x3_bn(ks[1], f, 2 * f)
        self.enc3_w, self.enc3_b = _make_conv3x3_bn(ks[2], 2 * f, 4 * f)
        self.enc4_w, self.enc4_b = _make_conv3x3_bn(ks[3], 4 * f, 8 * f)
        self.up4_w, self.up4_b = _make_conv3x3_bn(ks[4], 8 * f, 4 * f)
        self.up3_w, self.up3_b = _make_conv3x3_bn(ks[5], 4 * f, 2 * f)
        self.up2_w, self.up2_b = _make_conv3x3_bn(ks[6], 2 * f, f)
        w1, b1 = _conv_init(ks[7], 2, f, 1)          # up1: Conv2d(f, 2, 1), no BN
        self.up1_w = w1.reshape(2, f)                # f32, lives in SMEM
        self.up1_b = b1.reshape(2)                   # f32, lives in SMEM
        self._up_mats = {}                           # cache: (H, W) -> (A_h, A_w^T)

    def _mats(self, h, w):
        key = (h, w)
        if key not in self._up_mats:
            ah = _bilinear_matrix(h, 2 * h)                       # (2H, H)
            awt = jnp.transpose(_bilinear_matrix(w, 2 * w))       # (W, 2W)
            self._up_mats[key] = (ah, awt)
        return self._up_mats[key]

    def _cal_direction(self, x):
        # TODO(synk): `mask_to_direction` is external/undefined; stand-in = thresholded mask.
        return (x > 0.5).astype(x.dtype)

    def __call__(self, img, x):
        dir_feat = self._cal_direction(x)
        xx = jnp.concatenate([img, dir_feat], axis=1)

        e1p = encoder_stage(xx, self.enc1_w, self.enc1_b)
        e2p = encoder_stage(e1p, self.enc2_w, self.enc2_b)
        e3p = encoder_stage(e2p, self.enc3_w, self.enc3_b)
        e4p = encoder_stage(e3p, self.enc4_w, self.enc4_b)

        d4 = decoder_stage(e4p, self.up4_w, self.up4_b, e3p,
                           *self._mats(e4p.shape[2], e4p.shape[3]))
        d3 = decoder_stage(d4, self.up3_w, self.up3_b, e2p,
                           *self._mats(d4.shape[2], d4.shape[3]))
        d2 = decoder_stage(d3, self.up2_w, self.up2_b, e1p,
                           *self._mats(d3.shape[2], d3.shape[3]))

        return up1_stage(d2, self.up1_w, self.up1_b,
                         *self._mats(d2.shape[2], d2.shape[3]))


# ----------------------------- main ------------------------------------------

if __name__ == "__main__":
    key = jax.random.PRNGKey(0)
    k_img, k_mask, k_params = jax.random.split(key, 3)

    N, IMG_C, H, W = 2, 3, 32, 32                    # 4 pooling levels -> H,W multiple of 16
    INIT_FILTERS = 4
    img = jax.random.normal(k_img, (N, IMG_C, H, W), dtype=jnp.float32)
    prob = jax.random.uniform(k_mask, (N, 1, H, W), dtype=jnp.float32)   # probability map

    block = RefineBlockPallas(in_channels=IMG_C + 1, init_filters=INIT_FILTERS, key=k_params)
    fwd = jax.jit(lambda a, b: block(a, b))

    out = jax.block_until_ready(fwd(img, prob))

    assert out.shape == (N, 2, H, W), out.shape
    assert bool(jnp.all(jnp.isfinite(out)))
    print("KERNEL_OK")
</pallas_src>

<mosaic_0001>
module attributes {stable_mosaic.version = 11 : i64} {
  func.func @_conv3x3_bn_relu_kernel(%arg0: i32, %arg1: memref<1x4x1280xbf16, #tpu.memory_space<vmem>>, %arg2: memref<9x4x4xbf16, #tpu.memory_space<vmem>>, %arg3: memref<4x1xf32, #tpu.memory_space<vmem>>, %arg4: memref<1x4x1088xbf16, #tpu.memory_space<vmem>>) attributes {dimension_semantics = [#tpu.dimension_semantics<parallel>], iteration_bounds = array<i64: 2>, scalar_prefetch = 0 : i64, scratch_operands = 0 : i64, tpu.core_type = #tpu.core_type<tc>, window_params = [{transform_indices = @transform_0, window_bounds = array<i64: 1, 4, 1280>}, {pipeline_mode = #tpu.pipeline_mode<synchronous>, transform_indices = @transform_1, window_bounds = array<i64: 9, 4, 4>}, {pipeline_mode = #tpu.pipeline_mode<synchronous>, transform_indices = @transform_2, window_bounds = array<i64: 4, 1>}, {transform_indices = @transform_3, window_bounds = array<i64: 1, 4, 1088>}]} {
    %c0 = arith.constant 0 : index
    %c0_0 = arith.constant 0 : index
    %c0_1 = arith.constant 0 : index
    %0 = vector.load %arg1[%c0, %c0_0, %c0_1] : memref<1x4x1280xbf16, #tpu.memory_space<vmem>>, vector<1x4x1280xbf16>
    %1 = vector.shape_cast %0 : vector<1x4x1280xbf16> to vector<4x1280xbf16>
    %2 = vector.extract_strided_slice %1 {offsets = [0, 0], sizes = [4, 1088], strides = [1, 1]} : vector<4x1280xbf16> to vector<4x1088xbf16>
    %c0_2 = arith.constant 0 : index
    %c0_3 = arith.constant 0 : index
    %c0_4 = arith.constant 0 : index
    %3 = vector.load %arg2[%c0_2, %c0_3, %c0_4] : memref<9x4x4xbf16, #tpu.memory_space<vmem>>, vector<1x4x4xbf16>
    %4 = vector.shape_cast %3 : vector<1x4x4xbf16> to vector<4x4xbf16>
    %cst = arith.constant dense<0.000000e+00> : vector<4x1088xf32>
    %5 = tpu.matmul %4, %2, %cst {dimension_numbers = #tpu.dot_dimension_numbers<[1], [0], [0], [1], [0, 0, 1, 1], [], []>} : vector<4x4xbf16>, vector<4x1088xbf16>, vector<4x1088xf32> -> vector<4x1088xf32>
    %6 = vector.extract_strided_slice %1 {offsets = [0, 1], sizes = [4, 1088], strides = [1, 1]} : vector<4x1280xbf16> to vector<4x1088xbf16>
    %c1 = arith.constant 1 : index
    %c0_5 = arith.constant 0 : index
    %c0_6 = arith.constant 0 : index
    %7 = vector.load %arg2[%c1, %c0_5, %c0_6] : memref<9x4x4xbf16, #tpu.memory_space<vmem>>, vector<1x4x4xbf16>
    %8 = vector.shape_cast %7 : vector<1x4x4xbf16> to vector<4x4xbf16>
    %cst_7 = arith.constant dense<0.000000e+00> : vector<4x1088xf32>
    %9 = tpu.matmul %8, %6, %cst_7 {dimension_numbers = #tpu.dot_dimension_numbers<[1], [0], [0], [1], [0, 0, 1, 1], [], []>} : vector<4x4xbf16>, vector<4x1088xbf16>, vector<4x1088xf32> -> vector<4x1088xf32>
    %10 = arith.addf %5, %9 : vector<4x1088xf32>
    %11 = vector.extract_strided_slice %1 {offsets = [0, 2], sizes = [4, 1088], strides = [1, 1]} : vector<4x1280xbf16> to vector<4x1088xbf16>
    %c2 = arith.constant 2 : index
    %c0_8 = arith.constant 0 : index
    %c0_9 = arith.constant 0 : index
    %12 = vector.load %arg2[%c2, %c0_8, %c0_9] : memref<9x4x4xbf16, #tpu.memory_space<vmem>>, vector<1x4x4xbf16>
    %13 = vector.shape_cast %12 : vector<1x4x4xbf16> to vector<4x4xbf16>
    %cst_10 = arith.constant dense<0.000000e+00> : vector<4x1088xf32>
    %14 = tpu.matmul %13, %11, %cst_10 {dimension_numbers = #tpu.dot_dimension_numbers<[1], [0], [0], [1], [0, 0, 1, 1], [], []>} : vector<4x4xbf16>, vector<4x1088xbf16>, vector<4x1088xf32> -> vector<4x1088xf32>
    %15 = arith.addf %10, %14 : vector<4x1088xf32>
    %16 = vector.extract_strided_slice %1 {offsets = [0, 34], sizes = [4, 1088], strides = [1, 1]} : vector<4x1280xbf16> to vector<4x1088xbf16>
    %c3 = arith.constant 3 : index
    %c0_11 = arith.constant 0 : index
    %c0_12 = arith.constant 0 : index
    %17 = vector.load %arg2[%c3, %c0_11, %c0_12] : memref<9x4x4xbf16, #tpu.memory_space<vmem>>, vector<1x4x4xbf16>
    %18 = vector.shape_cast %17 : vector<1x4x4xbf16> to vector<4x4xbf16>
    %cst_13 = arith.constant dense<0.000000e+00> : vector<4x1088xf32>
    %19 = tpu.matmul %18, %16, %cst_13 {dimension_numbers = #tpu.dot_dimension_numbers<[1], [0], [0], [1], [0, 0, 1, 1], [], []>} : vector<4x4xbf16>, vector<4x1088xbf16>, vector<4x1088xf32> -> vector<4x1088xf32>
    %20 = arith.addf %15, %19 : vector<4x1088xf32>
    %21 = vector.extract_strided_slice %1 {offsets = [0, 35], sizes = [4, 1088], strides = [1, 1]} : vector<4x1280xbf16> to vector<4x1088xbf16>
    %c4 = arith.constant 4 : index
    %c0_14 = arith.constant 0 : index
    %c0_15 = arith.constant 0 : index
    %22 = vector.load %arg2[%c4, %c0_14, %c0_15] : memref<9x4x4xbf16, #tpu.memory_space<vmem>>, vector<1x4x4xbf16>
    %23 = vector.shape_cast %22 : vector<1x4x4xbf16> to vector<4x4xbf16>
    %cst_16 = arith.constant dense<0.000000e+00> : vector<4x1088xf32>
    %24 = tpu.matmul %23, %21, %cst_16 {dimension_numbers = #tpu.dot_dimension_numbers<[1], [0], [0], [1], [0, 0, 1, 1], [], []>} : vector<4x4xbf16>, vector<4x1088xbf16>, vector<4x1088xf32> -> vector<4x1088xf32>
    %25 = arith.addf %20, %24 : vector<4x1088xf32>
    %26 = vector.extract_strided_slice %1 {offsets = [0, 36], sizes = [4, 1088], strides = [1, 1]} : vector<4x1280xbf16> to vector<4x1088xbf16>
    %c5 = arith.constant 5 : index
    %c0_17 = arith.constant 0 : index
    %c0_18 = arith.constant 0 : index
    %27 = vector.load %arg2[%c5, %c0_17, %c0_18] : memref<9x4x4xbf16, #tpu.memory_space<vmem>>, vector<1x4x4xbf16>
    %28 = vector.shape_cast %27 : vector<1x4x4xbf16> to vector<4x4xbf16>
    %cst_19 = arith.constant dense<0.000000e+00> : vector<4x1088xf32>
    %29 = tpu.matmul %28, %26, %cst_19 {dimension_numbers = #tpu.dot_dimension_numbers<[1], [0], [0], [1], [0, 0, 1, 1], [], []>} : vector<4x4xbf16>, vector<4x1088xbf16>, vector<4x1088xf32> -> vector<4x1088xf32>
    %30 = arith.addf %25, %29 : vector<4x1088xf32>
    %31 = vector.extract_strided_slice %1 {offsets = [0, 68], sizes = [4, 1088], strides = [1, 1]} : vector<4x1280xbf16> to vector<4x1088xbf16>
    %c6 = arith.constant 6 : index
    %c0_20 = arith.constant 0 : index
    %c0_21 = arith.constant 0 : index
    %32 = vector.load %arg2[%c6, %c0_20, %c0_21] : memref<9x4x4xbf16, #tpu.memory_space<vmem>>, vector<1x4x4xbf16>
    %33 = vector.shape_cast %32 : vector<1x4x4xbf16> to vector<4x4xbf16>
    %cst_22 = arith.constant dense<0.000000e+00> : vector<4x1088xf32>
    %34 = tpu.matmul %33, %31, %cst_22 {dimension_numbers = #tpu.dot_dimension_numbers<[1], [0], [0], [1], [0, 0, 1, 1], [], []>} : vector<4x4xbf16>, vector<4x1088xbf16>, vector<4x1088xf32> -> vector<4x1088xf32>
    %35 = arith.addf %30, %34 : vector<4x1088xf32>
    %36 = vector.extract_strided_slice %1 {offsets = [0, 69], sizes = [4, 1088], strides = [1, 1]} : vector<4x1280xbf16> to vector<4x1088xbf16>
    %c7 = arith.constant 7 : index
    %c0_23 = arith.constant 0 : index
    %c0_24 = arith.constant 0 : index
    %37 = vector.load %arg2[%c7, %c0_23, %c0_24] : memref<9x4x4xbf16, #tpu.memory_space<vmem>>, vector<1x4x4xbf16>
    %38 = vector.shape_cast %37 : vector<1x4x4xbf16> to vector<4x4xbf16>
    %cst_25 = arith.constant dense<0.000000e+00> : vector<4x1088xf32>
    %39 = tpu.matmul %38, %36, %cst_25 {dimension_numbers = #tpu.dot_dimension_numbers<[1], [0], [0], [1], [0, 0, 1, 1], [], []>} : vector<4x4xbf16>, vector<4x1088xbf16>, vector<4x1088xf32> -> vector<4x1088xf32>
    %40 = arith.addf %35, %39 : vector<4x1088xf32>
    %41 = vector.extract_strided_slice %1 {offsets = [0, 70], sizes = [4, 1088], strides = [1, 1]} : vector<4x1280xbf16> to vector<4x1088xbf16>
    %c8 = arith.constant 8 : index
    %c0_26 = arith.constant 0 : index
    %c0_27 = arith.constant 0 : index
    %42 = vector.load %arg2[%c8, %c0_26, %c0_27] : memref<9x4x4xbf16, #tpu.memory_space<vmem>>, vector<1x4x4xbf16>
    %43 = vector.shape_cast %42 : vector<1x4x4xbf16> to vector<4x4xbf16>
    %cst_28 = arith.constant dense<0.000000e+00> : vector<4x1088xf32>
    %44 = tpu.matmul %43, %41, %cst_28 {dimension_numbers = #tpu.dot_dimension_numbers<[1], [0], [0], [1], [0, 0, 1, 1], [], []>} : vector<4x4xbf16>, vector<4x1088xbf16>, vector<4x1088xf32> -> vector<4x1088xf32>
    %45 = arith.addf %40, %44 : vector<4x1088xf32>
    %c0_29 = arith.constant 0 : index
    %c0_30 = arith.constant 0 : index
    %46 = vector.load %arg3[%c0_29, %c0_30] : memref<4x1xf32, #tpu.memory_space<vmem>>, vector<4x1xf32>
    %47 = vector.broadcast %46 : vector<4x1xf32> to vector<4x1088xf32>
    %48 = arith.addf %45, %47 : vector<4x1088xf32>
    %cst_31 = arith.constant 0.000000e+00 : f32
    %49 = vector.broadcast %cst_31 : f32 to vector<4x1088xf32>
    %50 = arith.maximumf %48, %49 : vector<4x1088xf32>
    %51 = arith.truncf %50 : vector<4x1088xf32> to vector<4x1088xbf16>
    %c0_32 = arith.constant 0 : index
    %c0_33 = arith.constant 0 : index
    %c0_34 = arith.constant 0 : index
    %52 = vector.load %arg4[%c0_32, %c0_33, %c0_34] : memref<1x4x1088xbf16, #tpu.memory_space<vmem>>, vector<1x4x1088xbf16>
    %53 = vector.shape_cast %52 : vector<1x4x1088xbf16> to vector<4x1088xbf16>
    %54 = vector.shape_cast %51 : vector<4x1088xbf16> to vector<1x4x1088xbf16>
    tpu.vector_store %arg4[%c0_32, %c0_33, %c0_34], %54 {strides = array<i32>} : memref<1x4x1088xbf16, #tpu.memory_space<vmem>>, vector<1x4x1088xbf16>,
    return
  }
  func.func @transform_0(%arg0: i32) -> (i32, i32, i32) {
    %c0_i32 = arith.constant 0 : i32
    %c0_i32_0 = arith.constant 0 : i32
    %c0_i32_1 = arith.constant 0 : i32
    return %arg0, %c0_i32, %c0_i32_0 : i32, i32, i32
  }
  func.func @transform_1(%arg0: i32) -> (i32, i32, i32) {
    %c0_i32 = arith.constant 0 : i32
    %c0_i32_0 = arith.constant 0 : i32
    %c0_i32_1 = arith.constant 0 : i32
    %c0_i32_2 = arith.constant 0 : i32
    return %c0_i32, %c0_i32_0, %c0_i32_1 : i32, i32, i32
  }
  func.func @transform_2(%arg0: i32) -> (i32, i32) {
    %c0_i32 = arith.constant 0 : i32
    %c0_i32_0 = arith.constant 0 : i32
    %c0_i32_1 = arith.constant 0 : i32
    return %c0_i32, %c0_i32_0 : i32, i32
  }
  func.func @transform_3(%arg0: i32) -> (i32, i32, i32) {
    %c0_i32 = arith.constant 0 : i32
    %c0_i32_0 = arith.constant 0 : i32
    %c0_i32_1 = arith.constant 0 : i32
    return %arg0, %c0_i32, %c0_i32_0 : i32, i32, i32
  }
}

module attributes {stable_mosaic.version = 11 : i64} {
  func.func @_conv3x3_bn_relu_kernel(%arg0: i32, %arg1: memref<1x4x384xbf16, #tpu.memory_space<vmem>>, %arg2: memref<9x8x4xbf16, #tpu.memory_space<vmem>>, %arg3: memref<8x1xf32, #tpu.memory_space<vmem>>, %arg4: memref<1x8x288xbf16, #tpu.memory_space<vmem>>) attributes {dimension_semantics = [#tpu.dimension_semantics<parallel>], iteration_bounds = array<i64: 2>, scalar_prefetch = 0 : i64, scratch_operands = 0 : i64, tpu.core_type = #tpu.core_type<tc>, window_params = [{transform_indices = @transform_0, window_bounds = array<i64: 1, 4, 384>}, {pipeline_mode = #tpu.pipeline_mode<synchronous>, transform_indices = @transform_1, window_bounds = array<i64: 9, 8, 4>}, {pipeline_mode = #tpu.pipeline_mode<synchronous>, transform_indices = @transform_2, window_bounds = array<i64: 8, 1>}, {transform_indices = @transform_3, window_bounds = array<i64: 1, 8, 288>}]} {
    %c0 = arith.constant 0 : index
    %c0_0 = arith.constant 0 : index
    %c0_1 = arith.constant 0 : index
    %0 = vector.load %arg1[%c0, %c0_0, %c0_1] : memref<1x4x384xbf16, #tpu.memory_space<vmem>>, vector<1x4x384xbf16>
    %1 = vector.shape_cast %0 : vector<1x4x384xbf16> to vector<4x384xbf16>
    %2 = vector.extract_strided_slice %1 {offsets = [0, 0], sizes = [4, 288], strides = [1, 1]} : vector<4x384xbf16> to vector<4x288xbf16>
    %c0_2 = arith.constant 0 : index
    %c0_3 = arith.constant 0 : index
    %c0_4 = arith.constant 0 : index
    %3 = vector.load %arg2[%c0_2, %c0_3, %c0_4] : memref<9x8x4xbf16, #tpu.memory_space<vmem>>, vector<1x8x4xbf16>
    %4 = vector.shape_cast %3 : vector<1x8x4xbf16> to vector<8x4xbf16>
    %cst = arith.constant dense<0.000000e+00> : vector<8x288xf32>
    %5 = tpu.matmul %4, %2, %cst {dimension_numbers = #tpu.dot_dimension_numbers<[1], [0], [0], [1], [0, 0, 1, 1], [], []>} : vector<8x4xbf16>, vector<4x288xbf16>, vector<8x288xf32> -> vector<8x288xf32>
    %6 = vector.extract_strided_slice %1 {offsets = [0, 1], sizes = [4, 288], strides = [1, 1]} : vector<4x384xbf16> to vector<4x288xbf16>
    %c1 = arith.constant 1 : index
    %c0_5 = arith.constant 0 : index
    %c0_6 = arith.constant 0 : index
    %7 = vector.load %arg2[%c1, %c0_5, %c0_6] : memref<9x8x4xbf16, #tpu.memory_space<vmem>>, vector<1x8x4xbf16>
    %8 = vector.shape_cast %7 : vector<1x8x4xbf16> to vector<8x4xbf16>
    %cst_7 = arith.constant dense<0.000000e+00> : vector<8x288xf32>
    %9 = tpu.matmul %8, %6, %cst_7 {dimension_numbers = #tpu.dot_dimension_numbers<[1], [0], [0], [1], [0, 0, 1, 1], [], []>} : vector<8x4xbf16>, vector<4x288xbf16>, vector<8x288xf32> -> vector<8x288xf32>
    %10 = arith.addf %5, %9 : vector<8x288xf32>
    %11 = vector.extract_strided_slice %1 {offsets = [0, 2], sizes = [4, 288], strides = [1, 1]} : vector<4x384xbf16> to vector<4x288xbf16>
    %c2 = arith.constant 2 : index
    %c0_8 = arith.constant 0 : index
    %c0_9 = arith.constant 0 : index
    %12 = vector.load %arg2[%c2, %c0_8, %c0_9] : memref<9x8x4xbf16, #tpu.memory_space<vmem>>, vector<1x8x4xbf16>
    %13 = vector.shape_cast %12 : vector<1x8x4xbf16> to vector<8x4xbf16>
    %cst_10 = arith.constant dense<0.000000e+00> : vector<8x288xf32>
    %14 = tpu.matmul %13, %11, %cst_10 {dimension_numbers = #tpu.dot_dimension_numbers<[1], [0], [0], [1], [0, 0, 1, 1], [], []>} : vector<8x4xbf16>, vector<4x288xbf16>, vector<8x288xf32> -> vector<8x288xf32>
    %15 = arith.addf %10, %14 : vector<8x288xf32>
    %16 = vector.extract_strided_slice %1 {offsets = [0, 18], sizes = [4, 288], strides = [1, 1]} : vector<4x384xbf16> to vector<4x288xbf16>
    %c3 = arith.constant 3 : index
    %c0_11 = arith.constant 0 : index
    %c0_12 = arith.constant 0 : index
    %17 = vector.load %arg2[%c3, %c0_11, %c0_12] : memref<9x8x4xbf16, #tpu.memory_space<vmem>>, vector<1x8x4xbf16>
    %18 = vector.shape_cast %17 : vector<1x8x4xbf16> to vector<8x4xbf16>
    %cst_13 = arith.constant dense<0.000000e+00> : vector<8x288xf32>
    %19 = tpu.matmul %18, %16, %cst_13 {dimension_numbers = #tpu.dot_dimension_numbers<[1], [0], [0], [1], [0, 0, 1, 1], [], []>} : vector<8x4xbf16>, vector<4x288xbf16>, vector<8x288xf32> -> vector<8x288xf32>
    %20 = arith.addf %15, %19 : vector<8x288xf32>
    %21 = vector.extract_strided_slice %1 {offsets = [0, 19], sizes = [4, 288], strides = [1, 1]} : vector<4x384xbf16> to vector<4x288xbf16>
    %c4 = arith.constant 4 : index
    %c0_14 = arith.constant 0 : index
    %c0_15 = arith.constant 0 : index
    %22 = vector.load %arg2[%c4, %c0_14, %c0_15] : memref<9x8x4xbf16, #tpu.memory_space<vmem>>, vector<1x8x4xbf16>
    %23 = vector.shape_cast %22 : vector<1x8x4xbf16> to vector<8x4xbf16>
    %cst_16 = arith.constant dense<0.000000e+00> : vector<8x288xf32>
    %24 = tpu.matmul %23, %21, %cst_16 {dimension_numbers = #tpu.dot_dimension_numbers<[1], [0], [0], [1], [0, 0, 1, 1], [], []>} : vector<8x4xbf16>, vector<4x288xbf16>, vector<8x288xf32> -> vector<8x288xf32>
    %25 = arith.addf %20, %24 : vector<8x288xf32>
    %26 = vector.extract_strided_slice %1 {offsets = [0, 20], sizes = [4, 288], strides = [1, 1]} : vector<4x384xbf16> to vector<4x288xbf16>
    %c5 = arith.constant 5 : index
    %c0_17 = arith.constant 0 : index
    %c0_18 = arith.constant 0 : index
    %27 = vector.load %arg2[%c5, %c0_17, %c0_18] : memref<9x8x4xbf16, #tpu.memory_space<vmem>>, vector<1x8x4xbf16>
    %28 = vector.shape_cast %27 : vector<1x8x4xbf16> to vector<8x4xbf16>
    %cst_19 = arith.constant dense<0.000000e+00> : vector<8x288xf32>
    %29 = tpu.matmul %28, %26, %cst_19 {dimension_numbers = #tpu.dot_dimension_numbers<[1], [0], [0], [1], [0, 0, 1, 1], [], []>} : vector<8x4xbf16>, vector<4x288xbf16>, vector<8x288xf32> -> vector<8x288xf32>
    %30 = arith.addf %25, %29 : vector<8x288xf32>
    %31 = vector.extract_strided_slice %1 {offsets = [0, 36], sizes = [4, 288], strides = [1, 1]} : vector<4x384xbf16> to vector<4x288xbf16>
    %c6 = arith.constant 6 : index
    %c0_20 = arith.constant 0 : index
    %c0_21 = arith.constant 0 : index
    %32 = vector.load %arg2[%c6, %c0_20, %c0_21] : memref<9x8x4xbf16, #tpu.memory_space<vmem>>, vector<1x8x4xbf16>
    %33 = vector.shape_cast %32 : vector<1x8x4xbf16> to vector<8x4xbf16>
    %cst_22 = arith.constant dense<0.000000e+00> : vector<8x288xf32>
    %34 = tpu.matmul %33, %31, %cst_22 {dimension_numbers = #tpu.dot_dimension_numbers<[1], [0], [0], [1], [0, 0, 1, 1], [], []>} : vector<8x4xbf16>, vector<4x288xbf16>, vector<8x288xf32> -> vector<8x288xf32>
    %35 = arith.addf %30, %34 : vector<8x288xf32>
    %36 = vector.extract_strided_slice %1 {offsets = [0, 37], sizes = [4, 288], strides = [1, 1]} : vector<4x384xbf16> to vector<4x288xbf16>
    %c7 = arith.constant 7 : index
    %c0_23 = arith.constant 0 : index
    %c0_24 = arith.constant 0 : index
    %37 = vector.load %arg2[%c7, %c0_23, %c0_24] : memref<9x8x4xbf16, #tpu.memory_space<vmem>>, vector<1x8x4xbf16>
    %38 = vector.shape_cast %37 : vector<1x8x4xbf16> to vector<8x4xbf16>
    %cst_25 = arith.constant dense<0.000000e+00> : vector<8x288xf32>
    %39 = tpu.matmul %38, %36, %cst_25 {dimension_numbers = #tpu.dot_dimension_numbers<[1], [0], [0], [1], [0, 0, 1, 1], [], []>} : vector<8x4xbf16>, vector<4x288xbf16>, vector<8x288xf32> -> vector<8x288xf32>
    %40 = arith.addf %35, %39 : vector<8x288xf32>
    %41 = vector.extract_strided_slice %1 {offsets = [0, 38], sizes = [4, 288], strides = [1, 1]} : vector<4x384xbf16> to vector<4x288xbf16>
    %c8 = arith.constant 8 : index
    %c0_26 = arith.constant 0 : index
    %c0_27 = arith.constant 0 : index
    %42 = vector.load %arg2[%c8, %c0_26, %c0_27] : memref<9x8x4xbf16, #tpu.memory_space<vmem>>, vector<1x8x4xbf16>
    %43 = vector.shape_cast %42 : vector<1x8x4xbf16> to vector<8x4xbf16>
    %cst_28 = arith.constant dense<0.000000e+00> : vector<8x288xf32>
    %44 = tpu.matmul %43, %41, %cst_28 {dimension_numbers = #tpu.dot_dimension_numbers<[1], [0], [0], [1], [0, 0, 1, 1], [], []>} : vector<8x4xbf16>, vector<4x288xbf16>, vector<8x288xf32> -> vector<8x288xf32>
    %45 = arith.addf %40, %44 : vector<8x288xf32>
    %c0_29 = arith.constant 0 : index
    %c0_30 = arith.constant 0 : index
    %46 = vector.load %arg3[%c0_29, %c0_30] : memref<8x1xf32, #tpu.memory_space<vmem>>, vector<8x1xf32>
    %47 = vector.broadcast %46 : vector<8x1xf32> to vector<8x288xf32>
    %48 = arith.addf %45, %47 : vector<8x288xf32>
    %cst_31 = arith.constant 0.000000e+00 : f32
    %49 = vector.broadcast %cst_31 : f32 to vector<8x288xf32>
    %50 = arith.maximumf %48, %49 : vector<8x288xf32>
    %51 = arith.truncf %50 : vector<8x288xf32> to vector<8x288xbf16>
    %c0_32 = arith.constant 0 : index
    %c0_33 = arith.constant 0 : index
    %c0_34 = arith.constant 0 : index
    %52 = vector.load %arg4[%c0_32, %c0_33, %c0_34] : memref<1x8x288xbf16, #tpu.memory_space<vmem>>, vector<1x8x288xbf16>
    %53 = vector.shape_cast %52 : vector<1x8x288xbf16> to vector<8x288xbf16>
    %54 = vector.shape_cast %51 : vector<8x288xbf16> to vector<1x8x288xbf16>
    tpu.vector_store %arg4[%c0_32, %c0_33, %c0_34], %54 {strides = array<i32>} : memref<1x8x288xbf16, #tpu.memory_space<vmem>>, vector<1x8x288xbf16>,
    return
  }
  func.func @transform_0(%arg0: i32) -> (i32, i32, i32) {
    %c0_i32 = arith.constant 0 : i32
    %c0_i32_0 = arith.constant 0 : i32
    %c0_i32_1 = arith.constant 0 : i32
    return %arg0, %c0_i32, %c0_i32_0 : i32, i32, i32
  }
  func.func @transform_1(%arg0: i32) -> (i32, i32, i32) {
    %c0_i32 = arith.constant 0 : i32
    %c0_i32_0 = arith.constant 0 : i32
    %c0_i32_1 = arith.constant 0 : i32
    %c0_i32_2 = arith.constant 0 : i32
    return %c0_i32, %c0_i32_0, %c0_i32_1 : i32, i32, i32
  }
  func.func @transform_2(%arg0: i32) -> (i32, i32) {
    %c0_i32 = arith.constant 0 : i32
    %c0_i32_0 = arith.constant 0 : i32
    %c0_i32_1 = arith.constant 0 : i32
    return %c0_i32, %c0_i32_0 : i32, i32
  }
  func.func @transform_3(%arg0: i32) -> (i32, i32, i32) {
    %c0_i32 = arith.constant 0 : i32
    %c0_i32_0 = arith.constant 0 : i32
    %c0_i32_1 = arith.constant 0 : i32
    return %arg0, %c0_i32, %c0_i32_0 : i32, i32, i32
  }
}

module attributes {stable_mosaic.version = 11 : i64} {
  func.func @_conv3x3_bn_relu_kernel(%arg0: i32, %arg1: memref<1x8x128xbf16, #tpu.memory_space<vmem>>, %arg2: memref<9x16x8xbf16, #tpu.memory_space<vmem>>, %arg3: memref<16x1xf32, #tpu.memory_space<vmem>>, %arg4: memref<1x16x80xbf16, #tpu.memory_space<vmem>>) attributes {dimension_semantics = [#tpu.dimension_semantics<parallel>], iteration_bounds = array<i64: 2>, scalar_prefetch = 0 : i64, scratch_operands = 0 : i64, tpu.core_type = #tpu.core_type<tc>, window_params = [{transform_indices = @transform_0, window_bounds = array<i64: 1, 8, 128>}, {pipeline_mode = #tpu.pipeline_mode<synchronous>, transform_indices = @transform_1, window_bounds = array<i64: 9, 16, 8>}, {pipeline_mode = #tpu.pipeline_mode<synchronous>, transform_indices = @transform_2, window_bounds = array<i64: 16, 1>}, {transform_indices = @transform_3, window_bounds = array<i64: 1, 16, 80>}]} {
    %c0 = arith.constant 0 : index
    %c0_0 = arith.constant 0 : index
    %c0_1 = arith.constant 0 : index
    %0 = vector.load %arg1[%c0, %c0_0, %c0_1] : memref<1x8x128xbf16, #tpu.memory_space<vmem>>, vector<1x8x128xbf16>
    %1 = vector.shape_cast %0 : vector<1x8x128xbf16> to vector<8x128xbf16>
    %2 = vector.extract_strided_slice %1 {offsets = [0, 0], sizes = [8, 80], strides = [1, 1]} : vector<8x128xbf16> to vector<8x80xbf16>
    %c0_2 = arith.constant 0 : index
    %c0_3 = arith.constant 0 : index
    %c0_4 = arith.constant 0 : index
    %3 = vector.load %arg2[%c0_2, %c0_3, %c0_4] : memref<9x16x8xbf16, #tpu.memory_space<vmem>>, vector<1x16x8xbf16>
    %4 = vector.shape_cast %3 : vector<1x16x8xbf16> to vector<16x8xbf16>
    %cst = arith.constant dense<0.000000e+00> : vector<16x80xf32>
    %5 = tpu.matmul %4, %2, %cst {dimension_numbers = #tpu.dot_dimension_numbers<[1], [0], [0], [1], [0, 0, 1, 1], [], []>} : vector<16x8xbf16>, vector<8x80xbf16>, vector<16x80xf32> -> vector<16x80xf32>
    %6 = vector.extract_strided_slice %1 {offsets = [0, 1], sizes = [8, 80], strides = [1, 1]} : vector<8x128xbf16> to vector<8x80xbf16>
    %c1 = arith.constant 1 : index
    %c0_5 = arith.constant 0 : index
    %c0_6 = arith.constant 0 : index
    %7 = vector.load %arg2[%c1, %c0_5, %c0_6] : memref<9x16x8xbf16, #tpu.memory_space<vmem>>, vector<1x16x8xbf16>
    %8 = vector.shape_cast %7 : vector<1x16x8xbf16> to vector<16x8xbf16>
    %cst_7 = arith.constant dense<0.000000e+00> : vector<16x80xf32>
    %9 = tpu.matmul %8, %6, %cst_7 {dimension_numbers = #tpu.dot_dimension_numbers<[1], [0], [0], [1], [0, 0, 1, 1], [], []>} : vector<16x8xbf16>, vector<8x80xbf16>, vector<16x80xf32> -> vector<16x80xf32>
    %10 = arith.addf %5, %9 : vector<16x80xf32>
    %11 = vector.extract_strided_slice %1 {offsets = [0, 2], sizes = [8, 80], strides = [1, 1]} : vector<8x128xbf16> to vector<8x80xbf16>
    %c2 = arith.constant 2 : index
    %c0_8 = arith.constant 0 : index
    %c0_9 = arith.constant 0 : index
    %12 = vector.load %arg2[%c2, %c0_8, %c0_9] : memref<9x16x8xbf16, #tpu.memory_space<vmem>>, vector<1x16x8xbf16>
    %13 = vector.shape_cast %12 : vector<1x16x8xbf16> to vector<16x8xbf16>
    %cst_10 = arith.constant dense<0.000000e+00> : vector<16x80xf32>
    %14 = tpu.matmul %13, %11, %cst_10 {dimension_numbers = #tpu.dot_dimension_numbers<[1], [0], [0], [1], [0, 0, 1, 1], [], []>} : vector<16x8xbf16>, vector<8x80xbf16>, vector<16x80xf32> -> vector<16x80xf32>
    %15 = arith.addf %10, %14 : vector<16x80xf32>
    %16 = vector.extract_strided_slice %1 {offsets = [0, 10], sizes = [8, 80], strides = [1, 1]} : vector<8x128xbf16> to vector<8x80xbf16>
    %c3 = arith.constant 3 : index
    %c0_11 = arith.constant 0 : index
    %c0_12 = arith.constant 0 : index
    %17 = vector.load %arg2[%c3, %c0_11, %c0_12] : memref<9x16x8xbf16, #tpu.memory_space<vmem>>, vector<1x16x8xbf16>
    %18 = vector.shape_cast %17 : vector<1x16x8xbf16> to vector<16x8xbf16>
    %cst_13 = arith.constant dense<0.000000e+00> : vector<16x80xf32>
    %19 = tpu.matmul %18, %16, %cst_13 {dimension_numbers = #tpu.dot_dimension_numbers<[1], [0], [0], [1], [0, 0, 1, 1], [], []>} : vector<16x8xbf16>, vector<8x80xbf16>, vector<16x80xf32> -> vector<16x80xf32>
    %20 = arith.addf %15, %19 : vector<16x80xf32>
    %21 = vector.extract_strided_slice %1 {offsets = [0, 11], sizes = [8, 80], strides = [1, 1]} : vector<8x128xbf16> to vector<8x80xbf16>
    %c4 = arith.constant 4 : index
    %c0_14 = arith.constant 0 : index
    %c0_15 = arith.constant 0 : index
    %22 = vector.load %arg2[%c4, %c0_14, %c0_15] : memref<9x16x8xbf16, #tpu.memory_space<vmem>>, vector<1x16x8xbf16>
    %23 = vector.shape_cast %22 : vector<1x16x8xbf16> to vector<16x8xbf16>
    %cst_16 = arith.constant dense<0.000000e+00> : vector<16x80xf32>
    %24 = tpu.matmul %23, %21, %cst_16 {dimension_numbers = #tpu.dot_dimension_numbers<[1], [0], [0], [1], [0, 0, 1, 1], [], []>} : vector<16x8xbf16>, vector<8x80xbf16>, vector<16x80xf32> -> vector<16x80xf32>
    %25 = arith.addf %20, %24 : vector<16x80xf32>
    %26 = vector.extract_strided_slice %1 {offsets = [0, 12], sizes = [8, 80], strides = [1, 1]} : vector<8x128xbf16> to vector<8x80xbf16>
    %c5 = arith.constant 5 : index
    %c0_17 = arith.constant 0 : index
    %c0_18 = arith.constant 0 : index
    %27 = vector.load %arg2[%c5, %c0_17, %c0_18] : memref<9x16x8xbf16, #tpu.memory_space<vmem>>, vector<1x16x8xbf16>
    %28 = vector.shape_cast %27 : vector<1x16x8xbf16> to vector<16x8xbf16>
    %cst_19 = arith.constant dense<0.000000e+00> : vector<16x80xf32>
    %29 = tpu.matmul %28, %26, %cst_19 {dimension_numbers = #tpu.dot_dimension_numbers<[1], [0], [0], [1], [0, 0, 1, 1], [], []>} : vector<16x8xbf16>, vector<8x80xbf16>, vector<16x80xf32> -> vector<16x80xf32>
    %30 = arith.addf %25, %29 : vector<16x80xf32>
    %31 = vector.extract_strided_slice %1 {offsets = [0, 20], sizes = [8, 80], strides = [1, 1]} : vector<8x128xbf16> to vector<8x80xbf16>
    %c6 = arith.constant 6 : index
    %c0_20 = arith.constant 0 : index
    %c0_21 = arith.constant 0 : index
    %32 = vector.load %arg2[%c6, %c0_20, %c0_21] : memref<9x16x8xbf16, #tpu.memory_space<vmem>>, vector<1x16x8xbf16>
    %33 = vector.shape_cast %32 : vector<1x16x8xbf16> to vector<16x8xbf16>
    %cst_22 = arith.constant dense<0.000000e+00> : vector<16x80xf32>
    %34 = tpu.matmul %33, %31, %cst_22 {dimension_numbers = #tpu.dot_dimension_numbers<[1], [0], [0], [1], [0, 0, 1, 1], [], []>} : vector<16x8xbf16>, vector<8x80xbf16>, vector<16x80xf32> -> vector<16x80xf32>
    %35 = arith.addf %30, %34 : vector<16x80xf32>
    %36 = vector.extract_strided_slice %1 {offsets = [0, 21], sizes = [8, 80], strides = [1, 1]} : vector<8x128xbf16> to vector<8x80xbf16>
    %c7 = arith.constant 7 : index
    %c0_23 = arith.constant 0 : index
    %c0_24 = arith.constant 0 : index
    %37 = vector.load %arg2[%c7, %c0_23, %c0_24] : memref<9x16x8xbf16, #tpu.memory_space<vmem>>, vector<1x16x8xbf16>
    %38 = vector.shape_cast %37 : vector<1x16x8xbf16> to vector<16x8xbf16>
    %cst_25 = arith.constant dense<0.000000e+00> : vector<16x80xf32>
    %39 = tpu.matmul %38, %36, %cst_25 {dimension_numbers = #tpu.dot_dimension_numbers<[1], [0], [0], [1], [0, 0, 1, 1], [], []>} : vector<16x8xbf16>, vector<8x80xbf16>, vector<16x80xf32> -> vector<16x80xf32>
    %40 = arith.addf %35, %39 : vector<16x80xf32>
    %41 = vector.extract_strided_slice %1 {offsets = [0, 22], sizes = [8, 80], strides = [1, 1]} : vector<8x128xbf16> to vector<8x80xbf16>
    %c8 = arith.constant 8 : index
    %c0_26 = arith.constant 0 : index
    %c0_27 = arith.constant 0 : index
    %42 = vector.load %arg2[%c8, %c0_26, %c0_27] : memref<9x16x8xbf16, #tpu.memory_space<vmem>>, vector<1x16x8xbf16>
    %43 = vector.shape_cast %42 : vector<1x16x8xbf16> to vector<16x8xbf16>
    %cst_28 = arith.constant dense<0.000000e+00> : vector<16x80xf32>
    %44 = tpu.matmul %43, %41, %cst_28 {dimension_numbers = #tpu.dot_dimension_numbers<[1], [0], [0], [1], [0, 0, 1, 1], [], []>} : vector<16x8xbf16>, vector<8x80xbf16>, vector<16x80xf32> -> vector<16x80xf32>
    %45 = arith.addf %40, %44 : vector<16x80xf32>
    %c0_29 = arith.constant 0 : index
    %c0_30 = arith.constant 0 : index
    %46 = vector.load %arg3[%c0_29, %c0_30] : memref<16x1xf32, #tpu.memory_space<vmem>>, vector<16x1xf32>
    %47 = vector.broadcast %46 : vector<16x1xf32> to vector<16x80xf32>
    %48 = arith.addf %45, %47 : vector<16x80xf32>
    %cst_31 = arith.constant 0.000000e+00 : f32
    %49 = vector.broadcast %cst_31 : f32 to vector<16x80xf32>
    %50 = arith.maximumf %48, %49 : vector<16x80xf32>
    %51 = arith.truncf %50 : vector<16x80xf32> to vector<16x80xbf16>
    %c0_32 = arith.constant 0 : index
    %c0_33 = arith.constant 0 : index
    %c0_34 = arith.constant 0 : index
    %52 = vector.load %arg4[%c0_32, %c0_33, %c0_34] : memref<1x16x80xbf16, #tpu.memory_space<vmem>>, vector<1x16x80xbf16>
    %53 = vector.shape_cast %52 : vector<1x16x80xbf16> to vector<16x80xbf16>
    %54 = vector.shape_cast %51 : vector<16x80xbf16> to vector<1x16x80xbf16>
    tpu.vector_store %arg4[%c0_32, %c0_33, %c0_34], %54 {strides = array<i32>} : memref<1x16x80xbf16, #tpu.memory_space<vmem>>, vector<1x16x80xbf16>,
    return
  }
  func.func @transform_0(%arg0: i32) -> (i32, i32, i32) {
    %c0_i32 = arith.constant 0 : i32
    %c0_i32_0 = arith.constant 0 : i32
    %c0_i32_1 = arith.constant 0 : i32
    return %arg0, %c0_i32, %c0_i32_0 : i32, i32, i32
  }
  func.func @transform_1(%arg0: i32) -> (i32, i32, i32) {
    %c0_i32 = arith.constant 0 : i32
    %c0_i32_0 = arith.constant 0 : i32
    %c0_i32_1 = arith.constant 0 : i32
    %c0_i32_2 = arith.constant 0 : i32
    return %c0_i32, %c0_i32_0, %c0_i32_1 : i32, i32, i32
  }
  func.func @transform_2(%arg0: i32) -> (i32, i32) {
    %c0_i32 = arith.constant 0 : i32
    %c0_i32_0 = arith.constant 0 : i32
    %c0_i32_1 = arith.constant 0 : i32
    return %c0_i32, %c0_i32_0 : i32, i32
  }
  func.func @transform_3(%arg0: i32) -> (i32, i32, i32) {
    %c0_i32 = arith.constant 0 : i32
    %c0_i32_0 = arith.constant 0 : i32
    %c0_i32_1 = arith.constant 0 : i32
    return %arg0, %c0_i32, %c0_i32_0 : i32, i32, i32
  }
}

module attributes {stable_mosaic.version = 11 : i64} {
  func.func @_conv3x3_bn_relu_kernel(%arg0: i32, %arg1: memref<1x16x128xbf16, #tpu.memory_space<vmem>>, %arg2: memref<9x32x16xbf16, #tpu.memory_space<vmem>>, %arg3: memref<32x1xf32, #tpu.memory_space<vmem>>, %arg4: memref<1x32x24xbf16, #tpu.memory_space<vmem>>) attributes {dimension_semantics = [#tpu.dimension_semantics<parallel>], iteration_bounds = array<i64: 2>, scalar_prefetch = 0 : i64, scratch_operands = 0 : i64, tpu.core_type = #tpu.core_type<tc>, window_params = [{transform_indices = @transform_0, window_bounds = array<i64: 1, 16, 128>}, {pipeline_mode = #tpu.pipeline_mode<synchronous>, transform_indices = @transform_1, window_bounds = array<i64: 9, 32, 16>}, {pipeline_mode = #tpu.pipeline_mode<synchronous>, transform_indices = @transform_2, window_bounds = array<i64: 32, 1>}, {transform_indices = @transform_3, window_bounds = array<i64: 1, 32, 24>}]} {
    %c0 = arith.constant 0 : index
    %c0_0 = arith.constant 0 : index
    %c0_1 = arith.constant 0 : index
    %0 = vector.load %arg1[%c0, %c0_0, %c0_1] : memref<1x16x128xbf16, #tpu.memory_space<vmem>>, vector<1x16x128xbf16>
    %1 = vector.shape_cast %0 : vector<1x16x128xbf16> to vector<16x128xbf16>
    %2 = vector.extract_strided_slice %1 {offsets = [0, 0], sizes = [16, 24], strides = [1, 1]} : vector<16x128xbf16> to vector<16x24xbf16>
    %c0_2 = arith.constant 0 : index
    %c0_3 = arith.constant 0 : index
    %c0_4 = arith.constant 0 : index
    %3 = vector.load %arg2[%c0_2, %c0_3, %c0_4] : memref<9x32x16xbf16, #tpu.memory_space<vmem>>, vector<1x32x16xbf16>
    %4 = vector.shape_cast %3 : vector<1x32x16xbf16> to vector<32x16xbf16>
    %cst = arith.constant dense<0.000000e+00> : vector<32x24xf32>
    %5 = tpu.matmul %4, %2, %cst {dimension_numbers = #tpu.dot_dimension_numbers<[1], [0], [0], [1], [0, 0, 1, 1], [], []>} : vector<32x16xbf16>, vector<16x24xbf16>, vector<32x24xf32> -> vector<32x24xf32>
    %6 = vector.extract_strided_slice %1 {offsets = [0, 1], sizes = [16, 24], strides = [1, 1]} : vector<16x128xbf16> to vector<16x24xbf16>
    %c1 = arith.constant 1 : index
    %c0_5 = arith.constant 0 : index
    %c0_6 = arith.constant 0 : index
    %7 = vector.load %arg2[%c1, %c0_5, %c0_6] : memref<9x32x16xbf16, #tpu.memory_space<vmem>>, vector<1x32x16xbf16>
    %8 = vector.shape_cast %7 : vector<1x32x16xbf16> to vector<32x16xbf16>
    %cst_7 = arith.constant dense<0.000000e+00> : vector<32x24xf32>
    %9 = tpu.matmul %8, %6, %cst_7 {dimension_numbers = #tpu.dot_dimension_numbers<[1], [0], [0], [1], [0, 0, 1, 1], [], []>} : vector<32x16xbf16>, vector<16x24xbf16>, vector<32x24xf32> -> vector<32x24xf32>
    %10 = arith.addf %5, %9 : vector<32x24xf32>
    %11 = vector.extract_strided_slice %1 {offsets = [0, 2], sizes = [16, 24], strides = [1, 1]} : vector<16x128xbf16> to vector<16x24xbf16>
    %c2 = arith.constant 2 : index
    %c0_8 = arith.constant 0 : index
    %c0_9 = arith.constant 0 : index
    %12 = vector.load %arg2[%c2, %c0_8, %c0_9] : memref<9x32x16xbf16, #tpu.memory_space<vmem>>, vector<1x32x16xbf16>
    %13 = vector.shape_cast %12 : vector<1x32x16xbf16> to vector<32x16xbf16>
    %cst_10 = arith.constant dense<0.000000e+00> : vector<32x24xf32>
    %14 = tpu.matmul %13, %11, %cst_10 {dimension_numbers = #tpu.dot_dimension_numbers<[1], [0], [0], [1], [0, 0, 1, 1], [], []>} : vector<32x16xbf16>, vector<16x24xbf16>, vector<32x24xf32> -> vector<32x24xf32>
    %15 = arith.addf %10, %14 : vector<32x24xf32>
    %16 = vector.extract_strided_slice %1 {offsets = [0, 6], sizes = [16, 24], strides = [1, 1]} : vector<16x128xbf16> to vector<16x24xbf16>
    %c3 = arith.constant 3 : index
    %c0_11 = arith.constant 0 : index
    %c0_12 = arith.constant 0 : index
    %17 = vector.load %arg2[%c3, %c0_11, %c0_12] : memref<9x32x16xbf16, #tpu.memory_space<vmem>>, vector<1x32x16xbf16>
    %18 = vector.shape_cast %17 : vector<1x32x16xbf16> to vector<32x16xbf16>
    %cst_13 = arith.constant dense<0.000000e+00> : vector<32x24xf32>
    %19 = tpu.matmul %18, %16, %cst_13 {dimension_numbers = #tpu.dot_dimension_numbers<[1], [0], [0], [1], [0, 0, 1, 1], [], []>} : vector<32x16xbf16>, vector<16x24xbf16>, vector<32x24xf32> -> vector<32x24xf32>
    %20 = arith.addf %15, %19 : vector<32x24xf32>
    %21 = vector.extract_strided_slice %1 {offsets = [0, 7], sizes = [16, 24], strides = [1, 1]} : vector<16x128xbf16> to vector<16x24xbf16>
    %c4 = arith.constant 4 : index
    %c0_14 = arith.constant 0 : index
    %c0_15 = arith.constant 0 : index
    %22 = vector.load %arg2[%c4, %c0_14, %c0_15] : memref<9x32x16xbf16, #tpu.memory_space<vmem>>, vector<1x32x16xbf16>
    %23 = vector.shape_cast %22 : vector<1x32x16xbf16> to vector<32x16xbf16>
    %cst_16 = arith.constant dense<0.000000e+00> : vector<32x24xf32>
    %24 = tpu.matmul %23, %21, %cst_16 {dimension_numbers = #tpu.dot_dimension_numbers<[1], [0], [0], [1], [0, 0, 1, 1], [], []>} : vector<32x16xbf16>, vector<16x24xbf16>, vector<32x24xf32> -> vector<32x24xf32>
    %25 = arith.addf %20, %24 : vector<32x24xf32>
    %26 = vector.extract_strided_slice %1 {offsets = [0, 8], sizes = [16, 24], strides = [1, 1]} : vector<16x128xbf16> to vector<16x24xbf16>
    %c5 = arith.constant 5 : index
    %c0_17 = arith.constant 0 : index
    %c0_18 = arith.constant 0 : index
    %27 = vector.load %arg2[%c5, %c0_17, %c0_18] : memref<9x32x16xbf16, #tpu.memory_space<vmem>>, vector<1x32x16xbf16>
    %28 = vector.shape_cast %27 : vector<1x32x16xbf16> to vector<32x16xbf16>
    %cst_19 = arith.constant dense<0.000000e+00> : vector<32x24xf32>
    %29 = tpu.matmul %28, %26, %cst_19 {dimension_numbers = #tpu.dot_dimension_numbers<[1], [0], [0], [1], [0, 0, 1, 1], [], []>} : vector<32x16xbf16>, vector<16x24xbf16>, vector<32x24xf32> -> vector<32x24xf32>
    %30 = arith.addf %25, %29 : vector<32x24xf32>
    %31 = vector.extract_strided_slice %1 {offsets = [0, 12], sizes = [16, 24], strides = [1, 1]} : vector<16x128xbf16> to vector<16x24xbf16>
    %c6 = arith.constant 6 : index
    %c0_20 = arith.constant 0 : index
    %c0_21 = arith.constant 0 : index
    %32 = vector.load %arg2[%c6, %c0_20, %c0_21] : memref<9x32x16xbf16, #tpu.memory_space<vmem>>, vector<1x32x16xbf16>
    %33 = vector.shape_cast %32 : vector<1x32x16xbf16> to vector<32x16xbf16>
    %cst_22 = arith.constant dense<0.000000e+00> : vector<32x24xf32>
    %34 = tpu.matmul %33, %31, %cst_22 {dimension_numbers = #tpu.dot_dimension_numbers<[1], [0], [0], [1], [0, 0, 1, 1], [], []>} : vector<32x16xbf16>, vector<16x24xbf16>, vector<32x24xf32> -> vector<32x24xf32>
    %35 = arith.addf %30, %34 : vector<32x24xf32>
    %36 = vector.extract_strided_slice %1 {offsets = [0, 13], sizes = [16, 24], strides = [1, 1]} : vector<16x128xbf16> to vector<16x24xbf16>
    %c7 = arith.constant 7 : index
    %c0_23 = arith.constant 0 : index
    %c0_24 = arith.constant 0 : index
    %37 = vector.load %arg2[%c7, %c0_23, %c0_24] : memref<9x32x16xbf16, #tpu.memory_space<vmem>>, vector<1x32x16xbf16>
    %38 = vector.shape_cast %37 : vector<1x32x16xbf16> to vector<32x16xbf16>
    %cst_25 = arith.constant dense<0.000000e+00> : vector<32x24xf32>
    %39 = tpu.matmul %38, %36, %cst_25 {dimension_numbers = #tpu.dot_dimension_numbers<[1], [0], [0], [1], [0, 0, 1, 1], [], []>} : vector<32x16xbf16>, vector<16x24xbf16>, vector<32x24xf32> -> vector<32x24xf32>
    %40 = arith.addf %35, %39 : vector<32x24xf32>
    %41 = vector.extract_strided_slice %1 {offsets = [0, 14], sizes = [16, 24], strides = [1, 1]} : vector<16x128xbf16> to vector<16x24xbf16>
    %c8 = arith.constant 8 : index
    %c0_26 = arith.constant 0 : index
    %c0_27 = arith.constant 0 : index
    %42 = vector.load %arg2[%c8, %c0_26, %c0_27] : memref<9x32x16xbf16, #tpu.memory_space<vmem>>, vector<1x32x16xbf16>
    %43 = vector.shape_cast %42 : vector<1x32x16xbf16> to vector<32x16xbf16>
    %cst_28 = arith.constant dense<0.000000e+00> : vector<32x24xf32>
    %44 = tpu.matmul %43, %41, %cst_28 {dimension_numbers = #tpu.dot_dimension_numbers<[1], [0], [0], [1], [0, 0, 1, 1], [], []>} : vector<32x16xbf16>, vector<16x24xbf16>, vector<32x24xf32> -> vector<32x24xf32>
    %45 = arith.addf %40, %44 : vector<32x24xf32>
    %c0_29 = arith.constant 0 : index
    %c0_30 = arith.constant 0 : index
    %46 = vector.load %arg3[%c0_29, %c0_30] : memref<32x1xf32, #tpu.memory_space<vmem>>, vector<32x1xf32>
    %47 = vector.broadcast %46 : vector<32x1xf32> to vector<32x24xf32>
    %48 = arith.addf %45, %47 : vector<32x24xf32>
    %cst_31 = arith.constant 0.000000e+00 : f32
    %49 = vector.broadcast %cst_31 : f32 to vector<32x24xf32>
    %50 = arith.maximumf %48, %49 : vector<32x24xf32>
    %51 = arith.truncf %50 : vector<32x24xf32> to vector<32x24xbf16>
    %c0_32 = arith.constant 0 : index
    %c0_33 = arith.constant 0 : index
    %c0_34 = arith.constant 0 : index
    %52 = vector.load %arg4[%c0_32, %c0_33, %c0_34] : memref<1x32x24xbf16, #tpu.memory_space<vmem>>, vector<1x32x24xbf16>
    %53 = vector.shape_cast %52 : vector<1x32x24xbf16> to vector<32x24xbf16>
    %54 = vector.shape_cast %51 : vector<32x24xbf16> to vector<1x32x24xbf16>
    tpu.vector_store %arg4[%c0_32, %c0_33, %c0_34], %54 {strides = array<i32>} : memref<1x32x24xbf16, #tpu.memory_space<vmem>>, vector<1x32x24xbf16>,
    return
  }
  func.func @transform_0(%arg0: i32) -> (i32, i32, i32) {
    %c0_i32 = arith.constant 0 : i32
    %c0_i32_0 = arith.constant 0 : i32
    %c0_i32_1 = arith.constant 0 : i32
    return %arg0, %c0_i32, %c0_i32_0 : i32, i32, i32
  }
  func.func @transform_1(%arg0: i32) -> (i32, i32, i32) {
    %c0_i32 = arith.constant 0 : i32
    %c0_i32_0 = arith.constant 0 : i32
    %c0_i32_1 = arith.constant 0 : i32
    %c0_i32_2 = arith.constant 0 : i32
    return %c0_i32, %c0_i32_0, %c0_i32_1 : i32, i32, i32
  }
  func.func @transform_2(%arg0: i32) -> (i32, i32) {
    %c0_i32 = arith.constant 0 : i32
    %c0_i32_0 = arith.constant 0 : i32
    %c0_i32_1 = arith.constant 0 : i32
    return %c0_i32, %c0_i32_0 : i32, i32
  }
  func.func @transform_3(%arg0: i32) -> (i32, i32, i32) {
    %c0_i32 = arith.constant 0 : i32
    %c0_i32_0 = arith.constant 0 : i32
    %c0_i32_1 = arith.constant 0 : i32
    return %arg0, %c0_i32, %c0_i32_0 : i32, i32, i32
  }
}

module attributes {stable_mosaic.version = 11 : i64} {
  func.func @_conv3x3_bn_relu_kernel(%arg0: i32, %arg1: memref<1x32x128xbf16, #tpu.memory_space<vmem>>, %arg2: memref<9x16x32xbf16, #tpu.memory_space<vmem>>, %arg3: memref<16x1xf32, #tpu.memory_space<vmem>>, %arg4: memref<1x16x8xbf16, #tpu.memory_space<vmem>>) attributes {dimension_semantics = [#tpu.dimension_semantics<parallel>], iteration_bounds = array<i64: 2>, scalar_prefetch = 0 : i64, scratch_operands = 0 : i64, tpu.core_type = #tpu.core_type<tc>, window_params = [{transform_indices = @transform_0, window_bounds = array<i64: 1, 32, 128>}, {pipeline_mode = #tpu.pipeline_mode<synchronous>, transform_indices = @transform_1, window_bounds = array<i64: 9, 16, 32>}, {pipeline_mode = #tpu.pipeline_mode<synchronous>, transform_indices = @transform_2, window_bounds = array<i64: 16, 1>}, {transform_indices = @transform_3, window_bounds = array<i64: 1, 16, 8>}]} {
    %c0 = arith.constant 0 : index
    %c0_0 = arith.constant 0 : index
    %c0_1 = arith.constant 0 : index
    %0 = vector.load %arg1[%c0, %c0_0, %c0_1] : memref<1x32x128xbf16, #tpu.memory_space<vmem>>, vector<1x32x128xbf16>
    %1 = vector.shape_cast %0 : vector<1x32x128xbf16> to vector<32x128xbf16>
    %2 = vector.extract_strided_slice %1 {offsets = [0, 0], sizes = [32, 8], strides = [1, 1]} : vector<32x128xbf16> to vector<32x8xbf16>
    %c0_2 = arith.constant 0 : index
    %c0_3 = arith.constant 0 : index
    %c0_4 = arith.constant 0 : index
    %3 = vector.load %arg2[%c0_2, %c0_3, %c0_4] : memref<9x16x32xbf16, #tpu.memory_space<vmem>>, vector<1x16x32xbf16>
    %4 = vector.shape_cast %3 : vector<1x16x32xbf16> to vector<16x32xbf16>
    %cst = arith.constant dense<0.000000e+00> : vector<16x8xf32>
    %5 = tpu.matmul %4, %2, %cst {dimension_numbers = #tpu.dot_dimension_numbers<[1], [0], [0], [1], [0, 0, 1, 1], [], []>} : vector<16x32xbf16>, vector<32x8xbf16>, vector<16x8xf32> -> vector<16x8xf32>
    %6 = vector.extract_strided_slice %1 {offsets = [0, 1], sizes = [32, 8], strides = [1, 1]} : vector<32x128xbf16> to vector<32x8xbf16>
    %c1 = arith.constant 1 : index
    %c0_5 = arith.constant 0 : index
    %c0_6 = arith.constant 0 : index
    %7 = vector.load %arg2[%c1, %c0_5, %c0_6] : memref<9x16x32xbf16, #tpu.memory_space<vmem>>, vector<1x16x32xbf16>
    %8 = vector.shape_cast %7 : vector<1x16x32xbf16> to vector<16x32xbf16>
    %cst_7 = arith.constant dense<0.000000e+00> : vector<16x8xf32>
    %9 = tpu.matmul %8, %6, %cst_7 {dimension_numbers = #tpu.dot_dimension_numbers<[1], [0], [0], [1], [0, 0, 1, 1], [], []>} : vector<16x32xbf16>, vector<32x8xbf16>, vector<16x8xf32> -> vector<16x8xf32>
    %10 = arith.addf %5, %9 : vector<16x8xf32>
    %11 = vector.extract_strided_slice %1 {offsets = [0, 2], sizes = [32, 8], strides = [1, 1]} : vector<32x128xbf16> to vector<32x8xbf16>
    %c2 = arith.constant 2 : index
    %c0_8 = arith.constant 0 : index
    %c0_9 = arith.constant 0 : index
    %12 = vector.load %arg2[%c2, %c0_8, %c0_9] : memref<9x16x32xbf16, #tpu.memory_space<vmem>>, vector<1x16x32xbf16>
    %13 = vector.shape_cast %12 : vector<1x16x32xbf16> to vector<16x32xbf16>
    %cst_10 = arith.constant dense<0.000000e+00> : vector<16x8xf32>
    %14 = tpu.matmul %13, %11, %cst_10 {dimension_numbers = #tpu.dot_dimension_numbers<[1], [0], [0], [1], [0, 0, 1, 1], [], []>} : vector<16x32xbf16>, vector<32x8xbf16>, vector<16x8xf32> -> vector<16x8xf32>
    %15 = arith.addf %10, %14 : vector<16x8xf32>
    %16 = vector.extract_strided_slice %1 {offsets = [0, 4], sizes = [32, 8], strides = [1, 1]} : vector<32x128xbf16> to vector<32x8xbf16>
    %c3 = arith.constant 3 : index
    %c0_11 = arith.constant 0 : index
    %c0_12 = arith.constant 0 : index
    %17 = vector.load %arg2[%c3, %c0_11, %c0_12] : memref<9x16x32xbf16, #tpu.memory_space<vmem>>, vector<1x16x32xbf16>
    %18 = vector.shape_cast %17 : vector<1x16x32xbf16> to vector<16x32xbf16>
    %cst_13 = arith.constant dense<0.000000e+00> : vector<16x8xf32>
    %19 = tpu.matmul %18, %16, %cst_13 {dimension_numbers = #tpu.dot_dimension_numbers<[1], [0], [0], [1], [0, 0, 1, 1], [], []>} : vector<16x32xbf16>, vector<32x8xbf16>, vector<16x8xf32> -> vector<16x8xf32>
    %20 = arith.addf %15, %19 : vector<16x8xf32>
    %21 = vector.extract_strided_slice %1 {offsets = [0, 5], sizes = [32, 8], strides = [1, 1]} : vector<32x128xbf16> to vector<32x8xbf16>
    %c4 = arith.constant 4 : index
    %c0_14 = arith.constant 0 : index
    %c0_15 = arith.constant 0 : index
    %22 = vector.load %arg2[%c4, %c0_14, %c0_15] : memref<9x16x32xbf16, #tpu.memory_space<vmem>>, vector<1x16x32xbf16>
    %23 = vector.shape_cast %22 : vector<1x16x32xbf16> to vector<16x32xbf16>
    %cst_16 = arith.constant dense<0.000000e+00> : vector<16x8xf32>
    %24 = tpu.matmul %23, %21, %cst_16 {dimension_numbers = #tpu.dot_dimension_numbers<[1], [0], [0], [1], [0, 0, 1, 1], [], []>} : vector<16x32xbf16>, vector<32x8xbf16>, vector<16x8xf32> -> vector<16x8xf32>
    %25 = arith.addf %20, %24 : vector<16x8xf32>
    %26 = vector.extract_strided_slice %1 {offsets = [0, 6], sizes = [32, 8], strides = [1, 1]} : vector<32x128xbf16> to vector<32x8xbf16>
    %c5 = arith.constant 5 : index
    %c0_17 = arith.constant 0 : index
    %c0_18 = arith.constant 0 : index
    %27 = vector.load %arg2[%c5, %c0_17, %c0_18] : memref<9x16x32xbf16, #tpu.memory_space<vmem>>, vector<1x16x32xbf16>
    %28 = vector.shape_cast %27 : vector<1x16x32xbf16> to vector<16x32xbf16>
    %cst_19 = arith.constant dense<0.000000e+00> : vector<16x8xf32>
    %29 = tpu.matmul %28, %26, %cst_19 {dimension_numbers = #tpu.dot_dimension_numbers<[1], [0], [0], [1], [0, 0, 1, 1], [], []>} : vector<16x32xbf16>, vector<32x8xbf16>, vector<16x8xf32> -> vector<16x8xf32>
    %30 = arith.addf %25, %29 : vector<16x8xf32>
    %31 = vector.extract_strided_slice %1 {offsets = [0, 8], sizes = [32, 8], strides = [1, 1]} : vector<32x128xbf16> to vector<32x8xbf16>
    %c6 = arith.constant 6 : index
    %c0_20 = arith.constant 0 : index
    %c0_21 = arith.constant 0 : index
    %32 = vector.load %arg2[%c6, %c0_20, %c0_21] : memref<9x16x32xbf16, #tpu.memory_space<vmem>>, vector<1x16x32xbf16>
    %33 = vector.shape_cast %32 : vector<1x16x32xbf16> to vector<16x32xbf16>
    %cst_22 = arith.constant dense<0.000000e+00> : vector<16x8xf32>
    %34 = tpu.matmul %33, %31, %cst_22 {dimension_numbers = #tpu.dot_dimension_numbers<[1], [0], [0], [1], [0, 0, 1, 1], [], []>} : vector<16x32xbf16>, vector<32x8xbf16>, vector<16x8xf32> -> vector<16x8xf32>
    %35 = arith.addf %30, %34 : vector<16x8xf32>
    %36 = vector.extract_strided_slice %1 {offsets = [0, 9], sizes = [32, 8], strides = [1, 1]} : vector<32x128xbf16> to vector<32x8xbf16>
    %c7 = arith.constant 7 : index
    %c0_23 = arith.constant 0 : index
    %c0_24 = arith.constant 0 : index
    %37 = vector.load %arg2[%c7, %c0_23, %c0_24] : memref<9x16x32xbf16, #tpu.memory_space<vmem>>, vector<1x16x32xbf16>
    %38 = vector.shape_cast %37 : vector<1x16x32xbf16> to vector<16x32xbf16>
    %cst_25 = arith.constant dense<0.000000e+00> : vector<16x8xf32>
    %39 = tpu.matmul %38, %36, %cst_25 {dimension_numbers = #tpu.dot_dimension_numbers<[1], [0], [0], [1], [0, 0, 1, 1], [], []>} : vector<16x32xbf16>, vector<32x8xbf16>, vector<16x8xf32> -> vector<16x8xf32>
    %40 = arith.addf %35, %39 : vector<16x8xf32>
    %41 = vector.extract_strided_slice %1 {offsets = [0, 10], sizes = [32, 8], strides = [1, 1]} : vector<32x128xbf16> to vector<32x8xbf16>
    %c8 = arith.constant 8 : index
    %c0_26 = arith.constant 0 : index
    %c0_27 = arith.constant 0 : index
    %42 = vector.load %arg2[%c8, %c0_26, %c0_27] : memref<9x16x32xbf16, #tpu.memory_space<vmem>>, vector<1x16x32xbf16>
    %43 = vector.shape_cast %42 : vector<1x16x32xbf16> to vector<16x32xbf16>
    %cst_28 = arith.constant dense<0.000000e+00> : vector<16x8xf32>
    %44 = tpu.matmul %43, %41, %cst_28 {dimension_numbers = #tpu.dot_dimension_numbers<[1], [0], [0], [1], [0, 0, 1, 1], [], []>} : vector<16x32xbf16>, vector<32x8xbf16>, vector<16x8xf32> -> vector<16x8xf32>
    %45 = arith.addf %40, %44 : vector<16x8xf32>
    %c0_29 = arith.constant 0 : index
    %c0_30 = arith.constant 0 : index
    %46 = vector.load %arg3[%c0_29, %c0_30] : memref<16x1xf32, #tpu.memory_space<vmem>>, vector<16x1xf32>
    %47 = vector.broadcast %46 : vector<16x1xf32> to vector<16x8xf32>
    %48 = arith.addf %45, %47 : vector<16x8xf32>
    %cst_31 = arith.constant 0.000000e+00 : f32
    %49 = vector.broadcast %cst_31 : f32 to vector<16x8xf32>
    %50 = arith.maximumf %48, %49 : vector<16x8xf32>
    %51 = arith.truncf %50 : vector<16x8xf32> to vector<16x8xbf16>
    %c0_32 = arith.constant 0 : index
    %c0_33 = arith.constant 0 : index
    %c0_34 = arith.constant 0 : index
    %52 = vector.load %arg4[%c0_32, %c0_33, %c0_34] : memref<1x16x8xbf16, #tpu.memory_space<vmem>>, vector<1x16x8xbf16>
    %53 = vector.shape_cast %52 : vector<1x16x8xbf16> to vector<16x8xbf16>
    %54 = vector.shape_cast %51 : vector<16x8xbf16> to vector<1x16x8xbf16>
    tpu.vector_store %arg4[%c0_32, %c0_33, %c0_34], %54 {strides = array<i32>} : memref<1x16x8xbf16, #tpu.memory_space<vmem>>, vector<1x16x8xbf16>,
    return
  }
  func.func @transform_0(%arg0: i32) -> (i32, i32, i32) {
    %c0_i32 = arith.constant 0 : i32
    %c0_i32_0 = arith.constant 0 : i32
    %c0_i32_1 = arith.constant 0 : i32
    return %arg0, %c0_i32, %c0_i32_0 : i32, i32, i32
  }
  func.func @transform_1(%arg0: i32) -> (i32, i32, i32) {
    %c0_i32 = arith.constant 0 : i32
    %c0_i32_0 = arith.constant 0 : i32
    %c0_i32_1 = arith.constant 0 : i32
    %c0_i32_2 = arith.constant 0 : i32
    return %c0_i32, %c0_i32_0, %c0_i32_1 : i32, i32, i32
  }
  func.func @transform_2(%arg0: i32) -> (i32, i32) {
    %c0_i32 = arith.constant 0 : i32
    %c0_i32_0 = arith.constant 0 : i32
    %c0_i32_1 = arith.constant 0 : i32
    return %c0_i32, %c0_i32_0 : i32, i32
  }
  func.func @transform_3(%arg0: i32) -> (i32, i32, i32) {
    %c0_i32 = arith.constant 0 : i32
    %c0_i32_0 = arith.constant 0 : i32
    %c0_i32_1 = arith.constant 0 : i32
    return %arg0, %c0_i32, %c0_i32_0 : i32, i32, i32
  }
}

module attributes {stable_mosaic.version = 11 : i64} {
  func.func @_upsample_skip_kernel(%arg0: i32, %arg1: memref<1x16x2x4xbf16, #tpu.memory_space<vmem>>, %arg2: memref<4x2xf32, #tpu.memory_space<vmem>>, %arg3: memref<2x4xf32, #tpu.memory_space<vmem>>, %arg4: memref<1x16x4x4xbf16, #tpu.memory_space<vmem>>, %arg5: memref<1x16x4x4xf32, #tpu.memory_space<vmem>>) attributes {dimension_semantics = [#tpu.dimension_semantics<parallel>], iteration_bounds = array<i64: 2>, scalar_prefetch = 0 : i64, scratch_operands = 0 : i64, tpu.core_type = #tpu.core_type<tc>, window_params = [{transform_indices = @transform_0, window_bounds = array<i64: 1, 16, 2, 4>}, {pipeline_mode = #tpu.pipeline_mode<synchronous>, transform_indices = @transform_1, window_bounds = array<i64: 4, 2>}, {pipeline_mode = #tpu.pipeline_mode<synchronous>, transform_indices = @transform_2, window_bounds = array<i64: 2, 4>}, {transform_indices = @transform_3, window_bounds = array<i64: 1, 16, 4, 4>}, {transform_indices = @transform_4, window_bounds = array<i64: 1, 16, 4, 4>}]} {
    %c0 = arith.constant 0 : index
    %c0_0 = arith.constant 0 : index
    %0 = vector.load %arg2[%c0, %c0_0] : memref<4x2xf32, #tpu.memory_space<vmem>>, vector<4x2xf32>
    %c0_1 = arith.constant 0 : index
    %c0_2 = arith.constant 0 : index
    %1 = vector.load %arg3[%c0_1, %c0_2] : memref<2x4xf32, #tpu.memory_space<vmem>>, vector<2x4xf32>
    %c0_3 = arith.constant 0 : index
    %c0_4 = arith.constant 0 : index
    %c0_5 = arith.constant 0 : index
    %c0_6 = arith.constant 0 : index
    %2 = vector.load %arg1[%c0_3, %c0_4, %c0_5, %c0_6] : memref<1x16x2x4xbf16, #tpu.memory_space<vmem>>, vector<1x1x2x2xbf16>
    %3 = vector.shape_cast %2 : vector<1x1x2x2xbf16> to vector<2x2xbf16>
    %4 = arith.extf %3 : vector<2x2xbf16> to vector<2x2xf32>
    %cst = arith.constant dense<0.000000e+00> : vector<4x2xf32>
    %5 = tpu.matmul %0, %4, %cst {dimension_numbers = #tpu.dot_dimension_numbers<[1], [0], [0], [1], [0, 0, 1, 1], [], []>} : vector<4x2xf32>, vector<2x2xf32>, vector<4x2xf32> -> vector<4x2xf32>
    %cst_7 = arith.constant dense<0.000000e+00> : vector<4x4xf32>
    %6 = tpu.matmul %5, %1, %cst_7 {dimension_numbers = #tpu.dot_dimension_numbers<[1], [0], [0], [1], [0, 0, 1, 1], [], []>} : vector<4x2xf32>, vector<2x4xf32>, vector<4x4xf32> -> vector<4x4xf32>
    %c0_8 = arith.constant 0 : index
    %c0_9 = arith.constant 0 : index
    %c0_10 = arith.constant 0 : index
    %c0_11 = arith.constant 0 : index
    %7 = vector.load %arg4[%c0_8, %c0_9, %c0_10, %c0_11] : memref<1x16x4x4xbf16, #tpu.memory_space<vmem>>, vector<1x1x4x4xbf16>
    %8 = vector.shape_cast %7 : vector<1x1x4x4xbf16> to vector<4x4xbf16>
    %9 = arith.extf %8 : vector<4x4xbf16> to vector<4x4xf32>
    %10 = arith.addf %6, %9 : vector<4x4xf32>
    %c0_12 = arith.constant 0 : index
    %c0_13 = arith.constant 0 : index
    %c0_14 = arith.constant 0 : index
    %c0_15 = arith.constant 0 : index
    %11 = vector.load %arg5[%c0_12, %c0_13, %c0_14, %c0_15] : memref<1x16x4x4xf32, #tpu.memory_space<vmem>>, vector<1x1x4x4xf32>
    %12 = vector.shape_cast %11 : vector<1x1x4x4xf32> to vector<4x4xf32>
    %13 = vector.shape_cast %10 : vector<4x4xf32> to vector<1x1x4x4xf32>
    tpu.vector_store %arg5[%c0_12, %c0_13, %c0_14, %c0_15], %13 {strides = array<i32>} : memref<1x16x4x4xf32, #tpu.memory_space<vmem>>, vector<1x1x4x4xf32>,
    %c0_16 = arith.constant 0 : index
    %c1 = arith.constant 1 : index
    %c0_17 = arith.constant 0 : index
    %c0_18 = arith.constant 0 : index
    %14 = vector.load %arg1[%c0_16, %c1, %c0_17, %c0_18] : memref<1x16x2x4xbf16, #tpu.memory_space<vmem>>, vector<1x1x2x2xbf16>
    %15 = vector.shape_cast %14 : vector<1x1x2x2xbf16> to vector<2x2xbf16>
    %16 = arith.extf %15 : vector<2x2xbf16> to vector<2x2xf32>
    %cst_19 = arith.constant dense<0.000000e+00> : vector<4x2xf32>
    %17 = tpu.matmul %0, %16, %cst_19 {dimension_numbers = #tpu.dot_dimension_numbers<[1], [0], [0], [1], [0, 0, 1, 1], [], []>} : vector<4x2xf32>, vector<2x2xf32>, vector<4x2xf32> -> vector<4x2xf32>
    %cst_20 = arith.constant dense<0.000000e+00> : vector<4x4xf32>
    %18 = tpu.matmul %17, %1, %cst_20 {dimension_numbers = #tpu.dot_dimension_numbers<[1], [0], [0], [1], [0, 0, 1, 1], [], []>} : vector<4x2xf32>, vector<2x4xf32>, vector<4x4xf32> -> vector<4x4xf32>
    %c0_21 = arith.constant 0 : index
    %c1_22 = arith.constant 1 : index
    %c0_23 = arith.constant 0 : index
    %c0_24 = arith.constant 0 : index
    %19 = vector.load %arg4[%c0_21, %c1_22, %c0_23, %c0_24] : memref<1x16x4x4xbf16, #tpu.memory_space<vmem>>, vector<1x1x4x4xbf16>
    %20 = vector.shape_cast %19 : vector<1x1x4x4xbf16> to vector<4x4xbf16>
    %21 = arith.extf %20 : vector<4x4xbf16> to vector<4x4xf32>
    %22 = arith.addf %18, %21 : vector<4x4xf32>
    %c0_25 = arith.constant 0 : index
    %c1_26 = arith.constant 1 : index
    %c0_27 = arith.constant 0 : index
    %c0_28 = arith.constant 0 : index
    %23 = vector.load %arg5[%c0_25, %c1_26, %c0_27, %c0_28] : memref<1x16x4x4xf32, #tpu.memory_space<vmem>>, vector<1x1x4x4xf32>
    %24 = vector.shape_cast %23 : vector<1x1x4x4xf32> to vector<4x4xf32>
    %25 = vector.shape_cast %22 : vector<4x4xf32> to vector<1x1x4x4xf32>
    tpu.vector_store %arg5[%c0_25, %c1_26, %c0_27, %c0_28], %25 {strides = array<i32>} : memref<1x16x4x4xf32, #tpu.memory_space<vmem>>, vector<1x1x4x4xf32>,
    %c0_29 = arith.constant 0 : index
    %c2 = arith.constant 2 : index
    %c0_30 = arith.constant 0 : index
    %c0_31 = arith.constant 0 : index
    %26 = vector.load %arg1[%c0_29, %c2, %c0_30, %c0_31] : memref<1x16x2x4xbf16, #tpu.memory_space<vmem>>, vector<1x1x2x2xbf16>
    %27 = vector.shape_cast %26 : vector<1x1x2x2xbf16> to vector<2x2xbf16>
    %28 = arith.extf %27 : vector<2x2xbf16> to vector<2x2xf32>
    %cst_32 = arith.constant dense<0.000000e+00> : vector<4x2xf32>
    %29 = tpu.matmul %0, %28, %cst_32 {dimension_numbers = #tpu.dot_dimension_numbers<[1], [0], [0], [1], [0, 0, 1, 1], [], []>} : vector<4x2xf32>, vector<2x2xf32>, vector<4x2xf32> -> vector<4x2xf32>
    %cst_33 = arith.constant dense<0.000000e+00> : vector<4x4xf32>
    %30 = tpu.matmul %29, %1, %cst_33 {dimension_numbers = #tpu.dot_dimension_numbers<[1], [0], [0], [1], [0, 0, 1, 1], [], []>} : vector<4x2xf32>, vector<2x4xf32>, vector<4x4xf32> -> vector<4x4xf32>
    %c0_34 = arith.constant 0 : index
    %c2_35 = arith.constant 2 : index
    %c0_36 = arith.constant 0 : index
    %c0_37 = arith.constant 0 : index
    %31 = vector.load %arg4[%c0_34, %c2_35, %c0_36, %c0_37] : memref<1x16x4x4xbf16, #tpu.memory_space<vmem>>, vector<1x1x4x4xbf16>
    %32 = vector.shape_cast %31 : vector<1x1x4x4xbf16> to vector<4x4xbf16>
    %33 = arith.extf %32 : vector<4x4xbf16> to vector<4x4xf32>
    %34 = arith.addf %30, %33 : vector<4x4xf32>
    %c0_38 = arith.constant 0 : index
    %c2_39 = arith.constant 2 : index
    %c0_40 = arith.constant 0 : index
    %c0_41 = arith.constant 0 : index
    %35 = vector.load %arg5[%c0_38, %c2_39, %c0_40, %c0_41] : memref<1x16x4x4xf32, #tpu.memory_space<vmem>>, vector<1x1x4x4xf32>
    %36 = vector.shape_cast %35 : vector<1x1x4x4xf32> to vector<4x4xf32>
    %37 = vector.shape_cast %34 : vector<4x4xf32> to vector<1x1x4x4xf32>
    tpu.vector_store %arg5[%c0_38, %c2_39, %c0_40, %c0_41], %37 {strides = array<i32>} : memref<1x16x4x4xf32, #tpu.memory_space<vmem>>, vector<1x1x4x4xf32>,
    %c0_42 = arith.constant 0 : index
    %c3 = arith.constant 3 : index
    %c0_43 = arith.constant 0 : index
    %c0_44 = arith.constant 0 : index
    %38 = vector.load %arg1[%c0_42, %c3, %c0_43, %c0_44] : memref<1x16x2x4xbf16, #tpu.memory_space<vmem>>, vector<1x1x2x2xbf16>
    %39 = vector.shape_cast %38 : vector<1x1x2x2xbf16> to vector<2x2xbf16>
    %40 = arith.extf %39 : vector<2x2xbf16> to vector<2x2xf32>
    %cst_45 = arith.constant dense<0.000000e+00> : vector<4x2xf32>
    %41 = tpu.matmul %0, %40, %cst_45 {dimension_numbers = #tpu.dot_dimension_numbers<[1], [0], [0], [1], [0, 0, 1, 1], [], []>} : vector<4x2xf32>, vector<2x2xf32>, vector<4x2xf32> -> vector<4x2xf32>
    %cst_46 = arith.constant dense<0.000000e+00> : vector<4x4xf32>
    %42 = tpu.matmul %41, %1, %cst_46 {dimension_numbers = #tpu.dot_dimension_numbers<[1], [0], [0], [1], [0, 0, 1, 1], [], []>} : vector<4x2xf32>, vector<2x4xf32>, vector<4x4xf32> -> vector<4x4xf32>
    %c0_47 = arith.constant 0 : index
    %c3_48 = arith.constant 3 : index
    %c0_49 = arith.constant 0 : index
    %c0_50 = arith.constant 0 : index
    %43 = vector.load %arg4[%c0_47, %c3_48, %c0_49, %c0_50] : memref<1x16x4x4xbf16, #tpu.memory_space<vmem>>, vector<1x1x4x4xbf16>
    %44 = vector.shape_cast %43 : vector<1x1x4x4xbf16> to vector<4x4xbf16>
    %45 = arith.extf %44 : vector<4x4xbf16> to vector<4x4xf32>
    %46 = arith.addf %42, %45 : vector<4x4xf32>
    %c0_51 = arith.constant 0 : index
    %c3_52 = arith.constant 3 : index
    %c0_53 = arith.constant 0 : index
    %c0_54 = arith.constant 0 : index
    %47 = vector.load %arg5[%c0_51, %c3_52, %c0_53, %c0_54] : memref<1x16x4x4xf32, #tpu.memory_space<vmem>>, vector<1x1x4x4xf32>
    %48 = vector.shape_cast %47 : vector<1x1x4x4xf32> to vector<4x4xf32>
    %49 = vector.shape_cast %46 : vector<4x4xf32> to vector<1x1x4x4xf32>
    tpu.vector_store %arg5[%c0_51, %c3_52, %c0_53, %c0_54], %49 {strides = array<i32>} : memref<1x16x4x4xf32, #tpu.memory_space<vmem>>, vector<1x1x4x4xf32>,
    %c0_55 = arith.constant 0 : index
    %c4 = arith.constant 4 : index
    %c0_56 = arith.constant 0 : index
    %c0_57 = arith.constant 0 : index
    %50 = vector.load %arg1[%c0_55, %c4, %c0_56, %c0_57] : memref<1x16x2x4xbf16, #tpu.memory_space<vmem>>, vector<1x1x2x2xbf16>
    %51 = vector.shape_cast %50 : vector<1x1x2x2xbf16> to vector<2x2xbf16>
    %52 = arith.extf %51 : vector<2x2xbf16> to vector<2x2xf32>
    %cst_58 = arith.constant dense<0.000000e+00> : vector<4x2xf32>
    %53 = tpu.matmul %0, %52, %cst_58 {dimension_numbers = #tpu.dot_dimension_numbers<[1], [0], [0], [1], [0, 0, 1, 1], [], []>} : vector<4x2xf32>, vector<2x2xf32>, vector<4x2xf32> -> vector<4x2xf32>
    %cst_59 = arith.constant dense<0.000000e+00> : vector<4x4xf32>
    %54 = tpu.matmul %53, %1, %cst_59 {dimension_numbers = #tpu.dot_dimension_numbers<[1], [0], [0], [1], [0, 0, 1, 1], [], []>} : vector<4x2xf32>, vector<2x4xf32>, vector<4x4xf32> -> vector<4x4xf32>
    %c0_60 = arith.constant 0 : index
    %c4_61 = arith.constant 4 : index
    %c0_62 = arith.constant 0 : index
    %c0_63 = arith.constant 0 : index
    %55 = vector.load %arg4[%c0_60, %c4_61, %c0_62, %c0_63] : memref<1x16x4x4xbf16, #tpu.memory_space<vmem>>, vector<1x1x4x4xbf16>
    %56 = vector.shape_cast %55 : vector<1x1x4x4xbf16> to vector<4x4xbf16>
    %57 = arith.extf %56 : vector<4x4xbf16> to vector<4x4xf32>
    %58 = arith.addf %54, %57 : vector<4x4xf32>
    %c0_64 = arith.constant 0 : index
    %c4_65 = arith.constant 4 : index
    %c0_66 = arith.constant 0 : index
    %c0_67 = arith.constant 0 : index
    %59 = vector.load %arg5[%c0_64, %c4_65, %c0_66, %c0_67] : memref<1x16x4x4xf32, #tpu.memory_space<vmem>>, vector<1x1x4x4xf32>
    %60 = vector.shape_cast %59 : vector<1x1x4x4xf32> to vector<4x4xf32>
    %61 = vector.shape_cast %58 : vector<4x4xf32> to vector<1x1x4x4xf32>
    tpu.vector_store %arg5[%c0_64, %c4_65, %c0_66, %c0_67], %61 {strides = array<i32>} : memref<1x16x4x4xf32, #tpu.memory_space<vmem>>, vector<1x1x4x4xf32>,
    %c0_68 = arith.constant 0 : index
    %c5 = arith.constant 5 : index
    %c0_69 = arith.constant 0 : index
    %c0_70 = arith.constant 0 : index
    %62 = vector.load %arg1[%c0_68, %c5, %c0_69, %c0_70] : memref<1x16x2x4xbf16, #tpu.memory_space<vmem>>, vector<1x1x2x2xbf16>
    %63 = vector.shape_cast %62 : vector<1x1x2x2xbf16> to vector<2x2xbf16>
    %64 = arith.extf %63 : vector<2x2xbf16> to vector<2x2xf32>
    %cst_71 = arith.constant dense<0.000000e+00> : vector<4x2xf32>
    %65 = tpu.matmul %0, %64, %cst_71 {dimension_numbers = #tpu.dot_dimension_numbers<[1], [0], [0], [1], [0, 0, 1, 1], [], []>} : vector<4x2xf32>, vector<2x2xf32>, vector<4x2xf32> -> vector<4x2xf32>
    %cst_72 = arith.constant dense<0.000000e+00> : vector<4x4xf32>
    %66 = tpu.matmul %65, %1, %cst_72 {dimension_numbers = #tpu.dot_dimension_numbers<[1], [0], [0], [1], [0, 0, 1, 1], [], []>} : vector<4x2xf32>, vector<2x4xf32>, vector<4x4xf32> -> vector<4x4xf32>
    %c0_73 = arith.constant 0 : index
    %c5_74 = arith.constant 5 : index
    %c0_75 = arith.constant 0 : index
    %c0_76 = arith.constant 0 : index
    %67 = vector.load %arg4[%c0_73, %c5_74, %c0_75, %c0_76] : memref<1x16x4x4xbf16, #tpu.memory_space<vmem>>, vector<1x1x4x4xbf16>
    %68 = vector.shape_cast %67 : vector<1x1x4x4xbf16> to vector<4x4xbf16>
    %69 = arith.extf %68 : vector<4x4xbf16> to vector<4x4xf32>
    %70 = arith.addf %66, %69 : vector<4x4xf32>
    %c0_77 = arith.constant 0 : index
    %c5_78 = arith.constant 5 : index
    %c0_79 = arith.constant 0 : index
    %c0_80 = arith.constant 0 : index
    %71 = vector.load %arg5[%c0_77, %c5_78, %c0_79, %c0_80] : memref<1x16x4x4xf32, #tpu.memory_space<vmem>>, vector<1x1x4x4xf32>
    %72 = vector.shape_cast %71 : vector<1x1x4x4xf32> to vector<4x4xf32>
    %73 = vector.shape_cast %70 : vector<4x4xf32> to vector<1x1x4x4xf32>
    tpu.vector_store %arg5[%c0_77, %c5_78, %c0_79, %c0_80], %73 {strides = array<i32>} : memref<1x16x4x4xf32, #tpu.memory_space<vmem>>, vector<1x1x4x4xf32>,
    %c0_81 = arith.constant 0 : index
    %c6 = arith.constant 6 : index
    %c0_82 = arith.constant 0 : index
    %c0_83 = arith.constant 0 : index
    %74 = vector.load %arg1[%c0_81, %c6, %c0_82, %c0_83] : memref<1x16x2x4xbf16, #tpu.memory_space<vmem>>, vector<1x1x2x2xbf16>
    %75 = vector.shape_cast %74 : vector<1x1x2x2xbf16> to vector<2x2xbf16>
    %76 = arith.extf %75 : vector<2x2xbf16> to vector<2x2xf32>
    %cst_84 = arith.constant dense<0.000000e+00> : vector<4x2xf32>
    %77 = tpu.matmul %0, %76, %cst_84 {dimension_numbers = #tpu.dot_dimension_numbers<[1], [0], [0], [1], [0, 0, 1, 1], [], []>} : vector<4x2xf32>, vector<2x2xf32>, vector<4x2xf32> -> vector<4x2xf32>
    %cst_85 = arith.constant dense<0.000000e+00> : vector<4x4xf32>
    %78 = tpu.matmul %77, %1, %cst_85 {dimension_numbers = #tpu.dot_dimension_numbers<[1], [0], [0], [1], [0, 0, 1, 1], [], []>} : vector<4x2xf32>, vector<2x4xf32>, vector<4x4xf32> -> vector<4x4xf32>
    %c0_86 = arith.constant 0 : index
    %c6_87 = arith.constant 6 : index
    %c0_88 = arith.constant 0 : index
    %c0_89 = arith.constant 0 : index
    %79 = vector.load %arg4[%c0_86, %c6_87, %c0_88, %c0_89] : memref<1x16x4x4xbf16, #tpu.memory_space<vmem>>, vector<1x1x4x4xbf16>
    %80 = vector.shape_cast %79 : vector<1x1x4x4xbf16> to vector<4x4xbf16>
    %81 = arith.extf %80 : vector<4x4xbf16> to vector<4x4xf32>
    %82 = arith.addf %78, %81 : vector<4x4xf32>
    %c0_90 = arith.constant 0 : index
    %c6_91 = arith.constant 6 : index
    %c0_92 = arith.constant 0 : index
    %c0_93 = arith.constant 0 : index
    %83 = vector.load %arg5[%c0_90, %c6_91, %c0_92, %c0_93] : memref<1x16x4x4xf32, #tpu.memory_space<vmem>>, vector<1x1x4x4xf32>
    %84 = vector.shape_cast %83 : vector<1x1x4x4xf32> to vector<4x4xf32>
    %85 = vector.shape_cast %82 : vector<4x4xf32> to vector<1x1x4x4xf32>
    tpu.vector_store %arg5[%c0_90, %c6_91, %c0_92, %c0_93], %85 {strides = array<i32>} : memref<1x16x4x4xf32, #tpu.memory_space<vmem>>, vector<1x1x4x4xf32>,
    %c0_94 = arith.constant 0 : index
    %c7 = arith.constant 7 : index
    %c0_95 = arith.constant 0 : index
    %c0_96 = arith.constant 0 : index
    %86 = vector.load %arg1[%c0_94, %c7, %c0_95, %c0_96] : memref<1x16x2x4xbf16, #tpu.memory_space<vmem>>, vector<1x1x2x2xbf16>
    %87 = vector.shape_cast %86 : vector<1x1x2x2xbf16> to vector<2x2xbf16>
    %88 = arith.extf %87 : vector<2x2xbf16> to vector<2x2xf32>
    %cst_97 = arith.constant dense<0.000000e+00> : vector<4x2xf32>
    %89 = tpu.matmul %0, %88, %cst_97 {dimension_numbers = #tpu.dot_dimension_numbers<[1], [0], [0], [1], [0, 0, 1, 1], [], []>} : vector<4x2xf32>, vector<2x2xf32>, vector<4x2xf32> -> vector<4x2xf32>
    %cst_98 = arith.constant dense<0.000000e+00> : vector<4x4xf32>
    %90 = tpu.matmul %89, %1, %cst_98 {dimension_numbers = #tpu.dot_dimension_numbers<[1], [0], [0], [1], [0, 0, 1, 1], [], []>} : vector<4x2xf32>, vector<2x4xf32>, vector<4x4xf32> -> vector<4x4xf32>
    %c0_99 = arith.constant 0 : index
    %c7_100 = arith.constant 7 : index
    %c0_101 = arith.constant 0 : index
    %c0_102 = arith.constant 0 : index
    %91 = vector.load %arg4[%c0_99, %c7_100, %c0_101, %c0_102] : memref<1x16x4x4xbf16, #tpu.memory_space<vmem>>, vector<1x1x4x4xbf16>
    %92 = vector.shape_cast %91 : vector<1x1x4x4xbf16> to vector<4x4xbf16>
    %93 = arith.extf %92 : vector<4x4xbf16> to vector<4x4xf32>
    %94 = arith.addf %90, %93 : vector<4x4xf32>
    %c0_103 = arith.constant 0 : index
    %c7_104 = arith.constant 7 : index
    %c0_105 = arith.constant 0 : index
    %c0_106 = arith.constant 0 : index
    %95 = vector.load %arg5[%c0_103, %c7_104, %c0_105, %c0_106] : memref<1x16x4x4xf32, #tpu.memory_space<vmem>>, vector<1x1x4x4xf32>
    %96 = vector.shape_cast %95 : vector<1x1x4x4xf32> to vector<4x4xf32>
    %97 = vector.shape_cast %94 : vector<4x4xf32> to vector<1x1x4x4xf32>
    tpu.vector_store %arg5[%c0_103, %c7_104, %c0_105, %c0_106], %97 {strides = array<i32>} : memref<1x16x4x4xf32, #tpu.memory_space<vmem>>, vector<1x1x4x4xf32>,
    %c0_107 = arith.constant 0 : index
    %c8 = arith.constant 8 : index
    %c0_108 = arith.constant 0 : index
    %c0_109 = arith.constant 0 : index
    %98 = vector.load %arg1[%c0_107, %c8, %c0_108, %c0_109] : memref<1x16x2x4xbf16, #tpu.memory_space<vmem>>, vector<1x1x2x2xbf16>
    %99 = vector.shape_cast %98 : vector<1x1x2x2xbf16> to vector<2x2xbf16>
    %100 = arith.extf %99 : vector<2x2xbf16> to vector<2x2xf32>
    %cst_110 = arith.constant dense<0.000000e+00> : vector<4x2xf32>
    %101 = tpu.matmul %0, %100, %cst_110 {dimension_numbers = #tpu.dot_dimension_numbers<[1], [0], [0], [1], [0, 0, 1, 1], [], []>} : vector<4x2xf32>, vector<2x2xf32>, vector<4x2xf32> -> vector<4x2xf32>
    %cst_111 = arith.constant dense<0.000000e+00> : vector<4x4xf32>
    %102 = tpu.matmul %101, %1, %cst_111 {dimension_numbers = #tpu.dot_dimension_numbers<[1], [0], [0], [1], [0, 0, 1, 1], [], []>} : vector<4x2xf32>, vector<2x4xf32>, vector<4x4xf32> -> vector<4x4xf32>
    %c0_112 = arith.constant 0 : index
    %c8_113 = arith.constant 8 : index
    %c0_114 = arith.constant 0 : index
    %c0_115 = arith.constant 0 : index
    %103 = vector.load %arg4[%c0_112, %c8_113, %c0_114, %c0_115] : memref<1x16x4x4xbf16, #tpu.memory_space<vmem>>, vector<1x1x4x4xbf16>
    %104 = vector.shape_cast %103 : vector<1x1x4x4xbf16> to vector<4x4xbf16>
    %105 = arith.extf %104 : vector<4x4xbf16> to vector<4x4xf32>
    %106 = arith.addf %102, %105 : vector<4x4xf32>
    %c0_116 = arith.constant 0 : index
    %c8_117 = arith.constant 8 : index
    %c0_118 = arith.constant 0 : index
    %c0_119 = arith.constant 0 : index
    %107 = vector.load %arg5[%c0_116, %c8_117, %c0_118, %c0_119] : memref<1x16x4x4xf32, #tpu.memory_space<vmem>>, vector<1x1x4x4xf32>
    %108 = vector.shape_cast %107 : vector<1x1x4x4xf32> to vector<4x4xf32>
    %109 = vector.shape_cast %106 : vector<4x4xf32> to vector<1x1x4x4xf32>
    tpu.vector_store %arg5[%c0_116, %c8_117, %c0_118, %c0_119], %109 {strides = array<i32>} : memref<1x16x4x4xf32, #tpu.memory_space<vmem>>, vector<1x1x4x4xf32>,
    %c0_120 = arith.constant 0 : index
    %c9 = arith.constant 9 : index
    %c0_121 = arith.constant 0 : index
    %c0_122 = arith.constant 0 : index
    %110 = vector.load %arg1[%c0_120, %c9, %c0_121, %c0_122] : memref<1x16x2x4xbf16, #tpu.memory_space<vmem>>, vector<1x1x2x2xbf16>
    %111 = vector.shape_cast %110 : vector<1x1x2x2xbf16> to vector<2x2xbf16>
    %112 = arith.extf %111 : vector<2x2xbf16> to vector<2x2xf32>
    %cst_123 = arith.constant dense<0.000000e+00> : vector<4x2xf32>
    %113 = tpu.matmul %0, %112, %cst_123 {dimension_numbers = #tpu.dot_dimension_numbers<[1], [0], [0], [1], [0, 0, 1, 1], [], []>} : vector<4x2xf32>, vector<2x2xf32>, vector<4x2xf32> -> vector<4x2xf32>
    %cst_124 = arith.constant dense<0.000000e+00> : vector<4x4xf32>
    %114 = tpu.matmul %113, %1, %cst_124 {dimension_numbers = #tpu.dot_dimension_numbers<[1], [0], [0], [1], [0, 0, 1, 1], [], []>} : vector<4x2xf32>, vector<2x4xf32>, vector<4x4xf32> -> vector<4x4xf32>
    %c0_125 = arith.constant 0 : index
    %c9_126 = arith.constant 9 : index
    %c0_127 = arith.constant 0 : index
    %c0_128 = arith.constant 0 : index
    %115 = vector.load %arg4[%c0_125, %c9_126, %c0_127, %c0_128] : memref<1x16x4x4xbf16, #tpu.memory_space<vmem>>, vector<1x1x4x4xbf16>
    %116 = vector.shape_cast %115 : vector<1x1x4x4xbf16> to vector<4x4xbf16>
    %117 = arith.extf %116 : vector<4x4xbf16> to vector<4x4xf32>
    %118 = arith.addf %114, %117 : vector<4x4xf32>
    %c0_129 = arith.constant 0 : index
    %c9_130 = arith.constant 9 : index
    %c0_131 = arith.constant 0 : index
    %c0_132 = arith.constant 0 : index
    %119 = vector.load %arg5[%c0_129, %c9_130, %c0_131, %c0_132] : memref<1x16x4x4xf32, #tpu.memory_space<vmem>>, vector<1x1x4x4xf32>
    %120 = vector.shape_cast %119 : vector<1x1x4x4xf32> to vector<4x4xf32>
    %121 = vector.shape_cast %118 : vector<4x4xf32> to vector<1x1x4x4xf32>
    tpu.vector_store %arg5[%c0_129, %c9_130, %c0_131, %c0_132], %121 {strides = array<i32>} : memref<1x16x4x4xf32, #tpu.memory_space<vmem>>, vector<1x1x4x4xf32>,
    %c0_133 = arith.constant 0 : index
    %c10 = arith.constant 10 : index
    %c0_134 = arith.constant 0 : index
    %c0_135 = arith.constant 0 : index
    %122 = vector.load %arg1[%c0_133, %c10, %c0_134, %c0_135] : memref<1x16x2x4xbf16, #tpu.memory_space<vmem>>, vector<1x1x2x2xbf16>
    %123 = vector.shape_cast %122 : vector<1x1x2x2xbf16> to vector<2x2xbf16>
    %124 = arith.extf %123 : vector<2x2xbf16> to vector<2x2xf32>
    %cst_136 = arith.constant dense<0.000000e+00> : vector<4x2xf32>
    %125 = tpu.matmul %0, %124, %cst_136 {dimension_numbers = #tpu.dot_dimension_numbers<[1], [0], [0], [1], [0, 0, 1, 1], [], []>} : vector<4x2xf32>, vector<2x2xf32>, vector<4x2xf32> -> vector<4x2xf32>
    %cst_137 = arith.constant dense<0.000000e+00> : vector<4x4xf32>
    %126 = tpu.matmul %125, %1, %cst_137 {dimension_numbers = #tpu.dot_dimension_numbers<[1], [0], [0], [1], [0, 0, 1, 1], [], []>} : vector<4x2xf32>, vector<2x4xf32>, vector<4x4xf32> -> vector<4x4xf32>
    %c0_138 = arith.constant 0 : index
    %c10_139 = arith.constant 10 : index
    %c0_140 = arith.constant 0 : index
    %c0_141 = arith.constant 0 : index
    %127 = vector.load %arg4[%c0_138, %c10_139, %c0_140, %c0_141] : memref<1x16x4x4xbf16, #tpu.memory_space<vmem>>, vector<1x1x4x4xbf16>
    %128 = vector.shape_cast %127 : vector<1x1x4x4xbf16> to vector<4x4xbf16>
    %129 = arith.extf %128 : vector<4x4xbf16> to vector<4x4xf32>
    %130 = arith.addf %126, %129 : vector<4x4xf32>
    %c0_142 = arith.constant 0 : index
    %c10_143 = arith.constant 10 : index
    %c0_144 = arith.constant 0 : index
    %c0_145 = arith.constant 0 : index
    %131 = vector.load %arg5[%c0_142, %c10_143, %c0_144, %c0_145] : memref<1x16x4x4xf32, #tpu.memory_space<vmem>>, vector<1x1x4x4xf32>
    %132 = vector.shape_cast %131 : vector<1x1x4x4xf32> to vector<4x4xf32>
    %133 = vector.shape_cast %130 : vector<4x4xf32> to vector<1x1x4x4xf32>
    tpu.vector_store %arg5[%c0_142, %c10_143, %c0_144, %c0_145], %133 {strides = array<i32>} : memref<1x16x4x4xf32, #tpu.memory_space<vmem>>, vector<1x1x4x4xf32>,
    %c0_146 = arith.constant 0 : index
    %c11 = arith.constant 11 : index
    %c0_147 = arith.constant 0 : index
    %c0_148 = arith.constant 0 : index
    %134 = vector.load %arg1[%c0_146, %c11, %c0_147, %c0_148] : memref<1x16x2x4xbf16, #tpu.memory_space<vmem>>, vector<1x1x2x2xbf16>
    %135 = vector.shape_cast %134 : vector<1x1x2x2xbf16> to vector<2x2xbf16>
    %136 = arith.extf %135 : vector<2x2xbf16> to vector<2x2xf32>
    %cst_149 = arith.constant dense<0.000000e+00> : vector<4x2xf32>
    %137 = tpu.matmul %0, %136, %cst_149 {dimension_numbers = #tpu.dot_dimension_numbers<[1], [0], [0], [1], [0, 0, 1, 1], [], []>} : vector<4x2xf32>, vector<2x2xf32>, vector<4x2xf32> -> vector<4x2xf32>
    %cst_150 = arith.constant dense<0.000000e+00> : vector<4x4xf32>
    %138 = tpu.matmul %137, %1, %cst_150 {dimension_numbers = #tpu.dot_dimension_numbers<[1], [0], [0], [1], [0, 0, 1, 1], [], []>} : vector<4x2xf32>, vector<2x4xf32>, vector<4x4xf32> -> vector<4x4xf32>
    %c0_151 = arith.constant 0 : index
    %c11_152 = arith.constant 11 : index
    %c0_153 = arith.constant 0 : index
    %c0_154 = arith.constant 0 : index
    %139 = vector.load %arg4[%c0_151, %c11_152, %c0_153, %c0_154] : memref<1x16x4x4xbf16, #tpu.memory_space<vmem>>, vector<1x1x4x4xbf16>
    %140 = vector.shape_cast %139 : vector<1x1x4x4xbf16> to vector<4x4xbf16>
    %141 = arith.extf %140 : vector<4x4xbf16> to vector<4x4xf32>
    %142 = arith.addf %138, %141 : vector<4x4xf32>
    %c0_155 = arith.constant 0 : index
    %c11_156 = arith.constant 11 : index
    %c0_157 = arith.constant 0 : index
    %c0_158 = arith.constant 0 : index
    %143 = vector.load %arg5[%c0_155, %c11_156, %c0_157, %c0_158] : memref<1x16x4x4xf32, #tpu.memory_space<vmem>>, vector<1x1x4x4xf32>
    %144 = vector.shape_cast %143 : vector<1x1x4x4xf32> to vector<4x4xf32>
    %145 = vector.shape_cast %142 : vector<4x4xf32> to vector<1x1x4x4xf32>
    tpu.vector_store %arg5[%c0_155, %c11_156, %c0_157, %c0_158], %145 {strides = array<i32>} : memref<1x16x4x4xf32, #tpu.memory_space<vmem>>, vector<1x1x4x4xf32>,
    %c0_159 = arith.constant 0 : index
    %c12 = arith.constant 12 : index
    %c0_160 = arith.constant 0 : index
    %c0_161 = arith.constant 0 : index
    %146 = vector.load %arg1[%c0_159, %c12, %c0_160, %c0_161] : memref<1x16x2x4xbf16, #tpu.memory_space<vmem>>, vector<1x1x2x2xbf16>
    %147 = vector.shape_cast %146 : vector<1x1x2x2xbf16> to vector<2x2xbf16>
    %148 = arith.extf %147 : vector<2x2xbf16> to vector<2x2xf32>
    %cst_162 = arith.constant dense<0.000000e+00> : vector<4x2xf32>
    %149 = tpu.matmul %0, %148, %cst_162 {dimension_numbers = #tpu.dot_dimension_numbers<[1], [0], [0], [1], [0, 0, 1, 1], [], []>} : vector<4x2xf32>, vector<2x2xf32>, vector<4x2xf32> -> vector<4x2xf32>
    %cst_163 = arith.constant dense<0.000000e+00> : vector<4x4xf32>
    %150 = tpu.matmul %149, %1, %cst_163 {dimension_numbers = #tpu.dot_dimension_numbers<[1], [0], [0], [1], [0, 0, 1, 1], [], []>} : vector<4x2xf32>, vector<2x4xf32>, vector<4x4xf32> -> vector<4x4xf32>
    %c0_164 = arith.constant 0 : index
    %c12_165 = arith.constant 12 : index
    %c0_166 = arith.constant 0 : index
    %c0_167 = arith.constant 0 : index
    %151 = vector.load %arg4[%c0_164, %c12_165, %c0_166, %c0_167] : memref<1x16x4x4xbf16, #tpu.memory_space<vmem>>, vector<1x1x4x4xbf16>
    %152 = vector.shape_cast %151 : vector<1x1x4x4xbf16> to vector<4x4xbf16>
    %153 = arith.extf %152 : vector<4x4xbf16> to vector<4x4xf32>
    %154 = arith.addf %150, %153 : vector<4x4xf32>
    %c0_168 = arith.constant 0 : index
    %c12_169 = arith.constant 12 : index
    %c0_170 = arith.constant 0 : index
    %c0_171 = arith.constant 0 : index
    %155 = vector.load %arg5[%c0_168, %c12_169, %c0_170, %c0_171] : memref<1x16x4x4xf32, #tpu.memory_space<vmem>>, vector<1x1x4x4xf32>
    %156 = vector.shape_cast %155 : vector<1x1x4x4xf32> to vector<4x4xf32>
    %157 = vector.shape_cast %154 : vector<4x4xf32> to vector<1x1x4x4xf32>
    tpu.vector_store %arg5[%c0_168, %c12_169, %c0_170, %c0_171], %157 {strides = array<i32>} : memref<1x16x4x4xf32, #tpu.memory_space<vmem>>, vector<1x1x4x4xf32>,
    %c0_172 = arith.constant 0 : index
    %c13 = arith.constant 13 : index
    %c0_173 = arith.constant 0 : index
    %c0_174 = arith.constant 0 : index
    %158 = vector.load %arg1[%c0_172, %c13, %c0_173, %c0_174] : memref<1x16x2x4xbf16, #tpu.memory_space<vmem>>, vector<1x1x2x2xbf16>
    %159 = vector.shape_cast %158 : vector<1x1x2x2xbf16> to vector<2x2xbf16>
    %160 = arith.extf %159 : vector<2x2xbf16> to vector<2x2xf32>
    %cst_175 = arith.constant dense<0.000000e+00> : vector<4x2xf32>
    %161 = tpu.matmul %0, %160, %cst_175 {dimension_numbers = #tpu.dot_dimension_numbers<[1], [0], [0], [1], [0, 0, 1, 1], [], []>} : vector<4x2xf32>, vector<2x2xf32>, vector<4x2xf32> -> vector<4x2xf32>
    %cst_176 = arith.constant dense<0.000000e+00> : vector<4x4xf32>
    %162 = tpu.matmul %161, %1, %cst_176 {dimension_numbers = #tpu.dot_dimension_numbers<[1], [0], [0], [1], [0, 0, 1, 1], [], []>} : vector<4x2xf32>, vector<2x4xf32>, vector<4x4xf32> -> vector<4x4xf32>
    %c0_177 = arith.constant 0 : index
    %c13_178 = arith.constant 13 : index
    %c0_179 = arith.constant 0 : index
    %c0_180 = arith.constant 0 : index
    %163 = vector.load %arg4[%c0_177, %c13_178, %c0_179, %c0_180] : memref<1x16x4x4xbf16, #tpu.memory_space<vmem>>, vector<1x1x4x4xbf16>
    %164 = vector.shape_cast %163 : vector<1x1x4x4xbf16> to vector<4x4xbf16>
    %165 = arith.extf %164 : vector<4x4xbf16> to vector<4x4xf32>
    %166 = arith.addf %162, %165 : vector<4x4xf32>
    %c0_181 = arith.constant 0 : index
    %c13_182 = arith.constant 13 : index
    %c0_183 = arith.constant 0 : index
    %c0_184 = arith.constant 0 : index
    %167 = vector.load %arg5[%c0_181, %c13_182, %c0_183, %c0_184] : memref<1x16x4x4xf32, #tpu.memory_space<vmem>>, vector<1x1x4x4xf32>
    %168 = vector.shape_cast %167 : vector<1x1x4x4xf32> to vector<4x4xf32>
    %169 = vector.shape_cast %166 : vector<4x4xf32> to vector<1x1x4x4xf32>
    tpu.vector_store %arg5[%c0_181, %c13_182, %c0_183, %c0_184], %169 {strides = array<i32>} : memref<1x16x4x4xf32, #tpu.memory_space<vmem>>, vector<1x1x4x4xf32>,
    %c0_185 = arith.constant 0 : index
    %c14 = arith.constant 14 : index
    %c0_186 = arith.constant 0 : index
    %c0_187 = arith.constant 0 : index
    %170 = vector.load %arg1[%c0_185, %c14, %c0_186, %c0_187] : memref<1x16x2x4xbf16, #tpu.memory_space<vmem>>, vector<1x1x2x2xbf16>
    %171 = vector.shape_cast %170 : vector<1x1x2x2xbf16> to vector<2x2xbf16>
    %172 = arith.extf %171 : vector<2x2xbf16> to vector<2x2xf32>
    %cst_188 = arith.constant dense<0.000000e+00> : vector<4x2xf32>
    %173 = tpu.matmul %0, %172, %cst_188 {dimension_numbers = #tpu.dot_dimension_numbers<[1], [0], [0], [1], [0, 0, 1, 1], [], []>} : vector<4x2xf32>, vector<2x2xf32>, vector<4x2xf32> -> vector<4x2xf32>
    %cst_189 = arith.constant dense<0.000000e+00> : vector<4x4xf32>
    %174 = tpu.matmul %173, %1, %cst_189 {dimension_numbers = #tpu.dot_dimension_numbers<[1], [0], [0], [1], [0, 0, 1, 1], [], []>} : vector<4x2xf32>, vector<2x4xf32>, vector<4x4xf32> -> vector<4x4xf32>
    %c0_190 = arith.constant 0 : index
    %c14_191 = arith.constant 14 : index
    %c0_192 = arith.constant 0 : index
    %c0_193 = arith.constant 0 : index
    %175 = vector.load %arg4[%c0_190, %c14_191, %c0_192, %c0_193] : memref<1x16x4x4xbf16, #tpu.memory_space<vmem>>, vector<1x1x4x4xbf16>
    %176 = vector.shape_cast %175 : vector<1x1x4x4xbf16> to vector<4x4xbf16>
    %177 = arith.extf %176 : vector<4x4xbf16> to vector<4x4xf32>
    %178 = arith.addf %174, %177 : vector<4x4xf32>
    %c0_194 = arith.constant 0 : index
    %c14_195 = arith.constant 14 : index
    %c0_196 = arith.constant 0 : index
    %c0_197 = arith.constant 0 : index
    %179 = vector.load %arg5[%c0_194, %c14_195, %c0_196, %c0_197] : memref<1x16x4x4xf32, #tpu.memory_space<vmem>>, vector<1x1x4x4xf32>
    %180 = vector.shape_cast %179 : vector<1x1x4x4xf32> to vector<4x4xf32>
    %181 = vector.shape_cast %178 : vector<4x4xf32> to vector<1x1x4x4xf32>
    tpu.vector_store %arg5[%c0_194, %c14_195, %c0_196, %c0_197], %181 {strides = array<i32>} : memref<1x16x4x4xf32, #tpu.memory_space<vmem>>, vector<1x1x4x4xf32>,
    %c0_198 = arith.constant 0 : index
    %c15 = arith.constant 15 : index
    %c0_199 = arith.constant 0 : index
    %c0_200 = arith.constant 0 : index
    %182 = vector.load %arg1[%c0_198, %c15, %c0_199, %c0_200] : memref<1x16x2x4xbf16, #tpu.memory_space<vmem>>, vector<1x1x2x2xbf16>
    %183 = vector.shape_cast %182 : vector<1x1x2x2xbf16> to vector<2x2xbf16>
    %184 = arith.extf %183 : vector<2x2xbf16> to vector<2x2xf32>
    %cst_201 = arith.constant dense<0.000000e+00> : vector<4x2xf32>
    %185 = tpu.matmul %0, %184, %cst_201 {dimension_numbers = #tpu.dot_dimension_numbers<[1], [0], [0], [1], [0, 0, 1, 1], [], []>} : vector<4x2xf32>, vector<2x2xf32>, vector<4x2xf32> -> vector<4x2xf32>
    %cst_202 = arith.constant dense<0.000000e+00> : vector<4x4xf32>
    %186 = tpu.matmul %185, %1, %cst_202 {dimension_numbers = #tpu.dot_dimension_numbers<[1], [0], [0], [1], [0, 0, 1, 1], [], []>} : vector<4x2xf32>, vector<2x4xf32>, vector<4x4xf32> -> vector<4x4xf32>
    %c0_203 = arith.constant 0 : index
    %c15_204 = arith.constant 15 : index
    %c0_205 = arith.constant 0 : index
    %c0_206 = arith.constant 0 : index
    %187 = vector.load %arg4[%c0_203, %c15_204, %c0_205, %c0_206] : memref<1x16x4x4xbf16, #tpu.memory_space<vmem>>, vector<1x1x4x4xbf16>
    %188 = vector.shape_cast %187 : vector<1x1x4x4xbf16> to vector<4x4xbf16>
    %189 = arith.extf %188 : vector<4x4xbf16> to vector<4x4xf32>
    %190 = arith.addf %186, %189 : vector<4x4xf32>
    %c0_207 = arith.constant 0 : index
    %c15_208 = arith.constant 15 : index
    %c0_209 = arith.constant 0 : index
    %c0_210 = arith.constant 0 : index
    %191 = vector.load %arg5[%c0_207, %c15_208, %c0_209, %c0_210] : memref<1x16x4x4xf32, #tpu.memory_space<vmem>>, vector<1x1x4x4xf32>
    %192 = vector.shape_cast %191 : vector<1x1x4x4xf32> to vector<4x4xf32>
    %193 = vector.shape_cast %190 : vector<4x4xf32> to vector<1x1x4x4xf32>
    tpu.vector_store %arg5[%c0_207, %c15_208, %c0_209, %c0_210], %193 {strides = array<i32>} : memref<1x16x4x4xf32, #tpu.memory_space<vmem>>, vector<1x1x4x4xf32>,
    return
  }
  func.func @transform_0(%arg0: i32) -> (i32, i32, i32, i32) {
    %c0_i32 = arith.constant 0 : i32
    %c0_i32_0 = arith.constant 0 : i32
    %c0_i32_1 = arith.constant 0 : i32
    %c0_i32_2 = arith.constant 0 : i32
    return %arg0, %c0_i32, %c0_i32_0, %c0_i32_1 : i32, i32, i32, i32
  }
  func.func @transform_1(%arg0: i32) -> (i32, i32) {
    %c0_i32 = arith.constant 0 : i32
    %c0_i32_0 = arith.constant 0 : i32
    %c0_i32_1 = arith.constant 0 : i32
    return %c0_i32, %c0_i32_0 : i32, i32
  }
  func.func @transform_2(%arg0: i32) -> (i32, i32) {
    %c0_i32 = arith.constant 0 : i32
    %c0_i32_0 = arith.constant 0 : i32
    %c0_i32_1 = arith.constant 0 : i32
    return %c0_i32, %c0_i32_0 : i32, i32
  }
  func.func @transform_3(%arg0: i32) -> (i32, i32, i32, i32) {
    %c0_i32 = arith.constant 0 : i32
    %c0_i32_0 = arith.constant 0 : i32
    %c0_i32_1 = arith.constant 0 : i32
    %c0_i32_2 = arith.constant 0 : i32
    return %arg0, %c0_i32, %c0_i32_0, %c0_i32_1 : i32, i32, i32, i32
  }
  func.func @transform_4(%arg0: i32) -> (i32, i32, i32, i32) {
    %c0_i32 = arith.constant 0 : i32
    %c0_i32_0 = arith.constant 0 : i32
    %c0_i32_1 = arith.constant 0 : i32
    %c0_i32_2 = arith.constant 0 : i32
    return %arg0, %c0_i32, %c0_i32_0, %c0_i32_1 : i32, i32, i32, i32
  }
}

module attributes {stable_mosaic.version = 11 : i64} {
  func.func @_conv3x3_bn_relu_kernel(%arg0: i32, %arg1: memref<1x16x128xbf16, #tpu.memory_space<vmem>>, %arg2: memref<9x8x16xbf16, #tpu.memory_space<vmem>>, %arg3: memref<8x1xf32, #tpu.memory_space<vmem>>, %arg4: memref<1x8x24xbf16, #tpu.memory_space<vmem>>) attributes {dimension_semantics = [#tpu.dimension_semantics<parallel>], iteration_bounds = array<i64: 2>, scalar_prefetch = 0 : i64, scratch_operands = 0 : i64, tpu.core_type = #tpu.core_type<tc>, window_params = [{transform_indices = @transform_0, window_bounds = array<i64: 1, 16, 128>}, {pipeline_mode = #tpu.pipeline_mode<synchronous>, transform_indices = @transform_1, window_bounds = array<i64: 9, 8, 16>}, {pipeline_mode = #tpu.pipeline_mode<synchronous>, transform_indices = @transform_2, window_bounds = array<i64: 8, 1>}, {transform_indices = @transform_3, window_bounds = array<i64: 1, 8, 24>}]} {
    %c0 = arith.constant 0 : index
    %c0_0 = arith.constant 0 : index
    %c0_1 = arith.constant 0 : index
    %0 = vector.load %arg1[%c0, %c0_0, %c0_1] : memref<1x16x128xbf16, #tpu.memory_space<vmem>>, vector<1x16x128xbf16>
    %1 = vector.shape_cast %0 : vector<1x16x128xbf16> to vector<16x128xbf16>
    %2 = vector.extract_strided_slice %1 {offsets = [0, 0], sizes = [16, 24], strides = [1, 1]} : vector<16x128xbf16> to vector<16x24xbf16>
    %c0_2 = arith.constant 0 : index
    %c0_3 = arith.constant 0 : index
    %c0_4 = arith.constant 0 : index
    %3 = vector.load %arg2[%c0_2, %c0_3, %c0_4] : memref<9x8x16xbf16, #tpu.memory_space<vmem>>, vector<1x8x16xbf16>
    %4 = vector.shape_cast %3 : vector<1x8x16xbf16> to vector<8x16xbf16>
    %cst = arith.constant dense<0.000000e+00> : vector<8x24xf32>
    %5 = tpu.matmul %4, %2, %cst {dimension_numbers = #tpu.dot_dimension_numbers<[1], [0], [0], [1], [0, 0, 1, 1], [], []>} : vector<8x16xbf16>, vector<16x24xbf16>, vector<8x24xf32> -> vector<8x24xf32>
    %6 = vector.extract_strided_slice %1 {offsets = [0, 1], sizes = [16, 24], strides = [1, 1]} : vector<16x128xbf16> to vector<16x24xbf16>
    %c1 = arith.constant 1 : index
    %c0_5 = arith.constant 0 : index
    %c0_6 = arith.constant 0 : index
    %7 = vector.load %arg2[%c1, %c0_5, %c0_6] : memref<9x8x16xbf16, #tpu.memory_space<vmem>>, vector<1x8x16xbf16>
    %8 = vector.shape_cast %7 : vector<1x8x16xbf16> to vector<8x16xbf16>
    %cst_7 = arith.constant dense<0.000000e+00> : vector<8x24xf32>
    %9 = tpu.matmul %8, %6, %cst_7 {dimension_numbers = #tpu.dot_dimension_numbers<[1], [0], [0], [1], [0, 0, 1, 1], [], []>} : vector<8x16xbf16>, vector<16x24xbf16>, vector<8x24xf32> -> vector<8x24xf32>
    %10 = arith.addf %5, %9 : vector<8x24xf32>
    %11 = vector.extract_strided_slice %1 {offsets = [0, 2], sizes = [16, 24], strides = [1, 1]} : vector<16x128xbf16> to vector<16x24xbf16>
    %c2 = arith.constant 2 : index
    %c0_8 = arith.constant 0 : index
    %c0_9 = arith.constant 0 : index
    %12 = vector.load %arg2[%c2, %c0_8, %c0_9] : memref<9x8x16xbf16, #tpu.memory_space<vmem>>, vector<1x8x16xbf16>
    %13 = vector.shape_cast %12 : vector<1x8x16xbf16> to vector<8x16xbf16>
    %cst_10 = arith.constant dense<0.000000e+00> : vector<8x24xf32>
    %14 = tpu.matmul %13, %11, %cst_10 {dimension_numbers = #tpu.dot_dimension_numbers<[1], [0], [0], [1], [0, 0, 1, 1], [], []>} : vector<8x16xbf16>, vector<16x24xbf16>, vector<8x24xf32> -> vector<8x24xf32>
    %15 = arith.addf %10, %14 : vector<8x24xf32>
    %16 = vector.extract_strided_slice %1 {offsets = [0, 6], sizes = [16, 24], strides = [1, 1]} : vector<16x128xbf16> to vector<16x24xbf16>
    %c3 = arith.constant 3 : index
    %c0_11 = arith.constant 0 : index
    %c0_12 = arith.constant 0 : index
    %17 = vector.load %arg2[%c3, %c0_11, %c0_12] : memref<9x8x16xbf16, #tpu.memory_space<vmem>>, vector<1x8x16xbf16>
    %18 = vector.shape_cast %17 : vector<1x8x16xbf16> to vector<8x16xbf16>
    %cst_13 = arith.constant dense<0.000000e+00> : vector<8x24xf32>
    %19 = tpu.matmul %18, %16, %cst_13 {dimension_numbers = #tpu.dot_dimension_numbers<[1], [0], [0], [1], [0, 0, 1, 1], [], []>} : vector<8x16xbf16>, vector<16x24xbf16>, vector<8x24xf32> -> vector<8x24xf32>
    %20 = arith.addf %15, %19 : vector<8x24xf32>
    %21 = vector.extract_strided_slice %1 {offsets = [0, 7], sizes = [16, 24], strides = [1, 1]} : vector<16x128xbf16> to vector<16x24xbf16>
    %c4 = arith.constant 4 : index
    %c0_14 = arith.constant 0 : index
    %c0_15 = arith.constant 0 : index
    %22 = vector.load %arg2[%c4, %c0_14, %c0_15] : memref<9x8x16xbf16, #tpu.memory_space<vmem>>, vector<1x8x16xbf16>
    %23 = vector.shape_cast %22 : vector<1x8x16xbf16> to vector<8x16xbf16>
    %cst_16 = arith.constant dense<0.000000e+00> : vector<8x24xf32>
    %24 = tpu.matmul %23, %21, %cst_16 {dimension_numbers = #tpu.dot_dimension_numbers<[1], [0], [0], [1], [0, 0, 1, 1], [], []>} : vector<8x16xbf16>, vector<16x24xbf16>, vector<8x24xf32> -> vector<8x24xf32>
    %25 = arith.addf %20, %24 : vector<8x24xf32>
    %26 = vector.extract_strided_slice %1 {offsets = [0, 8], sizes = [16, 24], strides = [1, 1]} : vector<16x128xbf16> to vector<16x24xbf16>
    %c5 = arith.constant 5 : index
    %c0_17 = arith.constant 0 : index
    %c0_18 = arith.constant 0 : index
    %27 = vector.load %arg2[%c5, %c0_17, %c0_18] : memref<9x8x16xbf16, #tpu.memory_space<vmem>>, vector<1x8x16xbf16>
    %28 = vector.shape_cast %27 : vector<1x8x16xbf16> to vector<8x16xbf16>
    %cst_19 = arith.constant dense<0.000000e+00> : vector<8x24xf32>
    %29 = tpu.matmul %28, %26, %cst_19 {dimension_numbers = #tpu.dot_dimension_numbers<[1], [0], [0], [1], [0, 0, 1, 1], [], []>} : vector<8x16xbf16>, vector<16x24xbf16>, vector<8x24xf32> -> vector<8x24xf32>
    %30 = arith.addf %25, %29 : vector<8x24xf32>
    %31 = vector.extract_strided_slice %1 {offsets = [0, 12], sizes = [16, 24], strides = [1, 1]} : vector<16x128xbf16> to vector<16x24xbf16>
    %c6 = arith.constant 6 : index
    %c0_20 = arith.constant 0 : index
    %c0_21 = arith.constant 0 : index
    %32 = vector.load %arg2[%c6, %c0_20, %c0_21] : memref<9x8x16xbf16, #tpu.memory_space<vmem>>, vector<1x8x16xbf16>
    %33 = vector.shape_cast %32 : vector<1x8x16xbf16> to vector<8x16xbf16>
    %cst_22 = arith.constant dense<0.000000e+00> : vector<8x24xf32>
    %34 = tpu.matmul %33, %31, %cst_22 {dimension_numbers = #tpu.dot_dimension_numbers<[1], [0], [0], [1], [0, 0, 1, 1], [], []>} : vector<8x16xbf16>, vector<16x24xbf16>, vector<8x24xf32> -> vector<8x24xf32>
    %35 = arith.addf %30, %34 : vector<8x24xf32>
    %36 = vector.extract_strided_slice %1 {offsets = [0, 13], sizes = [16, 24], strides = [1, 1]} : vector<16x128xbf16> to vector<16x24xbf16>
    %c7 = arith.constant 7 : index
    %c0_23 = arith.constant 0 : index
    %c0_24 = arith.constant 0 : index
    %37 = vector.load %arg2[%c7, %c0_23, %c0_24] : memref<9x8x16xbf16, #tpu.memory_space<vmem>>, vector<1x8x16xbf16>
    %38 = vector.shape_cast %37 : vector<1x8x16xbf16> to vector<8x16xbf16>
    %cst_25 = arith.constant dense<0.000000e+00> : vector<8x24xf32>
    %39 = tpu.matmul %38, %36, %cst_25 {dimension_numbers = #tpu.dot_dimension_numbers<[1], [0], [0], [1], [0, 0, 1, 1], [], []>} : vector<8x16xbf16>, vector<16x24xbf16>, vector<8x24xf32> -> vector<8x24xf32>
    %40 = arith.addf %35, %39 : vector<8x24xf32>
    %41 = vector.extract_strided_slice %1 {offsets = [0, 14], sizes = [16, 24], strides = [1, 1]} : vector<16x128xbf16> to vector<16x24xbf16>
    %c8 = arith.constant 8 : index
    %c0_26 = arith.constant 0 : index
    %c0_27 = arith.constant 0 : index
    %42 = vector.load %arg2[%c8, %c0_26, %c0_27] : memref<9x8x16xbf16, #tpu.memory_space<vmem>>, vector<1x8x16xbf16>
    %43 = vector.shape_cast %42 : vector<1x8x16xbf16> to vector<8x16xbf16>
    %cst_28 = arith.constant dense<0.000000e+00> : vector<8x24xf32>
    %44 = tpu.matmul %43, %41, %cst_28 {dimension_numbers = #tpu.dot_dimension_numbers<[1], [0], [0], [1], [0, 0, 1, 1], [], []>} : vector<8x16xbf16>, vector<16x24xbf16>, vector<8x24xf32> -> vector<8x24xf32>
    %45 = arith.addf %40, %44 : vector<8x24xf32>
    %c0_29 = arith.constant 0 : index
    %c0_30 = arith.constant 0 : index
    %46 = vector.load %arg3[%c0_29, %c0_30] : memref<8x1xf32, #tpu.memory_space<vmem>>, vector<8x1xf32>
    %47 = vector.broadcast %46 : vector<8x1xf32> to vector<8x24xf32>
    %48 = arith.addf %45, %47 : vector<8x24xf32>
    %cst_31 = arith.constant 0.000000e+00 : f32
    %49 = vector.broadcast %cst_31 : f32 to vector<8x24xf32>
    %50 = arith.maximumf %48, %49 : vector<8x24xf32>
    %51 = arith.truncf %50 : vector<8x24xf32> to vector<8x24xbf16>
    %c0_32 = arith.constant 0 : index
    %c0_33 = arith.constant 0 : index
    %c0_34 = arith.constant 0 : index
    %52 = vector.load %arg4[%c0_32, %c0_33, %c0_34] : memref<1x8x24xbf16, #tpu.memory_space<vmem>>, vector<1x8x24xbf16>
    %53 = vector.shape_cast %52 : vector<1x8x24xbf16> to vector<8x24xbf16>
    %54 = vector.shape_cast %51 : vector<8x24xbf16> to vector<1x8x24xbf16>
    tpu.vector_store %arg4[%c0_32, %c0_33, %c0_34], %54 {strides = array<i32>} : memref<1x8x24xbf16, #tpu.memory_space<vmem>>, vector<1x8x24xbf16>,
    return
  }
  func.func @transform_0(%arg0: i32) -> (i32, i32, i32) {
    %c0_i32 = arith.constant 0 : i32
    %c0_i32_0 = arith.constant 0 : i32
    %c0_i32_1 = arith.constant 0 : i32
    return %arg0, %c0_i32, %c0_i32_0 : i32, i32, i32
  }
  func.func @transform_1(%arg0: i32) -> (i32, i32, i32) {
    %c0_i32 = arith.constant 0 : i32
    %c0_i32_0 = arith.constant 0 : i32
    %c0_i32_1 = arith.constant 0 : i32
    %c0_i32_2 = arith.constant 0 : i32
    return %c0_i32, %c0_i32_0, %c0_i32_1 : i32, i32, i32
  }
  func.func @transform_2(%arg0: i32) -> (i32, i32) {
    %c0_i32 = arith.constant 0 : i32
    %c0_i32_0 = arith.constant 0 : i32
    %c0_i32_1 = arith.constant 0 : i32
    return %c0_i32, %c0_i32_0 : i32, i32
  }
  func.func @transform_3(%arg0: i32) -> (i32, i32, i32) {
    %c0_i32 = arith.constant 0 : i32
    %c0_i32_0 = arith.constant 0 : i32
    %c0_i32_1 = arith.constant 0 : i32
    return %arg0, %c0_i32, %c0_i32_0 : i32, i32, i32
  }
}

module attributes {stable_mosaic.version = 11 : i64} {
  func.func @_upsample_skip_kernel(%arg0: i32, %arg1: memref<1x8x4x6xbf16, #tpu.memory_space<vmem>>, %arg2: memref<8x4xf32, #tpu.memory_space<vmem>>, %arg3: memref<4x8xf32, #tpu.memory_space<vmem>>, %arg4: memref<1x8x8x8xbf16, #tpu.memory_space<vmem>>, %arg5: memref<1x8x8x8xf32, #tpu.memory_space<vmem>>) attributes {dimension_semantics = [#tpu.dimension_semantics<parallel>], iteration_bounds = array<i64: 2>, scalar_prefetch = 0 : i64, scratch_operands = 0 : i64, tpu.core_type = #tpu.core_type<tc>, window_params = [{transform_indices = @transform_0, window_bounds = array<i64: 1, 8, 4, 6>}, {pipeline_mode = #tpu.pipeline_mode<synchronous>, transform_indices = @transform_1, window_bounds = array<i64: 8, 4>}, {pipeline_mode = #tpu.pipeline_mode<synchronous>, transform_indices = @transform_2, window_bounds = array<i64: 4, 8>}, {transform_indices = @transform_3, window_bounds = array<i64: 1, 8, 8, 8>}, {transform_indices = @transform_4, window_bounds = array<i64: 1, 8, 8, 8>}]} {
    %c0 = arith.constant 0 : index
    %c0_0 = arith.constant 0 : index
    %0 = vector.load %arg2[%c0, %c0_0] : memref<8x4xf32, #tpu.memory_space<vmem>>, vector<8x4xf32>
    %c0_1 = arith.constant 0 : index
    %c0_2 = arith.constant 0 : index
    %1 = vector.load %arg3[%c0_1, %c0_2] : memref<4x8xf32, #tpu.memory_space<vmem>>, vector<4x8xf32>
    %c0_3 = arith.constant 0 : index
    %c0_4 = arith.constant 0 : index
    %c0_5 = arith.constant 0 : index
    %c0_6 = arith.constant 0 : index
    %2 = vector.load %arg1[%c0_3, %c0_4, %c0_5, %c0_6] : memref<1x8x4x6xbf16, #tpu.memory_space<vmem>>, vector<1x1x4x4xbf16>
    %3 = vector.shape_cast %2 : vector<1x1x4x4xbf16> to vector<4x4xbf16>
    %4 = arith.extf %3 : vector<4x4xbf16> to vector<4x4xf32>
    %cst = arith.constant dense<0.000000e+00> : vector<8x4xf32>
    %5 = tpu.matmul %0, %4, %cst {dimension_numbers = #tpu.dot_dimension_numbers<[1], [0], [0], [1], [0, 0, 1, 1], [], []>} : vector<8x4xf32>, vector<4x4xf32>, vector<8x4xf32> -> vector<8x4xf32>
    %cst_7 = arith.constant dense<0.000000e+00> : vector<8x8xf32>
    %6 = tpu.matmul %5, %1, %cst_7 {dimension_numbers = #tpu.dot_dimension_numbers<[1], [0], [0], [1], [0, 0, 1, 1], [], []>} : vector<8x4xf32>, vector<4x8xf32>, vector<8x8xf32> -> vector<8x8xf32>
    %c0_8 = arith.constant 0 : index
    %c0_9 = arith.constant 0 : index
    %c0_10 = arith.constant 0 : index
    %c0_11 = arith.constant 0 : index
    %7 = vector.load %arg4[%c0_8, %c0_9, %c0_10, %c0_11] : memref<1x8x8x8xbf16, #tpu.memory_space<vmem>>, vector<1x1x8x8xbf16>
    %8 = vector.shape_cast %7 : vector<1x1x8x8xbf16> to vector<8x8xbf16>
    %9 = arith.extf %8 : vector<8x8xbf16> to vector<8x8xf32>
    %10 = arith.addf %6, %9 : vector<8x8xf32>
    %c0_12 = arith.constant 0 : index
    %c0_13 = arith.constant 0 : index
    %c0_14 = arith.constant 0 : index
    %c0_15 = arith.constant 0 : index
    %11 = vector.load %arg5[%c0_12, %c0_13, %c0_14, %c0_15] : memref<1x8x8x8xf32, #tpu.memory_space<vmem>>, vector<1x1x8x8xf32>
    %12 = vector.shape_cast %11 : vector<1x1x8x8xf32> to vector<8x8xf32>
    %13 = vector.shape_cast %10 : vector<8x8xf32> to vector<1x1x8x8xf32>
    tpu.vector_store %arg5[%c0_12, %c0_13, %c0_14, %c0_15], %13 {strides = array<i32>} : memref<1x8x8x8xf32, #tpu.memory_space<vmem>>, vector<1x1x8x8xf32>,
    %c0_16 = arith.constant 0 : index
    %c1 = arith.constant 1 : index
    %c0_17 = arith.constant 0 : index
    %c0_18 = arith.constant 0 : index
    %14 = vector.load %arg1[%c0_16, %c1, %c0_17, %c0_18] : memref<1x8x4x6xbf16, #tpu.memory_space<vmem>>, vector<1x1x4x4xbf16>
    %15 = vector.shape_cast %14 : vector<1x1x4x4xbf16> to vector<4x4xbf16>
    %16 = arith.extf %15 : vector<4x4xbf16> to vector<4x4xf32>
    %cst_19 = arith.constant dense<0.000000e+00> : vector<8x4xf32>
    %17 = tpu.matmul %0, %16, %cst_19 {dimension_numbers = #tpu.dot_dimension_numbers<[1], [0], [0], [1], [0, 0, 1, 1], [], []>} : vector<8x4xf32>, vector<4x4xf32>, vector<8x4xf32> -> vector<8x4xf32>
    %cst_20 = arith.constant dense<0.000000e+00> : vector<8x8xf32>
    %18 = tpu.matmul %17, %1, %cst_20 {dimension_numbers = #tpu.dot_dimension_numbers<[1], [0], [0], [1], [0, 0, 1, 1], [], []>} : vector<8x4xf32>, vector<4x8xf32>, vector<8x8xf32> -> vector<8x8xf32>
    %c0_21 = arith.constant 0 : index
    %c1_22 = arith.constant 1 : index
    %c0_23 = arith.constant 0 : index
    %c0_24 = arith.constant 0 : index
    %19 = vector.load %arg4[%c0_21, %c1_22, %c0_23, %c0_24] : memref<1x8x8x8xbf16, #tpu.memory_space<vmem>>, vector<1x1x8x8xbf16>
    %20 = vector.shape_cast %19 : vector<1x1x8x8xbf16> to vector<8x8xbf16>
    %21 = arith.extf %20 : vector<8x8xbf16> to vector<8x8xf32>
    %22 = arith.addf %18, %21 : vector<8x8xf32>
    %c0_25 = arith.constant 0 : index
    %c1_26 = arith.constant 1 : index
    %c0_27 = arith.constant 0 : index
    %c0_28 = arith.constant 0 : index
    %23 = vector.load %arg5[%c0_25, %c1_26, %c0_27, %c0_28] : memref<1x8x8x8xf32, #tpu.memory_space<vmem>>, vector<1x1x8x8xf32>
    %24 = vector.shape_cast %23 : vector<1x1x8x8xf32> to vector<8x8xf32>
    %25 = vector.shape_cast %22 : vector<8x8xf32> to vector<1x1x8x8xf32>
    tpu.vector_store %arg5[%c0_25, %c1_26, %c0_27, %c0_28], %25 {strides = array<i32>} : memref<1x8x8x8xf32, #tpu.memory_space<vmem>>, vector<1x1x8x8xf32>,
    %c0_29 = arith.constant 0 : index
    %c2 = arith.constant 2 : index
    %c0_30 = arith.constant 0 : index
    %c0_31 = arith.constant 0 : index
    %26 = vector.load %arg1[%c0_29, %c2, %c0_30, %c0_31] : memref<1x8x4x6xbf16, #tpu.memory_space<vmem>>, vector<1x1x4x4xbf16>
    %27 = vector.shape_cast %26 : vector<1x1x4x4xbf16> to vector<4x4xbf16>
    %28 = arith.extf %27 : vector<4x4xbf16> to vector<4x4xf32>
    %cst_32 = arith.constant dense<0.000000e+00> : vector<8x4xf32>
    %29 = tpu.matmul %0, %28, %cst_32 {dimension_numbers = #tpu.dot_dimension_numbers<[1], [0], [0], [1], [0, 0, 1, 1], [], []>} : vector<8x4xf32>, vector<4x4xf32>, vector<8x4xf32> -> vector<8x4xf32>
    %cst_33 = arith.constant dense<0.000000e+00> : vector<8x8xf32>
    %30 = tpu.matmul %29, %1, %cst_33 {dimension_numbers = #tpu.dot_dimension_numbers<[1], [0], [0], [1], [0, 0, 1, 1], [], []>} : vector<8x4xf32>, vector<4x8xf32>, vector<8x8xf32> -> vector<8x8xf32>
    %c0_34 = arith.constant 0 : index
    %c2_35 = arith.constant 2 : index
    %c0_36 = arith.constant 0 : index
    %c0_37 = arith.constant 0 : index
    %31 = vector.load %arg4[%c0_34, %c2_35, %c0_36, %c0_37] : memref<1x8x8x8xbf16, #tpu.memory_space<vmem>>, vector<1x1x8x8xbf16>
    %32 = vector.shape_cast %31 : vector<1x1x8x8xbf16> to vector<8x8xbf16>
    %33 = arith.extf %32 : vector<8x8xbf16> to vector<8x8xf32>
    %34 = arith.addf %30, %33 : vector<8x8xf32>
    %c0_38 = arith.constant 0 : index
    %c2_39 = arith.constant 2 : index
    %c0_40 = arith.constant 0 : index
    %c0_41 = arith.constant 0 : index
    %35 = vector.load %arg5[%c0_38, %c2_39, %c0_40, %c0_41] : memref<1x8x8x8xf32, #tpu.memory_space<vmem>>, vector<1x1x8x8xf32>
    %36 = vector.shape_cast %35 : vector<1x1x8x8xf32> to vector<8x8xf32>
    %37 = vector.shape_cast %34 : vector<8x8xf32> to vector<1x1x8x8xf32>
    tpu.vector_store %arg5[%c0_38, %c2_39, %c0_40, %c0_41], %37 {strides = array<i32>} : memref<1x8x8x8xf32, #tpu.memory_space<vmem>>, vector<1x1x8x8xf32>,
    %c0_42 = arith.constant 0 : index
    %c3 = arith.constant 3 : index
    %c0_43 = arith.constant 0 : index
    %c0_44 = arith.constant 0 : index
    %38 = vector.load %arg1[%c0_42, %c3, %c0_43, %c0_44] : memref<1x8x4x6xbf16, #tpu.memory_space<vmem>>, vector<1x1x4x4xbf16>
    %39 = vector.shape_cast %38 : vector<1x1x4x4xbf16> to vector<4x4xbf16>
    %40 = arith.extf %39 : vector<4x4xbf16> to vector<4x4xf32>
    %cst_45 = arith.constant dense<0.000000e+00> : vector<8x4xf32>
    %41 = tpu.matmul %0, %40, %cst_45 {dimension_numbers = #tpu.dot_dimension_numbers<[1], [0], [0], [1], [0, 0, 1, 1], [], []>} : vector<8x4xf32>, vector<4x4xf32>, vector<8x4xf32> -> vector<8x4xf32>
    %cst_46 = arith.constant dense<0.000000e+00> : vector<8x8xf32>
    %42 = tpu.matmul %41, %1, %cst_46 {dimension_numbers = #tpu.dot_dimension_numbers<[1], [0], [0], [1], [0, 0, 1, 1], [], []>} : vector<8x4xf32>, vector<4x8xf32>, vector<8x8xf32> -> vector<8x8xf32>
    %c0_47 = arith.constant 0 : index
    %c3_48 = arith.constant 3 : index
    %c0_49 = arith.constant 0 : index
    %c0_50 = arith.constant 0 : index
    %43 = vector.load %arg4[%c0_47, %c3_48, %c0_49, %c0_50] : memref<1x8x8x8xbf16, #tpu.memory_space<vmem>>, vector<1x1x8x8xbf16>
    %44 = vector.shape_cast %43 : vector<1x1x8x8xbf16> to vector<8x8xbf16>
    %45 = arith.extf %44 : vector<8x8xbf16> to vector<8x8xf32>
    %46 = arith.addf %42, %45 : vector<8x8xf32>
    %c0_51 = arith.constant 0 : index
    %c3_52 = arith.constant 3 : index
    %c0_53 = arith.constant 0 : index
    %c0_54 = arith.constant 0 : index
    %47 = vector.load %arg5[%c0_51, %c3_52, %c0_53, %c0_54] : memref<1x8x8x8xf32, #tpu.memory_space<vmem>>, vector<1x1x8x8xf32>
    %48 = vector.shape_cast %47 : vector<1x1x8x8xf32> to vector<8x8xf32>
    %49 = vector.shape_cast %46 : vector<8x8xf32> to vector<1x1x8x8xf32>
    tpu.vector_store %arg5[%c0_51, %c3_52, %c0_53, %c0_54], %49 {strides = array<i32>} : memref<1x8x8x8xf32, #tpu.memory_space<vmem>>, vector<1x1x8x8xf32>,
    %c0_55 = arith.constant 0 : index
    %c4 = arith.constant 4 : index
    %c0_56 = arith.constant 0 : index
    %c0_57 = arith.constant 0 : index
    %50 = vector.load %arg1[%c0_55, %c4, %c0_56, %c0_57] : memref<1x8x4x6xbf16, #tpu.memory_space<vmem>>, vector<1x1x4x4xbf16>
    %51 = vector.shape_cast %50 : vector<1x1x4x4xbf16> to vector<4x4xbf16>
    %52 = arith.extf %51 : vector<4x4xbf16> to vector<4x4xf32>
    %cst_58 = arith.constant dense<0.000000e+00> : vector<8x4xf32>
    %53 = tpu.matmul %0, %52, %cst_58 {dimension_numbers = #tpu.dot_dimension_numbers<[1], [0], [0], [1], [0, 0, 1, 1], [], []>} : vector<8x4xf32>, vector<4x4xf32>, vector<8x4xf32> -> vector<8x4xf32>
    %cst_59 = arith.constant dense<0.000000e+00> : vector<8x8xf32>
    %54 = tpu.matmul %53, %1, %cst_59 {dimension_numbers = #tpu.dot_dimension_numbers<[1], [0], [0], [1], [0, 0, 1, 1], [], []>} : vector<8x4xf32>, vector<4x8xf32>, vector<8x8xf32> -> vector<8x8xf32>
    %c0_60 = arith.constant 0 : index
    %c4_61 = arith.constant 4 : index
    %c0_62 = arith.constant 0 : index
    %c0_63 = arith.constant 0 : index
    %55 = vector.load %arg4[%c0_60, %c4_61, %c0_62, %c0_63] : memref<1x8x8x8xbf16, #tpu.memory_space<vmem>>, vector<1x1x8x8xbf16>
    %56 = vector.shape_cast %55 : vector<1x1x8x8xbf16> to vector<8x8xbf16>
    %57 = arith.extf %56 : vector<8x8xbf16> to vector<8x8xf32>
    %58 = arith.addf %54, %57 : vector<8x8xf32>
    %c0_64 = arith.constant 0 : index
    %c4_65 = arith.constant 4 : index
    %c0_66 = arith.constant 0 : index
    %c0_67 = arith.constant 0 : index
    %59 = vector.load %arg5[%c0_64, %c4_65, %c0_66, %c0_67] : memref<1x8x8x8xf32, #tpu.memory_space<vmem>>, vector<1x1x8x8xf32>
    %60 = vector.shape_cast %59 : vector<1x1x8x8xf32> to vector<8x8xf32>
    %61 = vector.shape_cast %58 : vector<8x8xf32> to vector<1x1x8x8xf32>
    tpu.vector_store %arg5[%c0_64, %c4_65, %c0_66, %c0_67], %61 {strides = array<i32>} : memref<1x8x8x8xf32, #tpu.memory_space<vmem>>, vector<1x1x8x8xf32>,
    %c0_68 = arith.constant 0 : index
    %c5 = arith.constant 5 : index
    %c0_69 = arith.constant 0 : index
    %c0_70 = arith.constant 0 : index
    %62 = vector.load %arg1[%c0_68, %c5, %c0_69, %c0_70] : memref<1x8x4x6xbf16, #tpu.memory_space<vmem>>, vector<1x1x4x4xbf16>
    %63 = vector.shape_cast %62 : vector<1x1x4x4xbf16> to vector<4x4xbf16>
    %64 = arith.extf %63 : vector<4x4xbf16> to vector<4x4xf32>
    %cst_71 = arith.constant dense<0.000000e+00> : vector<8x4xf32>
    %65 = tpu.matmul %0, %64, %cst_71 {dimension_numbers = #tpu.dot_dimension_numbers<[1], [0], [0], [1], [0, 0, 1, 1], [], []>} : vector<8x4xf32>, vector<4x4xf32>, vector<8x4xf32> -> vector<8x4xf32>
    %cst_72 = arith.constant dense<0.000000e+00> : vector<8x8xf32>
    %66 = tpu.matmul %65, %1, %cst_72 {dimension_numbers = #tpu.dot_dimension_numbers<[1], [0], [0], [1], [0, 0, 1, 1], [], []>} : vector<8x4xf32>, vector<4x8xf32>, vector<8x8xf32> -> vector<8x8xf32>
    %c0_73 = arith.constant 0 : index
    %c5_74 = arith.constant 5 : index
    %c0_75 = arith.constant 0 : index
    %c0_76 = arith.constant 0 : index
    %67 = vector.load %arg4[%c0_73, %c5_74, %c0_75, %c0_76] : memref<1x8x8x8xbf16, #tpu.memory_space<vmem>>, vector<1x1x8x8xbf16>
    %68 = vector.shape_cast %67 : vector<1x1x8x8xbf16> to vector<8x8xbf16>
    %69 = arith.extf %68 : vector<8x8xbf16> to vector<8x8xf32>
    %70 = arith.addf %66, %69 : vector<8x8xf32>
    %c0_77 = arith.constant 0 : index
    %c5_78 = arith.constant 5 : index
    %c0_79 = arith.constant 0 : index
    %c0_80 = arith.constant 0 : index
    %71 = vector.load %arg5[%c0_77, %c5_78, %c0_79, %c0_80] : memref<1x8x8x8xf32, #tpu.memory_space<vmem>>, vector<1x1x8x8xf32>
    %72 = vector.shape_cast %71 : vector<1x1x8x8xf32> to vector<8x8xf32>
    %73 = vector.shape_cast %70 : vector<8x8xf32> to vector<1x1x8x8xf32>
    tpu.vector_store %arg5[%c0_77, %c5_78, %c0_79, %c0_80], %73 {strides = array<i32>} : memref<1x8x8x8xf32, #tpu.memory_space<vmem>>, vector<1x1x8x8xf32>,
    %c0_81 = arith.constant 0 : index
    %c6 = arith.constant 6 : index
    %c0_82 = arith.constant 0 : index
    %c0_83 = arith.constant 0 : index
    %74 = vector.load %arg1[%c0_81, %c6, %c0_82, %c0_83] : memref<1x8x4x6xbf16, #tpu.memory_space<vmem>>, vector<1x1x4x4xbf16>
    %75 = vector.shape_cast %74 : vector<1x1x4x4xbf16> to vector<4x4xbf16>
    %76 = arith.extf %75 : vector<4x4xbf16> to vector<4x4xf32>
    %cst_84 = arith.constant dense<0.000000e+00> : vector<8x4xf32>
    %77 = tpu.matmul %0, %76, %cst_84 {dimension_numbers = #tpu.dot_dimension_numbers<[1], [0], [0], [1], [0, 0, 1, 1], [], []>} : vector<8x4xf32>, vector<4x4xf32>, vector<8x4xf32> -> vector<8x4xf32>
    %cst_85 = arith.constant dense<0.000000e+00> : vector<8x8xf32>
    %78 = tpu.matmul %77, %1, %cst_85 {dimension_numbers = #tpu.dot_dimension_numbers<[1], [0], [0], [1], [0, 0, 1, 1], [], []>} : vector<8x4xf32>, vector<4x8xf32>, vector<8x8xf32> -> vector<8x8xf32>
    %c0_86 = arith.constant 0 : index
    %c6_87 = arith.constant 6 : index
    %c0_88 = arith.constant 0 : index
    %c0_89 = arith.constant 0 : index
    %79 = vector.load %arg4[%c0_86, %c6_87, %c0_88, %c0_89] : memref<1x8x8x8xbf16, #tpu.memory_space<vmem>>, vector<1x1x8x8xbf16>
    %80 = vector.shape_cast %79 : vector<1x1x8x8xbf16> to vector<8x8xbf16>
    %81 = arith.extf %80 : vector<8x8xbf16> to vector<8x8xf32>
    %82 = arith.addf %78, %81 : vector<8x8xf32>
    %c0_90 = arith.constant 0 : index
    %c6_91 = arith.constant 6 : index
    %c0_92 = arith.constant 0 : index
    %c0_93 = arith.constant 0 : index
    %83 = vector.load %arg5[%c0_90, %c6_91, %c0_92, %c0_93] : memref<1x8x8x8xf32, #tpu.memory_space<vmem>>, vector<1x1x8x8xf32>
    %84 = vector.shape_cast %83 : vector<1x1x8x8xf32> to vector<8x8xf32>
    %85 = vector.shape_cast %82 : vector<8x8xf32> to vector<1x1x8x8xf32>
    tpu.vector_store %arg5[%c0_90, %c6_91, %c0_92, %c0_93], %85 {strides = array<i32>} : memref<1x8x8x8xf32, #tpu.memory_space<vmem>>, vector<1x1x8x8xf32>,
    %c0_94 = arith.constant 0 : index
    %c7 = arith.constant 7 : index
    %c0_95 = arith.constant 0 : index
    %c0_96 = arith.constant 0 : index
    %86 = vector.load %arg1[%c0_94, %c7, %c0_95, %c0_96] : memref<1x8x4x6xbf16, #tpu.memory_space<vmem>>, vector<1x1x4x4xbf16>
    %87 = vector.shape_cast %86 : vector<1x1x4x4xbf16> to vector<4x4xbf16>
    %88 = arith.extf %87 : vector<4x4xbf16> to vector<4x4xf32>
    %cst_97 = arith.constant dense<0.000000e+00> : vector<8x4xf32>
    %89 = tpu.matmul %0, %88, %cst_97 {dimension_numbers = #tpu.dot_dimension_numbers<[1], [0], [0], [1], [0, 0, 1, 1], [], []>} : vector<8x4xf32>, vector<4x4xf32>, vector<8x4xf32> -> vector<8x4xf32>
    %cst_98 = arith.constant dense<0.000000e+00> : vector<8x8xf32>
    %90 = tpu.matmul %89, %1, %cst_98 {dimension_numbers = #tpu.dot_dimension_numbers<[1], [0], [0], [1], [0, 0, 1, 1], [], []>} : vector<8x4xf32>, vector<4x8xf32>, vector<8x8xf32> -> vector<8x8xf32>
    %c0_99 = arith.constant 0 : index
    %c7_100 = arith.constant 7 : index
    %c0_101 = arith.constant 0 : index
    %c0_102 = arith.constant 0 : index
    %91 = vector.load %arg4[%c0_99, %c7_100, %c0_101, %c0_102] : memref<1x8x8x8xbf16, #tpu.memory_space<vmem>>, vector<1x1x8x8xbf16>
    %92 = vector.shape_cast %91 : vector<1x1x8x8xbf16> to vector<8x8xbf16>
    %93 = arith.extf %92 : vector<8x8xbf16> to vector<8x8xf32>
    %94 = arith.addf %90, %93 : vector<8x8xf32>
    %c0_103 = arith.constant 0 : index
    %c7_104 = arith.constant 7 : index
    %c0_105 = arith.constant 0 : index
    %c0_106 = arith.constant 0 : index
    %95 = vector.load %arg5[%c0_103, %c7_104, %c0_105, %c0_106] : memref<1x8x8x8xf32, #tpu.memory_space<vmem>>, vector<1x1x8x8xf32>
    %96 = vector.shape_cast %95 : vector<1x1x8x8xf32> to vector<8x8xf32>
    %97 = vector.shape_cast %94 : vector<8x8xf32> to vector<1x1x8x8xf32>
    tpu.vector_store %arg5[%c0_103, %c7_104, %c0_105, %c0_106], %97 {strides = array<i32>} : memref<1x8x8x8xf32, #tpu.memory_space<vmem>>, vector<1x1x8x8xf32>,
    return
  }
  func.func @transform_0(%arg0: i32) -> (i32, i32, i32, i32) {
    %c0_i32 = arith.constant 0 : i32
    %c0_i32_0 = arith.constant 0 : i32
    %c0_i32_1 = arith.constant 0 : i32
    %c0_i32_2 = arith.constant 0 : i32
    return %arg0, %c0_i32, %c0_i32_0, %c0_i32_1 : i32, i32, i32, i32
  }
  func.func @transform_1(%arg0: i32) -> (i32, i32) {
    %c0_i32 = arith.constant 0 : i32
    %c0_i32_0 = arith.constant 0 : i32
    %c0_i32_1 = arith.constant 0 : i32
    return %c0_i32, %c0_i32_0 : i32, i32
  }
  func.func @transform_2(%arg0: i32) -> (i32, i32) {
    %c0_i32 = arith.constant 0 : i32
    %c0_i32_0 = arith.constant 0 : i32
    %c0_i32_1 = arith.constant 0 : i32
    return %c0_i32, %c0_i32_0 : i32, i32
  }
  func.func @transform_3(%arg0: i32) -> (i32, i32, i32, i32) {
    %c0_i32 = arith.constant 0 : i32
    %c0_i32_0 = arith.constant 0 : i32
    %c0_i32_1 = arith.constant 0 : i32
    %c0_i32_2 = arith.constant 0 : i32
    return %arg0, %c0_i32, %c0_i32_0, %c0_i32_1 : i32, i32, i32, i32
  }
  func.func @transform_4(%arg0: i32) -> (i32, i32, i32, i32) {
    %c0_i32 = arith.constant 0 : i32
    %c0_i32_0 = arith.constant 0 : i32
    %c0_i32_1 = arith.constant 0 : i32
    %c0_i32_2 = arith.constant 0 : i32
    return %arg0, %c0_i32, %c0_i32_0, %c0_i32_1 : i32, i32, i32, i32
  }
}

module attributes {stable_mosaic.version = 11 : i64} {
  func.func @_conv3x3_bn_relu_kernel(%arg0: i32, %arg1: memref<1x8x128xbf16, #tpu.memory_space<vmem>>, %arg2: memref<9x4x8xbf16, #tpu.memory_space<vmem>>, %arg3: memref<4x1xf32, #tpu.memory_space<vmem>>, %arg4: memref<1x4x80xbf16, #tpu.memory_space<vmem>>) attributes {dimension_semantics = [#tpu.dimension_semantics<parallel>], iteration_bounds = array<i64: 2>, scalar_prefetch = 0 : i64, scratch_operands = 0 : i64, tpu.core_type = #tpu.core_type<tc>, window_params = [{transform_indices = @transform_0, window_bounds = array<i64: 1, 8, 128>}, {pipeline_mode = #tpu.pipeline_mode<synchronous>, transform_indices = @transform_1, window_bounds = array<i64: 9, 4, 8>}, {pipeline_mode = #tpu.pipeline_mode<synchronous>, transform_indices = @transform_2, window_bounds = array<i64: 4, 1>}, {transform_indices = @transform_3, window_bounds = array<i64: 1, 4, 80>}]} {
    %c0 = arith.constant 0 : index
    %c0_0 = arith.constant 0 : index
    %c0_1 = arith.constant 0 : index
    %0 = vector.load %arg1[%c0, %c0_0, %c0_1] : memref<1x8x128xbf16, #tpu.memory_space<vmem>>, vector<1x8x128xbf16>
    %1 = vector.shape_cast %0 : vector<1x8x128xbf16> to vector<8x128xbf16>
    %2 = vector.extract_strided_slice %1 {offsets = [0, 0], sizes = [8, 80], strides = [1, 1]} : vector<8x128xbf16> to vector<8x80xbf16>
    %c0_2 = arith.constant 0 : index
    %c0_3 = arith.constant 0 : index
    %c0_4 = arith.constant 0 : index
    %3 = vector.load %arg2[%c0_2, %c0_3, %c0_4] : memref<9x4x8xbf16, #tpu.memory_space<vmem>>, vector<1x4x8xbf16>
    %4 = vector.shape_cast %3 : vector<1x4x8xbf16> to vector<4x8xbf16>
    %cst = arith.constant dense<0.000000e+00> : vector<4x80xf32>
    %5 = tpu.matmul %4, %2, %cst {dimension_numbers = #tpu.dot_dimension_numbers<[1], [0], [0], [1], [0, 0, 1, 1], [], []>} : vector<4x8xbf16>, vector<8x80xbf16>, vector<4x80xf32> -> vector<4x80xf32>
    %6 = vector.extract_strided_slice %1 {offsets = [0, 1], sizes = [8, 80], strides = [1, 1]} : vector<8x128xbf16> to vector<8x80xbf16>
    %c1 = arith.constant 1 : index
    %c0_5 = arith.constant 0 : index
    %c0_6 = arith.constant 0 : index
    %7 = vector.load %arg2[%c1, %c0_5, %c0_6] : memref<9x4x8xbf16, #tpu.memory_space<vmem>>, vector<1x4x8xbf16>
    %8 = vector.shape_cast %7 : vector<1x4x8xbf16> to vector<4x8xbf16>
    %cst_7 = arith.constant dense<0.000000e+00> : vector<4x80xf32>
    %9 = tpu.matmul %8, %6, %cst_7 {dimension_numbers = #tpu.dot_dimension_numbers<[1], [0], [0], [1], [0, 0, 1, 1], [], []>} : vector<4x8xbf16>, vector<8x80xbf16>, vector<4x80xf32> -> vector<4x80xf32>
    %10 = arith.addf %5, %9 : vector<4x80xf32>
    %11 = vector.extract_strided_slice %1 {offsets = [0, 2], sizes = [8, 80], strides = [1, 1]} : vector<8x128xbf16> to vector<8x80xbf16>
    %c2 = arith.constant 2 : index
    %c0_8 = arith.constant 0 : index
    %c0_9 = arith.constant 0 : index
    %12 = vector.load %arg2[%c2, %c0_8, %c0_9] : memref<9x4x8xbf16, #tpu.memory_space<vmem>>, vector<1x4x8xbf16>
    %13 = vector.shape_cast %12 : vector<1x4x8xbf16> to vector<4x8xbf16>
    %cst_10 = arith.constant dense<0.000000e+00> : vector<4x80xf32>
    %14 = tpu.matmul %13, %11, %cst_10 {dimension_numbers = #tpu.dot_dimension_numbers<[1], [0], [0], [1], [0, 0, 1, 1], [], []>} : vector<4x8xbf16>, vector<8x80xbf16>, vector<4x80xf32> -> vector<4x80xf32>
    %15 = arith.addf %10, %14 : vector<4x80xf32>
    %16 = vector.extract_strided_slice %1 {offsets = [0, 10], sizes = [8, 80], strides = [1, 1]} : vector<8x128xbf16> to vector<8x80xbf16>
    %c3 = arith.constant 3 : index
    %c0_11 = arith.constant 0 : index
    %c0_12 = arith.constant 0 : index
    %17 = vector.load %arg2[%c3, %c0_11, %c0_12] : memref<9x4x8xbf16, #tpu.memory_space<vmem>>, vector<1x4x8xbf16>
    %18 = vector.shape_cast %17 : vector<1x4x8xbf16> to vector<4x8xbf16>
    %cst_13 = arith.constant dense<0.000000e+00> : vector<4x80xf32>
    %19 = tpu.matmul %18, %16, %cst_13 {dimension_numbers = #tpu.dot_dimension_numbers<[1], [0], [0], [1], [0, 0, 1, 1], [], []>} : vector<4x8xbf16>, vector<8x80xbf16>, vector<4x80xf32> -> vector<4x80xf32>
    %20 = arith.addf %15, %19 : vector<4x80xf32>
    %21 = vector.extract_strided_slice %1 {offsets = [0, 11], sizes = [8, 80], strides = [1, 1]} : vector<8x128xbf16> to vector<8x80xbf16>
    %c4 = arith.constant 4 : index
    %c0_14 = arith.constant 0 : index
    %c0_15 = arith.constant 0 : index
    %22 = vector.load %arg2[%c4, %c0_14, %c0_15] : memref<9x4x8xbf16, #tpu.memory_space<vmem>>, vector<1x4x8xbf16>
    %23 = vector.shape_cast %22 : vector<1x4x8xbf16> to vector<4x8xbf16>
    %cst_16 = arith.constant dense<0.000000e+00> : vector<4x80xf32>
    %24 = tpu.matmul %23, %21, %cst_16 {dimension_numbers = #tpu.dot_dimension_numbers<[1], [0], [0], [1], [0, 0, 1, 1], [], []>} : vector<4x8xbf16>, vector<8x80xbf16>, vector<4x80xf32> -> vector<4x80xf32>
    %25 = arith.addf %20, %24 : vector<4x80xf32>
    %26 = vector.extract_strided_slice %1 {offsets = [0, 12], sizes = [8, 80], strides = [1, 1]} : vector<8x128xbf16> to vector<8x80xbf16>
    %c5 = arith.constant 5 : index
    %c0_17 = arith.constant 0 : index
    %c0_18 = arith.constant 0 : index
    %27 = vector.load %arg2[%c5, %c0_17, %c0_18] : memref<9x4x8xbf16, #tpu.memory_space<vmem>>, vector<1x4x8xbf16>
    %28 = vector.shape_cast %27 : vector<1x4x8xbf16> to vector<4x8xbf16>
    %cst_19 = arith.constant dense<0.000000e+00> : vector<4x80xf32>
    %29 = tpu.matmul %28, %26, %cst_19 {dimension_numbers = #tpu.dot_dimension_numbers<[1], [0], [0], [1], [0, 0, 1, 1], [], []>} : vector<4x8xbf16>, vector<8x80xbf16>, vector<4x80xf32> -> vector<4x80xf32>
    %30 = arith.addf %25, %29 : vector<4x80xf32>
    %31 = vector.extract_strided_slice %1 {offsets = [0, 20], sizes = [8, 80], strides = [1, 1]} : vector<8x128xbf16> to vector<8x80xbf16>
    %c6 = arith.constant 6 : index
    %c0_20 = arith.constant 0 : index
    %c0_21 = arith.constant 0 : index
    %32 = vector.load %arg2[%c6, %c0_20, %c0_21] : memref<9x4x8xbf16, #tpu.memory_space<vmem>>, vector<1x4x8xbf16>
    %33 = vector.shape_cast %32 : vector<1x4x8xbf16> to vector<4x8xbf16>
    %cst_22 = arith.constant dense<0.000000e+00> : vector<4x80xf32>
    %34 = tpu.matmul %33, %31, %cst_22 {dimension_numbers = #tpu.dot_dimension_numbers<[1], [0], [0], [1], [0, 0, 1, 1], [], []>} : vector<4x8xbf16>, vector<8x80xbf16>, vector<4x80xf32> -> vector<4x80xf32>
    %35 = arith.addf %30, %34 : vector<4x80xf32>
    %36 = vector.extract_strided_slice %1 {offsets = [0, 21], sizes = [8, 80], strides = [1, 1]} : vector<8x128xbf16> to vector<8x80xbf16>
    %c7 = arith.constant 7 : index
    %c0_23 = arith.constant 0 : index
    %c0_24 = arith.constant 0 : index
    %37 = vector.load %arg2[%c7, %c0_23, %c0_24] : memref<9x4x8xbf16, #tpu.memory_space<vmem>>, vector<1x4x8xbf16>
    %38 = vector.shape_cast %37 : vector<1x4x8xbf16> to vector<4x8xbf16>
    %cst_25 = arith.constant dense<0.000000e+00> : vector<4x80xf32>
    %39 = tpu.matmul %38, %36, %cst_25 {dimension_numbers = #tpu.dot_dimension_numbers<[1], [0], [0], [1], [0, 0, 1, 1], [], []>} : vector<4x8xbf16>, vector<8x80xbf16>, vector<4x80xf32> -> vector<4x80xf32>
    %40 = arith.addf %35, %39 : vector<4x80xf32>
    %41 = vector.extract_strided_slice %1 {offsets = [0, 22], sizes = [8, 80], strides = [1, 1]} : vector<8x128xbf16> to vector<8x80xbf16>
    %c8 = arith.constant 8 : index
    %c0_26 = arith.constant 0 : index
    %c0_27 = arith.constant 0 : index
    %42 = vector.load %arg2[%c8, %c0_26, %c0_27] : memref<9x4x8xbf16, #tpu.memory_space<vmem>>, vector<1x4x8xbf16>
    %43 = vector.shape_cast %42 : vector<1x4x8xbf16> to vector<4x8xbf16>
    %cst_28 = arith.constant dense<0.000000e+00> : vector<4x80xf32>
    %44 = tpu.matmul %43, %41, %cst_28 {dimension_numbers = #tpu.dot_dimension_numbers<[1], [0], [0], [1], [0, 0, 1, 1], [], []>} : vector<4x8xbf16>, vector<8x80xbf16>, vector<4x80xf32> -> vector<4x80xf32>
    %45 = arith.addf %40, %44 : vector<4x80xf32>
    %c0_29 = arith.constant 0 : index
    %c0_30 = arith.constant 0 : index
    %46 = vector.load %arg3[%c0_29, %c0_30] : memref<4x1xf32, #tpu.memory_space<vmem>>, vector<4x1xf32>
    %47 = vector.broadcast %46 : vector<4x1xf32> to vector<4x80xf32>
    %48 = arith.addf %45, %47 : vector<4x80xf32>
    %cst_31 = arith.constant 0.000000e+00 : f32
    %49 = vector.broadcast %cst_31 : f32 to vector<4x80xf32>
    %50 = arith.maximumf %48, %49 : vector<4x80xf32>
    %51 = arith.truncf %50 : vector<4x80xf32> to vector<4x80xbf16>
    %c0_32 = arith.constant 0 : index
    %c0_33 = arith.constant 0 : index
    %c0_34 = arith.constant 0 : index
    %52 = vector.load %arg4[%c0_32, %c0_33, %c0_34] : memref<1x4x80xbf16, #tpu.memory_space<vmem>>, vector<1x4x80xbf16>
    %53 = vector.shape_cast %52 : vector<1x4x80xbf16> to vector<4x80xbf16>
    %54 = vector.shape_cast %51 : vector<4x80xbf16> to vector<1x4x80xbf16>
    tpu.vector_store %arg4[%c0_32, %c0_33, %c0_34], %54 {strides = array<i32>} : memref<1x4x80xbf16, #tpu.memory_space<vmem>>, vector<1x4x80xbf16>,
    return
  }
  func.func @transform_0(%arg0: i32) -> (i32, i32, i32) {
    %c0_i32 = arith.constant 0 : i32
    %c0_i32_0 = arith.constant 0 : i32
    %c0_i32_1 = arith.constant 0 : i32
    return %arg0, %c0_i32, %c0_i32_0 : i32, i32, i32
  }
  func.func @transform_1(%arg0: i32) -> (i32, i32, i32) {
    %c0_i32 = arith.constant 0 : i32
    %c0_i32_0 = arith.constant 0 : i32
    %c0_i32_1 = arith.constant 0 : i32
    %c0_i32_2 = arith.constant 0 : i32
    return %c0_i32, %c0_i32_0, %c0_i32_1 : i32, i32, i32
  }
  func.func @transform_2(%arg0: i32) -> (i32, i32) {
    %c0_i32 = arith.constant 0 : i32
    %c0_i32_0 = arith.constant 0 : i32
    %c0_i32_1 = arith.constant 0 : i32
    return %c0_i32, %c0_i32_0 : i32, i32
  }
  func.func @transform_3(%arg0: i32) -> (i32, i32, i32) {
    %c0_i32 = arith.constant 0 : i32
    %c0_i32_0 = arith.constant 0 : i32
    %c0_i32_1 = arith.constant 0 : i32
    return %arg0, %c0_i32, %c0_i32_0 : i32, i32, i32
  }
}

module attributes {stable_mosaic.version = 11 : i64} {
  func.func @_upsample_skip_kernel(%arg0: i32, %arg1: memref<1x4x8x10xbf16, #tpu.memory_space<vmem>>, %arg2: memref<16x8xf32, #tpu.memory_space<vmem>>, %arg3: memref<8x16xf32, #tpu.memory_space<vmem>>, %arg4: memref<1x4x16x16xbf16, #tpu.memory_space<vmem>>, %arg5: memref<1x4x16x16xf32, #tpu.memory_space<vmem>>) attributes {dimension_semantics = [#tpu.dimension_semantics<parallel>], iteration_bounds = array<i64: 2>, scalar_prefetch = 0 : i64, scratch_operands = 0 : i64, tpu.core_type = #tpu.core_type<tc>, window_params = [{transform_indices = @transform_0, window_bounds = array<i64: 1, 4, 8, 10>}, {pipeline_mode = #tpu.pipeline_mode<synchronous>, transform_indices = @transform_1, window_bounds = array<i64: 16, 8>}, {pipeline_mode = #tpu.pipeline_mode<synchronous>, transform_indices = @transform_2, window_bounds = array<i64: 8, 16>}, {transform_indices = @transform_3, window_bounds = array<i64: 1, 4, 16, 16>}, {transform_indices = @transform_4, window_bounds = array<i64: 1, 4, 16, 16>}]} {
    %c0 = arith.constant 0 : index
    %c0_0 = arith.constant 0 : index
    %0 = vector.load %arg2[%c0, %c0_0] : memref<16x8xf32, #tpu.memory_space<vmem>>, vector<16x8xf32>
    %c0_1 = arith.constant 0 : index
    %c0_2 = arith.constant 0 : index
    %1 = vector.load %arg3[%c0_1, %c0_2] : memref<8x16xf32, #tpu.memory_space<vmem>>, vector<8x16xf32>
    %c0_3 = arith.constant 0 : index
    %c0_4 = arith.constant 0 : index
    %c0_5 = arith.constant 0 : index
    %c0_6 = arith.constant 0 : index
    %2 = vector.load %arg1[%c0_3, %c0_4, %c0_5, %c0_6] : memref<1x4x8x10xbf16, #tpu.memory_space<vmem>>, vector<1x1x8x8xbf16>
    %3 = vector.shape_cast %2 : vector<1x1x8x8xbf16> to vector<8x8xbf16>
    %4 = arith.extf %3 : vector<8x8xbf16> to vector<8x8xf32>
    %cst = arith.constant dense<0.000000e+00> : vector<16x8xf32>
    %5 = tpu.matmul %0, %4, %cst {dimension_numbers = #tpu.dot_dimension_numbers<[1], [0], [0], [1], [0, 0, 1, 1], [], []>} : vector<16x8xf32>, vector<8x8xf32>, vector<16x8xf32> -> vector<16x8xf32>
    %cst_7 = arith.constant dense<0.000000e+00> : vector<16x16xf32>
    %6 = tpu.matmul %5, %1, %cst_7 {dimension_numbers = #tpu.dot_dimension_numbers<[1], [0], [0], [1], [0, 0, 1, 1], [], []>} : vector<16x8xf32>, vector<8x16xf32>, vector<16x16xf32> -> vector<16x16xf32>
    %c0_8 = arith.constant 0 : index
    %c0_9 = arith.constant 0 : index
    %c0_10 = arith.constant 0 : index
    %c0_11 = arith.constant 0 : index
    %7 = vector.load %arg4[%c0_8, %c0_9, %c0_10, %c0_11] : memref<1x4x16x16xbf16, #tpu.memory_space<vmem>>, vector<1x1x16x16xbf16>
    %8 = vector.shape_cast %7 : vector<1x1x16x16xbf16> to vector<16x16xbf16>
    %9 = arith.extf %8 : vector<16x16xbf16> to vector<16x16xf32>
    %10 = arith.addf %6, %9 : vector<16x16xf32>
    %c0_12 = arith.constant 0 : index
    %c0_13 = arith.constant 0 : index
    %c0_14 = arith.constant 0 : index
    %c0_15 = arith.constant 0 : index
    %11 = vector.load %arg5[%c0_12, %c0_13, %c0_14, %c0_15] : memref<1x4x16x16xf32, #tpu.memory_space<vmem>>, vector<1x1x16x16xf32>
    %12 = vector.shape_cast %11 : vector<1x1x16x16xf32> to vector<16x16xf32>
    %13 = vector.shape_cast %10 : vector<16x16xf32> to vector<1x1x16x16xf32>
    tpu.vector_store %arg5[%c0_12, %c0_13, %c0_14, %c0_15], %13 {strides = array<i32>} : memref<1x4x16x16xf32, #tpu.memory_space<vmem>>, vector<1x1x16x16xf32>,
    %c0_16 = arith.constant 0 : index
    %c1 = arith.constant 1 : index
    %c0_17 = arith.constant 0 : index
    %c0_18 = arith.constant 0 : index
    %14 = vector.load %arg1[%c0_16, %c1, %c0_17, %c0_18] : memref<1x4x8x10xbf16, #tpu.memory_space<vmem>>, vector<1x1x8x8xbf16>
    %15 = vector.shape_cast %14 : vector<1x1x8x8xbf16> to vector<8x8xbf16>
    %16 = arith.extf %15 : vector<8x8xbf16> to vector<8x8xf32>
    %cst_19 = arith.constant dense<0.000000e+00> : vector<16x8xf32>
    %17 = tpu.matmul %0, %16, %cst_19 {dimension_numbers = #tpu.dot_dimension_numbers<[1], [0], [0], [1], [0, 0, 1, 1], [], []>} : vector<16x8xf32>, vector<8x8xf32>, vector<16x8xf32> -> vector<16x8xf32>
    %cst_20 = arith.constant dense<0.000000e+00> : vector<16x16xf32>
    %18 = tpu.matmul %17, %1, %cst_20 {dimension_numbers = #tpu.dot_dimension_numbers<[1], [0], [0], [1], [0, 0, 1, 1], [], []>} : vector<16x8xf32>, vector<8x16xf32>, vector<16x16xf32> -> vector<16x16xf32>
    %c0_21 = arith.constant 0 : index
    %c1_22 = arith.constant 1 : index
    %c0_23 = arith.constant 0 : index
    %c0_24 = arith.constant 0 : index
    %19 = vector.load %arg4[%c0_21, %c1_22, %c0_23, %c0_24] : memref<1x4x16x16xbf16, #tpu.memory_space<vmem>>, vector<1x1x16x16xbf16>
    %20 = vector.shape_cast %19 : vector<1x1x16x16xbf16> to vector<16x16xbf16>
    %21 = arith.extf %20 : vector<16x16xbf16> to vector<16x16xf32>
    %22 = arith.addf %18, %21 : vector<16x16xf32>
    %c0_25 = arith.constant 0 : index
    %c1_26 = arith.constant 1 : index
    %c0_27 = arith.constant 0 : index
    %c0_28 = arith.constant 0 : index
    %23 = vector.load %arg5[%c0_25, %c1_26, %c0_27, %c0_28] : memref<1x4x16x16xf32, #tpu.memory_space<vmem>>, vector<1x1x16x16xf32>
    %24 = vector.shape_cast %23 : vector<1x1x16x16xf32> to vector<16x16xf32>
    %25 = vector.shape_cast %22 : vector<16x16xf32> to vector<1x1x16x16xf32>
    tpu.vector_store %arg5[%c0_25, %c1_26, %c0_27, %c0_28], %25 {strides = array<i32>} : memref<1x4x16x16xf32, #tpu.memory_space<vmem>>, vector<1x1x16x16xf32>,
    %c0_29 = arith.constant 0 : index
    %c2 = arith.constant 2 : index
    %c0_30 = arith.constant 0 : index
    %c0_31 = arith.constant 0 : index
    %26 = vector.load %arg1[%c0_29, %c2, %c0_30, %c0_31] : memref<1x4x8x10xbf16, #tpu.memory_space<vmem>>, vector<1x1x8x8xbf16>
    %27 = vector.shape_cast %26 : vector<1x1x8x8xbf16> to vector<8x8xbf16>
    %28 = arith.extf %27 : vector<8x8xbf16> to vector<8x8xf32>
    %cst_32 = arith.constant dense<0.000000e+00> : vector<16x8xf32>
    %29 = tpu.matmul %0, %28, %cst_32 {dimension_numbers = #tpu.dot_dimension_numbers<[1], [0], [0], [1], [0, 0, 1, 1], [], []>} : vector<16x8xf32>, vector<8x8xf32>, vector<16x8xf32> -> vector<16x8xf32>
    %cst_33 = arith.constant dense<0.000000e+00> : vector<16x16xf32>
    %30 = tpu.matmul %29, %1, %cst_33 {dimension_numbers = #tpu.dot_dimension_numbers<[1], [0], [0], [1], [0, 0, 1, 1], [], []>} : vector<16x8xf32>, vector<8x16xf32>, vector<16x16xf32> -> vector<16x16xf32>
    %c0_34 = arith.constant 0 : index
    %c2_35 = arith.constant 2 : index
    %c0_36 = arith.constant 0 : index
    %c0_37 = arith.constant 0 : index
    %31 = vector.load %arg4[%c0_34, %c2_35, %c0_36, %c0_37] : memref<1x4x16x16xbf16, #tpu.memory_space<vmem>>, vector<1x1x16x16xbf16>
    %32 = vector.shape_cast %31 : vector<1x1x16x16xbf16> to vector<16x16xbf16>
    %33 = arith.extf %32 : vector<16x16xbf16> to vector<16x16xf32>
    %34 = arith.addf %30, %33 : vector<16x16xf32>
    %c0_38 = arith.constant 0 : index
    %c2_39 = arith.constant 2 : index
    %c0_40 = arith.constant 0 : index
    %c0_41 = arith.constant 0 : index
    %35 = vector.load %arg5[%c0_38, %c2_39, %c0_40, %c0_41] : memref<1x4x16x16xf32, #tpu.memory_space<vmem>>, vector<1x1x16x16xf32>
    %36 = vector.shape_cast %35 : vector<1x1x16x16xf32> to vector<16x16xf32>
    %37 = vector.shape_cast %34 : vector<16x16xf32> to vector<1x1x16x16xf32>
    tpu.vector_store %arg5[%c0_38, %c2_39, %c0_40, %c0_41], %37 {strides = array<i32>} : memref<1x4x16x16xf32, #tpu.memory_space<vmem>>, vector<1x1x16x16xf32>,
    %c0_42 = arith.constant 0 : index
    %c3 = arith.constant 3 : index
    %c0_43 = arith.constant 0 : index
    %c0_44 = arith.constant 0 : index
    %38 = vector.load %arg1[%c0_42, %c3, %c0_43, %c0_44] : memref<1x4x8x10xbf16, #tpu.memory_space<vmem>>, vector<1x1x8x8xbf16>
    %39 = vector.shape_cast %38 : vector<1x1x8x8xbf16> to vector<8x8xbf16>
    %40 = arith.extf %39 : vector<8x8xbf16> to vector<8x8xf32>
    %cst_45 = arith.constant dense<0.000000e+00> : vector<16x8xf32>
    %41 = tpu.matmul %0, %40, %cst_45 {dimension_numbers = #tpu.dot_dimension_numbers<[1], [0], [0], [1], [0, 0, 1, 1], [], []>} : vector<16x8xf32>, vector<8x8xf32>, vector<16x8xf32> -> vector<16x8xf32>
    %cst_46 = arith.constant dense<0.000000e+00> : vector<16x16xf32>
    %42 = tpu.matmul %41, %1, %cst_46 {dimension_numbers = #tpu.dot_dimension_numbers<[1], [0], [0], [1], [0, 0, 1, 1], [], []>} : vector<16x8xf32>, vector<8x16xf32>, vector<16x16xf32> -> vector<16x16xf32>
    %c0_47 = arith.constant 0 : index
    %c3_48 = arith.constant 3 : index
    %c0_49 = arith.constant 0 : index
    %c0_50 = arith.constant 0 : index
    %43 = vector.load %arg4[%c0_47, %c3_48, %c0_49, %c0_50] : memref<1x4x16x16xbf16, #tpu.memory_space<vmem>>, vector<1x1x16x16xbf16>
    %44 = vector.shape_cast %43 : vector<1x1x16x16xbf16> to vector<16x16xbf16>
    %45 = arith.extf %44 : vector<16x16xbf16> to vector<16x16xf32>
    %46 = arith.addf %42, %45 : vector<16x16xf32>
    %c0_51 = arith.constant 0 : index
    %c3_52 = arith.constant 3 : index
    %c0_53 = arith.constant 0 : index
    %c0_54 = arith.constant 0 : index
    %47 = vector.load %arg5[%c0_51, %c3_52, %c0_53, %c0_54] : memref<1x4x16x16xf32, #tpu.memory_space<vmem>>, vector<1x1x16x16xf32>
    %48 = vector.shape_cast %47 : vector<1x1x16x16xf32> to vector<16x16xf32>
    %49 = vector.shape_cast %46 : vector<16x16xf32> to vector<1x1x16x16xf32>
    tpu.vector_store %arg5[%c0_51, %c3_52, %c0_53, %c0_54], %49 {strides = array<i32>} : memref<1x4x16x16xf32, #tpu.memory_space<vmem>>, vector<1x1x16x16xf32>,
    return
  }
  func.func @transform_0(%arg0: i32) -> (i32, i32, i32, i32) {
    %c0_i32 = arith.constant 0 : i32
    %c0_i32_0 = arith.constant 0 : i32
    %c0_i32_1 = arith.constant 0 : i32
    %c0_i32_2 = arith.constant 0 : i32
    return %arg0, %c0_i32, %c0_i32_0, %c0_i32_1 : i32, i32, i32, i32
  }
  func.func @transform_1(%arg0: i32) -> (i32, i32) {
    %c0_i32 = arith.constant 0 : i32
    %c0_i32_0 = arith.constant 0 : i32
    %c0_i32_1 = arith.constant 0 : i32
    return %c0_i32, %c0_i32_0 : i32, i32
  }
  func.func @transform_2(%arg0: i32) -> (i32, i32) {
    %c0_i32 = arith.constant 0 : i32
    %c0_i32_0 = arith.constant 0 : i32
    %c0_i32_1 = arith.constant 0 : i32
    return %c0_i32, %c0_i32_0 : i32, i32
  }
  func.func @transform_3(%arg0: i32) -> (i32, i32, i32, i32) {
    %c0_i32 = arith.constant 0 : i32
    %c0_i32_0 = arith.constant 0 : i32
    %c0_i32_1 = arith.constant 0 : i32
    %c0_i32_2 = arith.constant 0 : i32
    return %arg0, %c0_i32, %c0_i32_0, %c0_i32_1 : i32, i32, i32, i32
  }
  func.func @transform_4(%arg0: i32) -> (i32, i32, i32, i32) {
    %c0_i32 = arith.constant 0 : i32
    %c0_i32_0 = arith.constant 0 : i32
    %c0_i32_1 = arith.constant 0 : i32
    %c0_i32_2 = arith.constant 0 : i32
    return %arg0, %c0_i32, %c0_i32_0, %c0_i32_1 : i32, i32, i32, i32
  }
}

module attributes {stable_mosaic.version = 11 : i64} {
  func.func @_up1_kernel(%arg0: i32, %arg1: memref<1x4x16x16xf32, #tpu.memory_space<vmem>>, %arg2: memref<2x4xf32, #tpu.memory_space<smem>>, %arg3: memref<2xf32, #tpu.memory_space<smem>>, %arg4: memref<32x16xf32, #tpu.memory_space<vmem>>, %arg5: memref<16x32xf32, #tpu.memory_space<vmem>>, %arg6: memref<1x2x32x32xf32, #tpu.memory_space<vmem>>) attributes {dimension_semantics = [#tpu.dimension_semantics<parallel>], iteration_bounds = array<i64: 2>, scalar_prefetch = 0 : i64, scratch_operands = 0 : i64, tpu.core_type = #tpu.core_type<tc>, window_params = [{transform_indices = @transform_0, window_bounds = array<i64: 1, 4, 16, 16>}, {transform_indices = @transform_1, window_bounds = array<i64: 2, 4>}, {transform_indices = @transform_2, window_bounds = array<i64: 2>}, {pipeline_mode = #tpu.pipeline_mode<synchronous>, transform_indices = @transform_3, window_bounds = array<i64: 32, 16>}, {pipeline_mode = #tpu.pipeline_mode<synchronous>, transform_indices = @transform_4, window_bounds = array<i64: 16, 32>}, {transform_indices = @transform_5, window_bounds = array<i64: 1, 2, 32, 32>}]} {
    %c0 = arith.constant 0 : index
    %c0_0 = arith.constant 0 : index
    %0 = vector.load %arg4[%c0, %c0_0] : memref<32x16xf32, #tpu.memory_space<vmem>>, vector<32x16xf32>
    %c0_1 = arith.constant 0 : index
    %c0_2 = arith.constant 0 : index
    %1 = vector.load %arg5[%c0_1, %c0_2] : memref<16x32xf32, #tpu.memory_space<vmem>>, vector<16x32xf32>
    %c0_3 = arith.constant 0 : index
    %c0_4 = arith.constant 0 : index
    %c0_5 = arith.constant 0 : index
    %c0_6 = arith.constant 0 : index
    %2 = vector.load %arg1[%c0_3, %c0_4, %c0_5, %c0_6] : memref<1x4x16x16xf32, #tpu.memory_space<vmem>>, vector<1x1x16x16xf32>
    %3 = vector.shape_cast %2 : vector<1x1x16x16xf32> to vector<16x16xf32>
    %c0_7 = arith.constant 0 : index
    %c1 = arith.constant 1 : index
    %c0_8 = arith.constant 0 : index
    %c0_9 = arith.constant 0 : index
    %4 = vector.load %arg1[%c0_7, %c1, %c0_8, %c0_9] : memref<1x4x16x16xf32, #tpu.memory_space<vmem>>, vector<1x1x16x16xf32>
    %5 = vector.shape_cast %4 : vector<1x1x16x16xf32> to vector<16x16xf32>
    %c0_10 = arith.constant 0 : index
    %c2 = arith.constant 2 : index
    %c0_11 = arith.constant 0 : index
    %c0_12 = arith.constant 0 : index
    %6 = vector.load %arg1[%c0_10, %c2, %c0_11, %c0_12] : memref<1x4x16x16xf32, #tpu.memory_space<vmem>>, vector<1x1x16x16xf32>
    %7 = vector.shape_cast %6 : vector<1x1x16x16xf32> to vector<16x16xf32>
    %c0_13 = arith.constant 0 : index
    %c3 = arith.constant 3 : index
    %c0_14 = arith.constant 0 : index
    %c0_15 = arith.constant 0 : index
    %8 = vector.load %arg1[%c0_13, %c3, %c0_14, %c0_15] : memref<1x4x16x16xf32, #tpu.memory_space<vmem>>, vector<1x1x16x16xf32>
    %9 = vector.shape_cast %8 : vector<1x1x16x16xf32> to vector<16x16xf32>
    %c0_16 = arith.constant 0 : index
    %c0_17 = arith.constant 0 : index
    %10 = memref.load %arg2[%c0_16, %c0_17] : memref<2x4xf32, #tpu.memory_space<smem>>
    %11 = vector.broadcast %10 : f32 to vector<16x16xf32>
    %12 = arith.mulf %11, %3 : vector<16x16xf32>
    %c0_18 = arith.constant 0 : index
    %c1_19 = arith.constant 1 : index
    %13 = memref.load %arg2[%c0_18, %c1_19] : memref<2x4xf32, #tpu.memory_space<smem>>
    %14 = vector.broadcast %13 : f32 to vector<16x16xf32>
    %15 = arith.mulf %14, %5 : vector<16x16xf32>
    %16 = arith.addf %12, %15 : vector<16x16xf32>
    %c0_20 = arith.constant 0 : index
    %c2_21 = arith.constant 2 : index
    %17 = memref.load %arg2[%c0_20, %c2_21] : memref<2x4xf32, #tpu.memory_space<smem>>
    %18 = vector.broadcast %17 : f32 to vector<16x16xf32>
    %19 = arith.mulf %18, %7 : vector<16x16xf32>
    %20 = arith.addf %16, %19 : vector<16x16xf32>
    %c0_22 = arith.constant 0 : index
    %c3_23 = arith.constant 3 : index
    %21 = memref.load %arg2[%c0_22, %c3_23] : memref<2x4xf32, #tpu.memory_space<smem>>
    %22 = vector.broadcast %21 : f32 to vector<16x16xf32>
    %23 = arith.mulf %22, %9 : vector<16x16xf32>
    %24 = arith.addf %20, %23 : vector<16x16xf32>
    %cst = arith.constant dense<0.000000e+00> : vector<32x16xf32>
    %25 = tpu.matmul %0, %24, %cst {dimension_numbers = #tpu.dot_dimension_numbers<[1], [0], [0], [1], [0, 0, 1, 1], [], []>} : vector<32x16xf32>, vector<16x16xf32>, vector<32x16xf32> -> vector<32x16xf32>
    %cst_24 = arith.constant dense<0.000000e+00> : vector<32x32xf32>
    %26 = tpu.matmul %25, %1, %cst_24 {dimension_numbers = #tpu.dot_dimension_numbers<[1], [0], [0], [1], [0, 0, 1, 1], [], []>} : vector<32x16xf32>, vector<16x32xf32>, vector<32x32xf32> -> vector<32x32xf32>
    %c0_25 = arith.constant 0 : index
    %27 = memref.load %arg3[%c0_25] : memref<2xf32, #tpu.memory_space<smem>>
    %28 = vector.broadcast %27 : f32 to vector<32x32xf32>
    %29 = arith.addf %26, %28 : vector<32x32xf32>
    %c1_26 = arith.constant 1 : index
    %c0_27 = arith.constant 0 : index
    %30 = memref.load %arg2[%c1_26, %c0_27] : memref<2x4xf32, #tpu.memory_space<smem>>
    %31 = vector.broadcast %30 : f32 to vector<16x16xf32>
    %32 = arith.mulf %31, %3 : vector<16x16xf32>
    %c1_28 = arith.constant 1 : index
    %c1_29 = arith.constant 1 : index
    %33 = memref.load %arg2[%c1_28, %c1_29] : memref<2x4xf32, #tpu.memory_space<smem>>
    %34 = vector.broadcast %33 : f32 to vector<16x16xf32>
    %35 = arith.mulf %34, %5 : vector<16x16xf32>
    %36 = arith.addf %32, %35 : vector<16x16xf32>
    %c1_30 = arith.constant 1 : index
    %c2_31 = arith.constant 2 : index
    %37 = memref.load %arg2[%c1_30, %c2_31] : memref<2x4xf32, #tpu.memory_space<smem>>
    %38 = vector.broadcast %37 : f32 to vector<16x16xf32>
    %39 = arith.mulf %38, %7 : vector<16x16xf32>
    %40 = arith.addf %36, %39 : vector<16x16xf32>
    %c1_32 = arith.constant 1 : index
    %c3_33 = arith.constant 3 : index
    %41 = memref.load %arg2[%c1_32, %c3_33] : memref<2x4xf32, #tpu.memory_space<smem>>
    %42 = vector.broadcast %41 : f32 to vector<16x16xf32>
    %43 = arith.mulf %42, %9 : vector<16x16xf32>
    %44 = arith.addf %40, %43 : vector<16x16xf32>
    %cst_34 = arith.constant dense<0.000000e+00> : vector<32x16xf32>
    %45 = tpu.matmul %0, %44, %cst_34 {dimension_numbers = #tpu.dot_dimension_numbers<[1], [0], [0], [1], [0, 0, 1, 1], [], []>} : vector<32x16xf32>, vector<16x16xf32>, vector<32x16xf32> -> vector<32x16xf32>
    %cst_35 = arith.constant dense<0.000000e+00> : vector<32x32xf32>
    %46 = tpu.matmul %45, %1, %cst_35 {dimension_numbers = #tpu.dot_dimension_numbers<[1], [0], [0], [1], [0, 0, 1, 1], [], []>} : vector<32x16xf32>, vector<16x32xf32>, vector<32x32xf32> -> vector<32x32xf32>
    %c1_36 = arith.constant 1 : index
    %47 = memref.load %arg3[%c1_36] : memref<2xf32, #tpu.memory_space<smem>>
    %48 = vector.broadcast %47 : f32 to vector<32x32xf32>
    %49 = arith.addf %46, %48 : vector<32x32xf32>
    %50 = arith.mulf %29, %29 : vector<32x32xf32>
    %51 = arith.mulf %49, %49 : vector<32x32xf32>
    %52 = arith.addf %50, %51 : vector<32x32xf32>
    %cst_37 = arith.constant 1.000000e-24 : f32
    %53 = vector.broadcast %cst_37 : f32 to vector<32x32xf32>
    %54 = arith.maximumf %52, %53 : vector<32x32xf32>
    %55 = math.rsqrt %54 : vector<32x32xf32>
    %56 = arith.mulf %29, %55 : vector<32x32xf32>
    %c0_38 = arith.constant 0 : index
    %c0_39 = arith.constant 0 : index
    %c0_40 = arith.constant 0 : index
    %c0_41 = arith.constant 0 : index
    %57 = vector.load %arg6[%c0_38, %c0_39, %c0_40, %c0_41] : memref<1x2x32x32xf32, #tpu.memory_space<vmem>>, vector<1x1x32x32xf32>
    %58 = vector.shape_cast %57 : vector<1x1x32x32xf32> to vector<32x32xf32>
    %59 = vector.shape_cast %56 : vector<32x32xf32> to vector<1x1x32x32xf32>
    tpu.vector_store %arg6[%c0_38, %c0_39, %c0_40, %c0_41], %59 {strides = array<i32>} : memref<1x2x32x32xf32, #tpu.memory_space<vmem>>, vector<1x1x32x32xf32>,
    %60 = arith.mulf %49, %55 : vector<32x32xf32>
    %c0_42 = arith.constant 0 : index
    %c1_43 = arith.constant 1 : index
    %c0_44 = arith.constant 0 : index
    %c0_45 = arith.constant 0 : index
    %61 = vector.load %arg6[%c0_42, %c1_43, %c0_44, %c0_45] : memref<1x2x32x32xf32, #tpu.memory_space<vmem>>, vector<1x1x32x32xf32>
    %62 = vector.shape_cast %61 : vector<1x1x32x32xf32> to vector<32x32xf32>
    %63 = vector.shape_cast %60 : vector<32x32xf32> to vector<1x1x32x32xf32>
    tpu.vector_store %arg6[%c0_42, %c1_43, %c0_44, %c0_45], %63 {strides = array<i32>} : memref<1x2x32x32xf32, #tpu.memory_space<vmem>>, vector<1x1x32x32xf32>,
    return
  }
  func.func @transform_0(%arg0: i32) -> (i32, i32, i32, i32) {
    %c0_i32 = arith.constant 0 : i32
    %c0_i32_0 = arith.constant 0 : i32
    %c0_i32_1 = arith.constant 0 : i32
    %c0_i32_2 = arith.constant 0 : i32
    return %arg0, %c0_i32, %c0_i32_0, %c0_i32_1 : i32, i32, i32, i32
  }
  func.func @transform_1(%arg0: i32) -> (i32, i32) {
    %c0_i32 = arith.constant 0 : i32
    %c0_i32_0 = arith.constant 0 : i32
    %c0_i32_1 = arith.constant 0 : i32
    return %c0_i32, %c0_i32_0 : i32, i32
  }
  func.func @transform_2(%arg0: i32) -> i32 {
    %c0_i32 = arith.constant 0 : i32
    %c0_i32_0 = arith.constant 0 : i32
    return %c0_i32 : i32
  }
  func.func @transform_3(%arg0: i32) -> (i32, i32) {
    %c0_i32 = arith.constant 0 : i32
    %c0_i32_0 = arith.constant 0 : i32
    %c0_i32_1 = arith.constant 0 : i32
    return %c0_i32, %c0_i32_0 : i32, i32
  }
  func.func @transform_4(%arg0: i32) -> (i32, i32) {
    %c0_i32 = arith.constant 0 : i32
    %c0_i32_0 = arith.constant 0 : i32
    %c0_i32_1 = arith.constant 0 : i32
    return %c0_i32, %c0_i32_0 : i32, i32
  }
  func.func @transform_5(%arg0: i32) -> (i32, i32, i32, i32) {
    %c0_i32 = arith.constant 0 : i32
    %c0_i32_0 = arith.constant 0 : i32
    %c0_i32_1 = arith.constant 0 : i32
    %c0_i32_2 = arith.constant 0 : i32
    return %arg0, %c0_i32, %c0_i32_0, %c0_i32_1 : i32, i32, i32, i32
  }
}

</mosaic_0001>

<llo_original>
// kernel: _lambda_.11
$region0: #{_lambda_.11}
  #allocation0 [shape = 'u32[]', space=smem, size = 0x4, offset = 0x4, fixed_abs, tag = 'smem constant byte address 0x4 - core index']
  #allocation1 [shape = 'u32[72,128]{1,0:T(1,128)}', space=vmem, size = 0x9000, scoped, tag = 'internal scratch']
  %s0 = inlined_call_operand.vmem [shape: bf16[2,4,1280], index: 0, kind: input, shape index: {}]
  %s1 = inlined_call_operand.vmem [shape: bf16[9,4,4], index: 1, kind: input, shape index: {}]
  %s2 = inlined_call_operand.vmem [shape: f32[4,1], index: 2, kind: input, shape index: {}]
  %s3 = inlined_call_operand.vmem [shape: bf16[2,4,1088], index: 3, kind: output, shape index: {}]
  %s4 = sld [smem:[#allocation0]]
  $region45: #{_lambda_.11} parent=0
    _
  %s6 = ssub.s32 1, %s4
  %s7 = scalar_select 0, %s6, %s4
  loop: start=0, step=1, limit=4
  $region2: #{_lambda_.11} parent=0 // loop_pre_header
    _
  $region3: #{_lambda_.11} parent=0 // loop_header
    %s9 = sphi 0, %s13
    %p10 = scmp.ge.s32.totalorder %s9, 4
    %s19 = sphi 0, %s21
    %s22 = sphi 0, %s19
    %s23 = sphi 0, %s22
    %s39 = sphi 0, %s23
    %s43 = sphi 0, %s43
    %s45 = sphi 0, %s43
    %s46 = sphi 0, %s45
    %s60 = sphi 0, %s46
    %s64 = sphi 0, %s64
    %s66 = sphi 0, %s64
    %s67 = sphi 0, %s66
    %s81 = sphi 0, %s67
    %s87 = sphi 0, %s89
    %s90 = sphi 0, %s87
    %s91 = sphi 0, %s90
    %s107 = sphi 0, %s91
  $region4: #{_lambda_.11} parent=0 // loop_header_branch
    %12 = sbr.rel (%p10) target = $region8
  $region5: #{_lambda_.11} parent=0 // loop_body
    %s14 = ssub.s32 %s9, 1
    %s15 = ssub.s32 %s9, 2
    %s16 = sadd.s32 %s9, 1
    %s17 = ssub.s32 %s9, %s16
    %p18 = scmp.eq.s32.totalorder %s17, 0
    %s20 = sadd.s32 %s19, 1
    %s21 = scalar_select %p18, %s19, %s20
    %p24 = pneg %p18
    %p25 = scmp.eq.s32.totalorder %s9, 1
    %p26 = por %p24, %p25
    %p27 = scmp.ne.s32.totalorder %s19, %s22
    %p28 = scmp.eq.s32.totalorder %s9, 0
    %p29 = por %p27, %p28
    %p30 = scmp.ne.s32.totalorder %s19, %s22
    %p31 = scmp.eq.s32.totalorder %s14, 1
    %p32 = por %p30, %p31
    %p33 = scmp.ne.s32.totalorder %s22, %s23
    %p34 = scmp.eq.s32.totalorder %s14, 0
    %p35 = por %p33, %p34
    %p36 = scmp.ne.s32.totalorder %s22, %s23
    %p37 = scmp.eq.s32.totalorder %s15, 1
    %p38 = por %p36, %p37
    %p40 = scmp.ne.s32.totalorder %s23, %s39
    %p41 = scmp.eq.s32.totalorder %s15, 0
    %p42 = por %p40, %p41
    %s44 = sadd.s32 %s43, 1
    %p47 = scmp.eq.s32.totalorder %s9, 1
    %p48 = scmp.ne.s32.totalorder %s43, %s45
    %p49 = scmp.eq.s32.totalorder %s9, 0
    %p50 = por %p48, %p49
    %p51 = scmp.ne.s32.totalorder %s43, %s45
    %p52 = scmp.eq.s32.totalorder %s14, 1
    %p53 = por %p51, %p52
    %p54 = scmp.ne.s32.totalorder %s45, %s46
    %p55 = scmp.eq.s32.totalorder %s14, 0
    %p56 = por %p54, %p55
    %p57 = scmp.ne.s32.totalorder %s45, %s46
    %p58 = scmp.eq.s32.totalorder %s15, 1
    %p59 = por %p57, %p58
    %p61 = scmp.ne.s32.totalorder %s46, %s60
    %p62 = scmp.eq.s32.totalorder %s15, 0
    %p63 = por %p61, %p62
    %s65 = sadd.s32 %s64, 1
    %p68 = scmp.eq.s32.totalorder %s9, 1
    %p69 = scmp.ne.s32.totalorder %s64, %s66
    %p70 = scmp.eq.s32.totalorder %s9, 0
    %p71 = por %p69, %p70
    %p72 = scmp.ne.s32.totalorder %s64, %s66
    %p73 = scmp.eq.s32.totalorder %s14, 1
    %p74 = por %p72, %p73
    %p75 = scmp.ne.s32.totalorder %s66, %s67
    %p76 = scmp.eq.s32.totalorder %s14, 0
    %p77 = por %p75, %p76
    %p78 = scmp.ne.s32.totalorder %s66, %s67
    %p79 = scmp.eq.s32.totalorder %s15, 1
    %p80 = por %p78, %p79
    %p82 = scmp.ne.s32.totalorder %s67, %s81
    %p83 = scmp.eq.s32.totalorder %s15, 0
    %p84 = por %p82, %p83
    %s85 = ssub.s32 %s9, %s16
    %p86 = scmp.eq.s32.totalorder %s85, 0
    %s88 = sadd.s32 %s87, 1
    %s89 = scalar_select %p86, %s87, %s88
    %p92 = pneg %p86
    %p93 = scmp.eq.s32.totalorder %s9, 1
    %p94 = por %p92, %p93
    %p95 = scmp.ne.s32.totalorder %s87, %s90
    %p96 = scmp.eq.s32.totalorder %s9, 0
    %p97 = por %p95, %p96
    %p98 = scmp.ne.s32.totalorder %s87, %s90
    %p99 = scmp.eq.s32.totalorder %s14, 1
    %p100 = por %p98, %p99
    %p101 = scmp.ne.s32.totalorder %s90, %s91
    %p102 = scmp.eq.s32.totalorder %s14, 0
    %p103 = por %p101, %p102
    %p104 = scmp.ne.s32.totalorder %s90, %s91
    %p105 = scmp.eq.s32.totalorder %s15, 1
    %p106 = por %p104, %p105
    %p108 = scmp.ne.s32.totalorder %s91, %s107
    %p109 = scmp.eq.s32.totalorder %s15, 0
    %p110 = por %p108, %p109
    %p111 = scmp.le.s32.totalorder 1, %s9
    %p112 = scmp.lt.s32.totalorder %s9, 3
    %p113 = pnand %p111, %p112
    %p114 = pneg %p113
    // Predicated region
    $region9: #{_lambda_.11} parent=5 // pred_check
      _
    $region10: #{_lambda_.11} parent=5 // pred_check_branch
      %116 = sbr.rel (%p113) target = $region12
    $region11: #{_lambda_.11} parent=5 // pred_region
      %s117 = ssub.s32 %s9, 1
      // Predicated region
      $region13: #{_lambda_.11} parent=11 // pred_check
        %p118 = pneg %p56
      $region14: #{_lambda_.11} parent=11 // pred_check_branch
        %120 = sbr.rel (%p118) target = $region16
      $region15: #{_lambda_.11} parent=11 // pred_region
        _
      $region16: #{_lambda_.11} parent=11 // pred_fallthru
        _
      // Predicated region
      $region17: #{_lambda_.11} parent=11 // pred_check
        %p121 = pneg %p77
      $region18: #{_lambda_.11} parent=11 // pred_check_branch
        %123 = sbr.rel (%p121) target = $region20
      $region19: #{_lambda_.11} parent=11 // pred_region
        _
      $region20: #{_lambda_.11} parent=11 // pred_fallthru
        _
    $region12: #{_lambda_.11} parent=5 // pred_fallthru
      _
    %p124 = scmp.lt.s32.totalorder %s9, 2
    // Predicated region
    $region21: #{_lambda_.11} parent=5 // pred_check
      %p125 = pneg %p124
    $region22: #{_lambda_.11} parent=5 // pred_check_branch
      %127 = sbr.rel (%p125) target = $region24
    $region23: #{_lambda_.11} parent=5 // pred_region
      // Predicated region
      $region25: #{_lambda_.11} parent=23 // pred_check
        %p128 = pneg %p29
      $region26: #{_lambda_.11} parent=23 // pred_check_branch
        %130 = sbr.rel (%p128) target = $region28
      $region27: #{_lambda_.11} parent=23 // pred_region
        %p131 = scmp.lt.s32.totalorder %s9, 1
        %s132 = scalar_select %p131, %s9, 1
        %s133 = smul.addr %s132, 10
        %s134 = smul.addr %s133, 2
        %s135 = scalar_lea.vmem %s0, %s134
      $region28: #{_lambda_.11} parent=23 // pred_fallthru
        _
    $region24: #{_lambda_.11} parent=5 // pred_fallthru
      _
    %p136 = scmp.le.s32.totalorder 1, %s9
    %p137 = scmp.lt.s32.totalorder %s9, 3
    %p138 = pnand %p136, %p137
    %p139 = pneg %p138
    // Predicated region
    $region29: #{_lambda_.11} parent=5 // pred_check
      _
    $region30: #{_lambda_.11} parent=5 // pred_check_branch
      %141 = sbr.rel (%p138) target = $region32
    $region31: #{_lambda_.11} parent=5 // pred_region
      %s142 = ssub.s32 %s9, 1
      %p143 = scmp.lt.s32.totalorder %s14, 1
      %s144 = scalar_select %p143, %s14, 1
      %s145 = smul.addr %s144, 10
      %s146 = smul.addr %s145, 2
      %s147 = scalar_lea.vmem %s0, %s146
      %p148 = pneg %p35
      %p149 = pneg %p32
      %p150 = pneg %p56
      %p151 = pneg %p53
      %p152 = pneg %p77
      %p153 = pneg %p74
      %p154 = pneg %p103
      %p155 = pneg %p100
      %p156 = scmp.lt.s32.totalorder %s14, 1
      %s157 = scalar_select %p156, %s14, 1
      %s158 = smul.addr %s157, 9
      %s159 = smul.addr %s158, 2
      %s160 = scalar_lea.vmem %s3, %s159
      %p161 = scmp.lt.s32.totalorder %s14, 1
      %s162 = scalar_select %p161, %s14, 1
      %s163 = smul.addr %s162, 10
      %s164 = smul.addr %s163, 2
      %s165 = scalar_lea.vmem %s0, %s164
      %p166 = scmp.lt.s32.totalorder %s14, 1
      %s167 = scalar_select %p166, %s14, 1
      %s168 = smul.addr %s167, 9
      %s169 = smul.addr %s168, 2
      %s170 = scalar_lea.vmem %s3, %s169
      %v172 = vld [vmem:[%s165] sm:$0xff]
      %v173 = vld [vmem:[%s165 + $0x8] sm:$0xff]
      %v174 = vld [vmem:[%s165 + $0x10] sm:$0xf]
      %v175 = vld [vmem:[%s1] sm:$0x3]
      %s176 = scalar_lea.vmem %s1, 2
      %v177 = vld [vmem:[%s176] sm:$0x3]
      %179 = vst [vmem:[#allocation1] ss:$4 sm:$0xff] %v172
      %s181 = scalar_lea.vmem [#allocation1], 32
      %182 = vst [vmem:[%s181] ss:$4 sm:$0xff] %v173
      %v183 = vld.sshfl [vmem:[#allocation1] sm:$0xff pattern:$0x73625140]
      %v185 = vld.sshfl [vmem:[#allocation1 + $0x8] sm:$0xff pattern:$0x73625140]
      %v187 = vld.sshfl [vmem:[#allocation1 + $0x10] sm:$0xff pattern:$0x73625140]
      %v189 = vld.sshfl [vmem:[#allocation1 + $0x18] sm:$0xff pattern:$0x73625140]
      %v191 = vld.sshfl [vmem:[#allocation1 + $0x20] sm:$0xff pattern:$0x73625140]
      %v193 = vld.sshfl [vmem:[#allocation1 + $0x28] sm:$0xff pattern:$0x73625140]
      %v195 = vld.sshfl [vmem:[#allocation1 + $0x30] sm:$0xff pattern:$0x73625140]
      %v197 = vld.sshfl [vmem:[#allocation1 + $0x38] sm:$0xff pattern:$0x73625140]
      %200 = vst [vmem:[#allocation1] ss:$4 sm:$0xff] %v174
      %v201 = vld.sshfl [vmem:[#allocation1] sm:$0xff pattern:$0x73625140]
      %203 = vrot.lane.b32.xlu0 %v183, 127
      %v204 = vpop.permute.xlu0 %203
      %205 = vrot.lane.b32.xlu0 %v185, 127
      %v206 = vpop.permute.xlu0 %205
      %207 = vrot.lane.b32.xlu0 %v187, 127
      %v208 = vpop.permute.xlu0 %207
      %209 = vrot.lane.b32.xlu0 %v189, 127
      %v210 = vpop.permute.xlu0 %209
      %211 = vrot.lane.b32.xlu0 %v191, 127
      %v212 = vpop.permute.xlu0 %211
      %213 = vrot.lane.b32.xlu0 %v193, 127
      %v214 = vpop.permute.xlu0 %213
      %215 = vrot.lane.b32.xlu0 %v195, 127
      %v216 = vpop.permute.xlu0 %215
      %217 = vrot.lane.b32.xlu0 %v197, 127
      %v218 = vpop.permute.xlu0 %217
      %219 = vrot.lane.b32.xlu0 %v201, 127
      %v220 = vpop.permute.xlu0 %219
      %vm221 = vcmask 1039360
      %v222 = vsel %vm221, %v204, %v206
      %v223 = vsel %vm221, %v206, %v208
      %v224 = vsel %vm221, %v208, %v210
      %v225 = vsel %vm221, %v210, %v212
      %v226 = vsel %vm221, %v212, %v214
      %v227 = vsel %vm221, %v214, %v216
      %v228 = vsel %vm221, %v216, %v218
      %v229 = vsel %vm221, %v218, %v220
      %vm230 = vcmask 31744
      %v232 = vsel %vm230, %v177, 0
      %vm234 = vcmask 1041408
      %v236 = vsel %vm234, %v222, 0
      %v239 = vsel %vm234, %v223, 0
      %v242 = vsel %vm234, %v224, 0
      %v245 = vsel %vm234, %v225, 0
      %v248 = vsel %vm234, %v226, 0
      %v251 = vsel %vm234, %v227, 0
      %v254 = vsel %vm234, %v228, 0
      %v257 = vsel %vm234, %v229, 0
      %v260 = vsel %vm234, %v220, 0
      %262 = vmatpush.bf16.msra.mxu0 0
      %263 = vmatpush.bf16.msra.mxu0 0
      %264 = vmatpush.bf16.msra.mxu0 0
      %265 = vmatpush.bf16.msra.mxu0 0
      %266 = vmatpush.bf16.msra.mxu0 0
      %267 = vmatpush.bf16.msra.mxu0 0
      %268 = vmatpush.bf16.msra.mxu0 0
      %269 = vmatpush.bf16.msra.mxu0 %v236
      %270 = vmatmul.bf16.gmra.mxu0 %v232
      %v271 = vpop.f32.mrf.mxu0
      %v272 = vadd.f32 0.0, %v271
      %v273 = vpop.f32.mrf.mxu0
      %274 = vdwg.mxu0
      %275 = vmatpush.bf16.msra.mxu0 0
      %276 = vmatpush.bf16.msra.mxu0 0
      %277 = vmatpush.bf16.msra.mxu0 0
      %278 = vmatpush.bf16.msra.mxu0 0
      %279 = vmatpush.bf16.msra.mxu0 0
      %280 = vmatpush.bf16.msra.mxu0 0
      %281 = vmatpush.bf16.msra.mxu0 0
      %282 = vmatpush.bf16.msra.mxu0 %v239
      %283 = vmatmul.bf16.gmra.mxu0 %v232
      %v284 = vpop.f32.mrf.mxu0
      %v285 = vadd.f32 0.0, %v284
      %v286 = vpop.f32.mrf.mxu0
      %287 = vdwg.mxu0
      %288 = vmatpush.bf16.msra.mxu0 0
      %289 = vmatpush.bf16.msra.mxu0 0
      %290 = vmatpush.bf16.msra.mxu0 0
      %291 = vmatpush.bf16.msra.mxu0 0
      %292 = vmatpush.bf16.msra.mxu0 0
      %293 = vmatpush.bf16.msra.mxu0 0
      %294 = vmatpush.bf16.msra.mxu0 0
      %295 = vmatpush.bf16.msra.mxu0 %v242
      %296 = vmatmul.bf16.gmra.mxu0 %v232
      %v297 = vpop.f32.mrf.mxu0
      %v298 = vadd.f32 0.0, %v297
      %v299 = vpop.f32.mrf.mxu0
      %300 = vdwg.mxu0
      %301 = vmatpush.bf16.msra.mxu0 0
      %302 = vmatpush.bf16.msra.mxu0 0
      %303 = vmatpush.bf16.msra.mxu0 0
      %304 = vmatpush.bf16.msra.mxu0 0
      %305 = vmatpush.bf16.msra.mxu0 0
      %306 = vmatpush.bf16.msra.mxu0 0
      %307 = vmatpush.bf16.msra.mxu0 0
      %308 = vmatpush.bf16.msra.mxu0 %v245
      %309 = vmatmul.bf16.gmra.mxu0 %v232
      %v310 = vpop.f32.mrf.mxu0
      %v311 = vadd.f32 0.0, %v310
      %v312 = vpop.f32.mrf.mxu0
      %313 = vdwg.mxu0
      %314 = vmatpush.bf16.msra.mxu0 0
      %315 = vmatpush.bf16.msra.mxu0 0
      %316 = vmatpush.bf16.msra.mxu0 0
      %317 = vmatpush.bf16.msra.mxu0 0
      %318 = vmatpush.bf16.msra.mxu0 0
      %319 = vmatpush.bf16.msra.mxu0 0
      %320 = vmatpush.bf16.msra.mxu0 0
      %321 = vmatpush.bf16.msra.mxu0 %v248
      %322 = vmatmul.bf16.gmra.mxu0 %v232
      %v323 = vpop.f32.mrf.mxu0
      %v324 = vadd.f32 0.0, %v323
      %v325 = vpop.f32.mrf.mxu0
      %326 = vdwg.mxu0
      %327 = vmatpush.bf16.msra.mxu0 0
      %328 = vmatpush.bf16.msra.mxu0 0
      %329 = vmatpush.bf16.msra.mxu0 0
      %330 = vmatpush.bf16.msra.mxu0 0
      %331 = vmatpush.bf16.msra.mxu0 0
      %332 = vmatpush.bf16.msra.mxu0 0
      %333 = vmatpush.bf16.msra.mxu0 0
      %334 = vmatpush.bf16.msra.mxu0 %v251
      %335 = vmatmul.bf16.gmra.mxu0 %v232
      %v336 = vpop.f32.mrf.mxu0
      %v337 = vadd.f32 0.0, %v336
      %v338 = vpop.f32.mrf.mxu0
      %339 = vdwg.mxu0
      %340 = vmatpush.bf16.msra.mxu0 0
      %341 = vmatpush.bf16.msra.mxu0 0
      %342 = vmatpush.bf16.msra.mxu0 0
      %343 = vmatpush.bf16.msra.mxu0 0
      %344 = vmatpush.bf16.msra.mxu0 0
      %345 = vmatpush.bf16.msra.mxu0 0
      %346 = vmatpush.bf16.msra.mxu0 0
      %347 = vmatpush.bf16.msra.mxu0 %v254
      %348 = vmatmul.bf16.gmra.mxu0 %v232
      %v349 = vpop.f32.mrf.mxu0
      %v350 = vadd.f32 0.0, %v349
      %v351 = vpop.f32.mrf.mxu0
      %352 = vdwg.mxu0
      %353 = vmatpush.bf16.msra.mxu0 0
      %354 = vmatpush.bf16.msra.mxu0 0
      %355 = vmatpush.bf16.msra.mxu0 0
      %356 = vmatpush.bf16.msra.mxu0 0
      %357 = vmatpush.bf16.msra.mxu0 0
      %358 = vmatpush.bf16.msra.mxu0 0
      %359 = vmatpush.bf16.msra.mxu0 0
      %360 = vmatpush.bf16.msra.mxu0 %v257
      %361 = vmatmul.bf16.gmra.mxu0 %v232
      %v362 = vpop.f32.mrf.mxu0
      %v363 = vadd.f32 0.0, %v362
      %v364 = vpop.f32.mrf.mxu0
      %365 = vdwg.mxu0
      %366 = vmatpush.bf16.msra.mxu0 0
      %367 = vmatpush.bf16.msra.mxu0 0
      %368 = vmatpush.bf16.msra.mxu0 0
      %369 = vmatpush.bf16.msra.mxu0 0
      %370 = vmatpush.bf16.msra.mxu0 0
      %371 = vmatpush.bf16.msra.mxu0 0
      %372 = vmatpush.bf16.msra.mxu0 0
      %373 = vmatpush.bf16.msra.mxu0 %v260
      %374 = vmatmul.bf16.gmra.mxu0 %v232
      %v375 = vpop.f32.mrf.mxu0
      %v376 = vadd.f32 0.0, %v375
      %v377 = vpop.f32.mrf.mxu0
      %378 = vdwg.mxu0
      %379 = vst [vmem:[#allocation1] ss:$4 sm:$0xff] %v172
      %s380 = scalar_lea.vmem [#allocation1], 32
      %381 = vst [vmem:[%s380] ss:$4 sm:$0xff] %v173
      %v382 = vld.sshfl [vmem:[#allocation1] sm:$0xff pattern:$0x73625140]
      %v383 = vld.sshfl [vmem:[#allocation1 + $0x8] sm:$0xff pattern:$0x73625140]
      %v384 = vld.sshfl [vmem:[#allocation1 + $0x10] sm:$0xff pattern:$0x73625140]
      %v385 = vld.sshfl [vmem:[#allocation1 + $0x18] sm:$0xff pattern:$0x73625140]
      %v386 = vld.sshfl [vmem:[#allocation1 + $0x20] sm:$0xff pattern:$0x73625140]
      %v387 = vld.sshfl [vmem:[#allocation1 + $0x28] sm:$0xff pattern:$0x73625140]
      %v388 = vld.sshfl [vmem:[#allocation1 + $0x30] sm:$0xff pattern:$0x73625140]
      %v389 = vld.sshfl [vmem:[#allocation1 + $0x38] sm:$0xff pattern:$0x73625140]
      %390 = vst [vmem:[#allocation1] ss:$4 sm:$0xff] %v174
      %v391 = vld.sshfl [vmem:[#allocation1] sm:$0xff pattern:$0x73625140]
      %v393 = vsel %vm230, %v175, 0
      %v395 = vsel %vm234, %v382, 0
      %v397 = vsel %vm234, %v383, 0
      %v399 = vsel %vm234, %v384, 0
      %v401 = vsel %vm234, %v385, 0
      %v403 = vsel %vm234, %v386, 0
      %v405 = vsel %vm234, %v387, 0
      %v407 = vsel %vm234, %v388, 0
      %v409 = vsel %vm234, %v389, 0
      %v411 = vsel %vm234, %v391, 0
      %413 = vmatpush.bf16.msra.mxu0 0
      %414 = vmatpush.bf16.msra.mxu0 0
      %415 = vmatpush.bf16.msra.mxu0 0
      %416 = vmatpush.bf16.msra.mxu0 0
      %417 = vmatpush.bf16.msra.mxu0 0
      %418 = vmatpush.bf16.msra.mxu0 0
      %419 = vmatpush.bf16.msra.mxu0 0
      %420 = vmatpush.bf16.msra.mxu0 %v395
      %421 = vmatmul.bf16.gmra.mxu0 %v393
      %v422 = vpop.f32.mrf.mxu0
      %v423 = vadd.f32 %v272, %v422
      %v424 = vpop.f32.mrf.mxu0
      %425 = vdwg.mxu0
      %426 = vmatpush.bf16.msra.mxu0 0
      %427 = vmatpush.bf16.msra.mxu0 0
      %428 = vmatpush.bf16.msra.mxu0 0
      %429 = vmatpush.bf16.msra.mxu0 0
      %430 = vmatpush.bf16.msra.mxu0 0
      %431 = vmatpush.bf16.msra.mxu0 0
      %432 = vmatpush.bf16.msra.mxu0 0
      %433 = vmatpush.bf16.msra.mxu0 %v397
      %434 = vmatmul.bf16.gmra.mxu0 %v393
      %v435 = vpop.f32.mrf.mxu0
      %v436 = vadd.f32 %v285, %v435
      %v437 = vpop.f32.mrf.mxu0
      %438 = vdwg.mxu0
      %439 = vmatpush.bf16.msra.mxu0 0
      %440 = vmatpush.bf16.msra.mxu0 0
      %441 = vmatpush.bf16.msra.mxu0 0
      %442 = vmatpush.bf16.msra.mxu0 0
      %443 = vmatpush.bf16.msra.mxu0 0
      %444 = vmatpush.bf16.msra.mxu0 0
      %445 = vmatpush.bf16.msra.mxu0 0
      %446 = vmatpush.bf16.msra.mxu0 %v399
      %447 = vmatmul.bf16.gmra.mxu0 %v393
      %v448 = vpop.f32.mrf.mxu0
      %v449 = vadd.f32 %v298, %v448
      %v450 = vpop.f32.mrf.mxu0
      %451 = vdwg.mxu0
      %452 = vmatpush.bf16.msra.mxu0 0
      %453 = vmatpush.bf16.msra.mxu0 0
      %454 = vmatpush.bf16.msra.mxu0 0
      %455 = vmatpush.bf16.msra.mxu0 0
      %456 = vmatpush.bf16.msra.mxu0 0
      %457 = vmatpush.bf16.msra.mxu0 0
      %458 = vmatpush.bf16.msra.mxu0 0
      %459 = vmatpush.bf16.msra.mxu0 %v401
      %460 = vmatmul.bf16.gmra.mxu0 %v393
      %v461 = vpop.f32.mrf.mxu0
      %v462 = vadd.f32 %v311, %v461
      %v463 = vpop.f32.mrf.mxu0
      %464 = vdwg.mxu0
      %465 = vmatpush.bf16.msra.mxu0 0
      %466 = vmatpush.bf16.msra.mxu0 0
      %467 = vmatpush.bf16.msra.mxu0 0
      %468 = vmatpush.bf16.msra.mxu0 0
      %469 = vmatpush.bf16.msra.mxu0 0
      %470 = vmatpush.bf16.msra.mxu0 0
      %471 = vmatpush.bf16.msra.mxu0 0
      %472 = vmatpush.bf16.msra.mxu0 %v403
      %473 = vmatmul.bf16.gmra.mxu0 %v393
      %v474 = vpop.f32.mrf.mxu0
      %v475 = vadd.f32 %v324, %v474
      %v476 = vpop.f32.mrf.mxu0
      %477 = vdwg.mxu0
      %478 = vmatpush.bf16.msra.mxu0 0
      %479 = vmatpush.bf16.msra.mxu0 0
      %480 = vmatpush.bf16.msra.mxu0 0
      %481 = vmatpush.bf16.msra.mxu0 0
      %482 = vmatpush.bf16.msra.mxu0 0
      %483 = vmatpush.bf16.msra.mxu0 0
      %484 = vmatpush.bf16.msra.mxu0 0
      %485 = vmatpush.bf16.msra.mxu0 %v405
      %486 = vmatmul.bf16.gmra.mxu0 %v393
      %v487 = vpop.f32.mrf.mxu0
      %v488 = vadd.f32 %v337, %v487
      %v489 = vpop.f32.mrf.mxu0
      %490 = vdwg.mxu0
      %491 = vmatpush.bf16.msra.mxu0 0
      %492 = vmatpush.bf16.msra.mxu0 0
      %493 = vmatpush.bf16.msra.mxu0 0
      %494 = vmatpush.bf16.msra.mxu0 0
      %495 = vmatpush.bf16.msra.mxu0 0
      %496 = vmatpush.bf16.msra.mxu0 0
      %497 = vmatpush.bf16.msra.mxu0 0
      %498 = vmatpush.bf16.msra.mxu0 %v407
      %499 = vmatmul.bf16.gmra.mxu0 %v393
      %v500 = vpop.f32.mrf.mxu0
      %v501 = vadd.f32 %v350, %v500
      %v502 = vpop.f32.mrf.mxu0
      %503 = vdwg.mxu0
      %504 = vmatpush.bf16.msra.mxu0 0
      %505 = vmatpush.bf16.msra.mxu0 0
      %506 = vmatpush.bf16.msra.mxu0 0
      %507 = vmatpush.bf16.msra.mxu0 0
      %508 = vmatpush.bf16.msra.mxu0 0
      %509 = vmatpush.bf16.msra.mxu0 0
      %510 = vmatpush.bf16.msra.mxu0 0
      %511 = vmatpush.bf16.msra.mxu0 %v409
      %512 = vmatmul.bf16.gmra.mxu0 %v393
      %v513 = vpop.f32.mrf.mxu0
      %v514 = vadd.f32 %v363, %v513
      %v515 = vpop.f32.mrf.mxu0
      %516 = vdwg.mxu0
      %517 = vmatpush.bf16.msra.mxu0 0
      %518 = vmatpush.bf16.msra.mxu0 0
      %519 = vmatpush.bf16.msra.mxu0 0
      %520 = vmatpush.bf16.msra.mxu0 0
      %521 = vmatpush.bf16.msra.mxu0 0
      %522 = vmatpush.bf16.msra.mxu0 0
      %523 = vmatpush.bf16.msra.mxu0 0
      %524 = vmatpush.bf16.msra.mxu0 %v411
      %525 = vmatmul.bf16.gmra.mxu0 %v393
      %v526 = vpop.f32.mrf.mxu0
      %v527 = vadd.f32 %v376, %v526
      %v528 = vpop.f32.mrf.mxu0
      %529 = vdwg.mxu0
      %s530 = scalar_lea.vmem %s1, 4
      %v531 = vld [vmem:[%s530] sm:$0x3]
      %532 = vst [vmem:[#allocation1] ss:$4 sm:$0xff] %v172
      %s533 = scalar_lea.vmem [#allocation1], 32
      %534 = vst [vmem:[%s533] ss:$4 sm:$0xff] %v173
      %v535 = vld.sshfl [vmem:[#allocation1] sm:$0xff pattern:$0x73625140]
      %v537 = vld.sshfl [vmem:[#allocation1 + $0x8] sm:$0xff pattern:$0x73625140]
      %v539 = vld.sshfl [vmem:[#allocation1 + $0x10] sm:$0xff pattern:$0x73625140]
      %v541 = vld.sshfl [vmem:[#allocation1 + $0x18] sm:$0xff pattern:$0x73625140]
      %v543 = vld.sshfl [vmem:[#allocation1 + $0x20] sm:$0xff pattern:$0x73625140]
      %v545 = vld.sshfl [vmem:[#allocation1 + $0x28] sm:$0xff pattern:$0x73625140]
      %v547 = vld.sshfl [vmem:[#allocation1 + $0x30] sm:$0xff pattern:$0x73625140]
      %v549 = vld.sshfl [vmem:[#allocation1 + $0x38] sm:$0xff pattern:$0x73625140]
      %551 = vst [vmem:[#allocation1] ss:$4 sm:$0xff] %v174
      %v552 = vld.sshfl [vmem:[#allocation1] sm:$0xff pattern:$0x73625140]
      %554 = vrot.lane.b32.xlu0 %v535, 126
      %v555 = vpop.permute.xlu0 %554
      %556 = vrot.lane.b32.xlu0 %v537, 126
      %v557 = vpop.permute.xlu0 %556
      %558 = vrot.lane.b32.xlu0 %v539, 126
      %v559 = vpop.permute.xlu0 %558
      %560 = vrot.lane.b32.xlu0 %v541, 126
      %v561 = vpop.permute.xlu0 %560
      %562 = vrot.lane.b32.xlu0 %v543, 126
      %v563 = vpop.permute.xlu0 %562
      %564 = vrot.lane.b32.xlu0 %v545, 126
      %v565 = vpop.permute.xlu0 %564
      %566 = vrot.lane.b32.xlu0 %v547, 126
      %v567 = vpop.permute.xlu0 %566
      %568 = vrot.lane.b32.xlu0 %v549, 126
      %v569 = vpop.permute.xlu0 %568
      %570 = vrot.lane.b32.xlu0 %v552, 126
      %v571 = vpop.permute.xlu0 %570
      %vm572 = vcmask 1031168
      %v573 = vsel %vm572, %v555, %v557
      %v574 = vsel %vm572, %v557, %v559
      %v575 = vsel %vm572, %v559, %v561
      %v576 = vsel %vm572, %v561, %v563
      %v577 = vsel %vm572, %v563, %v565
      %v578 = vsel %vm572, %v565, %v567
      %v579 = vsel %vm572, %v567, %v569
      %v580 = vsel %vm572, %v569, %v571
      %v582 = vsel %vm230, %v531, 0
      %v585 = vsel %vm234, %v573, 0
      %v588 = vsel %vm234, %v574, 0
      %v591 = vsel %vm234, %v575, 0
      %v594 = vsel %vm234, %v576, 0
      %v597 = vsel %vm234, %v577, 0
      %v600 = vsel %vm234, %v578, 0
      %v603 = vsel %vm234, %v579, 0
      %v606 = vsel %vm234, %v580, 0
      %v609 = vsel %vm234, %v571, 0
      %611 = vmatpush.bf16.msra.mxu0 0
      %612 = vmatpush.bf16.msra.mxu0 0
      %613 = vmatpush.bf16.msra.mxu0 0
      %614 = vmatpush.bf16.msra.mxu0 0
      %615 = vmatpush.bf16.msra.mxu0 0
      %616 = vmatpush.bf16.msra.mxu0 0
      %617 = vmatpush.bf16.msra.mxu0 0
      %618 = vmatpush.bf16.msra.mxu0 %v585
      %619 = vmatmul.bf16.gmra.mxu0 %v582
      %v620 = vpop.f32.mrf.mxu0
      %v621 = vadd.f32 0.0, %v620
      %v622 = vpop.f32.mrf.mxu0
      %623 = vdwg.mxu0
      %624 = vmatpush.bf16.msra.mxu0 0
      %625 = vmatpush.bf16.msra.mxu0 0
      %626 = vmatpush.bf16.msra.mxu0 0
      %627 = vmatpush.bf16.msra.mxu0 0
      %628 = vmatpush.bf16.msra.mxu0 0
      %629 = vmatpush.bf16.msra.mxu0 0
      %630 = vmatpush.bf16.msra.mxu0 0
      %631 = vmatpush.bf16.msra.mxu0 %v588
      %632 = vmatmul.bf16.gmra.mxu0 %v582
      %v633 = vpop.f32.mrf.mxu0
      %v634 = vadd.f32 0.0, %v633
      %v635 = vpop.f32.mrf.mxu0
      %636 = vdwg.mxu0
      %637 = vmatpush.bf16.msra.mxu0 0
      %638 = vmatpush.bf16.msra.mxu0 0
      %639 = vmatpush.bf16.msra.mxu0 0
      %640 = vmatpush.bf16.msra.mxu0 0
      %641 = vmatpush.bf16.msra.mxu0 0
      %642 = vmatpush.bf16.msra.mxu0 0
      %643 = vmatpush.bf16.msra.mxu0 0
      %644 = vmatpush.bf16.msra.mxu0 %v591
      %645 = vmatmul.bf16.gmra.mxu0 %v582
      %v646 = vpop.f32.mrf.mxu0
      %v647 = vadd.f32 0.0, %v646
      %v648 = vpop.f32.mrf.mxu0
      %649 = vdwg.mxu0
      %650 = vmatpush.bf16.msra.mxu0 0
      %651 = vmatpush.bf16.msra.mxu0 0
      %652 = vmatpush.bf16.msra.mxu0 0
      %653 = vmatpush.bf16.msra.mxu0 0
      %654 = vmatpush.bf16.msra.mxu0 0
      %655 = vmatpush.bf16.msra.mxu0 0
      %656 = vmatpush.bf16.msra.mxu0 0
      %657 = vmatpush.bf16.msra.mxu0 %v594
      %658 = vmatmul.bf16.gmra.mxu0 %v582
      %v659 = vpop.f32.mrf.mxu0
      %v660 = vadd.f32 0.0, %v659
      %v661 = vpop.f32.mrf.mxu0
      %662 = vdwg.mxu0
      %663 = vmatpush.bf16.msra.mxu0 0
      %664 = vmatpush.bf16.msra.mxu0 0
      %665 = vmatpush.bf16.msra.mxu0 0
      %666 = vmatpush.bf16.msra.mxu0 0
      %667 = vmatpush.bf16.msra.mxu0 0
      %668 = vmatpush.bf16.msra.mxu0 0
      %669 = vmatpush.bf16.msra.mxu0 0
      %670 = vmatpush.bf16.msra.mxu0 %v597
      %671 = vmatmul.bf16.gmra.mxu0 %v582
      %v672 = vpop.f32.mrf.mxu0
      %v673 = vadd.f32 0.0, %v672
      %v674 = vpop.f32.mrf.mxu0
      %675 = vdwg.mxu0
      %676 = vmatpush.bf16.msra.mxu0 0
      %677 = vmatpush.bf16.msra.mxu0 0
      %678 = vmatpush.bf16.msra.mxu0 0
      %679 = vmatpush.bf16.msra.mxu0 0
      %680 = vmatpush.bf16.msra.mxu0 0
      %681 = vmatpush.bf16.msra.mxu0 0
      %682 = vmatpush.bf16.msra.mxu0 0
      %683 = vmatpush.bf16.msra.mxu0 %v600
      %684 = vmatmul.bf16.gmra.mxu0 %v582
      %v685 = vpop.f32.mrf.mxu0
      %v686 = vadd.f32 0.0, %v685
      %v687 = vpop.f32.mrf.mxu0
      %688 = vdwg.mxu0
      %689 = vmatpush.bf16.msra.mxu0 0
      %690 = vmatpush.bf16.msra.mxu0 0
      %691 = vmatpush.bf16.msra.mxu0 0
      %692 = vmatpush.bf16.msra.mxu0 0
      %693 = vmatpush.bf16.msra.mxu0 0
      %694 = vmatpush.bf16.msra.mxu0 0
      %695 = vmatpush.bf16.msra.mxu0 0
      %696 = vmatpush.bf16.msra.mxu0 %v603
      %697 = vmatmul.bf16.gmra.mxu0 %v582
      %v698 = vpop.f32.mrf.mxu0
      %v699 = vadd.f32 0.0, %v698
      %v700 = vpop.f32.mrf.mxu0
      %701 = vdwg.mxu0
      %702 = vmatpush.bf16.msra.mxu0 0
      %703 = vmatpush.bf16.msra.mxu0 0
      %704 = vmatpush.bf16.msra.mxu0 0
      %705 = vmatpush.bf16.msra.mxu0 0
      %706 = vmatpush.bf16.msra.mxu0 0
      %707 = vmatpush.bf16.msra.mxu0 0
      %708 = vmatpush.bf16.msra.mxu0 0
      %709 = vmatpush.bf16.msra.mxu0 %v606
      %710 = vmatmul.bf16.gmra.mxu0 %v582
      %v711 = vpop.f32.mrf.mxu0
      %v712 = vadd.f32 0.0, %v711
      %v713 = vpop.f32.mrf.mxu0
      %714 = vdwg.mxu0
      %715 = vmatpush.bf16.msra.mxu0 0
      %716 = vmatpush.bf16.msra.mxu0 0
      %717 = vmatpush.bf16.msra.mxu0 0
      %718 = vmatpush.bf16.msra.mxu0 0
      %719 = vmatpush.bf16.msra.mxu0 0
      %720 = vmatpush.bf16.msra.mxu0 0
      %721 = vmatpush.bf16.msra.mxu0 0
      %722 = vmatpush.bf16.msra.mxu0 %v609
      %723 = vmatmul.bf16.gmra.mxu0 %v582
      %v724 = vpop.f32.mrf.mxu0
      %v725 = vadd.f32 0.0, %v724
      %v726 = vpop.f32.mrf.mxu0
      %727 = vdwg.mxu0
      %v728 = vadd.f32 %v423, %v621
      %v729 = vadd.f32 %v436, %v634
      %v730 = vadd.f32 %v449, %v647
      %v731 = vadd.f32 %v462, %v660
      %v732 = vadd.f32 %v475, %v673
      %v733 = vadd.f32 %v488, %v686
      %v734 = vadd.f32 %v501, %v699
      %v735 = vadd.f32 %v514, %v712
      %v736 = vadd.f32 %v527, %v725
      %s737 = scalar_lea.vmem %s1, 6
      %v738 = vld [vmem:[%s737] sm:$0x3]
      %739 = vst [vmem:[#allocation1] ss:$4 sm:$0xff] %v172
      %s740 = scalar_lea.vmem [#allocation1], 32
      %741 = vst [vmem:[%s740] ss:$4 sm:$0xff] %v173
      %v742 = vld.sshfl [vmem:[#allocation1] sm:$0xff pattern:$0x73625140]
      %v744 = vld.sshfl [vmem:[#allocation1 + $0x8] sm:$0xff pattern:$0x73625140]
      %v746 = vld.sshfl [vmem:[#allocation1 + $0x10] sm:$0xff pattern:$0x73625140]
      %v748 = vld.sshfl [vmem:[#allocation1 + $0x18] sm:$0xff pattern:$0x73625140]
      %v750 = vld.sshfl [vmem:[#allocation1 + $0x20] sm:$0xff pattern:$0x73625140]
      %v752 = vld.sshfl [vmem:[#allocation1 + $0x28] sm:$0xff pattern:$0x73625140]
      %v754 = vld.sshfl [vmem:[#allocation1 + $0x30] sm:$0xff pattern:$0x73625140]
      %v756 = vld.sshfl [vmem:[#allocation1 + $0x38] sm:$0xff pattern:$0x73625140]
      %758 = vst [vmem:[#allocation1] ss:$4 sm:$0xff] %v174
      %v759 = vld.sshfl [vmem:[#allocation1] sm:$0xff pattern:$0x73625140]
      %761 = vrot.lane.b32.xlu0 %v742, 94
      %v762 = vpop.permute.xlu0 %761
      %763 = vrot.lane.b32.xlu0 %v744, 94
      %v764 = vpop.permute.xlu0 %763
      %765 = vrot.lane.b32.xlu0 %v746, 94
      %v766 = vpop.permute.xlu0 %765
      %767 = vrot.lane.b32.xlu0 %v748, 94
      %v768 = vpop.permute.xlu0 %767
      %769 = vrot.lane.b32.xlu0 %v750, 94
      %v770 = vpop.permute.xlu0 %769
      %771 = vrot.lane.b32.xlu0 %v752, 94
      %v772 = vpop.permute.xlu0 %771
      %773 = vrot.lane.b32.xlu0 %v754, 94
      %v774 = vpop.permute.xlu0 %773
      %775 = vrot.lane.b32.xlu0 %v756, 94
      %v776 = vpop.permute.xlu0 %775
      %777 = vrot.lane.b32.xlu0 %v759, 94
      %v778 = vpop.permute.xlu0 %777
      %vm779 = vcmask 769024
      %v780 = vsel %vm779, %v762, %v764
      %v781 = vsel %vm779, %v764, %v766
      %v782 = vsel %vm779, %v766, %v768
      %v783 = vsel %vm779, %v768, %v770
      %v784 = vsel %vm779, %v770, %v772
      %v785 = vsel %vm779, %v772, %v774
      %v786 = vsel %vm779, %v774, %v776
      %v787 = vsel %vm779, %v776, %v778
      %v789 = vsel %vm230, %v738, 0
      %v792 = vsel %vm234, %v780, 0
      %v795 = vsel %vm234, %v781, 0
      %v798 = vsel %vm234, %v782, 0
      %v801 = vsel %vm234, %v783, 0
      %v804 = vsel %vm234, %v784, 0
      %v807 = vsel %vm234, %v785, 0
      %v810 = vsel %vm234, %v786, 0
      %v813 = vsel %vm234, %v787, 0
      %v816 = vsel %vm234, %v778, 0
      %818 = vmatpush.bf16.msra.mxu0 0
      %819 = vmatpush.bf16.msra.mxu0 0
      %820 = vmatpush.bf16.msra.mxu0 0
      %821 = vmatpush.bf16.msra.mxu0 0
      %822 = vmatpush.bf16.msra.mxu0 0
      %823 = vmatpush.bf16.msra.mxu0 0
      %824 = vmatpush.bf16.msra.mxu0 0
      %825 = vmatpush.bf16.msra.mxu0 %v792
      %826 = vmatmul.bf16.gmra.mxu0 %v789
      %v827 = vpop.f32.mrf.mxu0
      %v828 = vadd.f32 0.0, %v827
      %v829 = vpop.f32.mrf.mxu0
      %830 = vdwg.mxu0
      %831 = vmatpush.bf16.msra.mxu0 0
      %832 = vmatpush.bf16.msra.mxu0 0
      %833 = vmatpush.bf16.msra.mxu0 0
      %834 = vmatpush.bf16.msra.mxu0 0
      %835 = vmatpush.bf16.msra.mxu0 0
      %836 = vmatpush.bf16.msra.mxu0 0
      %837 = vmatpush.bf16.msra.mxu0 0
      %838 = vmatpush.bf16.msra.mxu0 %v795
      %839 = vmatmul.bf16.gmra.mxu0 %v789
      %v840 = vpop.f32.mrf.mxu0
      %v841 = vadd.f32 0.0, %v840
      %v842 = vpop.f32.mrf.mxu0
      %843 = vdwg.mxu0
      %844 = vmatpush.bf16.msra.mxu0 0
      %845 = vmatpush.bf16.msra.mxu0 0
      %846 = vmatpush.bf16.msra.mxu0 0
      %847 = vmatpush.bf16.msra.mxu0 0
      %848 = vmatpush.bf16.msra.mxu0 0
      %849 = vmatpush.bf16.msra.mxu0 0
      %850 = vmatpush.bf16.msra.mxu0 0
      %851 = vmatpush.bf16.msra.mxu0 %v798
      %852 = vmatmul.bf16.gmra.mxu0 %v789
      %v853 = vpop.f32.mrf.mxu0
      %v854 = vadd.f32 0.0, %v853
      %v855 = vpop.f32.mrf.mxu0
      %856 = vdwg.mxu0
      %857 = vmatpush.bf16.msra.mxu0 0
      %858 = vmatpush.bf16.msra.mxu0 0
      %859 = vmatpush.bf16.msra.mxu0 0
      %860 = vmatpush.bf16.msra.mxu0 0
      %861 = vmatpush.bf16.msra.mxu0 0
      %862 = vmatpush.bf16.msra.mxu0 0
      %863 = vmatpush.bf16.msra.mxu0 0
      %864 = vmatpush.bf16.msra.mxu0 %v801
      %865 = vmatmul.bf16.gmra.mxu0 %v789
      %v866 = vpop.f32.mrf.mxu0
      %v867 = vadd.f32 0.0, %v866
      %v868 = vpop.f32.mrf.mxu0
      %869 = vdwg.mxu0
      %870 = vmatpush.bf16.msra.mxu0 0
      %871 = vmatpush.bf16.msra.mxu0 0
      %872 = vmatpush.bf16.msra.mxu0 0
      %873 = vmatpush.bf16.msra.mxu0 0
      %874 = vmatpush.bf16.msra.mxu0 0
      %875 = vmatpush.bf16.msra.mxu0 0
      %876 = vmatpush.bf16.msra.mxu0 0
      %877 = vmatpush.bf16.msra.mxu0 %v804
      %878 = vmatmul.bf16.gmra.mxu0 %v789
      %v879 = vpop.f32.mrf.mxu0
      %v880 = vadd.f32 0.0, %v879
      %v881 = vpop.f32.mrf.mxu0
      %882 = vdwg.mxu0
      %883 = vmatpush.bf16.msra.mxu0 0
      %884 = vmatpush.bf16.msra.mxu0 0
      %885 = vmatpush.bf16.msra.mxu0 0
      %886 = vmatpush.bf16.msra.mxu0 0
      %887 = vmatpush.bf16.msra.mxu0 0
      %888 = vmatpush.bf16.msra.mxu0 0
      %889 = vmatpush.bf16.msra.mxu0 0
      %890 = vmatpush.bf16.msra.mxu0 %v807
      %891 = vmatmul.bf16.gmra.mxu0 %v789
      %v892 = vpop.f32.mrf.mxu0
      %v893 = vadd.f32 0.0, %v892
      %v894 = vpop.f32.mrf.mxu0
      %895 = vdwg.mxu0
      %896 = vmatpush.bf16.msra.mxu0 0
      %897 = vmatpush.bf16.msra.mxu0 0
      %898 = vmatpush.bf16.msra.mxu0 0
      %899 = vmatpush.bf16.msra.mxu0 0
      %900 = vmatpush.bf16.msra.mxu0 0
      %901 = vmatpush.bf16.msra.mxu0 0
      %902 = vmatpush.bf16.msra.mxu0 0
      %903 = vmatpush.bf16.msra.mxu0 %v810
      %904 = vmatmul.bf16.gmra.mxu0 %v789
      %v905 = vpop.f32.mrf.mxu0
      %v906 = vadd.f32 0.0, %v905
      %v907 = vpop.f32.mrf.mxu0
      %908 = vdwg.mxu0
      %909 = vmatpush.bf16.msra.mxu0 0
      %910 = vmatpush.bf16.msra.mxu0 0
      %911 = vmatpush.bf16.msra.mxu0 0
      %912 = vmatpush.bf16.msra.mxu0 0
      %913 = vmatpush.bf16.msra.mxu0 0
      %914 = vmatpush.bf16.msra.mxu0 0
      %915 = vmatpush.bf16.msra.mxu0 0
      %916 = vmatpush.bf16.msra.mxu0 %v813
      %917 = vmatmul.bf16.gmra.mxu0 %v789
      %v918 = vpop.f32.mrf.mxu0
      %v919 = vadd.f32 0.0, %v918
      %v920 = vpop.f32.mrf.mxu0
      %921 = vdwg.mxu0
      %922 = vmatpush.bf16.msra.mxu0 0
      %923 = vmatpush.bf16.msra.mxu0 0
      %924 = vmatpush.bf16.msra.mxu0 0
      %925 = vmatpush.bf16.msra.mxu0 0
      %926 = vmatpush.bf16.msra.mxu0 0
      %927 = vmatpush.bf16.msra.mxu0 0
      %928 = vmatpush.bf16.msra.mxu0 0
      %929 = vmatpush.bf16.msra.mxu0 %v816
      %930 = vmatmul.bf16.gmra.mxu0 %v789
      %v931 = vpop.f32.mrf.mxu0
      %v932 = vadd.f32 0.0, %v931
      %v933 = vpop.f32.mrf.mxu0
      %934 = vdwg.mxu0
      %v935 = vadd.f32 %v728, %v828
      %v936 = vadd.f32 %v729, %v841
      %v937 = vadd.f32 %v730, %v854
      %v938 = vadd.f32 %v731, %v867
      %v939 = vadd.f32 %v732, %v880
      %v940 = vadd.f32 %v733, %v893
      %v941 = vadd.f32 %v734, %v906
      %v942 = vadd.f32 %v735, %v919
      %v943 = vadd.f32 %v736, %v932
      %s944 = scalar_lea.vmem %s1, 8
      %v945 = vld [vmem:[%s944] sm:$0x3]
      %946 = vst [vmem:[#allocation1] ss:$4 sm:$0xff] %v172
      %s947 = scalar_lea.vmem [#allocation1], 32
      %948 = vst [vmem:[%s947] ss:$4 sm:$0xff] %v173
      %v949 = vld.sshfl [vmem:[#allocation1] sm:$0xff pattern:$0x73625140]
      %v951 = vld.sshfl [vmem:[#allocation1 + $0x8] sm:$0xff pattern:$0x73625140]
      %v953 = vld.sshfl [vmem:[#allocation1 + $0x10] sm:$0xff pattern:$0x73625140]
      %v955 = vld.sshfl [vmem:[#allocation1 + $0x18] sm:$0xff pattern:$0x73625140]
      %v957 = vld.sshfl [vmem:[#allocation1 + $0x20] sm:$0xff pattern:$0x73625140]
      %v959 = vld.sshfl [vmem:[#allocation1 + $0x28] sm:$0xff pattern:$0x73625140]
      %v961 = vld.sshfl [vmem:[#allocation1 + $0x30] sm:$0xff pattern:$0x73625140]
      %v963 = vld.sshfl [vmem:[#allocation1 + $0x38] sm:$0xff pattern:$0x73625140]
      %965 = vst [vmem:[#allocation1] ss:$4 sm:$0xff] %v174
      %v966 = vld.sshfl [vmem:[#allocation1] sm:$0xff pattern:$0x73625140]
      %968 = vrot.lane.b32.xlu0 %v949, 93
      %v969 = vpop.permute.xlu0 %968
      %970 = vrot.lane.b32.xlu0 %v951, 93
      %v971 = vpop.permute.xlu0 %970
      %972 = vrot.lane.b32.xlu0 %v953, 93
      %v973 = vpop.permute.xlu0 %972
      %974 = vrot.lane.b32.xlu0 %v955, 93
      %v975 = vpop.permute.xlu0 %974
      %976 = vrot.lane.b32.xlu0 %v957, 93
      %v977 = vpop.permute.xlu0 %976
      %978 = vrot.lane.b32.xlu0 %v959, 93
      %v979 = vpop.permute.xlu0 %978
      %980 = vrot.lane.b32.xlu0 %v961, 93
      %v981 = vpop.permute.xlu0 %980
      %982 = vrot.lane.b32.xlu0 %v963, 93
      %v983 = vpop.permute.xlu0 %982
      %984 = vrot.lane.b32.xlu0 %v966, 93
      %v985 = vpop.permute.xlu0 %984
      %vm986 = vcmask 760832
      %v987 = vsel %vm986, %v969, %v971
      %v988 = vsel %vm986, %v971, %v973
      %v989 = vsel %vm986, %v973, %v975
      %v990 = vsel %vm986, %v975, %v977
      %v991 = vsel %vm986, %v977, %v979
      %v992 = vsel %vm986, %v979, %v981
      %v993 = vsel %vm986, %v981, %v983
      %v994 = vsel %vm986, %v983, %v985
      %v996 = vsel %vm230, %v945, 0
      %v999 = vsel %vm234, %v987, 0
      %v1002 = vsel %vm234, %v988, 0
      %v1005 = vsel %vm234, %v989, 0
      %v1008 = vsel %vm234, %v990, 0
      %v1011 = vsel %vm234, %v991, 0
      %v1014 = vsel %vm234, %v992, 0
      %v1017 = vsel %vm234, %v993, 0
      %v1020 = vsel %vm234, %v994, 0
      %v1023 = vsel %vm234, %v985, 0
      %1025 = vmatpush.bf16.msra.mxu0 0
      %1026 = vmatpush.bf16.msra.mxu0 0
      %1027 = vmatpush.bf16.msra.mxu0 0
      %1028 = vmatpush.bf16.msra.mxu0 0
      %1029 = vmatpush.bf16.msra.mxu0 0
      %1030 = vmatpush.bf16.msra.mxu0 0
      %1031 = vmatpush.bf16.msra.mxu0 0
      %1032 = vmatpush.bf16.msra.mxu0 %v999
      %1033 = vmatmul.bf16.gmra.mxu0 %v996
      %v1034 = vpop.f32.mrf.mxu0
      %v1035 = vadd.f32 0.0, %v1034
      %v1036 = vpop.f32.mrf.mxu0
      %1037 = vdwg.mxu0
      %1038 = vmatpush.bf16.msra.mxu0 0
      %1039 = vmatpush.bf16.msra.mxu0 0
      %1040 = vmatpush.bf16.msra.mxu0 0
      %1041 = vmatpush.bf16.msra.mxu0 0
      %1042 = vmatpush.bf16.msra.mxu0 0
      %1043 = vmatpush.bf16.msra.mxu0 0
      %1044 = vmatpush.bf16.msra.mxu0 0
      %1045 = vmatpush.bf16.msra.mxu0 %v1002
      %1046 = vmatmul.bf16.gmra.mxu0 %v996
      %v1047 = vpop.f32.mrf.mxu0
      %v1048 = vadd.f32 0.0, %v1047
      %v1049 = vpop.f32.mrf.mxu0
      %1050 = vdwg.mxu0
      %1051 = vmatpush.bf16.msra.mxu0 0
      %1052 = vmatpush.bf16.msra.mxu0 0
      %1053 = vmatpush.bf16.msra.mxu0 0
      %1054 = vmatpush.bf16.msra.mxu0 0
      %1055 = vmatpush.bf16.msra.mxu0 0
      %1056 = vmatpush.bf16.msra.mxu0 0
      %1057 = vmatpush.bf16.msra.mxu0 0
      %1058 = vmatpush.bf16.msra.mxu0 %v1005
      %1059 = vmatmul.bf16.gmra.mxu0 %v996
      %v1060 = vpop.f32.mrf.mxu0
      %v1061 = vadd.f32 0.0, %v1060
      %v1062 = vpop.f32.mrf.mxu0
      %1063 = vdwg.mxu0
      %1064 = vmatpush.bf16.msra.mxu0 0
      %1065 = vmatpush.bf16.msra.mxu0 0
      %1066 = vmatpush.bf16.msra.mxu0 0
      %1067 = vmatpush.bf16.msra.mxu0 0
      %1068 = vmatpush.bf16.msra.mxu0 0
      %1069 = vmatpush.bf16.msra.mxu0 0
      %1070 = vmatpush.bf16.msra.mxu0 0
      %1071 = vmatpush.bf16.msra.mxu0 %v1008
      %1072 = vmatmul.bf16.gmra.mxu0 %v996
      %v1073 = vpop.f32.mrf.mxu0
      %v1074 = vadd.f32 0.0, %v1073
      %v1075 = vpop.f32.mrf.mxu0
      %1076 = vdwg.mxu0
      %1077 = vmatpush.bf16.msra.mxu0 0
      %1078 = vmatpush.bf16.msra.mxu0 0
      %1079 = vmatpush.bf16.msra.mxu0 0
      %1080 = vmatpush.bf16.msra.mxu0 0
      %1081 = vmatpush.bf16.msra.mxu0 0
      %1082 = vmatpush.bf16.msra.mxu0 0
      %1083 = vmatpush.bf16.msra.mxu0 0
      %1084 = vmatpush.bf16.msra.mxu0 %v1011
      %1085 = vmatmul.bf16.gmra.mxu0 %v996
      %v1086 = vpop.f32.mrf.mxu0
      %v1087 = vadd.f32 0.0, %v1086
      %v1088 = vpop.f32.mrf.mxu0
      %1089 = vdwg.mxu0
      %1090 = vmatpush.bf16.msra.mxu0 0
      %1091 = vmatpush.bf16.msra.mxu0 0
      %1092 = vmatpush.bf16.msra.mxu0 0
      %1093 = vmatpush.bf16.msra.mxu0 0
      %1094 = vmatpush.bf16.msra.mxu0 0
      %1095 = vmatpush.bf16.msra.mxu0 0
      %1096 = vmatpush.bf16.msra.mxu0 0
      %1097 = vmatpush.bf16.msra.mxu0 %v1014
      %1098 = vmatmul.bf16.gmra.mxu0 %v996
      %v1099 = vpop.f32.mrf.mxu0
      %v1100 = vadd.f32 0.0, %v1099
      %v1101 = vpop.f32.mrf.mxu0
      %1102 = vdwg.mxu0
      %1103 = vmatpush.bf16.msra.mxu0 0
      %1104 = vmatpush.bf16.msra.mxu0 0
      %1105 = vmatpush.bf16.msra.mxu0 0
      %1106 = vmatpush.bf16.msra.mxu0 0
      %1107 = vmatpush.bf16.msra.mxu0 0
      %1108 = vmatpush.bf16.msra.mxu0 0
      %1109 = vmatpush.bf16.msra.mxu0 0
      %1110 = vmatpush.bf16.msra.mxu0 %v1017
      %1111 = vmatmul.bf16.gmra.mxu0 %v996
      %v1112 = vpop.f32.mrf.mxu0
      %v1113 = vadd.f32 0.0, %v1112
      %v1114 = vpop.f32.mrf.mxu0
      %1115 = vdwg.mxu0
      %1116 = vmatpush.bf16.msra.mxu0 0
      %1117 = vmatpush.bf16.msra.mxu0 0
      %1118 = vmatpush.bf16.msra.mxu0 0
      %1119 = vmatpush.bf16.msra.mxu0 0
      %1120 = vmatpush.bf16.msra.mxu0 0
      %1121 = vmatpush.bf16.msra.mxu0 0
      %1122 = vmatpush.bf16.msra.mxu0 0
      %1123 = vmatpush.bf16.msra.mxu0 %v1020
      %1124 = vmatmul.bf16.gmra.mxu0 %v996
      %v1125 = vpop.f32.mrf.mxu0
      %v1126 = vadd.f32 0.0, %v1125
      %v1127 = vpop.f32.mrf.mxu0
      %1128 = vdwg.mxu0
      %1129 = vmatpush.bf16.msra.mxu0 0
      %1130 = vmatpush.bf16.msra.mxu0 0
      %1131 = vmatpush.bf16.msra.mxu0 0
      %1132 = vmatpush.bf16.msra.mxu0 0
      %1133 = vmatpush.bf16.msra.mxu0 0
      %1134 = vmatpush.bf16.msra.mxu0 0
      %1135 = vmatpush.bf16.msra.mxu0 0
      %1136 = vmatpush.bf16.msra.mxu0 %v1023
      %1137 = vmatmul.bf16.gmra.mxu0 %v996
      %v1138 = vpop.f32.mrf.mxu0
      %v1139 = vadd.f32 0.0, %v1138
      %v1140 = vpop.f32.mrf.mxu0
      %1141 = vdwg.mxu0
      %v1142 = vadd.f32 %v935, %v1035
      %v1143 = vadd.f32 %v936, %v1048
      %v1144 = vadd.f32 %v937, %v1061
      %v1145 = vadd.f32 %v938, %v1074
      %v1146 = vadd.f32 %v939, %v1087
      %v1147 = vadd.f32 %v940, %v1100
      %v1148 = vadd.f32 %v941, %v1113
      %v1149 = vadd.f32 %v942, %v1126
      %v1150 = vadd.f32 %v943, %v1139
      %s1151 = scalar_lea.vmem %s1, 10
      %v1152 = vld [vmem:[%s1151] sm:$0x3]
      %1153 = vst [vmem:[#allocation1] ss:$4 sm:$0xff] %v172
      %s1154 = scalar_lea.vmem [#allocation1], 32
      %1155 = vst [vmem:[%s1154] ss:$4 sm:$0xff] %v173
      %v1156 = vld.sshfl [vmem:[#allocation1] sm:$0xff pattern:$0x73625140]
      %v1158 = vld.sshfl [vmem:[#allocation1 + $0x8] sm:$0xff pattern:$0x73625140]
      %v1160 = vld.sshfl [vmem:[#allocation1 + $0x10] sm:$0xff pattern:$0x73625140]
      %v1162 = vld.sshfl [vmem:[#allocation1 + $0x18] sm:$0xff pattern:$0x73625140]
      %v1164 = vld.sshfl [vmem:[#allocation1 + $0x20] sm:$0xff pattern:$0x73625140]
      %v1166 = vld.sshfl [vmem:[#allocation1 + $0x28] sm:$0xff pattern:$0x73625140]
      %v1168 = vld.sshfl [vmem:[#allocation1 + $0x30] sm:$0xff pattern:$0x73625140]
      %v1170 = vld.sshfl [vmem:[#allocation1 + $0x38] sm:$0xff pattern:$0x73625140]
      %1172 = vst [vmem:[#allocation1] ss:$4 sm:$0xff] %v174
      %v1173 = vld.sshfl [vmem:[#allocation1] sm:$0xff pattern:$0x73625140]
      %1175 = vrot.lane.b32.xlu0 %v1156, 92
      %v1176 = vpop.permute.xlu0 %1175
      %1177 = vrot.lane.b32.xlu0 %v1158, 92
      %v1178 = vpop.permute.xlu0 %1177
      %1179 = vrot.lane.b32.xlu0 %v1160, 92
      %v1180 = vpop.permute.xlu0 %1179
      %1181 = vrot.lane.b32.xlu0 %v1162, 92
      %v1182 = vpop.permute.xlu0 %1181
      %1183 = vrot.lane.b32.xlu0 %v1164, 92
      %v1184 = vpop.permute.xlu0 %1183
      %1185 = vrot.lane.b32.xlu0 %v1166, 92
      %v1186 = vpop.permute.xlu0 %1185
      %1187 = vrot.lane.b32.xlu0 %v1168, 92
      %v1188 = vpop.permute.xlu0 %1187
      %1189 = vrot.lane.b32.xlu0 %v1170, 92
      %v1190 = vpop.permute.xlu0 %1189
      %1191 = vrot.lane.b32.xlu0 %v1173, 92
      %v1192 = vpop.permute.xlu0 %1191
      %vm1193 = vcmask 752640
      %v1194 = vsel %vm1193, %v1176, %v1178
      %v1195 = vsel %vm1193, %v1178, %v1180
      %v1196 = vsel %vm1193, %v1180, %v1182
      %v1197 = vsel %vm1193, %v1182, %v1184
      %v1198 = vsel %vm1193, %v1184, %v1186
      %v1199 = vsel %vm1193, %v1186, %v1188
      %v1200 = vsel %vm1193, %v1188, %v1190
      %v1201 = vsel %vm1193, %v1190, %v1192
      %v1203 = vsel %vm230, %v1152, 0
      %v1206 = vsel %vm234, %v1194, 0
      %v1209 = vsel %vm234, %v1195, 0
      %v1212 = vsel %vm234, %v1196, 0
      %v1215 = vsel %vm234, %v1197, 0
      %v1218 = vsel %vm234, %v1198, 0
      %v1221 = vsel %vm234, %v1199, 0
      %v1224 = vsel %vm234, %v1200, 0
      %v1227 = vsel %vm234, %v1201, 0
      %v1230 = vsel %vm234, %v1192, 0
      %1232 = vmatpush.bf16.msra.mxu0 0
      %1233 = vmatpush.bf16.msra.mxu0 0
      %1234 = vmatpush.bf16.msra.mxu0 0
      %1235 = vmatpush.bf16.msra.mxu0 0
      %1236 = vmatpush.bf16.msra.mxu0 0
      %1237 = vmatpush.bf16.msra.mxu0 0
      %1238 = vmatpush.bf16.msra.mxu0 0
      %1239 = vmatpush.bf16.msra.mxu0 %v1206
      %1240 = vmatmul.bf16.gmra.mxu0 %v1203
      %v1241 = vpop.f32.mrf.mxu0
      %v1242 = vadd.f32 0.0, %v1241
      %v1243 = vpop.f32.mrf.mxu0
      %1244 = vdwg.mxu0
      %1245 = vmatpush.bf16.msra.mxu0 0
      %1246 = vmatpush.bf16.msra.mxu0 0
      %1247 = vmatpush.bf16.msra.mxu0 0
      %1248 = vmatpush.bf16.msra.mxu0 0
      %1249 = vmatpush.bf16.msra.mxu0 0
      %1250 = vmatpush.bf16.msra.mxu0 0
      %1251 = vmatpush.bf16.msra.mxu0 0
      %1252 = vmatpush.bf16.msra.mxu0 %v1209
      %1253 = vmatmul.bf16.gmra.mxu0 %v1203
      %v1254 = vpop.f32.mrf.mxu0
      %v1255 = vadd.f32 0.0, %v1254
      %v1256 = vpop.f32.mrf.mxu0
      %1257 = vdwg.mxu0
      %1258 = vmatpush.bf16.msra.mxu0 0
      %1259 = vmatpush.bf16.msra.mxu0 0
      %1260 = vmatpush.bf16.msra.mxu0 0
      %1261 = vmatpush.bf16.msra.mxu0 0
      %1262 = vmatpush.bf16.msra.mxu0 0
      %1263 = vmatpush.bf16.msra.mxu0 0
      %1264 = vmatpush.bf16.msra.mxu0 0
      %1265 = vmatpush.bf16.msra.mxu0 %v1212
      %1266 = vmatmul.bf16.gmra.mxu0 %v1203
      %v1267 = vpop.f32.mrf.mxu0
      %v1268 = vadd.f32 0.0, %v1267
      %v1269 = vpop.f32.mrf.mxu0
      %1270 = vdwg.mxu0
      %1271 = vmatpush.bf16.msra.mxu0 0
      %1272 = vmatpush.bf16.msra.mxu0 0
      %1273 = vmatpush.bf16.msra.mxu0 0
      %1274 = vmatpush.bf16.msra.mxu0 0
      %1275 = vmatpush.bf16.msra.mxu0 0
      %1276 = vmatpush.bf16.msra.mxu0 0
      %1277 = vmatpush.bf16.msra.mxu0 0
      %1278 = vmatpush.bf16.msra.mxu0 %v1215
      %1279 = vmatmul.bf16.gmra.mxu0 %v1203
      %v1280 = vpop.f32.mrf.mxu0
      %v1281 = vadd.f32 0.0, %v1280
      %v1282 = vpop.f32.mrf.mxu0
      %1283 = vdwg.mxu0
      %1284 = vmatpush.bf16.msra.mxu0 0
      %1285 = vmatpush.bf16.msra.mxu0 0
      %1286 = vmatpush.bf16.msra.mxu0 0
      %1287 = vmatpush.bf16.msra.mxu0 0
      %1288 = vmatpush.bf16.msra.mxu0 0
      %1289 = vmatpush.bf16.msra.mxu0 0
      %1290 = vmatpush.bf16.msra.mxu0 0
      %1291 = vmatpush.bf16.msra.mxu0 %v1218
      %1292 = vmatmul.bf16.gmra.mxu0 %v1203
      %v1293 = vpop.f32.mrf.mxu0
      %v1294 = vadd.f32 0.0, %v1293
      %v1295 = vpop.f32.mrf.mxu0
      %1296 = vdwg.mxu0
      %1297 = vmatpush.bf16.msra.mxu0 0
      %1298 = vmatpush.bf16.msra.mxu0 0
      %1299 = vmatpush.bf16.msra.mxu0 0
      %1300 = vmatpush.bf16.msra.mxu0 0
      %1301 = vmatpush.bf16.msra.mxu0 0
      %1302 = vmatpush.bf16.msra.mxu0 0
      %1303 = vmatpush.bf16.msra.mxu0 0
      %1304 = vmatpush.bf16.msra.mxu0 %v1221
      %1305 = vmatmul.bf16.gmra.mxu0 %v1203
      %v1306 = vpop.f32.mrf.mxu0
      %v1307 = vadd.f32 0.0, %v1306
      %v1308 = vpop.f32.mrf.mxu0
      %1309 = vdwg.mxu0
      %1310 = vmatpush.bf16.msra.mxu0 0
      %1311 = vmatpush.bf16.msra.mxu0 0
      %1312 = vmatpush.bf16.msra.mxu0 0
      %1313 = vmatpush.bf16.msra.mxu0 0
      %1314 = vmatpush.bf16.msra.mxu0 0
      %1315 = vmatpush.bf16.msra.mxu0 0
      %1316 = vmatpush.bf16.msra.mxu0 0
      %1317 = vmatpush.bf16.msra.mxu0 %v1224
      %1318 = vmatmul.bf16.gmra.mxu0 %v1203
      %v1319 = vpop.f32.mrf.mxu0
      %v1320 = vadd.f32 0.0, %v1319
      %v1321 = vpop.f32.mrf.mxu0
      %1322 = vdwg.mxu0
      %1323 = vmatpush.bf16.msra.mxu0 0
      %1324 = vmatpush.bf16.msra.mxu0 0
      %1325 = vmatpush.bf16.msra.mxu0 0
      %1326 = vmatpush.bf16.msra.mxu0 0
      %1327 = vmatpush.bf16.msra.mxu0 0
      %1328 = vmatpush.bf16.msra.mxu0 0
      %1329 = vmatpush.bf16.msra.mxu0 0
      %1330 = vmatpush.bf16.msra.mxu0 %v1227
      %1331 = vmatmul.bf16.gmra.mxu0 %v1203
      %v1332 = vpop.f32.mrf.mxu0
      %v1333 = vadd.f32 0.0, %v1332
      %v1334 = vpop.f32.mrf.mxu0
      %1335 = vdwg.mxu0
      %1336 = vmatpush.bf16.msra.mxu0 0
      %1337 = vmatpush.bf16.msra.mxu0 0
      %1338 = vmatpush.bf16.msra.mxu0 0
      %1339 = vmatpush.bf16.msra.mxu0 0
      %1340 = vmatpush.bf16.msra.mxu0 0
      %1341 = vmatpush.bf16.msra.mxu0 0
      %1342 = vmatpush.bf16.msra.mxu0 0
      %1343 = vmatpush.bf16.msra.mxu0 %v1230
      %1344 = vmatmul.bf16.gmra.mxu0 %v1203
      %v1345 = vpop.f32.mrf.mxu0
      %v1346 = vadd.f32 0.0, %v1345
      %v1347 = vpop.f32.mrf.mxu0
      %1348 = vdwg.mxu0
      %v1349 = vadd.f32 %v1142, %v1242
      %v1350 = vadd.f32 %v1143, %v1255
      %v1351 = vadd.f32 %v1144, %v1268
      %v1352 = vadd.f32 %v1145, %v1281
      %v1353 = vadd.f32 %v1146, %v1294
      %v1354 = vadd.f32 %v1147, %v1307
      %v1355 = vadd.f32 %v1148, %v1320
      %v1356 = vadd.f32 %v1149, %v1333
      %v1357 = vadd.f32 %v1150, %v1346
      %s1358 = scalar_lea.vmem %s1, 12
      %v1359 = vld [vmem:[%s1358] sm:$0x3]
      %1360 = vst [vmem:[#allocation1] ss:$4 sm:$0xff] %v172
      %s1361 = scalar_lea.vmem [#allocation1], 32
      %1362 = vst [vmem:[%s1361] ss:$4 sm:$0xff] %v173
      %v1363 = vld.sshfl [vmem:[#allocation1] sm:$0xff pattern:$0x73625140]
      %v1365 = vld.sshfl [vmem:[#allocation1 + $0x8] sm:$0xff pattern:$0x73625140]
      %v1367 = vld.sshfl [vmem:[#allocation1 + $0x10] sm:$0xff pattern:$0x73625140]
      %v1369 = vld.sshfl [vmem:[#allocation1 + $0x18] sm:$0xff pattern:$0x73625140]
      %v1371 = vld.sshfl [vmem:[#allocation1 + $0x20] sm:$0xff pattern:$0x73625140]
      %v1373 = vld.sshfl [vmem:[#allocation1 + $0x28] sm:$0xff pattern:$0x73625140]
      %v1375 = vld.sshfl [vmem:[#allocation1 + $0x30] sm:$0xff pattern:$0x73625140]
      %v1377 = vld.sshfl [vmem:[#allocation1 + $0x38] sm:$0xff pattern:$0x73625140]
      %1379 = vst [vmem:[#allocation1] ss:$4 sm:$0xff] %v174
      %v1380 = vld.sshfl [vmem:[#allocation1] sm:$0xff pattern:$0x73625140]
      %v1382 = vld.sshfl [vmem:[#allocation1 + $0x8] sm:$0xff pattern:$0x73625140]
      %1384 = vrot.lane.b32.xlu0 %v1363, 60
      %v1385 = vpop.permute.xlu0 %1384
      %1386 = vrot.lane.b32.xlu0 %v1365, 60
      %v1387 = vpop.permute.xlu0 %1386
      %1388 = vrot.lane.b32.xlu0 %v1367, 60
      %v1389 = vpop.permute.xlu0 %1388
      %1390 = vrot.lane.b32.xlu0 %v1369, 60
      %v1391 = vpop.permute.xlu0 %1390
      %1392 = vrot.lane.b32.xlu0 %v1371, 60
      %v1393 = vpop.permute.xlu0 %1392
      %1394 = vrot.lane.b32.xlu0 %v1373, 60
      %v1395 = vpop.permute.xlu0 %1394
      %1396 = vrot.lane.b32.xlu0 %v1375, 60
      %v1397 = vpop.permute.xlu0 %1396
      %1398 = vrot.lane.b32.xlu0 %v1377, 60
      %v1399 = vpop.permute.xlu0 %1398
      %1400 = vrot.lane.b32.xlu0 %v1380, 60
      %v1401 = vpop.permute.xlu0 %1400
      %1402 = vrot.lane.b32.xlu0 %v1382, 60
      %v1403 = vpop.permute.xlu0 %1402
      %vm1404 = vcmask 490496
      %v1405 = vsel %vm1404, %v1385, %v1387
      %v1406 = vsel %vm1404, %v1387, %v1389
      %v1407 = vsel %vm1404, %v1389, %v1391
      %v1408 = vsel %vm1404, %v1391, %v1393
      %v1409 = vsel %vm1404, %v1393, %v1395
      %v1410 = vsel %vm1404, %v1395, %v1397
      %v1411 = vsel %vm1404, %v1397, %v1399
      %v1412 = vsel %vm1404, %v1399, %v1401
      %v1413 = vsel %vm1404, %v1401, %v1403
      %v1415 = vsel %vm230, %v1359, 0
      %v1418 = vsel %vm234, %v1405, 0
      %v1421 = vsel %vm234, %v1406, 0
      %v1424 = vsel %vm234, %v1407, 0
      %v1427 = vsel %vm234, %v1408, 0
      %v1430 = vsel %vm234, %v1409, 0
      %v1433 = vsel %vm234, %v1410, 0
      %v1436 = vsel %vm234, %v1411, 0
      %v1439 = vsel %vm234, %v1412, 0
      %v1442 = vsel %vm234, %v1413, 0
      %1444 = vmatpush.bf16.msra.mxu0 0
      %1445 = vmatpush.bf16.msra.mxu0 0
      %1446 = vmatpush.bf16.msra.mxu0 0
      %1447 = vmatpush.bf16.msra.mxu0 0
      %1448 = vmatpush.bf16.msra.mxu0 0
      %1449 = vmatpush.bf16.msra.mxu0 0
      %1450 = vmatpush.bf16.msra.mxu0 0
      %1451 = vmatpush.bf16.msra.mxu0 %v1418
      %1452 = vmatmul.bf16.gmra.mxu0 %v1415
      %v1453 = vpop.f32.mrf.mxu0
      %v1454 = vadd.f32 0.0, %v1453
      %v1455 = vpop.f32.mrf.mxu0
      %1456 = vdwg.mxu0
      %1457 = vmatpush.bf16.msra.mxu0 0
      %1458 = vmatpush.bf16.msra.mxu0 0
      %1459 = vmatpush.bf16.msra.mxu0 0
      %1460 = vmatpush.bf16.msra.mxu0 0
      %1461 = vmatpush.bf16.msra.mxu0 0
      %1462 = vmatpush.bf16.msra.mxu0 0
      %1463 = vmatpush.bf16.msra.mxu0 0
      %1464 = vmatpush.bf16.msra.mxu0 %v1421
      %1465 = vmatmul.bf16.gmra.mxu0 %v1415
      %v1466 = vpop.f32.mrf.mxu0
      %v1467 = vadd.f32 0.0, %v1466
      %v1468 = vpop.f32.mrf.mxu0
      %1469 = vdwg.mxu0
      %1470 = vmatpush.bf16.msra.mxu0 0
      %1471 = vmatpush.bf16.msra.mxu0 0
      %1472 = vmatpush.bf16.msra.mxu0 0
      %1473 = vmatpush.bf16.msra.mxu0 0
      %1474 = vmatpush.bf16.msra.mxu0 0
      %1475 = vmatpush.bf16.msra.mxu0 0
      %1476 = vmatpush.bf16.msra.mxu0 0
      %1477 = vmatpush.bf16.msra.mxu0 %v1424
      %1478 = vmatmul.bf16.gmra.mxu0 %v1415
      %v1479 = vpop.f32.mrf.mxu0
      %v1480 = vadd.f32 0.0, %v1479
      %v1481 = vpop.f32.mrf.mxu0
      %1482 = vdwg.mxu0
      %1483 = vmatpush.bf16.msra.mxu0 0
      %1484 = vmatpush.bf16.msra.mxu0 0
      %1485 = vmatpush.bf16.msra.mxu0 0
      %1486 = vmatpush.bf16.msra.mxu0 0
      %1487 = vmatpush.bf16.msra.mxu0 0
      %1488 = vmatpush.bf16.msra.mxu0 0
      %1489 = vmatpush.bf16.msra.mxu0 0
      %1490 = vmatpush.bf16.msra.mxu0 %v1427
      %1491 = vmatmul.bf16.gmra.mxu0 %v1415
      %v1492 = vpop.f32.mrf.mxu0
      %v1493 = vadd.f32 0.0, %v1492
      %v1494 = vpop.f32.mrf.mxu0
      %1495 = vdwg.mxu0
      %1496 = vmatpush.bf16.msra.mxu0 0
      %1497 = vmatpush.bf16.msra.mxu0 0
      %1498 = vmatpush.bf16.msra.mxu0 0
      %1499 = vmatpush.bf16.msra.mxu0 0
      %1500 = vmatpush.bf16.msra.mxu0 0
      %1501 = vmatpush.bf16.msra.mxu0 0
      %1502 = vmatpush.bf16.msra.mxu0 0
      %1503 = vmatpush.bf16.msra.mxu0 %v1430
      %1504 = vmatmul.bf16.gmra.mxu0 %v1415
      %v1505 = vpop.f32.mrf.mxu0
      %v1506 = vadd.f32 0.0, %v1505
      %v1507 = vpop.f32.mrf.mxu0
      %1508 = vdwg.mxu0
      %1509 = vmatpush.bf16.msra.mxu0 0
      %1510 = vmatpush.bf16.msra.mxu0 0
      %1511 = vmatpush.bf16.msra.mxu0 0
      %1512 = vmatpush.bf16.msra.mxu0 0
      %1513 = vmatpush.bf16.msra.mxu0 0
      %1514 = vmatpush.bf16.msra.mxu0 0
      %1515 = vmatpush.bf16.msra.mxu0 0
      %1516 = vmatpush.bf16.msra.mxu0 %v1433
      %1517 = vmatmul.bf16.gmra.mxu0 %v1415
      %v1518 = vpop.f32.mrf.mxu0
      %v1519 = vadd.f32 0.0, %v1518
      %v1520 = vpop.f32.mrf.mxu0
      %1521 = vdwg.mxu0
      %1522 = vmatpush.bf16.msra.mxu0 0
      %1523 = vmatpush.bf16.msra.mxu0 0
      %1524 = vmatpush.bf16.msra.mxu0 0
      %1525 = vmatpush.bf16.msra.mxu0 0
      %1526 = vmatpush.bf16.msra.mxu0 0
      %1527 = vmatpush.bf16.msra.mxu0 0
      %1528 = vmatpush.bf16.msra.mxu0 0
      %1529 = vmatpush.bf16.msra.mxu0 %v1436
      %1530 = vmatmul.bf16.gmra.mxu0 %v1415
      %v1531 = vpop.f32.mrf.mxu0
      %v1532 = vadd.f32 0.0, %v1531
      %v1533 = vpop.f32.mrf.mxu0
      %1534 = vdwg.mxu0
      %1535 = vmatpush.bf16.msra.mxu0 0
      %1536 = vmatpush.bf16.msra.mxu0 0
      %1537 = vmatpush.bf16.msra.mxu0 0
      %1538 = vmatpush.bf16.msra.mxu0 0
      %1539 = vmatpush.bf16.msra.mxu0 0
      %1540 = vmatpush.bf16.msra.mxu0 0
      %1541 = vmatpush.bf16.msra.mxu0 0
      %1542 = vmatpush.bf16.msra.mxu0 %v1439
      %1543 = vmatmul.bf16.gmra.mxu0 %v1415
      %v1544 = vpop.f32.mrf.mxu0
      %v1545 = vadd.f32 0.0, %v1544
      %v1546 = vpop.f32.mrf.mxu0
      %1547 = vdwg.mxu0
      %1548 = vmatpush.bf16.msra.mxu0 0
      %1549 = vmatpush.bf16.msra.mxu0 0
      %1550 = vmatpush.bf16.msra.mxu0 0
      %1551 = vmatpush.bf16.msra.mxu0 0
      %1552 = vmatpush.bf16.msra.mxu0 0
      %1553 = vmatpush.bf16.msra.mxu0 0
      %1554 = vmatpush.bf16.msra.mxu0 0
      %1555 = vmatpush.bf16.msra.mxu0 %v1442
      %1556 = vmatmul.bf16.gmra.mxu0 %v1415
      %v1557 = vpop.f32.mrf.mxu0
      %v1558 = vadd.f32 0.0, %v1557
      %v1559 = vpop.f32.mrf.mxu0
      %1560 = vdwg.mxu0
      %v1561 = vadd.f32 %v1349, %v1454
      %v1562 = vadd.f32 %v1350, %v1467
      %v1563 = vadd.f32 %v1351, %v1480
      %v1564 = vadd.f32 %v1352, %v1493
      %v1565 = vadd.f32 %v1353, %v1506
      %v1566 = vadd.f32 %v1354, %v1519
      %v1567 = vadd.f32 %v1355, %v1532
      %v1568 = vadd.f32 %v1356, %v1545
      %v1569 = vadd.f32 %v1357, %v1558
      %s1570 = scalar_lea.vmem %s1, 14
      %v1571 = vld [vmem:[%s1570] sm:$0x3]
      %1572 = vst [vmem:[#allocation1] ss:$4 sm:$0xff] %v172
      %s1573 = scalar_lea.vmem [#allocation1], 32
      %1574 = vst [vmem:[%s1573] ss:$4 sm:$0xff] %v173
      %v1575 = vld.sshfl [vmem:[#allocation1] sm:$0xff pattern:$0x73625140]
      %v1577 = vld.sshfl [vmem:[#allocation1 + $0x8] sm:$0xff pattern:$0x73625140]
      %v1579 = vld.sshfl [vmem:[#allocation1 + $0x10] sm:$0xff pattern:$0x73625140]
      %v1581 = vld.sshfl [vmem:[#allocation1 + $0x18] sm:$0xff pattern:$0x73625140]
      %v1583 = vld.sshfl [vmem:[#allocation1 + $0x20] sm:$0xff pattern:$0x73625140]
      %v1585 = vld.sshfl [vmem:[#allocation1 + $0x28] sm:$0xff pattern:$0x73625140]
      %v1587 = vld.sshfl [vmem:[#allocation1 + $0x30] sm:$0xff pattern:$0x73625140]
      %v1589 = vld.sshfl [vmem:[#allocation1 + $0x38] sm:$0xff pattern:$0x73625140]
      %1591 = vst [vmem:[#allocation1] ss:$4 sm:$0xff] %v174
      %v1592 = vld.sshfl [vmem:[#allocation1] sm:$0xff pattern:$0x73625140]
      %v1594 = vld.sshfl [vmem:[#allocation1 + $0x8] sm:$0xff pattern:$0x73625140]
      %1596 = vrot.lane.b32.xlu0 %v1575, 59
      %v1597 = vpop.permute.xlu0 %1596
      %1598 = vrot.lane.b32.xlu0 %v1577, 59
      %v1599 = vpop.permute.xlu0 %1598
      %1600 = vrot.lane.b32.xlu0 %v1579, 59
      %v1601 = vpop.permute.xlu0 %1600
      %1602 = vrot.lane.b32.xlu0 %v1581, 59
      %v1603 = vpop.permute.xlu0 %1602
      %1604 = vrot.lane.b32.xlu0 %v1583, 59
      %v1605 = vpop.permute.xlu0 %1604
      %1606 = vrot.lane.b32.xlu0 %v1585, 59
      %v1607 = vpop.permute.xlu0 %1606
      %1608 = vrot.lane.b32.xlu0 %v1587, 59
      %v1609 = vpop.permute.xlu0 %1608
      %1610 = vrot.lane.b32.xlu0 %v1589, 59
      %v1611 = vpop.permute.xlu0 %1610
      %1612 = vrot.lane.b32.xlu0 %v1592, 59
      %v1613 = vpop.permute.xlu0 %1612
      %1614 = vrot.lane.b32.xlu0 %v1594, 59
      %v1615 = vpop.permute.xlu0 %1614
      %vm1616 = vcmask 482304
      %v1617 = vsel %vm1616, %v1597, %v1599
      %v1618 = vsel %vm1616, %v1599, %v1601
      %v1619 = vsel %vm1616, %v1601, %v1603
      %v1620 = vsel %vm1616, %v1603, %v1605
      %v1621 = vsel %vm1616, %v1605, %v1607
      %v1622 = vsel %vm1616, %v1607, %v1609
      %v1623 = vsel %vm1616, %v1609, %v1611
      %v1624 = vsel %vm1616, %v1611, %v1613
      %v1625 = vsel %vm1616, %v1613, %v1615
      %v1627 = vsel %vm230, %v1571, 0
      %v1630 = vsel %vm234, %v1617, 0
      %v1633 = vsel %vm234, %v1618, 0
      %v1636 = vsel %vm234, %v1619, 0
      %v1639 = vsel %vm234, %v1620, 0
      %v1642 = vsel %vm234, %v1621, 0
      %v1645 = vsel %vm234, %v1622, 0
      %v1648 = vsel %vm234, %v1623, 0
      %v1651 = vsel %vm234, %v1624, 0
      %v1654 = vsel %vm234, %v1625, 0
      %1656 = vmatpush.bf16.msra.mxu0 0
      %1657 = vmatpush.bf16.msra.mxu0 0
      %1658 = vmatpush.bf16.msra.mxu0 0
      %1659 = vmatpush.bf16.msra.mxu0 0
      %1660 = vmatpush.bf16.msra.mxu0 0
      %1661 = vmatpush.bf16.msra.mxu0 0
      %1662 = vmatpush.bf16.msra.mxu0 0
      %1663 = vmatpush.bf16.msra.mxu0 %v1630
      %1664 = vmatmul.bf16.gmra.mxu0 %v1627
      %v1665 = vpop.f32.mrf.mxu0
      %v1666 = vadd.f32 0.0, %v1665
      %v1667 = vpop.f32.mrf.mxu0
      %1668 = vdwg.mxu0
      %1669 = vmatpush.bf16.msra.mxu0 0
      %1670 = vmatpush.bf16.msra.mxu0 0
      %1671 = vmatpush.bf16.msra.mxu0 0
      %1672 = vmatpush.bf16.msra.mxu0 0
      %1673 = vmatpush.bf16.msra.mxu0 0
      %1674 = vmatpush.bf16.msra.mxu0 0
      %1675 = vmatpush.bf16.msra.mxu0 0
      %1676 = vmatpush.bf16.msra.mxu0 %v1633
      %1677 = vmatmul.bf16.gmra.mxu0 %v1627
      %v1678 = vpop.f32.mrf.mxu0
      %v1679 = vadd.f32 0.0, %v1678
      %v1680 = vpop.f32.mrf.mxu0
      %1681 = vdwg.mxu0
      %1682 = vmatpush.bf16.msra.mxu0 0
      %1683 = vmatpush.bf16.msra.mxu0 0
      %1684 = vmatpush.bf16.msra.mxu0 0
      %1685 = vmatpush.bf16.msra.mxu0 0
      %1686 = vmatpush.bf16.msra.mxu0 0
      %1687 = vmatpush.bf16.msra.mxu0 0
      %1688 = vmatpush.bf16.msra.mxu0 0
      %1689 = vmatpush.bf16.msra.mxu0 %v1636
      %1690 = vmatmul.bf16.gmra.mxu0 %v1627
      %v1691 = vpop.f32.mrf.mxu0
      %v1692 = vadd.f32 0.0, %v1691
      %v1693 = vpop.f32.mrf.mxu0
      %1694 = vdwg.mxu0
      %1695 = vmatpush.bf16.msra.mxu0 0
      %1696 = vmatpush.bf16.msra.mxu0 0
      %1697 = vmatpush.bf16.msra.mxu0 0
      %1698 = vmatpush.bf16.msra.mxu0 0
      %1699 = vmatpush.bf16.msra.mxu0 0
      %1700 = vmatpush.bf16.msra.mxu0 0
      %1701 = vmatpush.bf16.msra.mxu0 0
      %1702 = vmatpush.bf16.msra.mxu0 %v1639
      %1703 = vmatmul.bf16.gmra.mxu0 %v1627
      %v1704 = vpop.f32.mrf.mxu0
      %v1705 = vadd.f32 0.0, %v1704
      %v1706 = vpop.f32.mrf.mxu0
      %1707 = vdwg.mxu0
      %1708 = vmatpush.bf16.msra.mxu0 0
      %1709 = vmatpush.bf16.msra.mxu0 0
      %1710 = vmatpush.bf16.msra.mxu0 0
      %1711 = vmatpush.bf16.msra.mxu0 0
      %1712 = vmatpush.bf16.msra.mxu0 0
      %1713 = vmatpush.bf16.msra.mxu0 0
      %1714 = vmatpush.bf16.msra.mxu0 0
      %1715 = vmatpush.bf16.msra.mxu0 %v1642
      %1716 = vmatmul.bf16.gmra.mxu0 %v1627
      %v1717 = vpop.f32.mrf.mxu0
      %v1718 = vadd.f32 0.0, %v1717
      %v1719 = vpop.f32.mrf.mxu0
      %1720 = vdwg.mxu0
      %1721 = vmatpush.bf16.msra.mxu0 0
      %1722 = vmatpush.bf16.msra.mxu0 0
      %1723 = vmatpush.bf16.msra.mxu0 0
      %1724 = vmatpush.bf16.msra.mxu0 0
      %1725 = vmatpush.bf16.msra.mxu0 0
      %1726 = vmatpush.bf16.msra.mxu0 0
      %1727 = vmatpush.bf16.msra.mxu0 0
      %1728 = vmatpush.bf16.msra.mxu0 %v1645
      %1729 = vmatmul.bf16.gmra.mxu0 %v1627
      %v1730 = vpop.f32.mrf.mxu0
      %v1731 = vadd.f32 0.0, %v1730
      %v1732 = vpop.f32.mrf.mxu0
      %1733 = vdwg.mxu0
      %1734 = vmatpush.bf16.msra.mxu0 0
      %1735 = vmatpush.bf16.msra.mxu0 0
      %1736 = vmatpush.bf16.msra.mxu0 0
      %1737 = vmatpush.bf16.msra.mxu0 0
      %1738 = vmatpush.bf16.msra.mxu0 0
      %1739 = vmatpush.bf16.msra.mxu0 0
      %1740 = vmatpush.bf16.msra.mxu0 0
      %1741 = vmatpush.bf16.msra.mxu0 %v1648
      %1742 = vmatmul.bf16.gmra.mxu0 %v1627
      %v1743 = vpop.f32.mrf.mxu0
      %v1744 = vadd.f32 0.0, %v1743
      %v1745 = vpop.f32.mrf.mxu0
      %1746 = vdwg.mxu0
      %1747 = vmatpush.bf16.msra.mxu0 0
      %1748 = vmatpush.bf16.msra.mxu0 0
      %1749 = vmatpush.bf16.msra.mxu0 0
      %1750 = vmatpush.bf16.msra.mxu0 0
      %1751 = vmatpush.bf16.msra.mxu0 0
      %1752 = vmatpush.bf16.msra.mxu0 0
      %1753 = vmatpush.bf16.msra.mxu0 0
      %1754 = vmatpush.bf16.msra.mxu0 %v1651
      %1755 = vmatmul.bf16.gmra.mxu0 %v1627
      %v1756 = vpop.f32.mrf.mxu0
      %v1757 = vadd.f32 0.0, %v1756
      %v1758 = vpop.f32.mrf.mxu0
      %1759 = vdwg.mxu0
      %1760 = vmatpush.bf16.msra.mxu0 0
      %1761 = vmatpush.bf16.msra.mxu0 0
      %1762 = vmatpush.bf16.msra.mxu0 0
      %1763 = vmatpush.bf16.msra.mxu0 0
      %1764 = vmatpush.bf16.msra.mxu0 0
      %1765 = vmatpush.bf16.msra.mxu0 0
      %1766 = vmatpush.bf16.msra.mxu0 0
      %1767 = vmatpush.bf16.msra.mxu0 %v1654
      %1768 = vmatmul.bf16.gmra.mxu0 %v1627
      %v1769 = vpop.f32.mrf.mxu0
      %v1770 = vadd.f32 0.0, %v1769
      %v1771 = vpop.f32.mrf.mxu0
      %1772 = vdwg.mxu0
      %v1773 = vadd.f32 %v1561, %v1666
      %v1774 = vadd.f32 %v1562, %v1679
      %v1775 = vadd.f32 %v1563, %v1692
      %v1776 = vadd.f32 %v1564, %v1705
      %v1777 = vadd.f32 %v1565, %v1718
      %v1778 = vadd.f32 %v1566, %v1731
      %v1779 = vadd.f32 %v1567, %v1744
      %v1780 = vadd.f32 %v1568, %v1757
      %v1781 = vadd.f32 %v1569, %v1770
      %s1782 = scalar_lea.vmem %s1, 16
      %v1783 = vld [vmem:[%s1782] sm:$0x3]
      %1784 = vst [vmem:[#allocation1] ss:$4 sm:$0xff] %v172
      %s1785 = scalar_lea.vmem [#allocation1], 32
      %1786 = vst [vmem:[%s1785] ss:$4 sm:$0xff] %v173
      %v1787 = vld.sshfl [vmem:[#allocation1] sm:$0xff pattern:$0x73625140]
      %v1789 = vld.sshfl [vmem:[#allocation1 + $0x8] sm:$0xff pattern:$0x73625140]
      %v1791 = vld.sshfl [vmem:[#allocation1 + $0x10] sm:$0xff pattern:$0x73625140]
      %v1793 = vld.sshfl [vmem:[#allocation1 + $0x18] sm:$0xff pattern:$0x73625140]
      %v1795 = vld.sshfl [vmem:[#allocation1 + $0x20] sm:$0xff pattern:$0x73625140]
      %v1797 = vld.sshfl [vmem:[#allocation1 + $0x28] sm:$0xff pattern:$0x73625140]
      %v1799 = vld.sshfl [vmem:[#allocation1 + $0x30] sm:$0xff pattern:$0x73625140]
      %v1801 = vld.sshfl [vmem:[#allocation1 + $0x38] sm:$0xff pattern:$0x73625140]
      %1803 = vst [vmem:[#allocation1] ss:$4 sm:$0xff] %v174
      %v1804 = vld.sshfl [vmem:[#allocation1] sm:$0xff pattern:$0x73625140]
      %v1806 = vld.sshfl [vmem:[#allocation1 + $0x8] sm:$0xff pattern:$0x73625140]
      %1808 = vrot.lane.b32.xlu0 %v1787, 58
      %v1809 = vpop.permute.xlu0 %1808
      %1810 = vrot.lane.b32.xlu0 %v1789, 58
      %v1811 = vpop.permute.xlu0 %1810
      %1812 = vrot.lane.b32.xlu0 %v1791, 58
      %v1813 = vpop.permute.xlu0 %1812
      %1814 = vrot.lane.b32.xlu0 %v1793, 58
      %v1815 = vpop.permute.xlu0 %1814
      %1816 = vrot.lane.b32.xlu0 %v1795, 58
      %v1817 = vpop.permute.xlu0 %1816
      %1818 = vrot.lane.b32.xlu0 %v1797, 58
      %v1819 = vpop.permute.xlu0 %1818
      %1820 = vrot.lane.b32.xlu0 %v1799, 58
      %v1821 = vpop.permute.xlu0 %1820
      %1822 = vrot.lane.b32.xlu0 %v1801, 58
      %v1823 = vpop.permute.xlu0 %1822
      %1824 = vrot.lane.b32.xlu0 %v1804, 58
      %v1825 = vpop.permute.xlu0 %1824
      %1826 = vrot.lane.b32.xlu0 %v1806, 58
      %v1827 = vpop.permute.xlu0 %1826
      %vm1828 = vcmask 474112
      %v1829 = vsel %vm1828, %v1809, %v1811
      %v1830 = vsel %vm1828, %v1811, %v1813
      %v1831 = vsel %vm1828, %v1813, %v1815
      %v1832 = vsel %vm1828, %v1815, %v1817
      %v1833 = vsel %vm1828, %v1817, %v1819
      %v1834 = vsel %vm1828, %v1819, %v1821
      %v1835 = vsel %vm1828, %v1821, %v1823
      %v1836 = vsel %vm1828, %v1823, %v1825
      %v1837 = vsel %vm1828, %v1825, %v1827
      %v1839 = vsel %vm230, %v1783, 0
      %v1842 = vsel %vm234, %v1829, 0
      %v1845 = vsel %vm234, %v1830, 0
      %v1848 = vsel %vm234, %v1831, 0
      %v1851 = vsel %vm234, %v1832, 0
      %v1854 = vsel %vm234, %v1833, 0
      %v1857 = vsel %vm234, %v1834, 0
      %v1860 = vsel %vm234, %v1835, 0
      %v1863 = vsel %vm234, %v1836, 0
      %v1866 = vsel %vm234, %v1837, 0
      %1868 = vmatpush.bf16.msra.mxu0 0
      %1869 = vmatpush.bf16.msra.mxu0 0
      %1870 = vmatpush.bf16.msra.mxu0 0
      %1871 = vmatpush.bf16.msra.mxu0 0
      %1872 = vmatpush.bf16.msra.mxu0 0
      %1873 = vmatpush.bf16.msra.mxu0 0
      %1874 = vmatpush.bf16.msra.mxu0 0
      %1875 = vmatpush.bf16.msra.mxu0 %v1842
      %1876 = vmatmul.bf16.gmra.mxu0 %v1839
      %v1877 = vpop.f32.mrf.mxu0
      %v1878 = vadd.f32 0.0, %v1877
      %v1879 = vpop.f32.mrf.mxu0
      %1880 = vdwg.mxu0
      %1881 = vmatpush.bf16.msra.mxu0 0
      %1882 = vmatpush.bf16.msra.mxu0 0
      %1883 = vmatpush.bf16.msra.mxu0 0
      %1884 = vmatpush.bf16.msra.mxu0 0
      %1885 = vmatpush.bf16.msra.mxu0 0
      %1886 = vmatpush.bf16.msra.mxu0 0
      %1887 = vmatpush.bf16.msra.mxu0 0
      %1888 = vmatpush.bf16.msra.mxu0 %v1845
      %1889 = vmatmul.bf16.gmra.mxu0 %v1839
      %v1890 = vpop.f32.mrf.mxu0
      %v1891 = vadd.f32 0.0, %v1890
      %v1892 = vpop.f32.mrf.mxu0
      %1893 = vdwg.mxu0
      %1894 = vmatpush.bf16.msra.mxu0 0
      %1895 = vmatpush.bf16.msra.mxu0 0
      %1896 = vmatpush.bf16.msra.mxu0 0
      %1897 = vmatpush.bf16.msra.mxu0 0
      %1898 = vmatpush.bf16.msra.mxu0 0
      %1899 = vmatpush.bf16.msra.mxu0 0
      %1900 = vmatpush.bf16.msra.mxu0 0
      %1901 = vmatpush.bf16.msra.mxu0 %v1848
      %1902 = vmatmul.bf16.gmra.mxu0 %v1839
      %v1903 = vpop.f32.mrf.mxu0
      %v1904 = vadd.f32 0.0, %v1903
      %v1905 = vpop.f32.mrf.mxu0
      %1906 = vdwg.mxu0
      %1907 = vmatpush.bf16.msra.mxu0 0
      %1908 = vmatpush.bf16.msra.mxu0 0
      %1909 = vmatpush.bf16.msra.mxu0 0
      %1910 = vmatpush.bf16.msra.mxu0 0
      %1911 = vmatpush.bf16.msra.mxu0 0
      %1912 = vmatpush.bf16.msra.mxu0 0
      %1913 = vmatpush.bf16.msra.mxu0 0
      %1914 = vmatpush.bf16.msra.mxu0 %v1851
      %1915 = vmatmul.bf16.gmra.mxu0 %v1839
      %v1916 = vpop.f32.mrf.mxu0
      %v1917 = vadd.f32 0.0, %v1916
      %v1918 = vpop.f32.mrf.mxu0
      %1919 = vdwg.mxu0
      %1920 = vmatpush.bf16.msra.mxu0 0
      %1921 = vmatpush.bf16.msra.mxu0 0
      %1922 = vmatpush.bf16.msra.mxu0 0
      %1923 = vmatpush.bf16.msra.mxu0 0
      %1924 = vmatpush.bf16.msra.mxu0 0
      %1925 = vmatpush.bf16.msra.mxu0 0
      %1926 = vmatpush.bf16.msra.mxu0 0
      %1927 = vmatpush.bf16.msra.mxu0 %v1854
      %1928 = vmatmul.bf16.gmra.mxu0 %v1839
      %v1929 = vpop.f32.mrf.mxu0
      %v1930 = vadd.f32 0.0, %v1929
      %v1931 = vpop.f32.mrf.mxu0
      %1932 = vdwg.mxu0
      %1933 = vmatpush.bf16.msra.mxu0 0
      %1934 = vmatpush.bf16.msra.mxu0 0
      %1935 = vmatpush.bf16.msra.mxu0 0
      %1936 = vmatpush.bf16.msra.mxu0 0
      %1937 = vmatpush.bf16.msra.mxu0 0
      %1938 = vmatpush.bf16.msra.mxu0 0
      %1939 = vmatpush.bf16.msra.mxu0 0
      %1940 = vmatpush.bf16.msra.mxu0 %v1857
      %1941 = vmatmul.bf16.gmra.mxu0 %v1839
      %v1942 = vpop.f32.mrf.mxu0
      %v1943 = vadd.f32 0.0, %v1942
      %v1944 = vpop.f32.mrf.mxu0
      %1945 = vdwg.mxu0
      %1946 = vmatpush.bf16.msra.mxu0 0
      %1947 = vmatpush.bf16.msra.mxu0 0
      %1948 = vmatpush.bf16.msra.mxu0 0
      %1949 = vmatpush.bf16.msra.mxu0 0
      %1950 = vmatpush.bf16.msra.mxu0 0
      %1951 = vmatpush.bf16.msra.mxu0 0
      %1952 = vmatpush.bf16.msra.mxu0 0
      %1953 = vmatpush.bf16.msra.mxu0 %v1860
      %1954 = vmatmul.bf16.gmra.mxu0 %v1839
      %v1955 = vpop.f32.mrf.mxu0
      %v1956 = vadd.f32 0.0, %v1955
      %v1957 = vpop.f32.mrf.mxu0
      %1958 = vdwg.mxu0
      %1959 = vmatpush.bf16.msra.mxu0 0
      %1960 = vmatpush.bf16.msra.mxu0 0
      %1961 = vmatpush.bf16.msra.mxu0 0
      %1962 = vmatpush.bf16.msra.mxu0 0
      %1963 = vmatpush.bf16.msra.mxu0 0
      %1964 = vmatpush.bf16.msra.mxu0 0
      %1965 = vmatpush.bf16.msra.mxu0 0
      %1966 = vmatpush.bf16.msra.mxu0 %v1863
      %1967 = vmatmul.bf16.gmra.mxu0 %v1839
      %v1968 = vpop.f32.mrf.mxu0
      %v1969 = vadd.f32 0.0, %v1968
      %v1970 = vpop.f32.mrf.mxu0
      %1971 = vdwg.mxu0
      %1972 = vmatpush.bf16.msra.mxu0 0
      %1973 = vmatpush.bf16.msra.mxu0 0
      %1974 = vmatpush.bf16.msra.mxu0 0
      %1975 = vmatpush.bf16.msra.mxu0 0
      %1976 = vmatpush.bf16.msra.mxu0 0
      %1977 = vmatpush.bf16.msra.mxu0 0
      %1978 = vmatpush.bf16.msra.mxu0 0
      %1979 = vmatpush.bf16.msra.mxu0 %v1866
      %1980 = vmatmul.bf16.gmra.mxu0 %v1839
      %v1981 = vpop.f32.mrf.mxu0
      %v1982 = vadd.f32 0.0, %v1981
      %v1983 = vpop.f32.mrf.mxu0
      %1984 = vdwg.mxu0
      %v1985 = vadd.f32 %v1773, %v1878
      %v1986 = vadd.f32 %v1774, %v1891
      %v1987 = vadd.f32 %v1775, %v1904
      %v1988 = vadd.f32 %v1776, %v1917
      %v1989 = vadd.f32 %v1777, %v1930
      %v1990 = vadd.f32 %v1778, %v1943
      %v1991 = vadd.f32 %v1779, %v1956
      %v1992 = vadd.f32 %v1780, %v1969
      %v1993 = vadd.f32 %v1781, %v1982
      %v1994 = vld [vmem:[%s2] sm:$0xf]
      %1996 = vset.pattern.permute.xlu0 0
      %1997 = vperm.xlu0 %1996, %v1994
      %v1998 = vpop.permute.xlu0 %1997
      %v2000 = vadd.f32 %v1985, %v1998
      %v2001 = vadd.f32 %v1986, %v1998
      %v2002 = vadd.f32 %v1987, %v1998
      %v2003 = vadd.f32 %v1988, %v1998
      %v2004 = vadd.f32 %v1989, %v1998
      %v2005 = vadd.f32 %v1990, %v1998
      %v2006 = vadd.f32 %v1991, %v1998
      %v2007 = vadd.f32 %v1992, %v1998
      %v2008 = vadd.f32 %v1993, %v1998
      %v2009 = vmax.f32 %v2000, 0.0
      %v2010 = vmax.f32 %v2001, 0.0
      %v2011 = vmax.f32 %v2002, 0.0
      %v2012 = vmax.f32 %v2003, 0.0
      %v2013 = vmax.f32 %v2004, 0.0
      %v2014 = vmax.f32 %v2005, 0.0
      %v2015 = vmax.f32 %v2006, 0.0
      %v2016 = vmax.f32 %v2007, 0.0
      %v2017 = vmax.f32 %v2008, 0.0
      %v2018 = vpack.c.bf16 %v2010, %v2009
      %v2019 = vpack.c.bf16 %v2012, %v2011
      %v2020 = vpack.c.bf16 %v2014, %v2013
      %v2021 = vpack.c.bf16 %v2016, %v2015
      %v2022 = vpack.c.bf16 %v2017, %v2017
      %v2028 = vrot.slane %v2018, 2
      %v2029 = vrot.slane %v2019, 4
      %v2030 = vrot.slane %v2019, 6
      %v2031 = vrot.slane %v2020, 2
      %v2032 = vrot.slane %v2021, 4
      %v2033 = vrot.slane %v2021, 6
      %v2034 = vrot.slane %v2022, 2
      %v2037 = vsel %vm234, %v2018, %v2028
      %vm2038 = vcmask 1045508
      %v2041 = vsel %vm2038, %v2029, %v2030
      %vm2042 = vcmask 1043456
      %v2043 = vsel %vm2042, %v2037, %v2041
      %v2046 = vsel %vm234, %v2020, %v2031
      %v2049 = vsel %vm2038, %v2032, %v2033
      %v2050 = vsel %vm2042, %v2046, %v2049
      %v2053 = vsel %vm234, %v2022, %v2034
      %2057 = vst [vmem:[%s170] sm:$0xff] %v2043
      %2058 = vst [vmem:[%s170 + $0x8] sm:$0xff] %v2050
      %vm2059 = vcmask 517120
      %2060 = vst.msk [vmem:[%s170 + $0x10] sm:$0x3] %vm2059, %v2053
      %p2061 = scmp.lt.s32.totalorder %s14, 1
      %s2062 = scalar_select %p2061, %s14, 1
      %s2063 = smul.addr %s2062, 9
      %s2064 = smul.addr %s2063, 2
      %s2065 = scalar_lea.vmem %s3, %s2064
      // Predicated region
      $region33: #{_lambda_.11} parent=31 // pred_check
        %p2066 = pneg %p100
      $region34: #{_lambda_.11} parent=31 // pred_check_branch
        %2068 = sbr.rel (%p2066) target = $region36
      $region35: #{_lambda_.11} parent=31 // pred_region
        _
      $region36: #{_lambda_.11} parent=31 // pred_fallthru
        _
    $region32: #{_lambda_.11} parent=5 // pred_fallthru
      _
    %p2069 = scmp.le.s32.totalorder 2, %s9
    // Predicated region
    $region37: #{_lambda_.11} parent=5 // pred_check
      %p2070 = pneg %p2069
    $region38: #{_lambda_.11} parent=5 // pred_check_branch
      %2072 = sbr.rel (%p2070) target = $region40
    $region39: #{_lambda_.11} parent=5 // pred_region
      %s2073 = ssub.s32 %s9, 2
      // Predicated region
      $region41: #{_lambda_.11} parent=39 // pred_check
        %p2074 = pneg %p106
      $region42: #{_lambda_.11} parent=39 // pred_check_branch
        %2076 = sbr.rel (%p2074) target = $region44
      $region43: #{_lambda_.11} parent=39 // pred_region
        %p2077 = scmp.lt.s32.totalorder %s15, 1
        %s2078 = scalar_select %p2077, %s15, 1
        %s2079 = smul.addr %s2078, 9
        %s2080 = smul.addr %s2079, 2
        %s2081 = scalar_lea.vmem %s3, %s2080
      $region44: #{_lambda_.11} parent=39 // pred_fallthru
        _
    $region40: #{_lambda_.11} parent=5 // pred_fallthru
      _
  $region6: #{_lambda_.11} parent=0 // loop_footer
    %s13 = sadd.s32 1, %s9
  $region7: #{_lambda_.11} parent=0 // loop_footer_branch
    %8 = sbr.rel target = $region3
  $region8: #{_lambda_.11} parent=0 // loop_exit
    _

// kernel: _lambda_.12
$region0: #{_lambda_.12}
  #allocation0 [shape = 'u32[]', space=smem, size = 0x4, offset = 0x4, fixed_abs, tag = 'smem constant byte address 0x4 - core index']
  #allocation1 [shape = 'u32[72,128]{1,0:T(1,128)}', space=vmem, size = 0x9000, scoped, tag = 'internal scratch']
  %s0 = inlined_call_operand.vmem [shape: bf16[2,4,384], index: 0, kind: input, shape index: {}]
  %s1 = inlined_call_operand.vmem [shape: bf16[9,8,4], index: 1, kind: input, shape index: {}]
  %s2 = inlined_call_operand.vmem [shape: f32[8,1], index: 2, kind: input, shape index: {}]
  %s3 = inlined_call_operand.vmem [shape: bf16[2,8,288], index: 3, kind: output, shape index: {}]
  %s4 = sld [smem:[#allocation0]]
  $region45: #{_lambda_.12} parent=0
    _
  %s6 = ssub.s32 1, %s4
  %s7 = scalar_select 0, %s6, %s4
  loop: start=0, step=1, limit=4
  $region2: #{_lambda_.12} parent=0 // loop_pre_header
    _
  $region3: #{_lambda_.12} parent=0 // loop_header
    %s9 = sphi 0, %s13
    %p10 = scmp.ge.s32.totalorder %s9, 4
    %s19 = sphi 0, %s21
    %s22 = sphi 0, %s19
    %s23 = sphi 0, %s22
    %s39 = sphi 0, %s23
    %s43 = sphi 0, %s43
    %s45 = sphi 0, %s43
    %s46 = sphi 0, %s45
    %s60 = sphi 0, %s46
    %s64 = sphi 0, %s64
    %s66 = sphi 0, %s64
    %s67 = sphi 0, %s66
    %s81 = sphi 0, %s67
    %s87 = sphi 0, %s89
    %s90 = sphi 0, %s87
    %s91 = sphi 0, %s90
    %s107 = sphi 0, %s91
  $region4: #{_lambda_.12} parent=0 // loop_header_branch
    %12 = sbr.rel (%p10) target = $region8
  $region5: #{_lambda_.12} parent=0 // loop_body
    %s14 = ssub.s32 %s9, 1
    %s15 = ssub.s32 %s9, 2
    %s16 = sadd.s32 %s9, 1
    %s17 = ssub.s32 %s9, %s16
    %p18 = scmp.eq.s32.totalorder %s17, 0
    %s20 = sadd.s32 %s19, 1
    %s21 = scalar_select %p18, %s19, %s20
    %p24 = pneg %p18
    %p25 = scmp.eq.s32.totalorder %s9, 1
    %p26 = por %p24, %p25
    %p27 = scmp.ne.s32.totalorder %s19, %s22
    %p28 = scmp.eq.s32.totalorder %s9, 0
    %p29 = por %p27, %p28
    %p30 = scmp.ne.s32.totalorder %s19, %s22
    %p31 = scmp.eq.s32.totalorder %s14, 1
    %p32 = por %p30, %p31
    %p33 = scmp.ne.s32.totalorder %s22, %s23
    %p34 = scmp.eq.s32.totalorder %s14, 0
    %p35 = por %p33, %p34
    %p36 = scmp.ne.s32.totalorder %s22, %s23
    %p37 = scmp.eq.s32.totalorder %s15, 1
    %p38 = por %p36, %p37
    %p40 = scmp.ne.s32.totalorder %s23, %s39
    %p41 = scmp.eq.s32.totalorder %s15, 0
    %p42 = por %p40, %p41
    %s44 = sadd.s32 %s43, 1
    %p47 = scmp.eq.s32.totalorder %s9, 1
    %p48 = scmp.ne.s32.totalorder %s43, %s45
    %p49 = scmp.eq.s32.totalorder %s9, 0
    %p50 = por %p48, %p49
    %p51 = scmp.ne.s32.totalorder %s43, %s45
    %p52 = scmp.eq.s32.totalorder %s14, 1
    %p53 = por %p51, %p52
    %p54 = scmp.ne.s32.totalorder %s45, %s46
    %p55 = scmp.eq.s32.totalorder %s14, 0
    %p56 = por %p54, %p55
    %p57 = scmp.ne.s32.totalorder %s45, %s46
    %p58 = scmp.eq.s32.totalorder %s15, 1
    %p59 = por %p57, %p58
    %p61 = scmp.ne.s32.totalorder %s46, %s60
    %p62 = scmp.eq.s32.totalorder %s15, 0
    %p63 = por %p61, %p62
    %s65 = sadd.s32 %s64, 1
    %p68 = scmp.eq.s32.totalorder %s9, 1
    %p69 = scmp.ne.s32.totalorder %s64, %s66
    %p70 = scmp.eq.s32.totalorder %s9, 0
    %p71 = por %p69, %p70
    %p72 = scmp.ne.s32.totalorder %s64, %s66
    %p73 = scmp.eq.s32.totalorder %s14, 1
    %p74 = por %p72, %p73
    %p75 = scmp.ne.s32.totalorder %s66, %s67
    %p76 = scmp.eq.s32.totalorder %s14, 0
    %p77 = por %p75, %p76
    %p78 = scmp.ne.s32.totalorder %s66, %s67
    %p79 = scmp.eq.s32.totalorder %s15, 1
    %p80 = por %p78, %p79
    %p82 = scmp.ne.s32.totalorder %s67, %s81
    %p83 = scmp.eq.s32.totalorder %s15, 0
    %p84 = por %p82, %p83
    %s85 = ssub.s32 %s9, %s16
    %p86 = scmp.eq.s32.totalorder %s85, 0
    %s88 = sadd.s32 %s87, 1
    %s89 = scalar_select %p86, %s87, %s88
    %p92 = pneg %p86
    %p93 = scmp.eq.s32.totalorder %s9, 1
    %p94 = por %p92, %p93
    %p95 = scmp.ne.s32.totalorder %s87, %s90
    %p96 = scmp.eq.s32.totalorder %s9, 0
    %p97 = por %p95, %p96
    %p98 = scmp.ne.s32.totalorder %s87, %s90
    %p99 = scmp.eq.s32.totalorder %s14, 1
    %p100 = por %p98, %p99
    %p101 = scmp.ne.s32.totalorder %s90, %s91
    %p102 = scmp.eq.s32.totalorder %s14, 0
    %p103 = por %p101, %p102
    %p104 = scmp.ne.s32.totalorder %s90, %s91
    %p105 = scmp.eq.s32.totalorder %s15, 1
    %p106 = por %p104, %p105
    %p108 = scmp.ne.s32.totalorder %s91, %s107
    %p109 = scmp.eq.s32.totalorder %s15, 0
    %p110 = por %p108, %p109
    %p111 = scmp.le.s32.totalorder 1, %s9
    %p112 = scmp.lt.s32.totalorder %s9, 3
    %p113 = pnand %p111, %p112
    %p114 = pneg %p113
    // Predicated region
    $region9: #{_lambda_.12} parent=5 // pred_check
      _
    $region10: #{_lambda_.12} parent=5 // pred_check_branch
      %116 = sbr.rel (%p113) target = $region12
    $region11: #{_lambda_.12} parent=5 // pred_region
      %s117 = ssub.s32 %s9, 1
      // Predicated region
      $region13: #{_lambda_.12} parent=11 // pred_check
        %p118 = pneg %p56
      $region14: #{_lambda_.12} parent=11 // pred_check_branch
        %120 = sbr.rel (%p118) target = $region16
      $region15: #{_lambda_.12} parent=11 // pred_region
        _
      $region16: #{_lambda_.12} parent=11 // pred_fallthru
        _
      // Predicated region
      $region17: #{_lambda_.12} parent=11 // pred_check
        %p121 = pneg %p77
      $region18: #{_lambda_.12} parent=11 // pred_check_branch
        %123 = sbr.rel (%p121) target = $region20
      $region19: #{_lambda_.12} parent=11 // pred_region
        _
      $region20: #{_lambda_.12} parent=11 // pred_fallthru
        _
    $region12: #{_lambda_.12} parent=5 // pred_fallthru
      _
    %p124 = scmp.lt.s32.totalorder %s9, 2
    // Predicated region
    $region21: #{_lambda_.12} parent=5 // pred_check
      %p125 = pneg %p124
    $region22: #{_lambda_.12} parent=5 // pred_check_branch
      %127 = sbr.rel (%p125) target = $region24
    $region23: #{_lambda_.12} parent=5 // pred_region
      // Predicated region
      $region25: #{_lambda_.12} parent=23 // pred_check
        %p128 = pneg %p29
      $region26: #{_lambda_.12} parent=23 // pred_check_branch
        %130 = sbr.rel (%p128) target = $region28
      $region27: #{_lambda_.12} parent=23 // pred_region
        %p131 = scmp.lt.s32.totalorder %s9, 1
        %s132 = scalar_select %p131, %s9, 1
        %s133 = smul.addr %s132, 3
        %s134 = smul.addr %s133, 2
        %s135 = scalar_lea.vmem %s0, %s134
      $region28: #{_lambda_.12} parent=23 // pred_fallthru
        _
    $region24: #{_lambda_.12} parent=5 // pred_fallthru
      _
    %p136 = scmp.le.s32.totalorder 1, %s9
    %p137 = scmp.lt.s32.totalorder %s9, 3
    %p138 = pnand %p136, %p137
    %p139 = pneg %p138
    // Predicated region
    $region29: #{_lambda_.12} parent=5 // pred_check
      _
    $region30: #{_lambda_.12} parent=5 // pred_check_branch
      %141 = sbr.rel (%p138) target = $region32
    $region31: #{_lambda_.12} parent=5 // pred_region
      %s142 = ssub.s32 %s9, 1
      %p143 = scmp.lt.s32.totalorder %s14, 1
      %s144 = scalar_select %p143, %s14, 1
      %s145 = smul.addr %s144, 3
      %s146 = smul.addr %s145, 2
      %s147 = scalar_lea.vmem %s0, %s146
      %p148 = pneg %p35
      %p149 = pneg %p32
      %p150 = pneg %p56
      %p151 = pneg %p53
      %p152 = pneg %p77
      %p153 = pneg %p74
      %p154 = pneg %p103
      %p155 = pneg %p100
      %p156 = scmp.lt.s32.totalorder %s14, 1
      %s157 = scalar_select %p156, %s14, 1
      %s158 = smul.addr %s157, 3
      %s159 = smul.addr %s158, 4
      %s160 = scalar_lea.vmem %s3, %s159
      %p161 = scmp.lt.s32.totalorder %s14, 1
      %s162 = scalar_select %p161, %s14, 1
      %s163 = smul.addr %s162, 3
      %s164 = smul.addr %s163, 2
      %s165 = scalar_lea.vmem %s0, %s164
      %p166 = scmp.lt.s32.totalorder %s14, 1
      %s167 = scalar_select %p166, %s14, 1
      %s168 = smul.addr %s167, 3
      %s169 = smul.addr %s168, 4
      %s170 = scalar_lea.vmem %s3, %s169
      %v172 = vld [vmem:[%s165] sm:$0x3f]
      %v173 = vld [vmem:[%s1] sm:$0xf]
      %s174 = scalar_lea.vmem %s1, 4
      %v175 = vld [vmem:[%s174] sm:$0xf]
      %177 = vst [vmem:[#allocation1] ss:$4 sm:$0xff] %v172
      %v178 = vld.sshfl [vmem:[#allocation1] sm:$0xff pattern:$0x73625140]
      %v180 = vld.sshfl [vmem:[#allocation1 + $0x8] sm:$0xff pattern:$0x73625140]
      %v182 = vld.sshfl [vmem:[#allocation1 + $0x10] sm:$0xff pattern:$0x73625140]
      %184 = vrot.lane.b32.xlu0 %v178, 127
      %v185 = vpop.permute.xlu0 %184
      %186 = vrot.lane.b32.xlu0 %v180, 127
      %v187 = vpop.permute.xlu0 %186
      %188 = vrot.lane.b32.xlu0 %v182, 127
      %v189 = vpop.permute.xlu0 %188
      %vm190 = vcmask 1039360
      %v191 = vsel %vm190, %v185, %v187
      %v192 = vsel %vm190, %v187, %v189
      %vm193 = vcmask 31744
      %v195 = vsel %vm193, %v175, 0
      %vm197 = vcmask 1041408
      %v199 = vsel %vm197, %v191, 0
      %v202 = vsel %vm197, %v192, 0
      %v205 = vsel %vm197, %v189, 0
      %207 = vmatpush.bf16.msra.mxu0 0
      %208 = vmatpush.bf16.msra.mxu0 0
      %209 = vmatpush.bf16.msra.mxu0 0
      %210 = vmatpush.bf16.msra.mxu0 0
      %211 = vmatpush.bf16.msra.mxu0 0
      %212 = vmatpush.bf16.msra.mxu0 0
      %213 = vmatpush.bf16.msra.mxu0 0
      %214 = vmatpush.bf16.msra.mxu0 %v199
      %215 = vmatmul.bf16.gmra.mxu0 %v195
      %v216 = vpop.f32.mrf.mxu0
      %v217 = vadd.f32 0.0, %v216
      %v218 = vpop.f32.mrf.mxu0
      %219 = vdwg.mxu0
      %220 = vmatpush.bf16.msra.mxu0 0
      %221 = vmatpush.bf16.msra.mxu0 0
      %222 = vmatpush.bf16.msra.mxu0 0
      %223 = vmatpush.bf16.msra.mxu0 0
      %224 = vmatpush.bf16.msra.mxu0 0
      %225 = vmatpush.bf16.msra.mxu0 0
      %226 = vmatpush.bf16.msra.mxu0 0
      %227 = vmatpush.bf16.msra.mxu0 %v202
      %228 = vmatmul.bf16.gmra.mxu0 %v195
      %v229 = vpop.f32.mrf.mxu0
      %v230 = vadd.f32 0.0, %v229
      %v231 = vpop.f32.mrf.mxu0
      %232 = vdwg.mxu0
      %233 = vmatpush.bf16.msra.mxu0 0
      %234 = vmatpush.bf16.msra.mxu0 0
      %235 = vmatpush.bf16.msra.mxu0 0
      %236 = vmatpush.bf16.msra.mxu0 0
      %237 = vmatpush.bf16.msra.mxu0 0
      %238 = vmatpush.bf16.msra.mxu0 0
      %239 = vmatpush.bf16.msra.mxu0 0
      %240 = vmatpush.bf16.msra.mxu0 %v205
      %241 = vmatmul.bf16.gmra.mxu0 %v195
      %v242 = vpop.f32.mrf.mxu0
      %v243 = vadd.f32 0.0, %v242
      %v244 = vpop.f32.mrf.mxu0
      %245 = vdwg.mxu0
      %246 = vst [vmem:[#allocation1] ss:$4 sm:$0xff] %v172
      %v247 = vld.sshfl [vmem:[#allocation1] sm:$0xff pattern:$0x73625140]
      %v248 = vld.sshfl [vmem:[#allocation1 + $0x8] sm:$0xff pattern:$0x73625140]
      %v249 = vld.sshfl [vmem:[#allocation1 + $0x10] sm:$0xff pattern:$0x73625140]
      %v251 = vsel %vm193, %v173, 0
      %v253 = vsel %vm197, %v247, 0
      %v255 = vsel %vm197, %v248, 0
      %v257 = vsel %vm197, %v249, 0
      %259 = vmatpush.bf16.msra.mxu0 0
      %260 = vmatpush.bf16.msra.mxu0 0
      %261 = vmatpush.bf16.msra.mxu0 0
      %262 = vmatpush.bf16.msra.mxu0 0
      %263 = vmatpush.bf16.msra.mxu0 0
      %264 = vmatpush.bf16.msra.mxu0 0
      %265 = vmatpush.bf16.msra.mxu0 0
      %266 = vmatpush.bf16.msra.mxu0 %v253
      %267 = vmatmul.bf16.gmra.mxu0 %v251
      %v268 = vpop.f32.mrf.mxu0
      %v269 = vadd.f32 %v217, %v268
      %v270 = vpop.f32.mrf.mxu0
      %271 = vdwg.mxu0
      %272 = vmatpush.bf16.msra.mxu0 0
      %273 = vmatpush.bf16.msra.mxu0 0
      %274 = vmatpush.bf16.msra.mxu0 0
      %275 = vmatpush.bf16.msra.mxu0 0
      %276 = vmatpush.bf16.msra.mxu0 0
      %277 = vmatpush.bf16.msra.mxu0 0
      %278 = vmatpush.bf16.msra.mxu0 0
      %279 = vmatpush.bf16.msra.mxu0 %v255
      %280 = vmatmul.bf16.gmra.mxu0 %v251
      %v281 = vpop.f32.mrf.mxu0
      %v282 = vadd.f32 %v230, %v281
      %v283 = vpop.f32.mrf.mxu0
      %284 = vdwg.mxu0
      %285 = vmatpush.bf16.msra.mxu0 0
      %286 = vmatpush.bf16.msra.mxu0 0
      %287 = vmatpush.bf16.msra.mxu0 0
      %288 = vmatpush.bf16.msra.mxu0 0
      %289 = vmatpush.bf16.msra.mxu0 0
      %290 = vmatpush.bf16.msra.mxu0 0
      %291 = vmatpush.bf16.msra.mxu0 0
      %292 = vmatpush.bf16.msra.mxu0 %v257
      %293 = vmatmul.bf16.gmra.mxu0 %v251
      %v294 = vpop.f32.mrf.mxu0
      %v295 = vadd.f32 %v243, %v294
      %v296 = vpop.f32.mrf.mxu0
      %297 = vdwg.mxu0
      %s298 = scalar_lea.vmem %s1, 8
      %v299 = vld [vmem:[%s298] sm:$0xf]
      %300 = vst [vmem:[#allocation1] ss:$4 sm:$0xff] %v172
      %v301 = vld.sshfl [vmem:[#allocation1] sm:$0xff pattern:$0x73625140]
      %v303 = vld.sshfl [vmem:[#allocation1 + $0x8] sm:$0xff pattern:$0x73625140]
      %v305 = vld.sshfl [vmem:[#allocation1 + $0x10] sm:$0xff pattern:$0x73625140]
      %307 = vrot.lane.b32.xlu0 %v301, 126
      %v308 = vpop.permute.xlu0 %307
      %309 = vrot.lane.b32.xlu0 %v303, 126
      %v310 = vpop.permute.xlu0 %309
      %311 = vrot.lane.b32.xlu0 %v305, 126
      %v312 = vpop.permute.xlu0 %311
      %vm313 = vcmask 1031168
      %v314 = vsel %vm313, %v308, %v310
      %v315 = vsel %vm313, %v310, %v312
      %v317 = vsel %vm193, %v299, 0
      %v320 = vsel %vm197, %v314, 0
      %v323 = vsel %vm197, %v315, 0
      %v326 = vsel %vm197, %v312, 0
      %328 = vmatpush.bf16.msra.mxu0 0
      %329 = vmatpush.bf16.msra.mxu0 0
      %330 = vmatpush.bf16.msra.mxu0 0
      %331 = vmatpush.bf16.msra.mxu0 0
      %332 = vmatpush.bf16.msra.mxu0 0
      %333 = vmatpush.bf16.msra.mxu0 0
      %334 = vmatpush.bf16.msra.mxu0 0
      %335 = vmatpush.bf16.msra.mxu0 %v320
      %336 = vmatmul.bf16.gmra.mxu0 %v317
      %v337 = vpop.f32.mrf.mxu0
      %v338 = vadd.f32 0.0, %v337
      %v339 = vpop.f32.mrf.mxu0
      %340 = vdwg.mxu0
      %341 = vmatpush.bf16.msra.mxu0 0
      %342 = vmatpush.bf16.msra.mxu0 0
      %343 = vmatpush.bf16.msra.mxu0 0
      %344 = vmatpush.bf16.msra.mxu0 0
      %345 = vmatpush.bf16.msra.mxu0 0
      %346 = vmatpush.bf16.msra.mxu0 0
      %347 = vmatpush.bf16.msra.mxu0 0
      %348 = vmatpush.bf16.msra.mxu0 %v323
      %349 = vmatmul.bf16.gmra.mxu0 %v317
      %v350 = vpop.f32.mrf.mxu0
      %v351 = vadd.f32 0.0, %v350
      %v352 = vpop.f32.mrf.mxu0
      %353 = vdwg.mxu0
      %354 = vmatpush.bf16.msra.mxu0 0
      %355 = vmatpush.bf16.msra.mxu0 0
      %356 = vmatpush.bf16.msra.mxu0 0
      %357 = vmatpush.bf16.msra.mxu0 0
      %358 = vmatpush.bf16.msra.mxu0 0
      %359 = vmatpush.bf16.msra.mxu0 0
      %360 = vmatpush.bf16.msra.mxu0 0
      %361 = vmatpush.bf16.msra.mxu0 %v326
      %362 = vmatmul.bf16.gmra.mxu0 %v317
      %v363 = vpop.f32.mrf.mxu0
      %v364 = vadd.f32 0.0, %v363
      %v365 = vpop.f32.mrf.mxu0
      %366 = vdwg.mxu0
      %v367 = vadd.f32 %v269, %v338
      %v368 = vadd.f32 %v282, %v351
      %v369 = vadd.f32 %v295, %v364
      %s370 = scalar_lea.vmem %s1, 12
      %v371 = vld [vmem:[%s370] sm:$0xf]
      %372 = vst [vmem:[#allocation1] ss:$4 sm:$0xff] %v172
      %v373 = vld.sshfl [vmem:[#allocation1] sm:$0xff pattern:$0x73625140]
      %v375 = vld.sshfl [vmem:[#allocation1 + $0x8] sm:$0xff pattern:$0x73625140]
      %v377 = vld.sshfl [vmem:[#allocation1 + $0x10] sm:$0xff pattern:$0x73625140]
      %379 = vrot.lane.b32.xlu0 %v373, 110
      %v380 = vpop.permute.xlu0 %379
      %381 = vrot.lane.b32.xlu0 %v375, 110
      %v382 = vpop.permute.xlu0 %381
      %383 = vrot.lane.b32.xlu0 %v377, 110
      %v384 = vpop.permute.xlu0 %383
      %vm385 = vcmask 900096
      %v386 = vsel %vm385, %v380, %v382
      %v387 = vsel %vm385, %v382, %v384
      %v389 = vsel %vm193, %v371, 0
      %v392 = vsel %vm197, %v386, 0
      %v395 = vsel %vm197, %v387, 0
      %v398 = vsel %vm197, %v384, 0
      %400 = vmatpush.bf16.msra.mxu0 0
      %401 = vmatpush.bf16.msra.mxu0 0
      %402 = vmatpush.bf16.msra.mxu0 0
      %403 = vmatpush.bf16.msra.mxu0 0
      %404 = vmatpush.bf16.msra.mxu0 0
      %405 = vmatpush.bf16.msra.mxu0 0
      %406 = vmatpush.bf16.msra.mxu0 0
      %407 = vmatpush.bf16.msra.mxu0 %v392
      %408 = vmatmul.bf16.gmra.mxu0 %v389
      %v409 = vpop.f32.mrf.mxu0
      %v410 = vadd.f32 0.0, %v409
      %v411 = vpop.f32.mrf.mxu0
      %412 = vdwg.mxu0
      %413 = vmatpush.bf16.msra.mxu0 0
      %414 = vmatpush.bf16.msra.mxu0 0
      %415 = vmatpush.bf16.msra.mxu0 0
      %416 = vmatpush.bf16.msra.mxu0 0
      %417 = vmatpush.bf16.msra.mxu0 0
      %418 = vmatpush.bf16.msra.mxu0 0
      %419 = vmatpush.bf16.msra.mxu0 0
      %420 = vmatpush.bf16.msra.mxu0 %v395
      %421 = vmatmul.bf16.gmra.mxu0 %v389
      %v422 = vpop.f32.mrf.mxu0
      %v423 = vadd.f32 0.0, %v422
      %v424 = vpop.f32.mrf.mxu0
      %425 = vdwg.mxu0
      %426 = vmatpush.bf16.msra.mxu0 0
      %427 = vmatpush.bf16.msra.mxu0 0
      %428 = vmatpush.bf16.msra.mxu0 0
      %429 = vmatpush.bf16.msra.mxu0 0
      %430 = vmatpush.bf16.msra.mxu0 0
      %431 = vmatpush.bf16.msra.mxu0 0
      %432 = vmatpush.bf16.msra.mxu0 0
      %433 = vmatpush.bf16.msra.mxu0 %v398
      %434 = vmatmul.bf16.gmra.mxu0 %v389
      %v435 = vpop.f32.mrf.mxu0
      %v436 = vadd.f32 0.0, %v435
      %v437 = vpop.f32.mrf.mxu0
      %438 = vdwg.mxu0
      %v439 = vadd.f32 %v367, %v410
      %v440 = vadd.f32 %v368, %v423
      %v441 = vadd.f32 %v369, %v436
      %s442 = scalar_lea.vmem %s1, 16
      %v443 = vld [vmem:[%s442] sm:$0xf]
      %444 = vst [vmem:[#allocation1] ss:$4 sm:$0xff] %v172
      %v445 = vld.sshfl [vmem:[#allocation1] sm:$0xff pattern:$0x73625140]
      %v447 = vld.sshfl [vmem:[#allocation1 + $0x8] sm:$0xff pattern:$0x73625140]
      %v449 = vld.sshfl [vmem:[#allocation1 + $0x10] sm:$0xff pattern:$0x73625140]
      %451 = vrot.lane.b32.xlu0 %v445, 109
      %v452 = vpop.permute.xlu0 %451
      %453 = vrot.lane.b32.xlu0 %v447, 109
      %v454 = vpop.permute.xlu0 %453
      %455 = vrot.lane.b32.xlu0 %v449, 109
      %v456 = vpop.permute.xlu0 %455
      %vm457 = vcmask 891904
      %v458 = vsel %vm457, %v452, %v454
      %v459 = vsel %vm457, %v454, %v456
      %v461 = vsel %vm193, %v443, 0
      %v464 = vsel %vm197, %v458, 0
      %v467 = vsel %vm197, %v459, 0
      %v470 = vsel %vm197, %v456, 0
      %472 = vmatpush.bf16.msra.mxu0 0
      %473 = vmatpush.bf16.msra.mxu0 0
      %474 = vmatpush.bf16.msra.mxu0 0
      %475 = vmatpush.bf16.msra.mxu0 0
      %476 = vmatpush.bf16.msra.mxu0 0
      %477 = vmatpush.bf16.msra.mxu0 0
      %478 = vmatpush.bf16.msra.mxu0 0
      %479 = vmatpush.bf16.msra.mxu0 %v464
      %480 = vmatmul.bf16.gmra.mxu0 %v461
      %v481 = vpop.f32.mrf.mxu0
      %v482 = vadd.f32 0.0, %v481
      %v483 = vpop.f32.mrf.mxu0
      %484 = vdwg.mxu0
      %485 = vmatpush.bf16.msra.mxu0 0
      %486 = vmatpush.bf16.msra.mxu0 0
      %487 = vmatpush.bf16.msra.mxu0 0
      %488 = vmatpush.bf16.msra.mxu0 0
      %489 = vmatpush.bf16.msra.mxu0 0
      %490 = vmatpush.bf16.msra.mxu0 0
      %491 = vmatpush.bf16.msra.mxu0 0
      %492 = vmatpush.bf16.msra.mxu0 %v467
      %493 = vmatmul.bf16.gmra.mxu0 %v461
      %v494 = vpop.f32.mrf.mxu0
      %v495 = vadd.f32 0.0, %v494
      %v496 = vpop.f32.mrf.mxu0
      %497 = vdwg.mxu0
      %498 = vmatpush.bf16.msra.mxu0 0
      %499 = vmatpush.bf16.msra.mxu0 0
      %500 = vmatpush.bf16.msra.mxu0 0
      %501 = vmatpush.bf16.msra.mxu0 0
      %502 = vmatpush.bf16.msra.mxu0 0
      %503 = vmatpush.bf16.msra.mxu0 0
      %504 = vmatpush.bf16.msra.mxu0 0
      %505 = vmatpush.bf16.msra.mxu0 %v470
      %506 = vmatmul.bf16.gmra.mxu0 %v461
      %v507 = vpop.f32.mrf.mxu0
      %v508 = vadd.f32 0.0, %v507
      %v509 = vpop.f32.mrf.mxu0
      %510 = vdwg.mxu0
      %v511 = vadd.f32 %v439, %v482
      %v512 = vadd.f32 %v440, %v495
      %v513 = vadd.f32 %v441, %v508
      %s514 = scalar_lea.vmem %s1, 20
      %v515 = vld [vmem:[%s514] sm:$0xf]
      %516 = vst [vmem:[#allocation1] ss:$4 sm:$0xff] %v172
      %v517 = vld.sshfl [vmem:[#allocation1] sm:$0xff pattern:$0x73625140]
      %v519 = vld.sshfl [vmem:[#allocation1 + $0x8] sm:$0xff pattern:$0x73625140]
      %v521 = vld.sshfl [vmem:[#allocation1 + $0x10] sm:$0xff pattern:$0x73625140]
      %523 = vrot.lane.b32.xlu0 %v517, 108
      %v524 = vpop.permute.xlu0 %523
      %525 = vrot.lane.b32.xlu0 %v519, 108
      %v526 = vpop.permute.xlu0 %525
      %527 = vrot.lane.b32.xlu0 %v521, 108
      %v528 = vpop.permute.xlu0 %527
      %vm529 = vcmask 883712
      %v530 = vsel %vm529, %v524, %v526
      %v531 = vsel %vm529, %v526, %v528
      %v533 = vsel %vm193, %v515, 0
      %v536 = vsel %vm197, %v530, 0
      %v539 = vsel %vm197, %v531, 0
      %v542 = vsel %vm197, %v528, 0
      %544 = vmatpush.bf16.msra.mxu0 0
      %545 = vmatpush.bf16.msra.mxu0 0
      %546 = vmatpush.bf16.msra.mxu0 0
      %547 = vmatpush.bf16.msra.mxu0 0
      %548 = vmatpush.bf16.msra.mxu0 0
      %549 = vmatpush.bf16.msra.mxu0 0
      %550 = vmatpush.bf16.msra.mxu0 0
      %551 = vmatpush.bf16.msra.mxu0 %v536
      %552 = vmatmul.bf16.gmra.mxu0 %v533
      %v553 = vpop.f32.mrf.mxu0
      %v554 = vadd.f32 0.0, %v553
      %v555 = vpop.f32.mrf.mxu0
      %556 = vdwg.mxu0
      %557 = vmatpush.bf16.msra.mxu0 0
      %558 = vmatpush.bf16.msra.mxu0 0
      %559 = vmatpush.bf16.msra.mxu0 0
      %560 = vmatpush.bf16.msra.mxu0 0
      %561 = vmatpush.bf16.msra.mxu0 0
      %562 = vmatpush.bf16.msra.mxu0 0
      %563 = vmatpush.bf16.msra.mxu0 0
      %564 = vmatpush.bf16.msra.mxu0 %v539
      %565 = vmatmul.bf16.gmra.mxu0 %v533
      %v566 = vpop.f32.mrf.mxu0
      %v567 = vadd.f32 0.0, %v566
      %v568 = vpop.f32.mrf.mxu0
      %569 = vdwg.mxu0
      %570 = vmatpush.bf16.msra.mxu0 0
      %571 = vmatpush.bf16.msra.mxu0 0
      %572 = vmatpush.bf16.msra.mxu0 0
      %573 = vmatpush.bf16.msra.mxu0 0
      %574 = vmatpush.bf16.msra.mxu0 0
      %575 = vmatpush.bf16.msra.mxu0 0
      %576 = vmatpush.bf16.msra.mxu0 0
      %577 = vmatpush.bf16.msra.mxu0 %v542
      %578 = vmatmul.bf16.gmra.mxu0 %v533
      %v579 = vpop.f32.mrf.mxu0
      %v580 = vadd.f32 0.0, %v579
      %v581 = vpop.f32.mrf.mxu0
      %582 = vdwg.mxu0
      %v583 = vadd.f32 %v511, %v554
      %v584 = vadd.f32 %v512, %v567
      %v585 = vadd.f32 %v513, %v580
      %s586 = scalar_lea.vmem %s1, 24
      %v587 = vld [vmem:[%s586] sm:$0xf]
      %588 = vst [vmem:[#allocation1] ss:$4 sm:$0xff] %v172
      %v589 = vld.sshfl [vmem:[#allocation1] sm:$0xff pattern:$0x73625140]
      %v591 = vld.sshfl [vmem:[#allocation1 + $0x8] sm:$0xff pattern:$0x73625140]
      %v593 = vld.sshfl [vmem:[#allocation1 + $0x10] sm:$0xff pattern:$0x73625140]
      %595 = vrot.lane.b32.xlu0 %v589, 92
      %v596 = vpop.permute.xlu0 %595
      %597 = vrot.lane.b32.xlu0 %v591, 92
      %v598 = vpop.permute.xlu0 %597
      %599 = vrot.lane.b32.xlu0 %v593, 92
      %v600 = vpop.permute.xlu0 %599
      %vm601 = vcmask 752640
      %v602 = vsel %vm601, %v596, %v598
      %v603 = vsel %vm601, %v598, %v600
      %v605 = vsel %vm193, %v587, 0
      %v608 = vsel %vm197, %v602, 0
      %v611 = vsel %vm197, %v603, 0
      %v614 = vsel %vm197, %v600, 0
      %616 = vmatpush.bf16.msra.mxu0 0
      %617 = vmatpush.bf16.msra.mxu0 0
      %618 = vmatpush.bf16.msra.mxu0 0
      %619 = vmatpush.bf16.msra.mxu0 0
      %620 = vmatpush.bf16.msra.mxu0 0
      %621 = vmatpush.bf16.msra.mxu0 0
      %622 = vmatpush.bf16.msra.mxu0 0
      %623 = vmatpush.bf16.msra.mxu0 %v608
      %624 = vmatmul.bf16.gmra.mxu0 %v605
      %v625 = vpop.f32.mrf.mxu0
      %v626 = vadd.f32 0.0, %v625
      %v627 = vpop.f32.mrf.mxu0
      %628 = vdwg.mxu0
      %629 = vmatpush.bf16.msra.mxu0 0
      %630 = vmatpush.bf16.msra.mxu0 0
      %631 = vmatpush.bf16.msra.mxu0 0
      %632 = vmatpush.bf16.msra.mxu0 0
      %633 = vmatpush.bf16.msra.mxu0 0
      %634 = vmatpush.bf16.msra.mxu0 0
      %635 = vmatpush.bf16.msra.mxu0 0
      %636 = vmatpush.bf16.msra.mxu0 %v611
      %637 = vmatmul.bf16.gmra.mxu0 %v605
      %v638 = vpop.f32.mrf.mxu0
      %v639 = vadd.f32 0.0, %v638
      %v640 = vpop.f32.mrf.mxu0
      %641 = vdwg.mxu0
      %642 = vmatpush.bf16.msra.mxu0 0
      %643 = vmatpush.bf16.msra.mxu0 0
      %644 = vmatpush.bf16.msra.mxu0 0
      %645 = vmatpush.bf16.msra.mxu0 0
      %646 = vmatpush.bf16.msra.mxu0 0
      %647 = vmatpush.bf16.msra.mxu0 0
      %648 = vmatpush.bf16.msra.mxu0 0
      %649 = vmatpush.bf16.msra.mxu0 %v614
      %650 = vmatmul.bf16.gmra.mxu0 %v605
      %v651 = vpop.f32.mrf.mxu0
      %v652 = vadd.f32 0.0, %v651
      %v653 = vpop.f32.mrf.mxu0
      %654 = vdwg.mxu0
      %v655 = vadd.f32 %v583, %v626
      %v656 = vadd.f32 %v584, %v639
      %v657 = vadd.f32 %v585, %v652
      %s658 = scalar_lea.vmem %s1, 28
      %v659 = vld [vmem:[%s658] sm:$0xf]
      %660 = vst [vmem:[#allocation1] ss:$4 sm:$0xff] %v172
      %v661 = vld.sshfl [vmem:[#allocation1] sm:$0xff pattern:$0x73625140]
      %v663 = vld.sshfl [vmem:[#allocation1 + $0x8] sm:$0xff pattern:$0x73625140]
      %v665 = vld.sshfl [vmem:[#allocation1 + $0x10] sm:$0xff pattern:$0x73625140]
      %667 = vrot.lane.b32.xlu0 %v661, 91
      %v668 = vpop.permute.xlu0 %667
      %669 = vrot.lane.b32.xlu0 %v663, 91
      %v670 = vpop.permute.xlu0 %669
      %671 = vrot.lane.b32.xlu0 %v665, 91
      %v672 = vpop.permute.xlu0 %671
      %vm673 = vcmask 744448
      %v674 = vsel %vm673, %v668, %v670
      %v675 = vsel %vm673, %v670, %v672
      %v677 = vsel %vm193, %v659, 0
      %v680 = vsel %vm197, %v674, 0
      %v683 = vsel %vm197, %v675, 0
      %v686 = vsel %vm197, %v672, 0
      %688 = vmatpush.bf16.msra.mxu0 0
      %689 = vmatpush.bf16.msra.mxu0 0
      %690 = vmatpush.bf16.msra.mxu0 0
      %691 = vmatpush.bf16.msra.mxu0 0
      %692 = vmatpush.bf16.msra.mxu0 0
      %693 = vmatpush.bf16.msra.mxu0 0
      %694 = vmatpush.bf16.msra.mxu0 0
      %695 = vmatpush.bf16.msra.mxu0 %v680
      %696 = vmatmul.bf16.gmra.mxu0 %v677
      %v697 = vpop.f32.mrf.mxu0
      %v698 = vadd.f32 0.0, %v697
      %v699 = vpop.f32.mrf.mxu0
      %700 = vdwg.mxu0
      %701 = vmatpush.bf16.msra.mxu0 0
      %702 = vmatpush.bf16.msra.mxu0 0
      %703 = vmatpush.bf16.msra.mxu0 0
      %704 = vmatpush.bf16.msra.mxu0 0
      %705 = vmatpush.bf16.msra.mxu0 0
      %706 = vmatpush.bf16.msra.mxu0 0
      %707 = vmatpush.bf16.msra.mxu0 0
      %708 = vmatpush.bf16.msra.mxu0 %v683
      %709 = vmatmul.bf16.gmra.mxu0 %v677
      %v710 = vpop.f32.mrf.mxu0
      %v711 = vadd.f32 0.0, %v710
      %v712 = vpop.f32.mrf.mxu0
      %713 = vdwg.mxu0
      %714 = vmatpush.bf16.msra.mxu0 0
      %715 = vmatpush.bf16.msra.mxu0 0
      %716 = vmatpush.bf16.msra.mxu0 0
      %717 = vmatpush.bf16.msra.mxu0 0
      %718 = vmatpush.bf16.msra.mxu0 0
      %719 = vmatpush.bf16.msra.mxu0 0
      %720 = vmatpush.bf16.msra.mxu0 0
      %721 = vmatpush.bf16.msra.mxu0 %v686
      %722 = vmatmul.bf16.gmra.mxu0 %v677
      %v723 = vpop.f32.mrf.mxu0
      %v724 = vadd.f32 0.0, %v723
      %v725 = vpop.f32.mrf.mxu0
      %726 = vdwg.mxu0
      %v727 = vadd.f32 %v655, %v698
      %v728 = vadd.f32 %v656, %v711
      %v729 = vadd.f32 %v657, %v724
      %s730 = scalar_lea.vmem %s1, 32
      %v731 = vld [vmem:[%s730] sm:$0xf]
      %732 = vst [vmem:[#allocation1] ss:$4 sm:$0xff] %v172
      %v733 = vld.sshfl [vmem:[#allocation1] sm:$0xff pattern:$0x73625140]
      %v735 = vld.sshfl [vmem:[#allocation1 + $0x8] sm:$0xff pattern:$0x73625140]
      %v737 = vld.sshfl [vmem:[#allocation1 + $0x10] sm:$0xff pattern:$0x73625140]
      %739 = vrot.lane.b32.xlu0 %v733, 90
      %v740 = vpop.permute.xlu0 %739
      %741 = vrot.lane.b32.xlu0 %v735, 90
      %v742 = vpop.permute.xlu0 %741
      %743 = vrot.lane.b32.xlu0 %v737, 90
      %v744 = vpop.permute.xlu0 %743
      %vm745 = vcmask 736256
      %v746 = vsel %vm745, %v740, %v742
      %v747 = vsel %vm745, %v742, %v744
      %v749 = vsel %vm193, %v731, 0
      %v752 = vsel %vm197, %v746, 0
      %v755 = vsel %vm197, %v747, 0
      %v758 = vsel %vm197, %v744, 0
      %760 = vmatpush.bf16.msra.mxu0 0
      %761 = vmatpush.bf16.msra.mxu0 0
      %762 = vmatpush.bf16.msra.mxu0 0
      %763 = vmatpush.bf16.msra.mxu0 0
      %764 = vmatpush.bf16.msra.mxu0 0
      %765 = vmatpush.bf16.msra.mxu0 0
      %766 = vmatpush.bf16.msra.mxu0 0
      %767 = vmatpush.bf16.msra.mxu0 %v752
      %768 = vmatmul.bf16.gmra.mxu0 %v749
      %v769 = vpop.f32.mrf.mxu0
      %v770 = vadd.f32 0.0, %v769
      %v771 = vpop.f32.mrf.mxu0
      %772 = vdwg.mxu0
      %773 = vmatpush.bf16.msra.mxu0 0
      %774 = vmatpush.bf16.msra.mxu0 0
      %775 = vmatpush.bf16.msra.mxu0 0
      %776 = vmatpush.bf16.msra.mxu0 0
      %777 = vmatpush.bf16.msra.mxu0 0
      %778 = vmatpush.bf16.msra.mxu0 0
      %779 = vmatpush.bf16.msra.mxu0 0
      %780 = vmatpush.bf16.msra.mxu0 %v755
      %781 = vmatmul.bf16.gmra.mxu0 %v749
      %v782 = vpop.f32.mrf.mxu0
      %v783 = vadd.f32 0.0, %v782
      %v784 = vpop.f32.mrf.mxu0
      %785 = vdwg.mxu0
      %786 = vmatpush.bf16.msra.mxu0 0
      %787 = vmatpush.bf16.msra.mxu0 0
      %788 = vmatpush.bf16.msra.mxu0 0
      %789 = vmatpush.bf16.msra.mxu0 0
      %790 = vmatpush.bf16.msra.mxu0 0
      %791 = vmatpush.bf16.msra.mxu0 0
      %792 = vmatpush.bf16.msra.mxu0 0
      %793 = vmatpush.bf16.msra.mxu0 %v758
      %794 = vmatmul.bf16.gmra.mxu0 %v749
      %v795 = vpop.f32.mrf.mxu0
      %v796 = vadd.f32 0.0, %v795
      %v797 = vpop.f32.mrf.mxu0
      %798 = vdwg.mxu0
      %v799 = vadd.f32 %v727, %v770
      %v800 = vadd.f32 %v728, %v783
      %v801 = vadd.f32 %v729, %v796
      %v802 = vld [vmem:[%s2] sm:$0xff]
      %804 = vset.pattern.permute.xlu0 0
      %805 = vperm.xlu0 %804, %v802
      %v806 = vpop.permute.xlu0 %805
      %v808 = vadd.f32 %v799, %v806
      %v809 = vadd.f32 %v800, %v806
      %v810 = vadd.f32 %v801, %v806
      %v811 = vmax.f32 %v808, 0.0
      %v812 = vmax.f32 %v809, 0.0
      %v813 = vmax.f32 %v810, 0.0
      %v814 = vpack.c.bf16 %v812, %v811
      %v815 = vpack.c.bf16 %v813, %v813
      %816 = vst [vmem:[%s170] sm:$0xff] %v814
      %vm817 = vcmask 257024
      %818 = vst.msk [vmem:[%s170 + $0x8] sm:$0xf] %vm817, %v815
      %p819 = scmp.lt.s32.totalorder %s14, 1
      %s820 = scalar_select %p819, %s14, 1
      %s821 = smul.addr %s820, 3
      %s822 = smul.addr %s821, 4
      %s823 = scalar_lea.vmem %s3, %s822
      // Predicated region
      $region33: #{_lambda_.12} parent=31 // pred_check
        %p824 = pneg %p100
      $region34: #{_lambda_.12} parent=31 // pred_check_branch
        %826 = sbr.rel (%p824) target = $region36
      $region35: #{_lambda_.12} parent=31 // pred_region
        _
      $region36: #{_lambda_.12} parent=31 // pred_fallthru
        _
    $region32: #{_lambda_.12} parent=5 // pred_fallthru
      _
    %p827 = scmp.le.s32.totalorder 2, %s9
    // Predicated region
    $region37: #{_lambda_.12} parent=5 // pred_check
      %p828 = pneg %p827
    $region38: #{_lambda_.12} parent=5 // pred_check_branch
      %830 = sbr.rel (%p828) target = $region40
    $region39: #{_lambda_.12} parent=5 // pred_region
      %s831 = ssub.s32 %s9, 2
      // Predicated region
      $region41: #{_lambda_.12} parent=39 // pred_check
        %p832 = pneg %p106
      $region42: #{_lambda_.12} parent=39 // pred_check_branch
        %834 = sbr.rel (%p832) target = $region44
      $region43: #{_lambda_.12} parent=39 // pred_region
        %p835 = scmp.lt.s32.totalorder %s15, 1
        %s836 = scalar_select %p835, %s15, 1
        %s837 = smul.addr %s836, 3
        %s838 = smul.addr %s837, 4
        %s839 = scalar_lea.vmem %s3, %s838
      $region44: #{_lambda_.12} parent=39 // pred_fallthru
        _
    $region40: #{_lambda_.12} parent=5 // pred_fallthru
      _
  $region6: #{_lambda_.12} parent=0 // loop_footer
    %s13 = sadd.s32 1, %s9
  $region7: #{_lambda_.12} parent=0 // loop_footer_branch
    %8 = sbr.rel target = $region3
  $region8: #{_lambda_.12} parent=0 // loop_exit
    _

// kernel: _lambda_.13
$region0: #{_lambda_.13}
  #allocation0 [shape = 'u32[]', space=smem, size = 0x4, offset = 0x4, fixed_abs, tag = 'smem constant byte address 0x4 - core index']
  #allocation1 [shape = 'u32[72,128]{1,0:T(1,128)}', space=vmem, size = 0x9000, scoped, tag = 'internal scratch']
  %s0 = inlined_call_operand.vmem [shape: bf16[2,8,128], index: 0, kind: input, shape index: {}]
  %s1 = inlined_call_operand.vmem [shape: bf16[9,16,8], index: 1, kind: input, shape index: {}]
  %s2 = inlined_call_operand.vmem [shape: f32[16,1], index: 2, kind: input, shape index: {}]
  %s3 = inlined_call_operand.vmem [shape: bf16[2,16,80], index: 3, kind: output, shape index: {}]
  %s4 = sld [smem:[#allocation0]]
  $region45: #{_lambda_.13} parent=0
    _
  %s6 = ssub.s32 1, %s4
  %s7 = scalar_select 0, %s6, %s4
  loop: start=0, step=1, limit=4
  $region2: #{_lambda_.13} parent=0 // loop_pre_header
    _
  $region3: #{_lambda_.13} parent=0 // loop_header
    %s9 = sphi 0, %s13
    %p10 = scmp.ge.s32.totalorder %s9, 4
    %s19 = sphi 0, %s21
    %s22 = sphi 0, %s19
    %s23 = sphi 0, %s22
    %s39 = sphi 0, %s23
    %s43 = sphi 0, %s43
    %s45 = sphi 0, %s43
    %s46 = sphi 0, %s45
    %s60 = sphi 0, %s46
    %s64 = sphi 0, %s64
    %s66 = sphi 0, %s64
    %s67 = sphi 0, %s66
    %s81 = sphi 0, %s67
    %s87 = sphi 0, %s89
    %s90 = sphi 0, %s87
    %s91 = sphi 0, %s90
    %s107 = sphi 0, %s91
  $region4: #{_lambda_.13} parent=0 // loop_header_branch
    %12 = sbr.rel (%p10) target = $region8
  $region5: #{_lambda_.13} parent=0 // loop_body
    %s14 = ssub.s32 %s9, 1
    %s15 = ssub.s32 %s9, 2
    %s16 = sadd.s32 %s9, 1
    %s17 = ssub.s32 %s9, %s16
    %p18 = scmp.eq.s32.totalorder %s17, 0
    %s20 = sadd.s32 %s19, 1
    %s21 = scalar_select %p18, %s19, %s20
    %p24 = pneg %p18
    %p25 = scmp.eq.s32.totalorder %s9, 1
    %p26 = por %p24, %p25
    %p27 = scmp.ne.s32.totalorder %s19, %s22
    %p28 = scmp.eq.s32.totalorder %s9, 0
    %p29 = por %p27, %p28
    %p30 = scmp.ne.s32.totalorder %s19, %s22
    %p31 = scmp.eq.s32.totalorder %s14, 1
    %p32 = por %p30, %p31
    %p33 = scmp.ne.s32.totalorder %s22, %s23
    %p34 = scmp.eq.s32.totalorder %s14, 0
    %p35 = por %p33, %p34
    %p36 = scmp.ne.s32.totalorder %s22, %s23
    %p37 = scmp.eq.s32.totalorder %s15, 1
    %p38 = por %p36, %p37
    %p40 = scmp.ne.s32.totalorder %s23, %s39
    %p41 = scmp.eq.s32.totalorder %s15, 0
    %p42 = por %p40, %p41
    %s44 = sadd.s32 %s43, 1
    %p47 = scmp.eq.s32.totalorder %s9, 1
    %p48 = scmp.ne.s32.totalorder %s43, %s45
    %p49 = scmp.eq.s32.totalorder %s9, 0
    %p50 = por %p48, %p49
    %p51 = scmp.ne.s32.totalorder %s43, %s45
    %p52 = scmp.eq.s32.totalorder %s14, 1
    %p53 = por %p51, %p52
    %p54 = scmp.ne.s32.totalorder %s45, %s46
    %p55 = scmp.eq.s32.totalorder %s14, 0
    %p56 = por %p54, %p55
    %p57 = scmp.ne.s32.totalorder %s45, %s46
    %p58 = scmp.eq.s32.totalorder %s15, 1
    %p59 = por %p57, %p58
    %p61 = scmp.ne.s32.totalorder %s46, %s60
    %p62 = scmp.eq.s32.totalorder %s15, 0
    %p63 = por %p61, %p62
    %s65 = sadd.s32 %s64, 1
    %p68 = scmp.eq.s32.totalorder %s9, 1
    %p69 = scmp.ne.s32.totalorder %s64, %s66
    %p70 = scmp.eq.s32.totalorder %s9, 0
    %p71 = por %p69, %p70
    %p72 = scmp.ne.s32.totalorder %s64, %s66
    %p73 = scmp.eq.s32.totalorder %s14, 1
    %p74 = por %p72, %p73
    %p75 = scmp.ne.s32.totalorder %s66, %s67
    %p76 = scmp.eq.s32.totalorder %s14, 0
    %p77 = por %p75, %p76
    %p78 = scmp.ne.s32.totalorder %s66, %s67
    %p79 = scmp.eq.s32.totalorder %s15, 1
    %p80 = por %p78, %p79
    %p82 = scmp.ne.s32.totalorder %s67, %s81
    %p83 = scmp.eq.s32.totalorder %s15, 0
    %p84 = por %p82, %p83
    %s85 = ssub.s32 %s9, %s16
    %p86 = scmp.eq.s32.totalorder %s85, 0
    %s88 = sadd.s32 %s87, 1
    %s89 = scalar_select %p86, %s87, %s88
    %p92 = pneg %p86
    %p93 = scmp.eq.s32.totalorder %s9, 1
    %p94 = por %p92, %p93
    %p95 = scmp.ne.s32.totalorder %s87, %s90
    %p96 = scmp.eq.s32.totalorder %s9, 0
    %p97 = por %p95, %p96
    %p98 = scmp.ne.s32.totalorder %s87, %s90
    %p99 = scmp.eq.s32.totalorder %s14, 1
    %p100 = por %p98, %p99
    %p101 = scmp.ne.s32.totalorder %s90, %s91
    %p102 = scmp.eq.s32.totalorder %s14, 0
    %p103 = por %p101, %p102
    %p104 = scmp.ne.s32.totalorder %s90, %s91
    %p105 = scmp.eq.s32.totalorder %s15, 1
    %p106 = por %p104, %p105
    %p108 = scmp.ne.s32.totalorder %s91, %s107
    %p109 = scmp.eq.s32.totalorder %s15, 0
    %p110 = por %p108, %p109
    %p111 = scmp.le.s32.totalorder 1, %s9
    %p112 = scmp.lt.s32.totalorder %s9, 3
    %p113 = pnand %p111, %p112
    %p114 = pneg %p113
    // Predicated region
    $region9: #{_lambda_.13} parent=5 // pred_check
      _
    $region10: #{_lambda_.13} parent=5 // pred_check_branch
      %116 = sbr.rel (%p113) target = $region12
    $region11: #{_lambda_.13} parent=5 // pred_region
      %s117 = ssub.s32 %s9, 1
      // Predicated region
      $region13: #{_lambda_.13} parent=11 // pred_check
        %p118 = pneg %p56
      $region14: #{_lambda_.13} parent=11 // pred_check_branch
        %120 = sbr.rel (%p118) target = $region16
      $region15: #{_lambda_.13} parent=11 // pred_region
        _
      $region16: #{_lambda_.13} parent=11 // pred_fallthru
        _
      // Predicated region
      $region17: #{_lambda_.13} parent=11 // pred_check
        %p121 = pneg %p77
      $region18: #{_lambda_.13} parent=11 // pred_check_branch
        %123 = sbr.rel (%p121) target = $region20
      $region19: #{_lambda_.13} parent=11 // pred_region
        _
      $region20: #{_lambda_.13} parent=11 // pred_fallthru
        _
    $region12: #{_lambda_.13} parent=5 // pred_fallthru
      _
    %p124 = scmp.lt.s32.totalorder %s9, 2
    // Predicated region
    $region21: #{_lambda_.13} parent=5 // pred_check
      %p125 = pneg %p124
    $region22: #{_lambda_.13} parent=5 // pred_check_branch
      %127 = sbr.rel (%p125) target = $region24
    $region23: #{_lambda_.13} parent=5 // pred_region
      // Predicated region
      $region25: #{_lambda_.13} parent=23 // pred_check
        %p128 = pneg %p29
      $region26: #{_lambda_.13} parent=23 // pred_check_branch
        %130 = sbr.rel (%p128) target = $region28
      $region27: #{_lambda_.13} parent=23 // pred_region
        %p131 = scmp.lt.s32.totalorder %s9, 1
        %s132 = scalar_select %p131, %s9, 1
        %s133 = smul.addr %s132, 4
        %s134 = scalar_lea.vmem %s0, %s133
      $region28: #{_lambda_.13} parent=23 // pred_fallthru
        _
    $region24: #{_lambda_.13} parent=5 // pred_fallthru
      _
    %p135 = scmp.le.s32.totalorder 1, %s9
    %p136 = scmp.lt.s32.totalorder %s9, 3
    %p137 = pnand %p135, %p136
    %p138 = pneg %p137
    // Predicated region
    $region29: #{_lambda_.13} parent=5 // pred_check
      _
    $region30: #{_lambda_.13} parent=5 // pred_check_branch
      %140 = sbr.rel (%p137) target = $region32
    $region31: #{_lambda_.13} parent=5 // pred_region
      %s141 = ssub.s32 %s9, 1
      %p142 = scmp.lt.s32.totalorder %s14, 1
      %s143 = scalar_select %p142, %s14, 1
      %s144 = smul.addr %s143, 4
      %s145 = scalar_lea.vmem %s0, %s144
      %p146 = pneg %p35
      %p147 = pneg %p32
      %p148 = pneg %p56
      %p149 = pneg %p53
      %p150 = pneg %p77
      %p151 = pneg %p74
      %p152 = pneg %p103
      %p153 = pneg %p100
      %p154 = scmp.lt.s32.totalorder %s14, 1
      %s155 = scalar_select %p154, %s14, 1
      %s156 = smul.addr %s155, 2
      %s157 = smul.addr %s156, 4
      %s158 = scalar_lea.vmem %s3, %s157
      %p159 = scmp.lt.s32.totalorder %s14, 1
      %s160 = scalar_select %p159, %s14, 1
      %s161 = smul.addr %s160, 4
      %s162 = scalar_lea.vmem %s0, %s161
      %p163 = scmp.lt.s32.totalorder %s14, 1
      %s164 = scalar_select %p163, %s14, 1
      %s165 = smul.addr %s164, 2
      %s166 = smul.addr %s165, 4
      %s167 = scalar_lea.vmem %s3, %s166
      %v169 = vld [vmem:[%s162] sm:$0xf]
      %v170 = vld [vmem:[%s1] sm:$0xf]
      %v171 = vld [vmem:[%s1 + $0x4] sm:$0xf]
      %s172 = scalar_lea.vmem %s1, 8
      %v173 = vld [vmem:[%s172] sm:$0xf]
      %v174 = vld [vmem:[%s172 + $0x4] sm:$0xf]
      %v177 = vunpack.c.l.b16 %v173
      %v178 = vunpack.c.l.b16 %v174
      %v179 = vpack.c.b16 %v178, %v177
      %v181 = vunpack.c.l.b16 %v169
      %v182 = vpack.c.b16 %v181, %v181
      %183 = vrot.lane.b32.xlu0 %v182, 127
      %v184 = vpop.permute.xlu0 %183
      %vm185 = vcmask 64512
      %v187 = vsel %vm185, %v179, 0
      %vm189 = vcmask 1043456
      %v191 = vsel %vm189, %v184, 0
      %193 = vmatpush.bf16.msra.mxu0 0
      %194 = vmatpush.bf16.msra.mxu0 0
      %195 = vmatpush.bf16.msra.mxu0 0
      %196 = vmatpush.bf16.msra.mxu0 0
      %197 = vmatpush.bf16.msra.mxu0 0
      %198 = vmatpush.bf16.msra.mxu0 0
      %199 = vmatpush.bf16.msra.mxu0 0
      %200 = vmatpush.bf16.msra.mxu0 %v191
      %201 = vmatmul.bf16.gmra.mxu0 %v187
      %v202 = vpop.f32.mrf.mxu0
      %v203 = vadd.f32 0.0, %v202
      %v204 = vpop.f32.mrf.mxu0
      %v205 = vadd.f32 0.0, %v204
      %206 = vdwg.mxu0
      %v209 = vunpack.c.l.b16 %v170
      %v210 = vunpack.c.l.b16 %v171
      %v211 = vpack.c.b16 %v210, %v209
      %v213 = vsel %vm185, %v211, 0
      %v216 = vsel %vm189, %v169, 0
      %218 = vmatpush.bf16.msra.mxu0 0
      %219 = vmatpush.bf16.msra.mxu0 0
      %220 = vmatpush.bf16.msra.mxu0 0
      %221 = vmatpush.bf16.msra.mxu0 0
      %222 = vmatpush.bf16.msra.mxu0 0
      %223 = vmatpush.bf16.msra.mxu0 0
      %224 = vmatpush.bf16.msra.mxu0 0
      %225 = vmatpush.bf16.msra.mxu0 %v216
      %226 = vmatmul.bf16.gmra.mxu0 %v213
      %v227 = vpop.f32.mrf.mxu0
      %v228 = vadd.f32 %v203, %v227
      %v229 = vpop.f32.mrf.mxu0
      %v230 = vadd.f32 %v205, %v229
      %231 = vdwg.mxu0
      %s232 = scalar_lea.vmem %s1, 16
      %v233 = vld [vmem:[%s232] sm:$0xf]
      %v234 = vld [vmem:[%s232 + $0x4] sm:$0xf]
      %v237 = vunpack.c.l.b16 %v233
      %v238 = vunpack.c.l.b16 %v234
      %v239 = vpack.c.b16 %v238, %v237
      %240 = vrot.lane.b32.xlu0 %v182, 126
      %v241 = vpop.permute.xlu0 %240
      %v243 = vsel %vm185, %v239, 0
      %v246 = vsel %vm189, %v241, 0
      %248 = vmatpush.bf16.msra.mxu0 0
      %249 = vmatpush.bf16.msra.mxu0 0
      %250 = vmatpush.bf16.msra.mxu0 0
      %251 = vmatpush.bf16.msra.mxu0 0
      %252 = vmatpush.bf16.msra.mxu0 0
      %253 = vmatpush.bf16.msra.mxu0 0
      %254 = vmatpush.bf16.msra.mxu0 0
      %255 = vmatpush.bf16.msra.mxu0 %v246
      %256 = vmatmul.bf16.gmra.mxu0 %v243
      %v257 = vpop.f32.mrf.mxu0
      %v258 = vadd.f32 0.0, %v257
      %v259 = vpop.f32.mrf.mxu0
      %v260 = vadd.f32 0.0, %v259
      %261 = vdwg.mxu0
      %v262 = vadd.f32 %v228, %v258
      %v263 = vadd.f32 %v230, %v260
      %s264 = scalar_lea.vmem %s1, 24
      %v265 = vld [vmem:[%s264] sm:$0xf]
      %v266 = vld [vmem:[%s264 + $0x4] sm:$0xf]
      %v269 = vunpack.c.l.b16 %v265
      %v270 = vunpack.c.l.b16 %v266
      %v271 = vpack.c.b16 %v270, %v269
      %272 = vrot.lane.b32.xlu0 %v182, 118
      %v273 = vpop.permute.xlu0 %272
      %v275 = vsel %vm185, %v271, 0
      %v278 = vsel %vm189, %v273, 0
      %280 = vmatpush.bf16.msra.mxu0 0
      %281 = vmatpush.bf16.msra.mxu0 0
      %282 = vmatpush.bf16.msra.mxu0 0
      %283 = vmatpush.bf16.msra.mxu0 0
      %284 = vmatpush.bf16.msra.mxu0 0
      %285 = vmatpush.bf16.msra.mxu0 0
      %286 = vmatpush.bf16.msra.mxu0 0
      %287 = vmatpush.bf16.msra.mxu0 %v278
      %288 = vmatmul.bf16.gmra.mxu0 %v275
      %v289 = vpop.f32.mrf.mxu0
      %v290 = vadd.f32 0.0, %v289
      %v291 = vpop.f32.mrf.mxu0
      %v292 = vadd.f32 0.0, %v291
      %293 = vdwg.mxu0
      %v294 = vadd.f32 %v262, %v290
      %v295 = vadd.f32 %v263, %v292
      %s296 = scalar_lea.vmem %s1, 32
      %v297 = vld [vmem:[%s296] sm:$0xf]
      %v298 = vld [vmem:[%s296 + $0x4] sm:$0xf]
      %v301 = vunpack.c.l.b16 %v297
      %v302 = vunpack.c.l.b16 %v298
      %v303 = vpack.c.b16 %v302, %v301
      %304 = vrot.lane.b32.xlu0 %v182, 117
      %v305 = vpop.permute.xlu0 %304
      %v307 = vsel %vm185, %v303, 0
      %v310 = vsel %vm189, %v305, 0
      %312 = vmatpush.bf16.msra.mxu0 0
      %313 = vmatpush.bf16.msra.mxu0 0
      %314 = vmatpush.bf16.msra.mxu0 0
      %315 = vmatpush.bf16.msra.mxu0 0
      %316 = vmatpush.bf16.msra.mxu0 0
      %317 = vmatpush.bf16.msra.mxu0 0
      %318 = vmatpush.bf16.msra.mxu0 0
      %319 = vmatpush.bf16.msra.mxu0 %v310
      %320 = vmatmul.bf16.gmra.mxu0 %v307
      %v321 = vpop.f32.mrf.mxu0
      %v322 = vadd.f32 0.0, %v321
      %v323 = vpop.f32.mrf.mxu0
      %v324 = vadd.f32 0.0, %v323
      %325 = vdwg.mxu0
      %v326 = vadd.f32 %v294, %v322
      %v327 = vadd.f32 %v295, %v324
      %s328 = scalar_lea.vmem %s1, 40
      %v329 = vld [vmem:[%s328] sm:$0xf]
      %v330 = vld [vmem:[%s328 + $0x4] sm:$0xf]
      %v333 = vunpack.c.l.b16 %v329
      %v334 = vunpack.c.l.b16 %v330
      %v335 = vpack.c.b16 %v334, %v333
      %336 = vrot.lane.b32.xlu0 %v182, 116
      %v337 = vpop.permute.xlu0 %336
      %v339 = vsel %vm185, %v335, 0
      %v342 = vsel %vm189, %v337, 0
      %344 = vmatpush.bf16.msra.mxu0 0
      %345 = vmatpush.bf16.msra.mxu0 0
      %346 = vmatpush.bf16.msra.mxu0 0
      %347 = vmatpush.bf16.msra.mxu0 0
      %348 = vmatpush.bf16.msra.mxu0 0
      %349 = vmatpush.bf16.msra.mxu0 0
      %350 = vmatpush.bf16.msra.mxu0 0
      %351 = vmatpush.bf16.msra.mxu0 %v342
      %352 = vmatmul.bf16.gmra.mxu0 %v339
      %v353 = vpop.f32.mrf.mxu0
      %v354 = vadd.f32 0.0, %v353
      %v355 = vpop.f32.mrf.mxu0
      %v356 = vadd.f32 0.0, %v355
      %357 = vdwg.mxu0
      %v358 = vadd.f32 %v326, %v354
      %v359 = vadd.f32 %v327, %v356
      %s360 = scalar_lea.vmem %s1, 48
      %v361 = vld [vmem:[%s360] sm:$0xf]
      %v362 = vld [vmem:[%s360 + $0x4] sm:$0xf]
      %v365 = vunpack.c.l.b16 %v361
      %v366 = vunpack.c.l.b16 %v362
      %v367 = vpack.c.b16 %v366, %v365
      %368 = vrot.lane.b32.xlu0 %v182, 108
      %v369 = vpop.permute.xlu0 %368
      %v371 = vsel %vm185, %v367, 0
      %v374 = vsel %vm189, %v369, 0
      %376 = vmatpush.bf16.msra.mxu0 0
      %377 = vmatpush.bf16.msra.mxu0 0
      %378 = vmatpush.bf16.msra.mxu0 0
      %379 = vmatpush.bf16.msra.mxu0 0
      %380 = vmatpush.bf16.msra.mxu0 0
      %381 = vmatpush.bf16.msra.mxu0 0
      %382 = vmatpush.bf16.msra.mxu0 0
      %383 = vmatpush.bf16.msra.mxu0 %v374
      %384 = vmatmul.bf16.gmra.mxu0 %v371
      %v385 = vpop.f32.mrf.mxu0
      %v386 = vadd.f32 0.0, %v385
      %v387 = vpop.f32.mrf.mxu0
      %v388 = vadd.f32 0.0, %v387
      %389 = vdwg.mxu0
      %v390 = vadd.f32 %v358, %v386
      %v391 = vadd.f32 %v359, %v388
      %s392 = scalar_lea.vmem %s1, 56
      %v393 = vld [vmem:[%s392] sm:$0xf]
      %v394 = vld [vmem:[%s392 + $0x4] sm:$0xf]
      %v397 = vunpack.c.l.b16 %v393
      %v398 = vunpack.c.l.b16 %v394
      %v399 = vpack.c.b16 %v398, %v397
      %400 = vrot.lane.b32.xlu0 %v182, 107
      %v401 = vpop.permute.xlu0 %400
      %v403 = vsel %vm185, %v399, 0
      %v406 = vsel %vm189, %v401, 0
      %408 = vmatpush.bf16.msra.mxu0 0
      %409 = vmatpush.bf16.msra.mxu0 0
      %410 = vmatpush.bf16.msra.mxu0 0
      %411 = vmatpush.bf16.msra.mxu0 0
      %412 = vmatpush.bf16.msra.mxu0 0
      %413 = vmatpush.bf16.msra.mxu0 0
      %414 = vmatpush.bf16.msra.mxu0 0
      %415 = vmatpush.bf16.msra.mxu0 %v406
      %416 = vmatmul.bf16.gmra.mxu0 %v403
      %v417 = vpop.f32.mrf.mxu0
      %v418 = vadd.f32 0.0, %v417
      %v419 = vpop.f32.mrf.mxu0
      %v420 = vadd.f32 0.0, %v419
      %421 = vdwg.mxu0
      %v422 = vadd.f32 %v390, %v418
      %v423 = vadd.f32 %v391, %v420
      %s424 = scalar_lea.vmem %s1, 64
      %v425 = vld [vmem:[%s424] sm:$0xf]
      %v426 = vld [vmem:[%s424 + $0x4] sm:$0xf]
      %v429 = vunpack.c.l.b16 %v425
      %v430 = vunpack.c.l.b16 %v426
      %v431 = vpack.c.b16 %v430, %v429
      %432 = vrot.lane.b32.xlu0 %v182, 106
      %v433 = vpop.permute.xlu0 %432
      %v435 = vsel %vm185, %v431, 0
      %v438 = vsel %vm189, %v433, 0
      %440 = vmatpush.bf16.msra.mxu0 0
      %441 = vmatpush.bf16.msra.mxu0 0
      %442 = vmatpush.bf16.msra.mxu0 0
      %443 = vmatpush.bf16.msra.mxu0 0
      %444 = vmatpush.bf16.msra.mxu0 0
      %445 = vmatpush.bf16.msra.mxu0 0
      %446 = vmatpush.bf16.msra.mxu0 0
      %447 = vmatpush.bf16.msra.mxu0 %v438
      %448 = vmatmul.bf16.gmra.mxu0 %v435
      %v449 = vpop.f32.mrf.mxu0
      %v450 = vadd.f32 0.0, %v449
      %v451 = vpop.f32.mrf.mxu0
      %v452 = vadd.f32 0.0, %v451
      %453 = vdwg.mxu0
      %v454 = vadd.f32 %v422, %v450
      %v455 = vadd.f32 %v423, %v452
      %v456 = vld [vmem:[%s2] sm:$0xff]
      %v457 = vld [vmem:[%s2 + $0x8] sm:$0xff]
      %459 = vset.pattern.permute.xlu0 0
      %460 = vperm.xlu0 %459, %v456
      %v461 = vpop.permute.xlu0 %460
      %464 = vset.pattern.permute.xlu0 0
      %465 = vperm.xlu0 %464, %v457
      %v466 = vpop.permute.xlu0 %465
      %v468 = vadd.f32 %v454, %v461
      %v469 = vadd.f32 %v455, %v466
      %v470 = vmax.f32 %v468, 0.0
      %v471 = vmax.f32 %v469, 0.0
      %v472 = vpack.c.bf16 %v470, %v470
      %v473 = vpack.c.bf16 %v471, %v471
      %vm474 = vcmask 650240
      %475 = vst.msk [vmem:[%s167] sm:$0xf] %vm474, %v472
      %476 = vst.msk [vmem:[%s167 + $0x4] sm:$0xf] %vm474, %v473
      %p477 = scmp.lt.s32.totalorder %s14, 1
      %s478 = scalar_select %p477, %s14, 1
      %s479 = smul.addr %s478, 2
      %s480 = smul.addr %s479, 4
      %s481 = scalar_lea.vmem %s3, %s480
      // Predicated region
      $region33: #{_lambda_.13} parent=31 // pred_check
        %p482 = pneg %p100
      $region34: #{_lambda_.13} parent=31 // pred_check_branch
        %484 = sbr.rel (%p482) target = $region36
      $region35: #{_lambda_.13} parent=31 // pred_region
        _
      $region36: #{_lambda_.13} parent=31 // pred_fallthru
        _
    $region32: #{_lambda_.13} parent=5 // pred_fallthru
      _
    %p485 = scmp.le.s32.totalorder 2, %s9
    // Predicated region
    $region37: #{_lambda_.13} parent=5 // pred_check
      %p486 = pneg %p485
    $region38: #{_lambda_.13} parent=5 // pred_check_branch
      %488 = sbr.rel (%p486) target = $region40
    $region39: #{_lambda_.13} parent=5 // pred_region
      %s489 = ssub.s32 %s9, 2
      // Predicated region
      $region41: #{_lambda_.13} parent=39 // pred_check
        %p490 = pneg %p106
      $region42: #{_lambda_.13} parent=39 // pred_check_branch
        %492 = sbr.rel (%p490) target = $region44
      $region43: #{_lambda_.13} parent=39 // pred_region
        %p493 = scmp.lt.s32.totalorder %s15, 1
        %s494 = scalar_select %p493, %s15, 1
        %s495 = smul.addr %s494, 2
        %s496 = smul.addr %s495, 4
        %s497 = scalar_lea.vmem %s3, %s496
      $region44: #{_lambda_.13} parent=39 // pred_fallthru
        _
    $region40: #{_lambda_.13} parent=5 // pred_fallthru
      _
  $region6: #{_lambda_.13} parent=0 // loop_footer
    %s13 = sadd.s32 1, %s9
  $region7: #{_lambda_.13} parent=0 // loop_footer_branch
    %8 = sbr.rel target = $region3
  $region8: #{_lambda_.13} parent=0 // loop_exit
    _

// kernel: _lambda_.14
$region0: #{_lambda_.14}
  #allocation0 [shape = 'u32[]', space=smem, size = 0x4, offset = 0x4, fixed_abs, tag = 'smem constant byte address 0x4 - core index']
  #allocation1 [shape = 'u32[72,128]{1,0:T(1,128)}', space=vmem, size = 0x9000, scoped, tag = 'internal scratch']
  %s0 = inlined_call_operand.vmem [shape: bf16[2,16,128], index: 0, kind: input, shape index: {}]
  %s1 = inlined_call_operand.vmem [shape: bf16[9,32,16], index: 1, kind: input, shape index: {}]
  %s2 = inlined_call_operand.vmem [shape: f32[32,1], index: 2, kind: input, shape index: {}]
  %s3 = inlined_call_operand.vmem [shape: bf16[2,32,24], index: 3, kind: output, shape index: {}]
  %s4 = sld [smem:[#allocation0]]
  $region45: #{_lambda_.14} parent=0
    _
  %s6 = ssub.s32 1, %s4
  %s7 = scalar_select 0, %s6, %s4
  loop: start=0, step=1, limit=4
  $region2: #{_lambda_.14} parent=0 // loop_pre_header
    _
  $region3: #{_lambda_.14} parent=0 // loop_header
    %s9 = sphi 0, %s13
    %p10 = scmp.ge.s32.totalorder %s9, 4
    %s19 = sphi 0, %s21
    %s22 = sphi 0, %s19
    %s23 = sphi 0, %s22
    %s39 = sphi 0, %s23
    %s43 = sphi 0, %s43
    %s45 = sphi 0, %s43
    %s46 = sphi 0, %s45
    %s60 = sphi 0, %s46
    %s64 = sphi 0, %s64
    %s66 = sphi 0, %s64
    %s67 = sphi 0, %s66
    %s81 = sphi 0, %s67
    %s87 = sphi 0, %s89
    %s90 = sphi 0, %s87
    %s91 = sphi 0, %s90
    %s107 = sphi 0, %s91
  $region4: #{_lambda_.14} parent=0 // loop_header_branch
    %12 = sbr.rel (%p10) target = $region8
  $region5: #{_lambda_.14} parent=0 // loop_body
    %s14 = ssub.s32 %s9, 1
    %s15 = ssub.s32 %s9, 2
    %s16 = sadd.s32 %s9, 1
    %s17 = ssub.s32 %s9, %s16
    %p18 = scmp.eq.s32.totalorder %s17, 0
    %s20 = sadd.s32 %s19, 1
    %s21 = scalar_select %p18, %s19, %s20
    %p24 = pneg %p18
    %p25 = scmp.eq.s32.totalorder %s9, 1
    %p26 = por %p24, %p25
    %p27 = scmp.ne.s32.totalorder %s19, %s22
    %p28 = scmp.eq.s32.totalorder %s9, 0
    %p29 = por %p27, %p28
    %p30 = scmp.ne.s32.totalorder %s19, %s22
    %p31 = scmp.eq.s32.totalorder %s14, 1
    %p32 = por %p30, %p31
    %p33 = scmp.ne.s32.totalorder %s22, %s23
    %p34 = scmp.eq.s32.totalorder %s14, 0
    %p35 = por %p33, %p34
    %p36 = scmp.ne.s32.totalorder %s22, %s23
    %p37 = scmp.eq.s32.totalorder %s15, 1
    %p38 = por %p36, %p37
    %p40 = scmp.ne.s32.totalorder %s23, %s39
    %p41 = scmp.eq.s32.totalorder %s15, 0
    %p42 = por %p40, %p41
    %s44 = sadd.s32 %s43, 1
    %p47 = scmp.eq.s32.totalorder %s9, 1
    %p48 = scmp.ne.s32.totalorder %s43, %s45
    %p49 = scmp.eq.s32.totalorder %s9, 0
    %p50 = por %p48, %p49
    %p51 = scmp.ne.s32.totalorder %s43, %s45
    %p52 = scmp.eq.s32.totalorder %s14, 1
    %p53 = por %p51, %p52
    %p54 = scmp.ne.s32.totalorder %s45, %s46
    %p55 = scmp.eq.s32.totalorder %s14, 0
    %p56 = por %p54, %p55
    %p57 = scmp.ne.s32.totalorder %s45, %s46
    %p58 = scmp.eq.s32.totalorder %s15, 1
    %p59 = por %p57, %p58
    %p61 = scmp.ne.s32.totalorder %s46, %s60
    %p62 = scmp.eq.s32.totalorder %s15, 0
    %p63 = por %p61, %p62
    %s65 = sadd.s32 %s64, 1
    %p68 = scmp.eq.s32.totalorder %s9, 1
    %p69 = scmp.ne.s32.totalorder %s64, %s66
    %p70 = scmp.eq.s32.totalorder %s9, 0
    %p71 = por %p69, %p70
    %p72 = scmp.ne.s32.totalorder %s64, %s66
    %p73 = scmp.eq.s32.totalorder %s14, 1
    %p74 = por %p72, %p73
    %p75 = scmp.ne.s32.totalorder %s66, %s67
    %p76 = scmp.eq.s32.totalorder %s14, 0
    %p77 = por %p75, %p76
    %p78 = scmp.ne.s32.totalorder %s66, %s67
    %p79 = scmp.eq.s32.totalorder %s15, 1
    %p80 = por %p78, %p79
    %p82 = scmp.ne.s32.totalorder %s67, %s81
    %p83 = scmp.eq.s32.totalorder %s15, 0
    %p84 = por %p82, %p83
    %s85 = ssub.s32 %s9, %s16
    %p86 = scmp.eq.s32.totalorder %s85, 0
    %s88 = sadd.s32 %s87, 1
    %s89 = scalar_select %p86, %s87, %s88
    %p92 = pneg %p86
    %p93 = scmp.eq.s32.totalorder %s9, 1
    %p94 = por %p92, %p93
    %p95 = scmp.ne.s32.totalorder %s87, %s90
    %p96 = scmp.eq.s32.totalorder %s9, 0
    %p97 = por %p95, %p96
    %p98 = scmp.ne.s32.totalorder %s87, %s90
    %p99 = scmp.eq.s32.totalorder %s14, 1
    %p100 = por %p98, %p99
    %p101 = scmp.ne.s32.totalorder %s90, %s91
    %p102 = scmp.eq.s32.totalorder %s14, 0
    %p103 = por %p101, %p102
    %p104 = scmp.ne.s32.totalorder %s90, %s91
    %p105 = scmp.eq.s32.totalorder %s15, 1
    %p106 = por %p104, %p105
    %p108 = scmp.ne.s32.totalorder %s91, %s107
    %p109 = scmp.eq.s32.totalorder %s15, 0
    %p110 = por %p108, %p109
    %p111 = scmp.le.s32.totalorder 1, %s9
    %p112 = scmp.lt.s32.totalorder %s9, 3
    %p113 = pnand %p111, %p112
    %p114 = pneg %p113
    // Predicated region
    $region9: #{_lambda_.14} parent=5 // pred_check
      _
    $region10: #{_lambda_.14} parent=5 // pred_check_branch
      %116 = sbr.rel (%p113) target = $region12
    $region11: #{_lambda_.14} parent=5 // pred_region
      %s117 = ssub.s32 %s9, 1
      // Predicated region
      $region13: #{_lambda_.14} parent=11 // pred_check
        %p118 = pneg %p56
      $region14: #{_lambda_.14} parent=11 // pred_check_branch
        %120 = sbr.rel (%p118) target = $region16
      $region15: #{_lambda_.14} parent=11 // pred_region
        _
      $region16: #{_lambda_.14} parent=11 // pred_fallthru
        _
      // Predicated region
      $region17: #{_lambda_.14} parent=11 // pred_check
        %p121 = pneg %p77
      $region18: #{_lambda_.14} parent=11 // pred_check_branch
        %123 = sbr.rel (%p121) target = $region20
      $region19: #{_lambda_.14} parent=11 // pred_region
        _
      $region20: #{_lambda_.14} parent=11 // pred_fallthru
        _
    $region12: #{_lambda_.14} parent=5 // pred_fallthru
      _
    %p124 = scmp.lt.s32.totalorder %s9, 2
    // Predicated region
    $region21: #{_lambda_.14} parent=5 // pred_check
      %p125 = pneg %p124
    $region22: #{_lambda_.14} parent=5 // pred_check_branch
      %127 = sbr.rel (%p125) target = $region24
    $region23: #{_lambda_.14} parent=5 // pred_region
      // Predicated region
      $region25: #{_lambda_.14} parent=23 // pred_check
        %p128 = pneg %p29
      $region26: #{_lambda_.14} parent=23 // pred_check_branch
        %130 = sbr.rel (%p128) target = $region28
      $region27: #{_lambda_.14} parent=23 // pred_region
        %p131 = scmp.lt.s32.totalorder %s9, 1
        %s132 = scalar_select %p131, %s9, 1
        %s133 = smul.addr %s132, 2
        %s134 = smul.addr %s133, 4
        %s135 = scalar_lea.vmem %s0, %s134
      $region28: #{_lambda_.14} parent=23 // pred_fallthru
        _
    $region24: #{_lambda_.14} parent=5 // pred_fallthru
      _
    %p136 = scmp.le.s32.totalorder 1, %s9
    %p137 = scmp.lt.s32.totalorder %s9, 3
    %p138 = pnand %p136, %p137
    %p139 = pneg %p138
    // Predicated region
    $region29: #{_lambda_.14} parent=5 // pred_check
      _
    $region30: #{_lambda_.14} parent=5 // pred_check_branch
      %141 = sbr.rel (%p138) target = $region32
    $region31: #{_lambda_.14} parent=5 // pred_region
      %s142 = ssub.s32 %s9, 1
      %p143 = scmp.lt.s32.totalorder %s14, 1
      %s144 = scalar_select %p143, %s14, 1
      %s145 = smul.addr %s144, 2
      %s146 = smul.addr %s145, 4
      %s147 = scalar_lea.vmem %s0, %s146
      %p148 = pneg %p35
      %p149 = pneg %p32
      %p150 = pneg %p56
      %p151 = pneg %p53
      %p152 = pneg %p77
      %p153 = pneg %p74
      %p154 = pneg %p103
      %p155 = pneg %p100
      %p156 = scmp.lt.s32.totalorder %s14, 1
      %s157 = scalar_select %p156, %s14, 1
      %s158 = smul.addr %s157, 4
      %s159 = smul.addr %s158, 4
      %s160 = scalar_lea.vmem %s3, %s159
      %p161 = scmp.lt.s32.totalorder %s14, 1
      %s162 = scalar_select %p161, %s14, 1
      %s163 = smul.addr %s162, 2
      %s164 = smul.addr %s163, 4
      %s165 = scalar_lea.vmem %s0, %s164
      %p166 = scmp.lt.s32.totalorder %s14, 1
      %s167 = scalar_select %p166, %s14, 1
      %s168 = smul.addr %s167, 4
      %s169 = smul.addr %s168, 4
      %s170 = scalar_lea.vmem %s3, %s169
      %v172 = vld [vmem:[%s165] sm:$0xf]
      %v173 = vld [vmem:[%s165 + $0x4] sm:$0xf]
      %v174 = vld [vmem:[%s1] sm:$0xf]
      %v175 = vld [vmem:[%s1 + $0x4] sm:$0xf]
      %v176 = vld [vmem:[%s1 + $0x8] sm:$0xf]
      %v177 = vld [vmem:[%s1 + $0xc] sm:$0xf]
      %s178 = scalar_lea.vmem %s1, 16
      %v179 = vld [vmem:[%s178] sm:$0xf]
      %v180 = vld [vmem:[%s178 + $0x4] sm:$0xf]
      %v181 = vld [vmem:[%s178 + $0x8] sm:$0xf]
      %v182 = vld [vmem:[%s178 + $0xc] sm:$0xf]
      %v187 = vunpack.c.l.b16 %v179
      %v188 = vunpack.c.l.b16 %v180
      %v189 = vunpack.c.l.b16 %v181
      %v190 = vunpack.c.l.b16 %v182
      %v191 = vpack.c.b16 %v188, %v187
      %v192 = vpack.c.b16 %v190, %v189
      %v195 = vunpack.c.l.b16 %v172
      %v196 = vunpack.c.l.b16 %v173
      %v197 = vpack.c.b16 %v196, %v195
      %198 = vrot.lane.b32.xlu0 %v197, 127
      %v199 = vpop.permute.xlu0 %198
      %vm201 = vcmask 130048
      %v203 = vsel %vm201, %v191, 0
      %v206 = vsel %vm201, %v192, 0
      %208 = vmatpush.bf16.msra.mxu0 0
      %209 = vmatpush.bf16.msra.mxu0 0
      %210 = vmatpush.bf16.msra.mxu0 0
      %211 = vmatpush.bf16.msra.mxu0 0
      %212 = vmatpush.bf16.msra.mxu0 0
      %213 = vmatpush.bf16.msra.mxu0 0
      %214 = vmatpush.bf16.msra.mxu0 0
      %215 = vmatpush.bf16.msra.mxu0 %v199
      %216 = vmatmul.bf16.gmra.mxu0 %v203
      %v217 = vpop.f32.mrf.mxu0
      %v218 = vadd.f32 0.0, %v217
      %v219 = vpop.f32.mrf.mxu0
      %v220 = vadd.f32 0.0, %v219
      %221 = vmatmul.bf16.gmra.mxu0 %v206
      %v222 = vpop.f32.mrf.mxu0
      %v223 = vadd.f32 0.0, %v222
      %v224 = vpop.f32.mrf.mxu0
      %v225 = vadd.f32 0.0, %v224
      %226 = vdwg.mxu0
      %v231 = vunpack.c.l.b16 %v174
      %v232 = vunpack.c.l.b16 %v175
      %v233 = vunpack.c.l.b16 %v176
      %v234 = vunpack.c.l.b16 %v177
      %v235 = vpack.c.b16 %v232, %v231
      %v236 = vpack.c.b16 %v234, %v233
      %v239 = vsel %vm201, %v235, 0
      %v242 = vsel %vm201, %v236, 0
      %244 = vmatpush.bf16.msra.mxu0 0
      %245 = vmatpush.bf16.msra.mxu0 0
      %246 = vmatpush.bf16.msra.mxu0 0
      %247 = vmatpush.bf16.msra.mxu0 0
      %248 = vmatpush.bf16.msra.mxu0 0
      %249 = vmatpush.bf16.msra.mxu0 0
      %250 = vmatpush.bf16.msra.mxu0 0
      %251 = vmatpush.bf16.msra.mxu0 %v197
      %252 = vmatmul.bf16.gmra.mxu0 %v239
      %v253 = vpop.f32.mrf.mxu0
      %v254 = vadd.f32 %v218, %v253
      %v255 = vpop.f32.mrf.mxu0
      %v256 = vadd.f32 %v220, %v255
      %257 = vmatmul.bf16.gmra.mxu0 %v242
      %v258 = vpop.f32.mrf.mxu0
      %v259 = vadd.f32 %v223, %v258
      %v260 = vpop.f32.mrf.mxu0
      %v261 = vadd.f32 %v225, %v260
      %262 = vdwg.mxu0
      %s263 = scalar_lea.vmem %s1, 32
      %v264 = vld [vmem:[%s263] sm:$0xf]
      %v265 = vld [vmem:[%s263 + $0x4] sm:$0xf]
      %v266 = vld [vmem:[%s263 + $0x8] sm:$0xf]
      %v267 = vld [vmem:[%s263 + $0xc] sm:$0xf]
      %v272 = vunpack.c.l.b16 %v264
      %v273 = vunpack.c.l.b16 %v265
      %v274 = vunpack.c.l.b16 %v266
      %v275 = vunpack.c.l.b16 %v267
      %v276 = vpack.c.b16 %v273, %v272
      %v277 = vpack.c.b16 %v275, %v274
      %278 = vrot.lane.b32.xlu0 %v197, 126
      %v279 = vpop.permute.xlu0 %278
      %v282 = vsel %vm201, %v276, 0
      %v285 = vsel %vm201, %v277, 0
      %287 = vmatpush.bf16.msra.mxu0 0
      %288 = vmatpush.bf16.msra.mxu0 0
      %289 = vmatpush.bf16.msra.mxu0 0
      %290 = vmatpush.bf16.msra.mxu0 0
      %291 = vmatpush.bf16.msra.mxu0 0
      %292 = vmatpush.bf16.msra.mxu0 0
      %293 = vmatpush.bf16.msra.mxu0 0
      %294 = vmatpush.bf16.msra.mxu0 %v279
      %295 = vmatmul.bf16.gmra.mxu0 %v282
      %v296 = vpop.f32.mrf.mxu0
      %v297 = vadd.f32 0.0, %v296
      %v298 = vpop.f32.mrf.mxu0
      %v299 = vadd.f32 0.0, %v298
      %300 = vmatmul.bf16.gmra.mxu0 %v285
      %v301 = vpop.f32.mrf.mxu0
      %v302 = vadd.f32 0.0, %v301
      %v303 = vpop.f32.mrf.mxu0
      %v304 = vadd.f32 0.0, %v303
      %305 = vdwg.mxu0
      %v306 = vadd.f32 %v254, %v297
      %v307 = vadd.f32 %v256, %v299
      %v308 = vadd.f32 %v259, %v302
      %v309 = vadd.f32 %v261, %v304
      %s310 = scalar_lea.vmem %s1, 48
      %v311 = vld [vmem:[%s310] sm:$0xf]
      %v312 = vld [vmem:[%s310 + $0x4] sm:$0xf]
      %v313 = vld [vmem:[%s310 + $0x8] sm:$0xf]
      %v314 = vld [vmem:[%s310 + $0xc] sm:$0xf]
      %v319 = vunpack.c.l.b16 %v311
      %v320 = vunpack.c.l.b16 %v312
      %v321 = vunpack.c.l.b16 %v313
      %v322 = vunpack.c.l.b16 %v314
      %v323 = vpack.c.b16 %v320, %v319
      %v324 = vpack.c.b16 %v322, %v321
      %325 = vrot.lane.b32.xlu0 %v197, 122
      %v326 = vpop.permute.xlu0 %325
      %v329 = vsel %vm201, %v323, 0
      %v332 = vsel %vm201, %v324, 0
      %334 = vmatpush.bf16.msra.mxu0 0
      %335 = vmatpush.bf16.msra.mxu0 0
      %336 = vmatpush.bf16.msra.mxu0 0
      %337 = vmatpush.bf16.msra.mxu0 0
      %338 = vmatpush.bf16.msra.mxu0 0
      %339 = vmatpush.bf16.msra.mxu0 0
      %340 = vmatpush.bf16.msra.mxu0 0
      %341 = vmatpush.bf16.msra.mxu0 %v326
      %342 = vmatmul.bf16.gmra.mxu0 %v329
      %v343 = vpop.f32.mrf.mxu0
      %v344 = vadd.f32 0.0, %v343
      %v345 = vpop.f32.mrf.mxu0
      %v346 = vadd.f32 0.0, %v345
      %347 = vmatmul.bf16.gmra.mxu0 %v332
      %v348 = vpop.f32.mrf.mxu0
      %v349 = vadd.f32 0.0, %v348
      %v350 = vpop.f32.mrf.mxu0
      %v351 = vadd.f32 0.0, %v350
      %352 = vdwg.mxu0
      %v353 = vadd.f32 %v306, %v344
      %v354 = vadd.f32 %v307, %v346
      %v355 = vadd.f32 %v308, %v349
      %v356 = vadd.f32 %v309, %v351
      %s357 = scalar_lea.vmem %s1, 64
      %v358 = vld [vmem:[%s357] sm:$0xf]
      %v359 = vld [vmem:[%s357 + $0x4] sm:$0xf]
      %v360 = vld [vmem:[%s357 + $0x8] sm:$0xf]
      %v361 = vld [vmem:[%s357 + $0xc] sm:$0xf]
      %v366 = vunpack.c.l.b16 %v358
      %v367 = vunpack.c.l.b16 %v359
      %v368 = vunpack.c.l.b16 %v360
      %v369 = vunpack.c.l.b16 %v361
      %v370 = vpack.c.b16 %v367, %v366
      %v371 = vpack.c.b16 %v369, %v368
      %372 = vrot.lane.b32.xlu0 %v197, 121
      %v373 = vpop.permute.xlu0 %372
      %v376 = vsel %vm201, %v370, 0
      %v379 = vsel %vm201, %v371, 0
      %381 = vmatpush.bf16.msra.mxu0 0
      %382 = vmatpush.bf16.msra.mxu0 0
      %383 = vmatpush.bf16.msra.mxu0 0
      %384 = vmatpush.bf16.msra.mxu0 0
      %385 = vmatpush.bf16.msra.mxu0 0
      %386 = vmatpush.bf16.msra.mxu0 0
      %387 = vmatpush.bf16.msra.mxu0 0
      %388 = vmatpush.bf16.msra.mxu0 %v373
      %389 = vmatmul.bf16.gmra.mxu0 %v376
      %v390 = vpop.f32.mrf.mxu0
      %v391 = vadd.f32 0.0, %v390
      %v392 = vpop.f32.mrf.mxu0
      %v393 = vadd.f32 0.0, %v392
      %394 = vmatmul.bf16.gmra.mxu0 %v379
      %v395 = vpop.f32.mrf.mxu0
      %v396 = vadd.f32 0.0, %v395
      %v397 = vpop.f32.mrf.mxu0
      %v398 = vadd.f32 0.0, %v397
      %399 = vdwg.mxu0
      %v400 = vadd.f32 %v353, %v391
      %v401 = vadd.f32 %v354, %v393
      %v402 = vadd.f32 %v355, %v396
      %v403 = vadd.f32 %v356, %v398
      %s404 = scalar_lea.vmem %s1, 80
      %v405 = vld [vmem:[%s404] sm:$0xf]
      %v406 = vld [vmem:[%s404 + $0x4] sm:$0xf]
      %v407 = vld [vmem:[%s404 + $0x8] sm:$0xf]
      %v408 = vld [vmem:[%s404 + $0xc] sm:$0xf]
      %v413 = vunpack.c.l.b16 %v405
      %v414 = vunpack.c.l.b16 %v406
      %v415 = vunpack.c.l.b16 %v407
      %v416 = vunpack.c.l.b16 %v408
      %v417 = vpack.c.b16 %v414, %v413
      %v418 = vpack.c.b16 %v416, %v415
      %419 = vrot.lane.b32.xlu0 %v197, 120
      %v420 = vpop.permute.xlu0 %419
      %v423 = vsel %vm201, %v417, 0
      %v426 = vsel %vm201, %v418, 0
      %428 = vmatpush.bf16.msra.mxu0 0
      %429 = vmatpush.bf16.msra.mxu0 0
      %430 = vmatpush.bf16.msra.mxu0 0
      %431 = vmatpush.bf16.msra.mxu0 0
      %432 = vmatpush.bf16.msra.mxu0 0
      %433 = vmatpush.bf16.msra.mxu0 0
      %434 = vmatpush.bf16.msra.mxu0 0
      %435 = vmatpush.bf16.msra.mxu0 %v420
      %436 = vmatmul.bf16.gmra.mxu0 %v423
      %v437 = vpop.f32.mrf.mxu0
      %v438 = vadd.f32 0.0, %v437
      %v439 = vpop.f32.mrf.mxu0
      %v440 = vadd.f32 0.0, %v439
      %441 = vmatmul.bf16.gmra.mxu0 %v426
      %v442 = vpop.f32.mrf.mxu0
      %v443 = vadd.f32 0.0, %v442
      %v444 = vpop.f32.mrf.mxu0
      %v445 = vadd.f32 0.0, %v444
      %446 = vdwg.mxu0
      %v447 = vadd.f32 %v400, %v438
      %v448 = vadd.f32 %v401, %v440
      %v449 = vadd.f32 %v402, %v443
      %v450 = vadd.f32 %v403, %v445
      %s451 = scalar_lea.vmem %s1, 96
      %v452 = vld [vmem:[%s451] sm:$0xf]
      %v453 = vld [vmem:[%s451 + $0x4] sm:$0xf]
      %v454 = vld [vmem:[%s451 + $0x8] sm:$0xf]
      %v455 = vld [vmem:[%s451 + $0xc] sm:$0xf]
      %v460 = vunpack.c.l.b16 %v452
      %v461 = vunpack.c.l.b16 %v453
      %v462 = vunpack.c.l.b16 %v454
      %v463 = vunpack.c.l.b16 %v455
      %v464 = vpack.c.b16 %v461, %v460
      %v465 = vpack.c.b16 %v463, %v462
      %466 = vrot.lane.b32.xlu0 %v197, 116
      %v467 = vpop.permute.xlu0 %466
      %v470 = vsel %vm201, %v464, 0
      %v473 = vsel %vm201, %v465, 0
      %475 = vmatpush.bf16.msra.mxu0 0
      %476 = vmatpush.bf16.msra.mxu0 0
      %477 = vmatpush.bf16.msra.mxu0 0
      %478 = vmatpush.bf16.msra.mxu0 0
      %479 = vmatpush.bf16.msra.mxu0 0
      %480 = vmatpush.bf16.msra.mxu0 0
      %481 = vmatpush.bf16.msra.mxu0 0
      %482 = vmatpush.bf16.msra.mxu0 %v467
      %483 = vmatmul.bf16.gmra.mxu0 %v470
      %v484 = vpop.f32.mrf.mxu0
      %v485 = vadd.f32 0.0, %v484
      %v486 = vpop.f32.mrf.mxu0
      %v487 = vadd.f32 0.0, %v486
      %488 = vmatmul.bf16.gmra.mxu0 %v473
      %v489 = vpop.f32.mrf.mxu0
      %v490 = vadd.f32 0.0, %v489
      %v491 = vpop.f32.mrf.mxu0
      %v492 = vadd.f32 0.0, %v491
      %493 = vdwg.mxu0
      %v494 = vadd.f32 %v447, %v485
      %v495 = vadd.f32 %v448, %v487
      %v496 = vadd.f32 %v449, %v490
      %v497 = vadd.f32 %v450, %v492
      %s498 = scalar_lea.vmem %s1, 112
      %v499 = vld [vmem:[%s498] sm:$0xf]
      %v500 = vld [vmem:[%s498 + $0x4] sm:$0xf]
      %v501 = vld [vmem:[%s498 + $0x8] sm:$0xf]
      %v502 = vld [vmem:[%s498 + $0xc] sm:$0xf]
      %v507 = vunpack.c.l.b16 %v499
      %v508 = vunpack.c.l.b16 %v500
      %v509 = vunpack.c.l.b16 %v501
      %v510 = vunpack.c.l.b16 %v502
      %v511 = vpack.c.b16 %v508, %v507
      %v512 = vpack.c.b16 %v510, %v509
      %513 = vrot.lane.b32.xlu0 %v197, 115
      %v514 = vpop.permute.xlu0 %513
      %v517 = vsel %vm201, %v511, 0
      %v520 = vsel %vm201, %v512, 0
      %522 = vmatpush.bf16.msra.mxu0 0
      %523 = vmatpush.bf16.msra.mxu0 0
      %524 = vmatpush.bf16.msra.mxu0 0
      %525 = vmatpush.bf16.msra.mxu0 0
      %526 = vmatpush.bf16.msra.mxu0 0
      %527 = vmatpush.bf16.msra.mxu0 0
      %528 = vmatpush.bf16.msra.mxu0 0
      %529 = vmatpush.bf16.msra.mxu0 %v514
      %530 = vmatmul.bf16.gmra.mxu0 %v517
      %v531 = vpop.f32.mrf.mxu0
      %v532 = vadd.f32 0.0, %v531
      %v533 = vpop.f32.mrf.mxu0
      %v534 = vadd.f32 0.0, %v533
      %535 = vmatmul.bf16.gmra.mxu0 %v520
      %v536 = vpop.f32.mrf.mxu0
      %v537 = vadd.f32 0.0, %v536
      %v538 = vpop.f32.mrf.mxu0
      %v539 = vadd.f32 0.0, %v538
      %540 = vdwg.mxu0
      %v541 = vadd.f32 %v494, %v532
      %v542 = vadd.f32 %v495, %v534
      %v543 = vadd.f32 %v496, %v537
      %v544 = vadd.f32 %v497, %v539
      %s545 = scalar_lea.vmem %s1, 128
      %v546 = vld [vmem:[%s545] sm:$0xf]
      %v547 = vld [vmem:[%s545 + $0x4] sm:$0xf]
      %v548 = vld [vmem:[%s545 + $0x8] sm:$0xf]
      %v549 = vld [vmem:[%s545 + $0xc] sm:$0xf]
      %v554 = vunpack.c.l.b16 %v546
      %v555 = vunpack.c.l.b16 %v547
      %v556 = vunpack.c.l.b16 %v548
      %v557 = vunpack.c.l.b16 %v549
      %v558 = vpack.c.b16 %v555, %v554
      %v559 = vpack.c.b16 %v557, %v556
      %560 = vrot.lane.b32.xlu0 %v197, 114
      %v561 = vpop.permute.xlu0 %560
      %v564 = vsel %vm201, %v558, 0
      %v567 = vsel %vm201, %v559, 0
      %569 = vmatpush.bf16.msra.mxu0 0
      %570 = vmatpush.bf16.msra.mxu0 0
      %571 = vmatpush.bf16.msra.mxu0 0
      %572 = vmatpush.bf16.msra.mxu0 0
      %573 = vmatpush.bf16.msra.mxu0 0
      %574 = vmatpush.bf16.msra.mxu0 0
      %575 = vmatpush.bf16.msra.mxu0 0
      %576 = vmatpush.bf16.msra.mxu0 %v561
      %577 = vmatmul.bf16.gmra.mxu0 %v564
      %v578 = vpop.f32.mrf.mxu0
      %v579 = vadd.f32 0.0, %v578
      %v580 = vpop.f32.mrf.mxu0
      %v581 = vadd.f32 0.0, %v580
      %582 = vmatmul.bf16.gmra.mxu0 %v567
      %v583 = vpop.f32.mrf.mxu0
      %v584 = vadd.f32 0.0, %v583
      %v585 = vpop.f32.mrf.mxu0
      %v586 = vadd.f32 0.0, %v585
      %587 = vdwg.mxu0
      %v588 = vadd.f32 %v541, %v579
      %v589 = vadd.f32 %v542, %v581
      %v590 = vadd.f32 %v543, %v584
      %v591 = vadd.f32 %v544, %v586
      %v592 = vld [vmem:[%s2] sm:$0xff]
      %v593 = vld [vmem:[%s2 + $0x8] sm:$0xff]
      %v594 = vld [vmem:[%s2 + $0x10] sm:$0xff]
      %v595 = vld [vmem:[%s2 + $0x18] sm:$0xff]
      %597 = vset.pattern.permute.xlu0 0
      %598 = vperm.xlu0 %597, %v592
      %v599 = vpop.permute.xlu0 %598
      %602 = vset.pattern.permute.xlu0 0
      %603 = vperm.xlu0 %602, %v593
      %v604 = vpop.permute.xlu0 %603
      %607 = vset.pattern.permute.xlu0 0
      %608 = vperm.xlu0 %607, %v594
      %v609 = vpop.permute.xlu0 %608
      %612 = vset.pattern.permute.xlu0 0
      %613 = vperm.xlu0 %612, %v595
      %v614 = vpop.permute.xlu0 %613
      %v616 = vadd.f32 %v588, %v599
      %v617 = vadd.f32 %v589, %v604
      %v618 = vadd.f32 %v590, %v609
      %v619 = vadd.f32 %v591, %v614
      %v620 = vmax.f32 %v616, 0.0
      %v621 = vmax.f32 %v617, 0.0
      %v622 = vmax.f32 %v618, 0.0
      %v623 = vmax.f32 %v619, 0.0
      %v624 = vpack.c.bf16 %v620, %v620
      %v625 = vpack.c.bf16 %v621, %v621
      %v626 = vpack.c.bf16 %v622, %v622
      %v627 = vpack.c.bf16 %v623, %v623
      %vm628 = vcmask 191488
      %629 = vst.msk [vmem:[%s170] sm:$0xf] %vm628, %v624
      %630 = vst.msk [vmem:[%s170 + $0x4] sm:$0xf] %vm628, %v625
      %631 = vst.msk [vmem:[%s170 + $0x8] sm:$0xf] %vm628, %v626
      %632 = vst.msk [vmem:[%s170 + $0xc] sm:$0xf] %vm628, %v627
      %p633 = scmp.lt.s32.totalorder %s14, 1
      %s634 = scalar_select %p633, %s14, 1
      %s635 = smul.addr %s634, 4
      %s636 = smul.addr %s635, 4
      %s637 = scalar_lea.vmem %s3, %s636
      // Predicated region
      $region33: #{_lambda_.14} parent=31 // pred_check
        %p638 = pneg %p100
      $region34: #{_lambda_.14} parent=31 // pred_check_branch
        %640 = sbr.rel (%p638) target = $region36
      $region35: #{_lambda_.14} parent=31 // pred_region
        _
      $region36: #{_lambda_.14} parent=31 // pred_fallthru
        _
    $region32: #{_lambda_.14} parent=5 // pred_fallthru
      _
    %p641 = scmp.le.s32.totalorder 2, %s9
    // Predicated region
    $region37: #{_lambda_.14} parent=5 // pred_check
      %p642 = pneg %p641
    $region38: #{_lambda_.14} parent=5 // pred_check_branch
      %644 = sbr.rel (%p642) target = $region40
    $region39: #{_lambda_.14} parent=5 // pred_region
      %s645 = ssub.s32 %s9, 2
      // Predicated region
      $region41: #{_lambda_.14} parent=39 // pred_check
        %p646 = pneg %p106
      $region42: #{_lambda_.14} parent=39 // pred_check_branch
        %648 = sbr.rel (%p646) target = $region44
      $region43: #{_lambda_.14} parent=39 // pred_region
        %p649 = scmp.lt.s32.totalorder %s15, 1
        %s650 = scalar_select %p649, %s15, 1
        %s651 = smul.addr %s650, 4
        %s652 = smul.addr %s651, 4
        %s653 = scalar_lea.vmem %s3, %s652
      $region44: #{_lambda_.14} parent=39 // pred_fallthru
        _
    $region40: #{_lambda_.14} parent=5 // pred_fallthru
      _
  $region6: #{_lambda_.14} parent=0 // loop_footer
    %s13 = sadd.s32 1, %s9
  $region7: #{_lambda_.14} parent=0 // loop_footer_branch
    %8 = sbr.rel target = $region3
  $region8: #{_lambda_.14} parent=0 // loop_exit
    _

// kernel: _lambda_.15
$region0: #{_lambda_.15}
  #allocation0 [shape = 'u32[]', space=smem, size = 0x4, offset = 0x4, fixed_abs, tag = 'smem constant byte address 0x4 - core index']
  #allocation1 [shape = 'u32[72,128]{1,0:T(1,128)}', space=vmem, size = 0x9000, scoped, tag = 'internal scratch']
  %s0 = inlined_call_operand.vmem [shape: bf16[2,32,128], index: 0, kind: input, shape index: {}]
  %s1 = inlined_call_operand.vmem [shape: bf16[9,16,32], index: 1, kind: input, shape index: {}]
  %s2 = inlined_call_operand.vmem [shape: f32[16,1], index: 2, kind: input, shape index: {}]
  %s3 = inlined_call_operand.vmem [shape: bf16[2,16,8], index: 3, kind: output, shape index: {}]
  %s4 = sld [smem:[#allocation0]]
  $region45: #{_lambda_.15} parent=0
    _
  %s6 = ssub.s32 1, %s4
  %s7 = scalar_select 0, %s6, %s4
  loop: start=0, step=1, limit=4
  $region2: #{_lambda_.15} parent=0 // loop_pre_header
    _
  $region3: #{_lambda_.15} parent=0 // loop_header
    %s9 = sphi 0, %s13
    %p10 = scmp.ge.s32.totalorder %s9, 4
    %s19 = sphi 0, %s21
    %s22 = sphi 0, %s19
    %s23 = sphi 0, %s22
    %s39 = sphi 0, %s23
    %s43 = sphi 0, %s43
    %s45 = sphi 0, %s43
    %s46 = sphi 0, %s45
    %s60 = sphi 0, %s46
    %s64 = sphi 0, %s64
    %s66 = sphi 0, %s64
    %s67 = sphi 0, %s66
    %s81 = sphi 0, %s67
    %s87 = sphi 0, %s89
    %s90 = sphi 0, %s87
    %s91 = sphi 0, %s90
    %s107 = sphi 0, %s91
  $region4: #{_lambda_.15} parent=0 // loop_header_branch
    %12 = sbr.rel (%p10) target = $region8
  $region5: #{_lambda_.15} parent=0 // loop_body
    %s14 = ssub.s32 %s9, 1
    %s15 = ssub.s32 %s9, 2
    %s16 = sadd.s32 %s9, 1
    %s17 = ssub.s32 %s9, %s16
    %p18 = scmp.eq.s32.totalorder %s17, 0
    %s20 = sadd.s32 %s19, 1
    %s21 = scalar_select %p18, %s19, %s20
    %p24 = pneg %p18
    %p25 = scmp.eq.s32.totalorder %s9, 1
    %p26 = por %p24, %p25
    %p27 = scmp.ne.s32.totalorder %s19, %s22
    %p28 = scmp.eq.s32.totalorder %s9, 0
    %p29 = por %p27, %p28
    %p30 = scmp.ne.s32.totalorder %s19, %s22
    %p31 = scmp.eq.s32.totalorder %s14, 1
    %p32 = por %p30, %p31
    %p33 = scmp.ne.s32.totalorder %s22, %s23
    %p34 = scmp.eq.s32.totalorder %s14, 0
    %p35 = por %p33, %p34
    %p36 = scmp.ne.s32.totalorder %s22, %s23
    %p37 = scmp.eq.s32.totalorder %s15, 1
    %p38 = por %p36, %p37
    %p40 = scmp.ne.s32.totalorder %s23, %s39
    %p41 = scmp.eq.s32.totalorder %s15, 0
    %p42 = por %p40, %p41
    %s44 = sadd.s32 %s43, 1
    %p47 = scmp.eq.s32.totalorder %s9, 1
    %p48 = scmp.ne.s32.totalorder %s43, %s45
    %p49 = scmp.eq.s32.totalorder %s9, 0
    %p50 = por %p48, %p49
    %p51 = scmp.ne.s32.totalorder %s43, %s45
    %p52 = scmp.eq.s32.totalorder %s14, 1
    %p53 = por %p51, %p52
    %p54 = scmp.ne.s32.totalorder %s45, %s46
    %p55 = scmp.eq.s32.totalorder %s14, 0
    %p56 = por %p54, %p55
    %p57 = scmp.ne.s32.totalorder %s45, %s46
    %p58 = scmp.eq.s32.totalorder %s15, 1
    %p59 = por %p57, %p58
    %p61 = scmp.ne.s32.totalorder %s46, %s60
    %p62 = scmp.eq.s32.totalorder %s15, 0
    %p63 = por %p61, %p62
    %s65 = sadd.s32 %s64, 1
    %p68 = scmp.eq.s32.totalorder %s9, 1
    %p69 = scmp.ne.s32.totalorder %s64, %s66
    %p70 = scmp.eq.s32.totalorder %s9, 0
    %p71 = por %p69, %p70
    %p72 = scmp.ne.s32.totalorder %s64, %s66
    %p73 = scmp.eq.s32.totalorder %s14, 1
    %p74 = por %p72, %p73
    %p75 = scmp.ne.s32.totalorder %s66, %s67
    %p76 = scmp.eq.s32.totalorder %s14, 0
    %p77 = por %p75, %p76
    %p78 = scmp.ne.s32.totalorder %s66, %s67
    %p79 = scmp.eq.s32.totalorder %s15, 1
    %p80 = por %p78, %p79
    %p82 = scmp.ne.s32.totalorder %s67, %s81
    %p83 = scmp.eq.s32.totalorder %s15, 0
    %p84 = por %p82, %p83
    %s85 = ssub.s32 %s9, %s16
    %p86 = scmp.eq.s32.totalorder %s85, 0
    %s88 = sadd.s32 %s87, 1
    %s89 = scalar_select %p86, %s87, %s88
    %p92 = pneg %p86
    %p93 = scmp.eq.s32.totalorder %s9, 1
    %p94 = por %p92, %p93
    %p95 = scmp.ne.s32.totalorder %s87, %s90
    %p96 = scmp.eq.s32.totalorder %s9, 0
    %p97 = por %p95, %p96
    %p98 = scmp.ne.s32.totalorder %s87, %s90
    %p99 = scmp.eq.s32.totalorder %s14, 1
    %p100 = por %p98, %p99
    %p101 = scmp.ne.s32.totalorder %s90, %s91
    %p102 = scmp.eq.s32.totalorder %s14, 0
    %p103 = por %p101, %p102
    %p104 = scmp.ne.s32.totalorder %s90, %s91
    %p105 = scmp.eq.s32.totalorder %s15, 1
    %p106 = por %p104, %p105
    %p108 = scmp.ne.s32.totalorder %s91, %s107
    %p109 = scmp.eq.s32.totalorder %s15, 0
    %p110 = por %p108, %p109
    %p111 = scmp.le.s32.totalorder 1, %s9
    %p112 = scmp.lt.s32.totalorder %s9, 3
    %p113 = pnand %p111, %p112
    %p114 = pneg %p113
    // Predicated region
    $region9: #{_lambda_.15} parent=5 // pred_check
      _
    $region10: #{_lambda_.15} parent=5 // pred_check_branch
      %116 = sbr.rel (%p113) target = $region12
    $region11: #{_lambda_.15} parent=5 // pred_region
      %s117 = ssub.s32 %s9, 1
      // Predicated region
      $region13: #{_lambda_.15} parent=11 // pred_check
        %p118 = pneg %p56
      $region14: #{_lambda_.15} parent=11 // pred_check_branch
        %120 = sbr.rel (%p118) target = $region16
      $region15: #{_lambda_.15} parent=11 // pred_region
        _
      $region16: #{_lambda_.15} parent=11 // pred_fallthru
        _
      // Predicated region
      $region17: #{_lambda_.15} parent=11 // pred_check
        %p121 = pneg %p77
      $region18: #{_lambda_.15} parent=11 // pred_check_branch
        %123 = sbr.rel (%p121) target = $region20
      $region19: #{_lambda_.15} parent=11 // pred_region
        _
      $region20: #{_lambda_.15} parent=11 // pred_fallthru
        _
    $region12: #{_lambda_.15} parent=5 // pred_fallthru
      _
    %p124 = scmp.lt.s32.totalorder %s9, 2
    // Predicated region
    $region21: #{_lambda_.15} parent=5 // pred_check
      %p125 = pneg %p124
    $region22: #{_lambda_.15} parent=5 // pred_check_branch
      %127 = sbr.rel (%p125) target = $region24
    $region23: #{_lambda_.15} parent=5 // pred_region
      // Predicated region
      $region25: #{_lambda_.15} parent=23 // pred_check
        %p128 = pneg %p29
      $region26: #{_lambda_.15} parent=23 // pred_check_branch
        %130 = sbr.rel (%p128) target = $region28
      $region27: #{_lambda_.15} parent=23 // pred_region
        %p131 = scmp.lt.s32.totalorder %s9, 1
        %s132 = scalar_select %p131, %s9, 1
        %s133 = smul.addr %s132, 4
        %s134 = smul.addr %s133, 4
        %s135 = scalar_lea.vmem %s0, %s134
      $region28: #{_lambda_.15} parent=23 // pred_fallthru
        _
    $region24: #{_lambda_.15} parent=5 // pred_fallthru
      _
    %p136 = scmp.le.s32.totalorder 1, %s9
    %p137 = scmp.lt.s32.totalorder %s9, 3
    %p138 = pnand %p136, %p137
    %p139 = pneg %p138
    // Predicated region
    $region29: #{_lambda_.15} parent=5 // pred_check
      _
    $region30: #{_lambda_.15} parent=5 // pred_check_branch
      %141 = sbr.rel (%p138) target = $region32
    $region31: #{_lambda_.15} parent=5 // pred_region
      %s142 = ssub.s32 %s9, 1
      %p143 = scmp.lt.s32.totalorder %s14, 1
      %s144 = scalar_select %p143, %s14, 1
      %s145 = smul.addr %s144, 4
      %s146 = smul.addr %s145, 4
      %s147 = scalar_lea.vmem %s0, %s146
      %p148 = pneg %p35
      %p149 = pneg %p32
      %p150 = pneg %p56
      %p151 = pneg %p53
      %p152 = pneg %p77
      %p153 = pneg %p74
      %p154 = pneg %p103
      %p155 = pneg %p100
      %p156 = scmp.lt.s32.totalorder %s14, 1
      %s157 = scalar_select %p156, %s14, 1
      %s158 = smul.addr %s157, 2
      %s159 = smul.addr %s158, 4
      %s160 = scalar_lea.vmem %s3, %s159
      %p161 = scmp.lt.s32.totalorder %s14, 1
      %s162 = scalar_select %p161, %s14, 1
      %s163 = smul.addr %s162, 4
      %s164 = smul.addr %s163, 4
      %s165 = scalar_lea.vmem %s0, %s164
      %p166 = scmp.lt.s32.totalorder %s14, 1
      %s167 = scalar_select %p166, %s14, 1
      %s168 = smul.addr %s167, 2
      %s169 = smul.addr %s168, 4
      %s170 = scalar_lea.vmem %s3, %s169
      %v172 = vld [vmem:[%s165] sm:$0xf]
      %v173 = vld [vmem:[%s165 + $0x4] sm:$0xf]
      %v174 = vld [vmem:[%s165 + $0x8] sm:$0xf]
      %v175 = vld [vmem:[%s165 + $0xc] sm:$0xf]
      %v176 = vld [vmem:[%s1] sm:$0xf]
      %v177 = vld [vmem:[%s1 + $0x4] sm:$0xf]
      %s178 = scalar_lea.vmem %s1, 8
      %v179 = vld [vmem:[%s178] sm:$0xf]
      %v180 = vld [vmem:[%s178 + $0x4] sm:$0xf]
      %v183 = vunpack.c.l.b16 %v179
      %v184 = vunpack.c.l.b16 %v180
      %v185 = vpack.c.b16 %v184, %v183
      %v190 = vunpack.c.l.b16 %v172
      %v191 = vunpack.c.l.b16 %v173
      %v192 = vunpack.c.l.b16 %v174
      %v193 = vunpack.c.l.b16 %v175
      %v194 = vpack.c.b16 %v191, %v190
      %v195 = vpack.c.b16 %v193, %v192
      %196 = vrot.lane.b32.xlu0 %v194, 127
      %v197 = vpop.permute.xlu0 %196
      %198 = vrot.lane.b32.xlu0 %v195, 127
      %v199 = vpop.permute.xlu0 %198
      %vm202 = vcmask 261120
      %v204 = vsel %vm202, %v185, 0
      %206 = vmatpush.bf16.msra.mxu0 0
      %207 = vmatpush.bf16.msra.mxu0 0
      %208 = vmatpush.bf16.msra.mxu0 0
      %209 = vmatpush.bf16.msra.mxu0 0
      %210 = vmatpush.bf16.msra.mxu0 0
      %211 = vmatpush.bf16.msra.mxu0 0
      %212 = vmatpush.bf16.msra.mxu0 %v199
      %213 = vmatpush.bf16.msra.mxu0 %v197
      %214 = vmatmul.bf16.gmra.mxu0 %v204
      %v215 = vpop.f32.mrf.mxu0
      %v216 = vadd.f32 0.0, %v215
      %v217 = vpop.f32.mrf.mxu0
      %v218 = vadd.f32 0.0, %v217
      %219 = vdwg.mxu0
      %v222 = vunpack.c.l.b16 %v176
      %v223 = vunpack.c.l.b16 %v177
      %v224 = vpack.c.b16 %v223, %v222
      %v228 = vsel %vm202, %v224, 0
      %230 = vmatpush.bf16.msra.mxu0 0
      %231 = vmatpush.bf16.msra.mxu0 0
      %232 = vmatpush.bf16.msra.mxu0 0
      %233 = vmatpush.bf16.msra.mxu0 0
      %234 = vmatpush.bf16.msra.mxu0 0
      %235 = vmatpush.bf16.msra.mxu0 0
      %236 = vmatpush.bf16.msra.mxu0 %v195
      %237 = vmatpush.bf16.msra.mxu0 %v194
      %238 = vmatmul.bf16.gmra.mxu0 %v228
      %v239 = vpop.f32.mrf.mxu0
      %v240 = vadd.f32 %v216, %v239
      %v241 = vpop.f32.mrf.mxu0
      %v242 = vadd.f32 %v218, %v241
      %243 = vdwg.mxu0
      %s244 = scalar_lea.vmem %s1, 16
      %v245 = vld [vmem:[%s244] sm:$0xf]
      %v246 = vld [vmem:[%s244 + $0x4] sm:$0xf]
      %v249 = vunpack.c.l.b16 %v245
      %v250 = vunpack.c.l.b16 %v246
      %v251 = vpack.c.b16 %v250, %v249
      %252 = vrot.lane.b32.xlu0 %v194, 126
      %v253 = vpop.permute.xlu0 %252
      %254 = vrot.lane.b32.xlu0 %v195, 126
      %v255 = vpop.permute.xlu0 %254
      %v259 = vsel %vm202, %v251, 0
      %261 = vmatpush.bf16.msra.mxu0 0
      %262 = vmatpush.bf16.msra.mxu0 0
      %263 = vmatpush.bf16.msra.mxu0 0
      %264 = vmatpush.bf16.msra.mxu0 0
      %265 = vmatpush.bf16.msra.mxu0 0
      %266 = vmatpush.bf16.msra.mxu0 0
      %267 = vmatpush.bf16.msra.mxu0 %v255
      %268 = vmatpush.bf16.msra.mxu0 %v253
      %269 = vmatmul.bf16.gmra.mxu0 %v259
      %v270 = vpop.f32.mrf.mxu0
      %v271 = vadd.f32 0.0, %v270
      %v272 = vpop.f32.mrf.mxu0
      %v273 = vadd.f32 0.0, %v272
      %274 = vdwg.mxu0
      %v275 = vadd.f32 %v240, %v271
      %v276 = vadd.f32 %v242, %v273
      %s277 = scalar_lea.vmem %s1, 24
      %v278 = vld [vmem:[%s277] sm:$0xf]
      %v279 = vld [vmem:[%s277 + $0x4] sm:$0xf]
      %v282 = vunpack.c.l.b16 %v278
      %v283 = vunpack.c.l.b16 %v279
      %v284 = vpack.c.b16 %v283, %v282
      %285 = vrot.lane.b32.xlu0 %v194, 124
      %v286 = vpop.permute.xlu0 %285
      %287 = vrot.lane.b32.xlu0 %v195, 124
      %v288 = vpop.permute.xlu0 %287
      %v292 = vsel %vm202, %v284, 0
      %294 = vmatpush.bf16.msra.mxu0 0
      %295 = vmatpush.bf16.msra.mxu0 0
      %296 = vmatpush.bf16.msra.mxu0 0
      %297 = vmatpush.bf16.msra.mxu0 0
      %298 = vmatpush.bf16.msra.mxu0 0
      %299 = vmatpush.bf16.msra.mxu0 0
      %300 = vmatpush.bf16.msra.mxu0 %v288
      %301 = vmatpush.bf16.msra.mxu0 %v286
      %302 = vmatmul.bf16.gmra.mxu0 %v292
      %v303 = vpop.f32.mrf.mxu0
      %v304 = vadd.f32 0.0, %v303
      %v305 = vpop.f32.mrf.mxu0
      %v306 = vadd.f32 0.0, %v305
      %307 = vdwg.mxu0
      %v308 = vadd.f32 %v275, %v304
      %v309 = vadd.f32 %v276, %v306
      %s310 = scalar_lea.vmem %s1, 32
      %v311 = vld [vmem:[%s310] sm:$0xf]
      %v312 = vld [vmem:[%s310 + $0x4] sm:$0xf]
      %v315 = vunpack.c.l.b16 %v311
      %v316 = vunpack.c.l.b16 %v312
      %v317 = vpack.c.b16 %v316, %v315
      %318 = vrot.lane.b32.xlu0 %v194, 123
      %v319 = vpop.permute.xlu0 %318
      %320 = vrot.lane.b32.xlu0 %v195, 123
      %v321 = vpop.permute.xlu0 %320
      %v325 = vsel %vm202, %v317, 0
      %327 = vmatpush.bf16.msra.mxu0 0
      %328 = vmatpush.bf16.msra.mxu0 0
      %329 = vmatpush.bf16.msra.mxu0 0
      %330 = vmatpush.bf16.msra.mxu0 0
      %331 = vmatpush.bf16.msra.mxu0 0
      %332 = vmatpush.bf16.msra.mxu0 0
      %333 = vmatpush.bf16.msra.mxu0 %v321
      %334 = vmatpush.bf16.msra.mxu0 %v319
      %335 = vmatmul.bf16.gmra.mxu0 %v325
      %v336 = vpop.f32.mrf.mxu0
      %v337 = vadd.f32 0.0, %v336
      %v338 = vpop.f32.mrf.mxu0
      %v339 = vadd.f32 0.0, %v338
      %340 = vdwg.mxu0
      %v341 = vadd.f32 %v308, %v337
      %v342 = vadd.f32 %v309, %v339
      %s343 = scalar_lea.vmem %s1, 40
      %v344 = vld [vmem:[%s343] sm:$0xf]
      %v345 = vld [vmem:[%s343 + $0x4] sm:$0xf]
      %v348 = vunpack.c.l.b16 %v344
      %v349 = vunpack.c.l.b16 %v345
      %v350 = vpack.c.b16 %v349, %v348
      %351 = vrot.lane.b32.xlu0 %v194, 122
      %v352 = vpop.permute.xlu0 %351
      %353 = vrot.lane.b32.xlu0 %v195, 122
      %v354 = vpop.permute.xlu0 %353
      %v358 = vsel %vm202, %v350, 0
      %360 = vmatpush.bf16.msra.mxu0 0
      %361 = vmatpush.bf16.msra.mxu0 0
      %362 = vmatpush.bf16.msra.mxu0 0
      %363 = vmatpush.bf16.msra.mxu0 0
      %364 = vmatpush.bf16.msra.mxu0 0
      %365 = vmatpush.bf16.msra.mxu0 0
      %366 = vmatpush.bf16.msra.mxu0 %v354
      %367 = vmatpush.bf16.msra.mxu0 %v352
      %368 = vmatmul.bf16.gmra.mxu0 %v358
      %v369 = vpop.f32.mrf.mxu0
      %v370 = vadd.f32 0.0, %v369
      %v371 = vpop.f32.mrf.mxu0
      %v372 = vadd.f32 0.0, %v371
      %373 = vdwg.mxu0
      %v374 = vadd.f32 %v341, %v370
      %v375 = vadd.f32 %v342, %v372
      %s376 = scalar_lea.vmem %s1, 48
      %v377 = vld [vmem:[%s376] sm:$0xf]
      %v378 = vld [vmem:[%s376 + $0x4] sm:$0xf]
      %v381 = vunpack.c.l.b16 %v377
      %v382 = vunpack.c.l.b16 %v378
      %v383 = vpack.c.b16 %v382, %v381
      %384 = vrot.lane.b32.xlu0 %v194, 120
      %v385 = vpop.permute.xlu0 %384
      %386 = vrot.lane.b32.xlu0 %v195, 120
      %v387 = vpop.permute.xlu0 %386
      %v391 = vsel %vm202, %v383, 0
      %393 = vmatpush.bf16.msra.mxu0 0
      %394 = vmatpush.bf16.msra.mxu0 0
      %395 = vmatpush.bf16.msra.mxu0 0
      %396 = vmatpush.bf16.msra.mxu0 0
      %397 = vmatpush.bf16.msra.mxu0 0
      %398 = vmatpush.bf16.msra.mxu0 0
      %399 = vmatpush.bf16.msra.mxu0 %v387
      %400 = vmatpush.bf16.msra.mxu0 %v385
      %401 = vmatmul.bf16.gmra.mxu0 %v391
      %v402 = vpop.f32.mrf.mxu0
      %v403 = vadd.f32 0.0, %v402
      %v404 = vpop.f32.mrf.mxu0
      %v405 = vadd.f32 0.0, %v404
      %406 = vdwg.mxu0
      %v407 = vadd.f32 %v374, %v403
      %v408 = vadd.f32 %v375, %v405
      %s409 = scalar_lea.vmem %s1, 56
      %v410 = vld [vmem:[%s409] sm:$0xf]
      %v411 = vld [vmem:[%s409 + $0x4] sm:$0xf]
      %v414 = vunpack.c.l.b16 %v410
      %v415 = vunpack.c.l.b16 %v411
      %v416 = vpack.c.b16 %v415, %v414
      %417 = vrot.lane.b32.xlu0 %v194, 119
      %v418 = vpop.permute.xlu0 %417
      %419 = vrot.lane.b32.xlu0 %v195, 119
      %v420 = vpop.permute.xlu0 %419
      %v424 = vsel %vm202, %v416, 0
      %426 = vmatpush.bf16.msra.mxu0 0
      %427 = vmatpush.bf16.msra.mxu0 0
      %428 = vmatpush.bf16.msra.mxu0 0
      %429 = vmatpush.bf16.msra.mxu0 0
      %430 = vmatpush.bf16.msra.mxu0 0
      %431 = vmatpush.bf16.msra.mxu0 0
      %432 = vmatpush.bf16.msra.mxu0 %v420
      %433 = vmatpush.bf16.msra.mxu0 %v418
      %434 = vmatmul.bf16.gmra.mxu0 %v424
      %v435 = vpop.f32.mrf.mxu0
      %v436 = vadd.f32 0.0, %v435
      %v437 = vpop.f32.mrf.mxu0
      %v438 = vadd.f32 0.0, %v437
      %439 = vdwg.mxu0
      %v440 = vadd.f32 %v407, %v436
      %v441 = vadd.f32 %v408, %v438
      %s442 = scalar_lea.vmem %s1, 64
      %v443 = vld [vmem:[%s442] sm:$0xf]
      %v444 = vld [vmem:[%s442 + $0x4] sm:$0xf]
      %v447 = vunpack.c.l.b16 %v443
      %v448 = vunpack.c.l.b16 %v444
      %v449 = vpack.c.b16 %v448, %v447
      %450 = vrot.lane.b32.xlu0 %v194, 118
      %v451 = vpop.permute.xlu0 %450
      %452 = vrot.lane.b32.xlu0 %v195, 118
      %v453 = vpop.permute.xlu0 %452
      %v457 = vsel %vm202, %v449, 0
      %459 = vmatpush.bf16.msra.mxu0 0
      %460 = vmatpush.bf16.msra.mxu0 0
      %461 = vmatpush.bf16.msra.mxu0 0
      %462 = vmatpush.bf16.msra.mxu0 0
      %463 = vmatpush.bf16.msra.mxu0 0
      %464 = vmatpush.bf16.msra.mxu0 0
      %465 = vmatpush.bf16.msra.mxu0 %v453
      %466 = vmatpush.bf16.msra.mxu0 %v451
      %467 = vmatmul.bf16.gmra.mxu0 %v457
      %v468 = vpop.f32.mrf.mxu0
      %v469 = vadd.f32 0.0, %v468
      %v470 = vpop.f32.mrf.mxu0
      %v471 = vadd.f32 0.0, %v470
      %472 = vdwg.mxu0
      %v473 = vadd.f32 %v440, %v469
      %v474 = vadd.f32 %v441, %v471
      %v475 = vld [vmem:[%s2] sm:$0xff]
      %v476 = vld [vmem:[%s2 + $0x8] sm:$0xff]
      %478 = vset.pattern.permute.xlu0 0
      %479 = vperm.xlu0 %478, %v475
      %v480 = vpop.permute.xlu0 %479
      %483 = vset.pattern.permute.xlu0 0
      %484 = vperm.xlu0 %483, %v476
      %v485 = vpop.permute.xlu0 %484
      %v487 = vadd.f32 %v473, %v480
      %v488 = vadd.f32 %v474, %v485
      %v489 = vmax.f32 %v487, 0.0
      %v490 = vmax.f32 %v488, 0.0
      %v491 = vpack.c.bf16 %v489, %v489
      %v492 = vpack.c.bf16 %v490, %v490
      %vm493 = vcmask 60416
      %494 = vst.msk [vmem:[%s170] sm:$0xf] %vm493, %v491
      %495 = vst.msk [vmem:[%s170 + $0x4] sm:$0xf] %vm493, %v492
      %p496 = scmp.lt.s32.totalorder %s14, 1
      %s497 = scalar_select %p496, %s14, 1
      %s498 = smul.addr %s497, 2
      %s499 = smul.addr %s498, 4
      %s500 = scalar_lea.vmem %s3, %s499
      // Predicated region
      $region33: #{_lambda_.15} parent=31 // pred_check
        %p501 = pneg %p100
      $region34: #{_lambda_.15} parent=31 // pred_check_branch
        %503 = sbr.rel (%p501) target = $region36
      $region35: #{_lambda_.15} parent=31 // pred_region
        _
      $region36: #{_lambda_.15} parent=31 // pred_fallthru
        _
    $region32: #{_lambda_.15} parent=5 // pred_fallthru
      _
    %p504 = scmp.le.s32.totalorder 2, %s9
    // Predicated region
    $region37: #{_lambda_.15} parent=5 // pred_check
      %p505 = pneg %p504
    $region38: #{_lambda_.15} parent=5 // pred_check_branch
      %507 = sbr.rel (%p505) target = $region40
    $region39: #{_lambda_.15} parent=5 // pred_region
      %s508 = ssub.s32 %s9, 2
      // Predicated region
      $region41: #{_lambda_.15} parent=39 // pred_check
        %p509 = pneg %p106
      $region42: #{_lambda_.15} parent=39 // pred_check_branch
        %511 = sbr.rel (%p509) target = $region44
      $region43: #{_lambda_.15} parent=39 // pred_region
        %p512 = scmp.lt.s32.totalorder %s15, 1
        %s513 = scalar_select %p512, %s15, 1
        %s514 = smul.addr %s513, 2
        %s515 = smul.addr %s514, 4
        %s516 = scalar_lea.vmem %s3, %s515
      $region44: #{_lambda_.15} parent=39 // pred_fallthru
        _
    $region40: #{_lambda_.15} parent=5 // pred_fallthru
      _
  $region6: #{_lambda_.15} parent=0 // loop_footer
    %s13 = sadd.s32 1, %s9
  $region7: #{_lambda_.15} parent=0 // loop_footer_branch
    %8 = sbr.rel target = $region3
  $region8: #{_lambda_.15} parent=0 // loop_exit
    _

// kernel: _lambda_.16
$region0: #{_lambda_.16}
  #allocation0 [shape = 'u32[]', space=smem, size = 0x4, offset = 0x4, fixed_abs, tag = 'smem constant byte address 0x4 - core index']
  #allocation1 [shape = 'u32[72,128]{1,0:T(1,128)}', space=vmem, size = 0x9000, scoped, tag = 'internal scratch']
  %s0 = inlined_call_operand.vmem [shape: bf16[2,16,2,4], index: 0, kind: input, shape index: {}]
  %s1 = inlined_call_operand.vmem [shape: f32[4,2], index: 1, kind: input, shape index: {}]
  %s2 = inlined_call_operand.vmem [shape: f32[2,4], index: 2, kind: input, shape index: {}]
  %s3 = inlined_call_operand.vmem [shape: bf16[2,16,4,4], index: 3, kind: input, shape index: {}]
  %s4 = inlined_call_operand.vmem [shape: f32[2,16,4,4], index: 4, kind: output, shape index: {}]
  %s5 = sld [smem:[#allocation0]]
  $region49: #{_lambda_.16} parent=0
    _
  %s7 = ssub.s32 1, %s5
  %s8 = scalar_select 0, %s7, %s5
  loop: start=0, step=1, limit=4
  $region2: #{_lambda_.16} parent=0 // loop_pre_header
    _
  $region3: #{_lambda_.16} parent=0 // loop_header
    %s10 = sphi 0, %s14
    %p11 = scmp.ge.s32.totalorder %s10, 4
    %s20 = sphi 0, %s22
    %s23 = sphi 0, %s20
    %s24 = sphi 0, %s23
    %s40 = sphi 0, %s24
    %s44 = sphi 0, %s44
    %s46 = sphi 0, %s44
    %s47 = sphi 0, %s46
    %s61 = sphi 0, %s47
    %s65 = sphi 0, %s65
    %s67 = sphi 0, %s65
    %s68 = sphi 0, %s67
    %s82 = sphi 0, %s68
    %s88 = sphi 0, %s90
    %s91 = sphi 0, %s88
    %s92 = sphi 0, %s91
    %s108 = sphi 0, %s92
    %s114 = sphi 0, %s116
    %s117 = sphi 0, %s114
    %s118 = sphi 0, %s117
    %s134 = sphi 0, %s118
  $region4: #{_lambda_.16} parent=0 // loop_header_branch
    %13 = sbr.rel (%p11) target = $region8
  $region5: #{_lambda_.16} parent=0 // loop_body
    %s15 = ssub.s32 %s10, 1
    %s16 = ssub.s32 %s10, 2
    %s17 = sadd.s32 %s10, 1
    %s18 = ssub.s32 %s10, %s17
    %p19 = scmp.eq.s32.totalorder %s18, 0
    %s21 = sadd.s32 %s20, 1
    %s22 = scalar_select %p19, %s20, %s21
    %p25 = pneg %p19
    %p26 = scmp.eq.s32.totalorder %s10, 1
    %p27 = por %p25, %p26
    %p28 = scmp.ne.s32.totalorder %s20, %s23
    %p29 = scmp.eq.s32.totalorder %s10, 0
    %p30 = por %p28, %p29
    %p31 = scmp.ne.s32.totalorder %s20, %s23
    %p32 = scmp.eq.s32.totalorder %s15, 1
    %p33 = por %p31, %p32
    %p34 = scmp.ne.s32.totalorder %s23, %s24
    %p35 = scmp.eq.s32.totalorder %s15, 0
    %p36 = por %p34, %p35
    %p37 = scmp.ne.s32.totalorder %s23, %s24
    %p38 = scmp.eq.s32.totalorder %s16, 1
    %p39 = por %p37, %p38
    %p41 = scmp.ne.s32.totalorder %s24, %s40
    %p42 = scmp.eq.s32.totalorder %s16, 0
    %p43 = por %p41, %p42
    %s45 = sadd.s32 %s44, 1
    %p48 = scmp.eq.s32.totalorder %s10, 1
    %p49 = scmp.ne.s32.totalorder %s44, %s46
    %p50 = scmp.eq.s32.totalorder %s10, 0
    %p51 = por %p49, %p50
    %p52 = scmp.ne.s32.totalorder %s44, %s46
    %p53 = scmp.eq.s32.totalorder %s15, 1
    %p54 = por %p52, %p53
    %p55 = scmp.ne.s32.totalorder %s46, %s47
    %p56 = scmp.eq.s32.totalorder %s15, 0
    %p57 = por %p55, %p56
    %p58 = scmp.ne.s32.totalorder %s46, %s47
    %p59 = scmp.eq.s32.totalorder %s16, 1
    %p60 = por %p58, %p59
    %p62 = scmp.ne.s32.totalorder %s47, %s61
    %p63 = scmp.eq.s32.totalorder %s16, 0
    %p64 = por %p62, %p63
    %s66 = sadd.s32 %s65, 1
    %p69 = scmp.eq.s32.totalorder %s10, 1
    %p70 = scmp.ne.s32.totalorder %s65, %s67
    %p71 = scmp.eq.s32.totalorder %s10, 0
    %p72 = por %p70, %p71
    %p73 = scmp.ne.s32.totalorder %s65, %s67
    %p74 = scmp.eq.s32.totalorder %s15, 1
    %p75 = por %p73, %p74
    %p76 = scmp.ne.s32.totalorder %s67, %s68
    %p77 = scmp.eq.s32.totalorder %s15, 0
    %p78 = por %p76, %p77
    %p79 = scmp.ne.s32.totalorder %s67, %s68
    %p80 = scmp.eq.s32.totalorder %s16, 1
    %p81 = por %p79, %p80
    %p83 = scmp.ne.s32.totalorder %s68, %s82
    %p84 = scmp.eq.s32.totalorder %s16, 0
    %p85 = por %p83, %p84
    %s86 = ssub.s32 %s10, %s17
    %p87 = scmp.eq.s32.totalorder %s86, 0
    %s89 = sadd.s32 %s88, 1
    %s90 = scalar_select %p87, %s88, %s89
    %p93 = pneg %p87
    %p94 = scmp.eq.s32.totalorder %s10, 1
    %p95 = por %p93, %p94
    %p96 = scmp.ne.s32.totalorder %s88, %s91
    %p97 = scmp.eq.s32.totalorder %s10, 0
    %p98 = por %p96, %p97
    %p99 = scmp.ne.s32.totalorder %s88, %s91
    %p100 = scmp.eq.s32.totalorder %s15, 1
    %p101 = por %p99, %p100
    %p102 = scmp.ne.s32.totalorder %s91, %s92
    %p103 = scmp.eq.s32.totalorder %s15, 0
    %p104 = por %p102, %p103
    %p105 = scmp.ne.s32.totalorder %s91, %s92
    %p106 = scmp.eq.s32.totalorder %s16, 1
    %p107 = por %p105, %p106
    %p109 = scmp.ne.s32.totalorder %s92, %s108
    %p110 = scmp.eq.s32.totalorder %s16, 0
    %p111 = por %p109, %p110
    %s112 = ssub.s32 %s10, %s17
    %p113 = scmp.eq.s32.totalorder %s112, 0
    %s115 = sadd.s32 %s114, 1
    %s116 = scalar_select %p113, %s114, %s115
    %p119 = pneg %p113
    %p120 = scmp.eq.s32.totalorder %s10, 1
    %p121 = por %p119, %p120
    %p122 = scmp.ne.s32.totalorder %s114, %s117
    %p123 = scmp.eq.s32.totalorder %s10, 0
    %p124 = por %p122, %p123
    %p125 = scmp.ne.s32.totalorder %s114, %s117
    %p126 = scmp.eq.s32.totalorder %s15, 1
    %p127 = por %p125, %p126
    %p128 = scmp.ne.s32.totalorder %s117, %s118
    %p129 = scmp.eq.s32.totalorder %s15, 0
    %p130 = por %p128, %p129
    %p131 = scmp.ne.s32.totalorder %s117, %s118
    %p132 = scmp.eq.s32.totalorder %s16, 1
    %p133 = por %p131, %p132
    %p135 = scmp.ne.s32.totalorder %s118, %s134
    %p136 = scmp.eq.s32.totalorder %s16, 0
    %p137 = por %p135, %p136
    %p138 = scmp.le.s32.totalorder 1, %s10
    %p139 = scmp.lt.s32.totalorder %s10, 3
    %p140 = pnand %p138, %p139
    %p141 = pneg %p140
    // Predicated region
    $region9: #{_lambda_.16} parent=5 // pred_check
      _
    $region10: #{_lambda_.16} parent=5 // pred_check_branch
      %143 = sbr.rel (%p140) target = $region12
    $region11: #{_lambda_.16} parent=5 // pred_region
      %s144 = ssub.s32 %s10, 1
      // Predicated region
      $region13: #{_lambda_.16} parent=11 // pred_check
        %p145 = pneg %p57
      $region14: #{_lambda_.16} parent=11 // pred_check_branch
        %147 = sbr.rel (%p145) target = $region16
      $region15: #{_lambda_.16} parent=11 // pred_region
        _
      $region16: #{_lambda_.16} parent=11 // pred_fallthru
        _
      // Predicated region
      $region17: #{_lambda_.16} parent=11 // pred_check
        %p148 = pneg %p78
      $region18: #{_lambda_.16} parent=11 // pred_check_branch
        %150 = sbr.rel (%p148) target = $region20
      $region19: #{_lambda_.16} parent=11 // pred_region
        _
      $region20: #{_lambda_.16} parent=11 // pred_fallthru
        _
    $region12: #{_lambda_.16} parent=5 // pred_fallthru
      _
    %p151 = scmp.lt.s32.totalorder %s10, 2
    // Predicated region
    $region21: #{_lambda_.16} parent=5 // pred_check
      %p152 = pneg %p151
    $region22: #{_lambda_.16} parent=5 // pred_check_branch
      %154 = sbr.rel (%p152) target = $region24
    $region23: #{_lambda_.16} parent=5 // pred_region
      // Predicated region
      $region25: #{_lambda_.16} parent=23 // pred_check
        %p155 = pneg %p30
      $region26: #{_lambda_.16} parent=23 // pred_check_branch
        %157 = sbr.rel (%p155) target = $region28
      $region27: #{_lambda_.16} parent=23 // pred_region
        %p158 = scmp.lt.s32.totalorder %s10, 1
        %s159 = scalar_select %p158, %s10, 1
        %s160 = smul.addr %s159, 16
        %s161 = scalar_lea.vmem %s0, %s160
      $region28: #{_lambda_.16} parent=23 // pred_fallthru
        _
      // Predicated region
      $region29: #{_lambda_.16} parent=23 // pred_check
        %p162 = pneg %p98
      $region30: #{_lambda_.16} parent=23 // pred_check_branch
        %164 = sbr.rel (%p162) target = $region32
      $region31: #{_lambda_.16} parent=23 // pred_region
        %p165 = scmp.lt.s32.totalorder %s10, 1
        %s166 = scalar_select %p165, %s10, 1
        %s167 = smul.addr %s166, 16
        %s168 = smul.addr %s167, 2
        %s169 = scalar_lea.vmem %s3, %s168
      $region32: #{_lambda_.16} parent=23 // pred_fallthru
        _
    $region24: #{_lambda_.16} parent=5 // pred_fallthru
      _
    %p170 = scmp.le.s32.totalorder 1, %s10
    %p171 = scmp.lt.s32.totalorder %s10, 3
    %p172 = pnand %p170, %p171
    %p173 = pneg %p172
    // Predicated region
    $region33: #{_lambda_.16} parent=5 // pred_check
      _
    $region34: #{_lambda_.16} parent=5 // pred_check_branch
      %175 = sbr.rel (%p172) target = $region36
    $region35: #{_lambda_.16} parent=5 // pred_region
      %s176 = ssub.s32 %s10, 1
      %p177 = scmp.lt.s32.totalorder %s15, 1
      %s178 = scalar_select %p177, %s15, 1
      %s179 = smul.addr %s178, 16
      %s180 = scalar_lea.vmem %s0, %s179
      %p181 = pneg %p36
      %p182 = pneg %p33
      %p183 = pneg %p57
      %p184 = pneg %p54
      %p185 = pneg %p78
      %p186 = pneg %p75
      %p187 = scmp.lt.s32.totalorder %s15, 1
      %s188 = scalar_select %p187, %s15, 1
      %s189 = smul.addr %s188, 16
      %s190 = smul.addr %s189, 2
      %s191 = scalar_lea.vmem %s3, %s190
      %p192 = pneg %p104
      %p193 = pneg %p101
      %p194 = pneg %p130
      %p195 = pneg %p127
      %p196 = scmp.lt.s32.totalorder %s15, 1
      %s197 = scalar_select %p196, %s15, 1
      %s198 = smul.addr %s197, 16
      %s199 = smul.addr %s198, 4
      %s200 = scalar_lea.vmem %s4, %s199
      %p201 = scmp.lt.s32.totalorder %s15, 1
      %s202 = scalar_select %p201, %s15, 1
      %s203 = smul.addr %s202, 16
      %s204 = scalar_lea.vmem %s0, %s203
      %p205 = scmp.lt.s32.totalorder %s15, 1
      %s206 = scalar_select %p205, %s15, 1
      %s207 = smul.addr %s206, 16
      %s208 = smul.addr %s207, 2
      %s209 = scalar_lea.vmem %s3, %s208
      %p210 = scmp.lt.s32.totalorder %s15, 1
      %s211 = scalar_select %p210, %s15, 1
      %s212 = smul.addr %s211, 16
      %s213 = smul.addr %s212, 4
      %s214 = scalar_lea.vmem %s4, %s213
      %v215 = vld [vmem:[%s1] sm:$0xf]
      %v216 = vld [vmem:[%s2] sm:$0x3]
      %v217 = vld [vmem:[%s204] sm:$0x1]
      %v218 = vunpack.c.l.bf16 %v217
      %vm219 = vcmask 15360
      %v221 = vsel %vm219, %v215, 0
      %vm223 = vcmask 1041408
      %v225 = vsel %vm223, %v218, 0
      %227 = vmatpush.msra.mxu0 0.0
      %228 = vmatpush.msra.mxu0 0.0
      %229 = vmatpush.msra.mxu0 0.0
      %230 = vmatpush.msra.mxu0 0.0
      %231 = vmatpush.msra.mxu0 0.0
      %232 = vmatpush.msra.mxu0 0.0
      %233 = vmatpush.msra.mxu0 0.0
      %234 = vmatpush.msra.mxu0 0.0
      %235 = vmatpush.msra.mxu0 0.0
      %236 = vmatpush.msra.mxu0 0.0
      %237 = vmatpush.msra.mxu0 0.0
      %238 = vmatpush.msra.mxu0 0.0
      %239 = vmatpush.msra.mxu0 0.0
      %240 = vmatpush.msra.mxu0 0.0
      %241 = vmatpush.msra.mxu0 0.0
      %242 = vmatpush.msra.mxu0 %v225
      %243 = vmatmul.f32.gmra.mxu0 %v221
      %v244 = vpop.f32.mrf.mxu0
      %v245 = vadd.f32 0.0, %v244
      %246 = vdwg.mxu0
      %v247 = vld [vmem:[%s209] sm:$0x3]
      %v248 = vunpack.c.l.bf16 %v247
      %v250 = vsel %vm219, %v245, 0
      %v253 = vsel %vm223, %v216, 0
      %255 = vmatpush.msra.mxu0 0.0
      %256 = vmatpush.msra.mxu0 0.0
      %257 = vmatpush.msra.mxu0 0.0
      %258 = vmatpush.msra.mxu0 0.0
      %259 = vmatpush.msra.mxu0 0.0
      %260 = vmatpush.msra.mxu0 0.0
      %261 = vmatpush.msra.mxu0 0.0
      %262 = vmatpush.msra.mxu0 0.0
      %263 = vmatpush.msra.mxu0 0.0
      %264 = vmatpush.msra.mxu0 0.0
      %265 = vmatpush.msra.mxu0 0.0
      %266 = vmatpush.msra.mxu0 0.0
      %267 = vmatpush.msra.mxu0 0.0
      %268 = vmatpush.msra.mxu0 0.0
      %269 = vmatpush.msra.mxu0 0.0
      %270 = vmatpush.msra.mxu0 %v253
      %271 = vmatmul.f32.gmra.mxu0 %v250
      %v272 = vpop.f32.mrf.mxu0
      %v273 = vadd.f32 %v248, %v272
      %274 = vdwg.mxu0
      %vm275 = vcmask 27648
      %276 = vst.msk [vmem:[%s214] sm:$0xf] %vm275, %v273
      %s277 = scalar_lea.vmem %s204, 1
      %v278 = vld [vmem:[%s277] sm:$0x1]
      %v279 = vunpack.c.l.bf16 %v278
      %v281 = vsel %vm223, %v279, 0
      %283 = vmatpush.msra.mxu0 0.0
      %284 = vmatpush.msra.mxu0 0.0
      %285 = vmatpush.msra.mxu0 0.0
      %286 = vmatpush.msra.mxu0 0.0
      %287 = vmatpush.msra.mxu0 0.0
      %288 = vmatpush.msra.mxu0 0.0
      %289 = vmatpush.msra.mxu0 0.0
      %290 = vmatpush.msra.mxu0 0.0
      %291 = vmatpush.msra.mxu0 0.0
      %292 = vmatpush.msra.mxu0 0.0
      %293 = vmatpush.msra.mxu0 0.0
      %294 = vmatpush.msra.mxu0 0.0
      %295 = vmatpush.msra.mxu0 0.0
      %296 = vmatpush.msra.mxu0 0.0
      %297 = vmatpush.msra.mxu0 0.0
      %298 = vmatpush.msra.mxu0 %v281
      %299 = vmatmul.f32.gmra.mxu0 %v221
      %v300 = vpop.f32.mrf.mxu0
      %v301 = vadd.f32 0.0, %v300
      %302 = vdwg.mxu0
      %s303 = scalar_lea.vmem %s209, 2
      %v304 = vld [vmem:[%s303] sm:$0x3]
      %v305 = vunpack.c.l.bf16 %v304
      %v307 = vsel %vm219, %v301, 0
      %309 = vmatpush.msra.mxu0 0.0
      %310 = vmatpush.msra.mxu0 0.0
      %311 = vmatpush.msra.mxu0 0.0
      %312 = vmatpush.msra.mxu0 0.0
      %313 = vmatpush.msra.mxu0 0.0
      %314 = vmatpush.msra.mxu0 0.0
      %315 = vmatpush.msra.mxu0 0.0
      %316 = vmatpush.msra.mxu0 0.0
      %317 = vmatpush.msra.mxu0 0.0
      %318 = vmatpush.msra.mxu0 0.0
      %319 = vmatpush.msra.mxu0 0.0
      %320 = vmatpush.msra.mxu0 0.0
      %321 = vmatpush.msra.mxu0 0.0
      %322 = vmatpush.msra.mxu0 0.0
      %323 = vmatpush.msra.mxu0 0.0
      %324 = vmatpush.msra.mxu0 %v253
      %325 = vmatmul.f32.gmra.mxu0 %v307
      %v326 = vpop.f32.mrf.mxu0
      %v327 = vadd.f32 %v305, %v326
      %328 = vdwg.mxu0
      %s329 = scalar_lea.vmem %s214, 4
      %330 = vst.msk [vmem:[%s329] sm:$0xf] %vm275, %v327
      %s331 = scalar_lea.vmem %s204, 2
      %v332 = vld [vmem:[%s331] sm:$0x1]
      %v333 = vunpack.c.l.bf16 %v332
      %v335 = vsel %vm223, %v333, 0
      %337 = vmatpush.msra.mxu0 0.0
      %338 = vmatpush.msra.mxu0 0.0
      %339 = vmatpush.msra.mxu0 0.0
      %340 = vmatpush.msra.mxu0 0.0
      %341 = vmatpush.msra.mxu0 0.0
      %342 = vmatpush.msra.mxu0 0.0
      %343 = vmatpush.msra.mxu0 0.0
      %344 = vmatpush.msra.mxu0 0.0
      %345 = vmatpush.msra.mxu0 0.0
      %346 = vmatpush.msra.mxu0 0.0
      %347 = vmatpush.msra.mxu0 0.0
      %348 = vmatpush.msra.mxu0 0.0
      %349 = vmatpush.msra.mxu0 0.0
      %350 = vmatpush.msra.mxu0 0.0
      %351 = vmatpush.msra.mxu0 0.0
      %352 = vmatpush.msra.mxu0 %v335
      %353 = vmatmul.f32.gmra.mxu0 %v221
      %v354 = vpop.f32.mrf.mxu0
      %v355 = vadd.f32 0.0, %v354
      %356 = vdwg.mxu0
      %s357 = scalar_lea.vmem %s209, 4
      %v358 = vld [vmem:[%s357] sm:$0x3]
      %v359 = vunpack.c.l.bf16 %v358
      %v361 = vsel %vm219, %v355, 0
      %363 = vmatpush.msra.mxu0 0.0
      %364 = vmatpush.msra.mxu0 0.0
      %365 = vmatpush.msra.mxu0 0.0
      %366 = vmatpush.msra.mxu0 0.0
      %367 = vmatpush.msra.mxu0 0.0
      %368 = vmatpush.msra.mxu0 0.0
      %369 = vmatpush.msra.mxu0 0.0
      %370 = vmatpush.msra.mxu0 0.0
      %371 = vmatpush.msra.mxu0 0.0
      %372 = vmatpush.msra.mxu0 0.0
      %373 = vmatpush.msra.mxu0 0.0
      %374 = vmatpush.msra.mxu0 0.0
      %375 = vmatpush.msra.mxu0 0.0
      %376 = vmatpush.msra.mxu0 0.0
      %377 = vmatpush.msra.mxu0 0.0
      %378 = vmatpush.msra.mxu0 %v253
      %379 = vmatmul.f32.gmra.mxu0 %v361
      %v380 = vpop.f32.mrf.mxu0
      %v381 = vadd.f32 %v359, %v380
      %382 = vdwg.mxu0
      %s383 = scalar_lea.vmem %s214, 8
      %384 = vst.msk [vmem:[%s383] sm:$0xf] %vm275, %v381
      %s385 = scalar_lea.vmem %s204, 3
      %v386 = vld [vmem:[%s385] sm:$0x1]
      %v387 = vunpack.c.l.bf16 %v386
      %v389 = vsel %vm223, %v387, 0
      %391 = vmatpush.msra.mxu0 0.0
      %392 = vmatpush.msra.mxu0 0.0
      %393 = vmatpush.msra.mxu0 0.0
      %394 = vmatpush.msra.mxu0 0.0
      %395 = vmatpush.msra.mxu0 0.0
      %396 = vmatpush.msra.mxu0 0.0
      %397 = vmatpush.msra.mxu0 0.0
      %398 = vmatpush.msra.mxu0 0.0
      %399 = vmatpush.msra.mxu0 0.0
      %400 = vmatpush.msra.mxu0 0.0
      %401 = vmatpush.msra.mxu0 0.0
      %402 = vmatpush.msra.mxu0 0.0
      %403 = vmatpush.msra.mxu0 0.0
      %404 = vmatpush.msra.mxu0 0.0
      %405 = vmatpush.msra.mxu0 0.0
      %406 = vmatpush.msra.mxu0 %v389
      %407 = vmatmul.f32.gmra.mxu0 %v221
      %v408 = vpop.f32.mrf.mxu0
      %v409 = vadd.f32 0.0, %v408
      %410 = vdwg.mxu0
      %s411 = scalar_lea.vmem %s209, 6
      %v412 = vld [vmem:[%s411] sm:$0x3]
      %v413 = vunpack.c.l.bf16 %v412
      %v415 = vsel %vm219, %v409, 0
      %417 = vmatpush.msra.mxu0 0.0
      %418 = vmatpush.msra.mxu0 0.0
      %419 = vmatpush.msra.mxu0 0.0
      %420 = vmatpush.msra.mxu0 0.0
      %421 = vmatpush.msra.mxu0 0.0
      %422 = vmatpush.msra.mxu0 0.0
      %423 = vmatpush.msra.mxu0 0.0
      %424 = vmatpush.msra.mxu0 0.0
      %425 = vmatpush.msra.mxu0 0.0
      %426 = vmatpush.msra.mxu0 0.0
      %427 = vmatpush.msra.mxu0 0.0
      %428 = vmatpush.msra.mxu0 0.0
      %429 = vmatpush.msra.mxu0 0.0
      %430 = vmatpush.msra.mxu0 0.0
      %431 = vmatpush.msra.mxu0 0.0
      %432 = vmatpush.msra.mxu0 %v253
      %433 = vmatmul.f32.gmra.mxu0 %v415
      %v434 = vpop.f32.mrf.mxu0
      %v435 = vadd.f32 %v413, %v434
      %436 = vdwg.mxu0
      %s437 = scalar_lea.vmem %s214, 12
      %438 = vst.msk [vmem:[%s437] sm:$0xf] %vm275, %v435
      %s439 = scalar_lea.vmem %s204, 4
      %v440 = vld [vmem:[%s439] sm:$0x1]
      %v441 = vunpack.c.l.bf16 %v440
      %v443 = vsel %vm223, %v441, 0
      %445 = vmatpush.msra.mxu0 0.0
      %446 = vmatpush.msra.mxu0 0.0
      %447 = vmatpush.msra.mxu0 0.0
      %448 = vmatpush.msra.mxu0 0.0
      %449 = vmatpush.msra.mxu0 0.0
      %450 = vmatpush.msra.mxu0 0.0
      %451 = vmatpush.msra.mxu0 0.0
      %452 = vmatpush.msra.mxu0 0.0
      %453 = vmatpush.msra.mxu0 0.0
      %454 = vmatpush.msra.mxu0 0.0
      %455 = vmatpush.msra.mxu0 0.0
      %456 = vmatpush.msra.mxu0 0.0
      %457 = vmatpush.msra.mxu0 0.0
      %458 = vmatpush.msra.mxu0 0.0
      %459 = vmatpush.msra.mxu0 0.0
      %460 = vmatpush.msra.mxu0 %v443
      %461 = vmatmul.f32.gmra.mxu0 %v221
      %v462 = vpop.f32.mrf.mxu0
      %v463 = vadd.f32 0.0, %v462
      %464 = vdwg.mxu0
      %s465 = scalar_lea.vmem %s209, 8
      %v466 = vld [vmem:[%s465] sm:$0x3]
      %v467 = vunpack.c.l.bf16 %v466
      %v469 = vsel %vm219, %v463, 0
      %471 = vmatpush.msra.mxu0 0.0
      %472 = vmatpush.msra.mxu0 0.0
      %473 = vmatpush.msra.mxu0 0.0
      %474 = vmatpush.msra.mxu0 0.0
      %475 = vmatpush.msra.mxu0 0.0
      %476 = vmatpush.msra.mxu0 0.0
      %477 = vmatpush.msra.mxu0 0.0
      %478 = vmatpush.msra.mxu0 0.0
      %479 = vmatpush.msra.mxu0 0.0
      %480 = vmatpush.msra.mxu0 0.0
      %481 = vmatpush.msra.mxu0 0.0
      %482 = vmatpush.msra.mxu0 0.0
      %483 = vmatpush.msra.mxu0 0.0
      %484 = vmatpush.msra.mxu0 0.0
      %485 = vmatpush.msra.mxu0 0.0
      %486 = vmatpush.msra.mxu0 %v253
      %487 = vmatmul.f32.gmra.mxu0 %v469
      %v488 = vpop.f32.mrf.mxu0
      %v489 = vadd.f32 %v467, %v488
      %490 = vdwg.mxu0
      %s491 = scalar_lea.vmem %s214, 16
      %492 = vst.msk [vmem:[%s491] sm:$0xf] %vm275, %v489
      %s493 = scalar_lea.vmem %s204, 5
      %v494 = vld [vmem:[%s493] sm:$0x1]
      %v495 = vunpack.c.l.bf16 %v494
      %v497 = vsel %vm223, %v495, 0
      %499 = vmatpush.msra.mxu0 0.0
      %500 = vmatpush.msra.mxu0 0.0
      %501 = vmatpush.msra.mxu0 0.0
      %502 = vmatpush.msra.mxu0 0.0
      %503 = vmatpush.msra.mxu0 0.0
      %504 = vmatpush.msra.mxu0 0.0
      %505 = vmatpush.msra.mxu0 0.0
      %506 = vmatpush.msra.mxu0 0.0
      %507 = vmatpush.msra.mxu0 0.0
      %508 = vmatpush.msra.mxu0 0.0
      %509 = vmatpush.msra.mxu0 0.0
      %510 = vmatpush.msra.mxu0 0.0
      %511 = vmatpush.msra.mxu0 0.0
      %512 = vmatpush.msra.mxu0 0.0
      %513 = vmatpush.msra.mxu0 0.0
      %514 = vmatpush.msra.mxu0 %v497
      %515 = vmatmul.f32.gmra.mxu0 %v221
      %v516 = vpop.f32.mrf.mxu0
      %v517 = vadd.f32 0.0, %v516
      %518 = vdwg.mxu0
      %s519 = scalar_lea.vmem %s209, 10
      %v520 = vld [vmem:[%s519] sm:$0x3]
      %v521 = vunpack.c.l.bf16 %v520
      %v523 = vsel %vm219, %v517, 0
      %525 = vmatpush.msra.mxu0 0.0
      %526 = vmatpush.msra.mxu0 0.0
      %527 = vmatpush.msra.mxu0 0.0
      %528 = vmatpush.msra.mxu0 0.0
      %529 = vmatpush.msra.mxu0 0.0
      %530 = vmatpush.msra.mxu0 0.0
      %531 = vmatpush.msra.mxu0 0.0
      %532 = vmatpush.msra.mxu0 0.0
      %533 = vmatpush.msra.mxu0 0.0
      %534 = vmatpush.msra.mxu0 0.0
      %535 = vmatpush.msra.mxu0 0.0
      %536 = vmatpush.msra.mxu0 0.0
      %537 = vmatpush.msra.mxu0 0.0
      %538 = vmatpush.msra.mxu0 0.0
      %539 = vmatpush.msra.mxu0 0.0
      %540 = vmatpush.msra.mxu0 %v253
      %541 = vmatmul.f32.gmra.mxu0 %v523
      %v542 = vpop.f32.mrf.mxu0
      %v543 = vadd.f32 %v521, %v542
      %544 = vdwg.mxu0
      %s545 = scalar_lea.vmem %s214, 20
      %546 = vst.msk [vmem:[%s545] sm:$0xf] %vm275, %v543
      %s547 = scalar_lea.vmem %s204, 6
      %v548 = vld [vmem:[%s547] sm:$0x1]
      %v549 = vunpack.c.l.bf16 %v548
      %v551 = vsel %vm223, %v549, 0
      %553 = vmatpush.msra.mxu0 0.0
      %554 = vmatpush.msra.mxu0 0.0
      %555 = vmatpush.msra.mxu0 0.0
      %556 = vmatpush.msra.mxu0 0.0
      %557 = vmatpush.msra.mxu0 0.0
      %558 = vmatpush.msra.mxu0 0.0
      %559 = vmatpush.msra.mxu0 0.0
      %560 = vmatpush.msra.mxu0 0.0
      %561 = vmatpush.msra.mxu0 0.0
      %562 = vmatpush.msra.mxu0 0.0
      %563 = vmatpush.msra.mxu0 0.0
      %564 = vmatpush.msra.mxu0 0.0
      %565 = vmatpush.msra.mxu0 0.0
      %566 = vmatpush.msra.mxu0 0.0
      %567 = vmatpush.msra.mxu0 0.0
      %568 = vmatpush.msra.mxu0 %v551
      %569 = vmatmul.f32.gmra.mxu0 %v221
      %v570 = vpop.f32.mrf.mxu0
      %v571 = vadd.f32 0.0, %v570
      %572 = vdwg.mxu0
      %s573 = scalar_lea.vmem %s209, 12
      %v574 = vld [vmem:[%s573] sm:$0x3]
      %v575 = vunpack.c.l.bf16 %v574
      %v577 = vsel %vm219, %v571, 0
      %579 = vmatpush.msra.mxu0 0.0
      %580 = vmatpush.msra.mxu0 0.0
      %581 = vmatpush.msra.mxu0 0.0
      %582 = vmatpush.msra.mxu0 0.0
      %583 = vmatpush.msra.mxu0 0.0
      %584 = vmatpush.msra.mxu0 0.0
      %585 = vmatpush.msra.mxu0 0.0
      %586 = vmatpush.msra.mxu0 0.0
      %587 = vmatpush.msra.mxu0 0.0
      %588 = vmatpush.msra.mxu0 0.0
      %589 = vmatpush.msra.mxu0 0.0
      %590 = vmatpush.msra.mxu0 0.0
      %591 = vmatpush.msra.mxu0 0.0
      %592 = vmatpush.msra.mxu0 0.0
      %593 = vmatpush.msra.mxu0 0.0
      %594 = vmatpush.msra.mxu0 %v253
      %595 = vmatmul.f32.gmra.mxu0 %v577
      %v596 = vpop.f32.mrf.mxu0
      %v597 = vadd.f32 %v575, %v596
      %598 = vdwg.mxu0
      %s599 = scalar_lea.vmem %s214, 24
      %600 = vst.msk [vmem:[%s599] sm:$0xf] %vm275, %v597
      %s601 = scalar_lea.vmem %s204, 7
      %v602 = vld [vmem:[%s601] sm:$0x1]
      %v603 = vunpack.c.l.bf16 %v602
      %v605 = vsel %vm223, %v603, 0
      %607 = vmatpush.msra.mxu0 0.0
      %608 = vmatpush.msra.mxu0 0.0
      %609 = vmatpush.msra.mxu0 0.0
      %610 = vmatpush.msra.mxu0 0.0
      %611 = vmatpush.msra.mxu0 0.0
      %612 = vmatpush.msra.mxu0 0.0
      %613 = vmatpush.msra.mxu0 0.0
      %614 = vmatpush.msra.mxu0 0.0
      %615 = vmatpush.msra.mxu0 0.0
      %616 = vmatpush.msra.mxu0 0.0
      %617 = vmatpush.msra.mxu0 0.0
      %618 = vmatpush.msra.mxu0 0.0
      %619 = vmatpush.msra.mxu0 0.0
      %620 = vmatpush.msra.mxu0 0.0
      %621 = vmatpush.msra.mxu0 0.0
      %622 = vmatpush.msra.mxu0 %v605
      %623 = vmatmul.f32.gmra.mxu0 %v221
      %v624 = vpop.f32.mrf.mxu0
      %v625 = vadd.f32 0.0, %v624
      %626 = vdwg.mxu0
      %s627 = scalar_lea.vmem %s209, 14
      %v628 = vld [vmem:[%s627] sm:$0x3]
      %v629 = vunpack.c.l.bf16 %v628
      %v631 = vsel %vm219, %v625, 0
      %633 = vmatpush.msra.mxu0 0.0
      %634 = vmatpush.msra.mxu0 0.0
      %635 = vmatpush.msra.mxu0 0.0
      %636 = vmatpush.msra.mxu0 0.0
      %637 = vmatpush.msra.mxu0 0.0
      %638 = vmatpush.msra.mxu0 0.0
      %639 = vmatpush.msra.mxu0 0.0
      %640 = vmatpush.msra.mxu0 0.0
      %641 = vmatpush.msra.mxu0 0.0
      %642 = vmatpush.msra.mxu0 0.0
      %643 = vmatpush.msra.mxu0 0.0
      %644 = vmatpush.msra.mxu0 0.0
      %645 = vmatpush.msra.mxu0 0.0
      %646 = vmatpush.msra.mxu0 0.0
      %647 = vmatpush.msra.mxu0 0.0
      %648 = vmatpush.msra.mxu0 %v253
      %649 = vmatmul.f32.gmra.mxu0 %v631
      %v650 = vpop.f32.mrf.mxu0
      %v651 = vadd.f32 %v629, %v650
      %652 = vdwg.mxu0
      %s653 = scalar_lea.vmem %s214, 28
      %654 = vst.msk [vmem:[%s653] sm:$0xf] %vm275, %v651
      %s655 = scalar_lea.vmem %s204, 8
      %v656 = vld [vmem:[%s655] sm:$0x1]
      %v657 = vunpack.c.l.bf16 %v656
      %v659 = vsel %vm223, %v657, 0
      %661 = vmatpush.msra.mxu0 0.0
      %662 = vmatpush.msra.mxu0 0.0
      %663 = vmatpush.msra.mxu0 0.0
      %664 = vmatpush.msra.mxu0 0.0
      %665 = vmatpush.msra.mxu0 0.0
      %666 = vmatpush.msra.mxu0 0.0
      %667 = vmatpush.msra.mxu0 0.0
      %668 = vmatpush.msra.mxu0 0.0
      %669 = vmatpush.msra.mxu0 0.0
      %670 = vmatpush.msra.mxu0 0.0
      %671 = vmatpush.msra.mxu0 0.0
      %672 = vmatpush.msra.mxu0 0.0
      %673 = vmatpush.msra.mxu0 0.0
      %674 = vmatpush.msra.mxu0 0.0
      %675 = vmatpush.msra.mxu0 0.0
      %676 = vmatpush.msra.mxu0 %v659
      %677 = vmatmul.f32.gmra.mxu0 %v221
      %v678 = vpop.f32.mrf.mxu0
      %v679 = vadd.f32 0.0, %v678
      %680 = vdwg.mxu0
      %s681 = scalar_lea.vmem %s209, 16
      %v682 = vld [vmem:[%s681] sm:$0x3]
      %v683 = vunpack.c.l.bf16 %v682
      %v685 = vsel %vm219, %v679, 0
      %687 = vmatpush.msra.mxu0 0.0
      %688 = vmatpush.msra.mxu0 0.0
      %689 = vmatpush.msra.mxu0 0.0
      %690 = vmatpush.msra.mxu0 0.0
      %691 = vmatpush.msra.mxu0 0.0
      %692 = vmatpush.msra.mxu0 0.0
      %693 = vmatpush.msra.mxu0 0.0
      %694 = vmatpush.msra.mxu0 0.0
      %695 = vmatpush.msra.mxu0 0.0
      %696 = vmatpush.msra.mxu0 0.0
      %697 = vmatpush.msra.mxu0 0.0
      %698 = vmatpush.msra.mxu0 0.0
      %699 = vmatpush.msra.mxu0 0.0
      %700 = vmatpush.msra.mxu0 0.0
      %701 = vmatpush.msra.mxu0 0.0
      %702 = vmatpush.msra.mxu0 %v253
      %703 = vmatmul.f32.gmra.mxu0 %v685
      %v704 = vpop.f32.mrf.mxu0
      %v705 = vadd.f32 %v683, %v704
      %706 = vdwg.mxu0
      %s707 = scalar_lea.vmem %s214, 32
      %708 = vst.msk [vmem:[%s707] sm:$0xf] %vm275, %v705
      %s709 = scalar_lea.vmem %s204, 9
      %v710 = vld [vmem:[%s709] sm:$0x1]
      %v711 = vunpack.c.l.bf16 %v710
      %v713 = vsel %vm223, %v711, 0
      %715 = vmatpush.msra.mxu0 0.0
      %716 = vmatpush.msra.mxu0 0.0
      %717 = vmatpush.msra.mxu0 0.0
      %718 = vmatpush.msra.mxu0 0.0
      %719 = vmatpush.msra.mxu0 0.0
      %720 = vmatpush.msra.mxu0 0.0
      %721 = vmatpush.msra.mxu0 0.0
      %722 = vmatpush.msra.mxu0 0.0
      %723 = vmatpush.msra.mxu0 0.0
      %724 = vmatpush.msra.mxu0 0.0
      %725 = vmatpush.msra.mxu0 0.0
      %726 = vmatpush.msra.mxu0 0.0
      %727 = vmatpush.msra.mxu0 0.0
      %728 = vmatpush.msra.mxu0 0.0
      %729 = vmatpush.msra.mxu0 0.0
      %730 = vmatpush.msra.mxu0 %v713
      %731 = vmatmul.f32.gmra.mxu0 %v221
      %v732 = vpop.f32.mrf.mxu0
      %v733 = vadd.f32 0.0, %v732
      %734 = vdwg.mxu0
      %s735 = scalar_lea.vmem %s209, 18
      %v736 = vld [vmem:[%s735] sm:$0x3]
      %v737 = vunpack.c.l.bf16 %v736
      %v739 = vsel %vm219, %v733, 0
      %741 = vmatpush.msra.mxu0 0.0
      %742 = vmatpush.msra.mxu0 0.0
      %743 = vmatpush.msra.mxu0 0.0
      %744 = vmatpush.msra.mxu0 0.0
      %745 = vmatpush.msra.mxu0 0.0
      %746 = vmatpush.msra.mxu0 0.0
      %747 = vmatpush.msra.mxu0 0.0
      %748 = vmatpush.msra.mxu0 0.0
      %749 = vmatpush.msra.mxu0 0.0
      %750 = vmatpush.msra.mxu0 0.0
      %751 = vmatpush.msra.mxu0 0.0
      %752 = vmatpush.msra.mxu0 0.0
      %753 = vmatpush.msra.mxu0 0.0
      %754 = vmatpush.msra.mxu0 0.0
      %755 = vmatpush.msra.mxu0 0.0
      %756 = vmatpush.msra.mxu0 %v253
      %757 = vmatmul.f32.gmra.mxu0 %v739
      %v758 = vpop.f32.mrf.mxu0
      %v759 = vadd.f32 %v737, %v758
      %760 = vdwg.mxu0
      %s761 = scalar_lea.vmem %s214, 36
      %762 = vst.msk [vmem:[%s761] sm:$0xf] %vm275, %v759
      %s763 = scalar_lea.vmem %s204, 10
      %v764 = vld [vmem:[%s763] sm:$0x1]
      %v765 = vunpack.c.l.bf16 %v764
      %v767 = vsel %vm223, %v765, 0
      %769 = vmatpush.msra.mxu0 0.0
      %770 = vmatpush.msra.mxu0 0.0
      %771 = vmatpush.msra.mxu0 0.0
      %772 = vmatpush.msra.mxu0 0.0
      %773 = vmatpush.msra.mxu0 0.0
      %774 = vmatpush.msra.mxu0 0.0
      %775 = vmatpush.msra.mxu0 0.0
      %776 = vmatpush.msra.mxu0 0.0
      %777 = vmatpush.msra.mxu0 0.0
      %778 = vmatpush.msra.mxu0 0.0
      %779 = vmatpush.msra.mxu0 0.0
      %780 = vmatpush.msra.mxu0 0.0
      %781 = vmatpush.msra.mxu0 0.0
      %782 = vmatpush.msra.mxu0 0.0
      %783 = vmatpush.msra.mxu0 0.0
      %784 = vmatpush.msra.mxu0 %v767
      %785 = vmatmul.f32.gmra.mxu0 %v221
      %v786 = vpop.f32.mrf.mxu0
      %v787 = vadd.f32 0.0, %v786
      %788 = vdwg.mxu0
      %s789 = scalar_lea.vmem %s209, 20
      %v790 = vld [vmem:[%s789] sm:$0x3]
      %v791 = vunpack.c.l.bf16 %v790
      %v793 = vsel %vm219, %v787, 0
      %795 = vmatpush.msra.mxu0 0.0
      %796 = vmatpush.msra.mxu0 0.0
      %797 = vmatpush.msra.mxu0 0.0
      %798 = vmatpush.msra.mxu0 0.0
      %799 = vmatpush.msra.mxu0 0.0
      %800 = vmatpush.msra.mxu0 0.0
      %801 = vmatpush.msra.mxu0 0.0
      %802 = vmatpush.msra.mxu0 0.0
      %803 = vmatpush.msra.mxu0 0.0
      %804 = vmatpush.msra.mxu0 0.0
      %805 = vmatpush.msra.mxu0 0.0
      %806 = vmatpush.msra.mxu0 0.0
      %807 = vmatpush.msra.mxu0 0.0
      %808 = vmatpush.msra.mxu0 0.0
      %809 = vmatpush.msra.mxu0 0.0
      %810 = vmatpush.msra.mxu0 %v253
      %811 = vmatmul.f32.gmra.mxu0 %v793
      %v812 = vpop.f32.mrf.mxu0
      %v813 = vadd.f32 %v791, %v812
      %814 = vdwg.mxu0
      %s815 = scalar_lea.vmem %s214, 40
      %816 = vst.msk [vmem:[%s815] sm:$0xf] %vm275, %v813
      %s817 = scalar_lea.vmem %s204, 11
      %v818 = vld [vmem:[%s817] sm:$0x1]
      %v819 = vunpack.c.l.bf16 %v818
      %v821 = vsel %vm223, %v819, 0
      %823 = vmatpush.msra.mxu0 0.0
      %824 = vmatpush.msra.mxu0 0.0
      %825 = vmatpush.msra.mxu0 0.0
      %826 = vmatpush.msra.mxu0 0.0
      %827 = vmatpush.msra.mxu0 0.0
      %828 = vmatpush.msra.mxu0 0.0
      %829 = vmatpush.msra.mxu0 0.0
      %830 = vmatpush.msra.mxu0 0.0
      %831 = vmatpush.msra.mxu0 0.0
      %832 = vmatpush.msra.mxu0 0.0
      %833 = vmatpush.msra.mxu0 0.0
      %834 = vmatpush.msra.mxu0 0.0
      %835 = vmatpush.msra.mxu0 0.0
      %836 = vmatpush.msra.mxu0 0.0
      %837 = vmatpush.msra.mxu0 0.0
      %838 = vmatpush.msra.mxu0 %v821
      %839 = vmatmul.f32.gmra.mxu0 %v221
      %v840 = vpop.f32.mrf.mxu0
      %v841 = vadd.f32 0.0, %v840
      %842 = vdwg.mxu0
      %s843 = scalar_lea.vmem %s209, 22
      %v844 = vld [vmem:[%s843] sm:$0x3]
      %v845 = vunpack.c.l.bf16 %v844
      %v847 = vsel %vm219, %v841, 0
      %849 = vmatpush.msra.mxu0 0.0
      %850 = vmatpush.msra.mxu0 0.0
      %851 = vmatpush.msra.mxu0 0.0
      %852 = vmatpush.msra.mxu0 0.0
      %853 = vmatpush.msra.mxu0 0.0
      %854 = vmatpush.msra.mxu0 0.0
      %855 = vmatpush.msra.mxu0 0.0
      %856 = vmatpush.msra.mxu0 0.0
      %857 = vmatpush.msra.mxu0 0.0
      %858 = vmatpush.msra.mxu0 0.0
      %859 = vmatpush.msra.mxu0 0.0
      %860 = vmatpush.msra.mxu0 0.0
      %861 = vmatpush.msra.mxu0 0.0
      %862 = vmatpush.msra.mxu0 0.0
      %863 = vmatpush.msra.mxu0 0.0
      %864 = vmatpush.msra.mxu0 %v253
      %865 = vmatmul.f32.gmra.mxu0 %v847
      %v866 = vpop.f32.mrf.mxu0
      %v867 = vadd.f32 %v845, %v866
      %868 = vdwg.mxu0
      %s869 = scalar_lea.vmem %s214, 44
      %870 = vst.msk [vmem:[%s869] sm:$0xf] %vm275, %v867
      %s871 = scalar_lea.vmem %s204, 12
      %v872 = vld [vmem:[%s871] sm:$0x1]
      %v873 = vunpack.c.l.bf16 %v872
      %v875 = vsel %vm223, %v873, 0
      %877 = vmatpush.msra.mxu0 0.0
      %878 = vmatpush.msra.mxu0 0.0
      %879 = vmatpush.msra.mxu0 0.0
      %880 = vmatpush.msra.mxu0 0.0
      %881 = vmatpush.msra.mxu0 0.0
      %882 = vmatpush.msra.mxu0 0.0
      %883 = vmatpush.msra.mxu0 0.0
      %884 = vmatpush.msra.mxu0 0.0
      %885 = vmatpush.msra.mxu0 0.0
      %886 = vmatpush.msra.mxu0 0.0
      %887 = vmatpush.msra.mxu0 0.0
      %888 = vmatpush.msra.mxu0 0.0
      %889 = vmatpush.msra.mxu0 0.0
      %890 = vmatpush.msra.mxu0 0.0
      %891 = vmatpush.msra.mxu0 0.0
      %892 = vmatpush.msra.mxu0 %v875
      %893 = vmatmul.f32.gmra.mxu0 %v221
      %v894 = vpop.f32.mrf.mxu0
      %v895 = vadd.f32 0.0, %v894
      %896 = vdwg.mxu0
      %s897 = scalar_lea.vmem %s209, 24
      %v898 = vld [vmem:[%s897] sm:$0x3]
      %v899 = vunpack.c.l.bf16 %v898
      %v901 = vsel %vm219, %v895, 0
      %903 = vmatpush.msra.mxu0 0.0
      %904 = vmatpush.msra.mxu0 0.0
      %905 = vmatpush.msra.mxu0 0.0
      %906 = vmatpush.msra.mxu0 0.0
      %907 = vmatpush.msra.mxu0 0.0
      %908 = vmatpush.msra.mxu0 0.0
      %909 = vmatpush.msra.mxu0 0.0
      %910 = vmatpush.msra.mxu0 0.0
      %911 = vmatpush.msra.mxu0 0.0
      %912 = vmatpush.msra.mxu0 0.0
      %913 = vmatpush.msra.mxu0 0.0
      %914 = vmatpush.msra.mxu0 0.0
      %915 = vmatpush.msra.mxu0 0.0
      %916 = vmatpush.msra.mxu0 0.0
      %917 = vmatpush.msra.mxu0 0.0
      %918 = vmatpush.msra.mxu0 %v253
      %919 = vmatmul.f32.gmra.mxu0 %v901
      %v920 = vpop.f32.mrf.mxu0
      %v921 = vadd.f32 %v899, %v920
      %922 = vdwg.mxu0
      %s923 = scalar_lea.vmem %s214, 48
      %924 = vst.msk [vmem:[%s923] sm:$0xf] %vm275, %v921
      %s925 = scalar_lea.vmem %s204, 13
      %v926 = vld [vmem:[%s925] sm:$0x1]
      %v927 = vunpack.c.l.bf16 %v926
      %v929 = vsel %vm223, %v927, 0
      %931 = vmatpush.msra.mxu0 0.0
      %932 = vmatpush.msra.mxu0 0.0
      %933 = vmatpush.msra.mxu0 0.0
      %934 = vmatpush.msra.mxu0 0.0
      %935 = vmatpush.msra.mxu0 0.0
      %936 = vmatpush.msra.mxu0 0.0
      %937 = vmatpush.msra.mxu0 0.0
      %938 = vmatpush.msra.mxu0 0.0
      %939 = vmatpush.msra.mxu0 0.0
      %940 = vmatpush.msra.mxu0 0.0
      %941 = vmatpush.msra.mxu0 0.0
      %942 = vmatpush.msra.mxu0 0.0
      %943 = vmatpush.msra.mxu0 0.0
      %944 = vmatpush.msra.mxu0 0.0
      %945 = vmatpush.msra.mxu0 0.0
      %946 = vmatpush.msra.mxu0 %v929
      %947 = vmatmul.f32.gmra.mxu0 %v221
      %v948 = vpop.f32.mrf.mxu0
      %v949 = vadd.f32 0.0, %v948
      %950 = vdwg.mxu0
      %s951 = scalar_lea.vmem %s209, 26
      %v952 = vld [vmem:[%s951] sm:$0x3]
      %v953 = vunpack.c.l.bf16 %v952
      %v955 = vsel %vm219, %v949, 0
      %957 = vmatpush.msra.mxu0 0.0
      %958 = vmatpush.msra.mxu0 0.0
      %959 = vmatpush.msra.mxu0 0.0
      %960 = vmatpush.msra.mxu0 0.0
      %961 = vmatpush.msra.mxu0 0.0
      %962 = vmatpush.msra.mxu0 0.0
      %963 = vmatpush.msra.mxu0 0.0
      %964 = vmatpush.msra.mxu0 0.0
      %965 = vmatpush.msra.mxu0 0.0
      %966 = vmatpush.msra.mxu0 0.0
      %967 = vmatpush.msra.mxu0 0.0
      %968 = vmatpush.msra.mxu0 0.0
      %969 = vmatpush.msra.mxu0 0.0
      %970 = vmatpush.msra.mxu0 0.0
      %971 = vmatpush.msra.mxu0 0.0
      %972 = vmatpush.msra.mxu0 %v253
      %973 = vmatmul.f32.gmra.mxu0 %v955
      %v974 = vpop.f32.mrf.mxu0
      %v975 = vadd.f32 %v953, %v974
      %976 = vdwg.mxu0
      %s977 = scalar_lea.vmem %s214, 52
      %978 = vst.msk [vmem:[%s977] sm:$0xf] %vm275, %v975
      %s979 = scalar_lea.vmem %s204, 14
      %v980 = vld [vmem:[%s979] sm:$0x1]
      %v981 = vunpack.c.l.bf16 %v980
      %v983 = vsel %vm223, %v981, 0
      %985 = vmatpush.msra.mxu0 0.0
      %986 = vmatpush.msra.mxu0 0.0
      %987 = vmatpush.msra.mxu0 0.0
      %988 = vmatpush.msra.mxu0 0.0
      %989 = vmatpush.msra.mxu0 0.0
      %990 = vmatpush.msra.mxu0 0.0
      %991 = vmatpush.msra.mxu0 0.0
      %992 = vmatpush.msra.mxu0 0.0
      %993 = vmatpush.msra.mxu0 0.0
      %994 = vmatpush.msra.mxu0 0.0
      %995 = vmatpush.msra.mxu0 0.0
      %996 = vmatpush.msra.mxu0 0.0
      %997 = vmatpush.msra.mxu0 0.0
      %998 = vmatpush.msra.mxu0 0.0
      %999 = vmatpush.msra.mxu0 0.0
      %1000 = vmatpush.msra.mxu0 %v983
      %1001 = vmatmul.f32.gmra.mxu0 %v221
      %v1002 = vpop.f32.mrf.mxu0
      %v1003 = vadd.f32 0.0, %v1002
      %1004 = vdwg.mxu0
      %s1005 = scalar_lea.vmem %s209, 28
      %v1006 = vld [vmem:[%s1005] sm:$0x3]
      %v1007 = vunpack.c.l.bf16 %v1006
      %v1009 = vsel %vm219, %v1003, 0
      %1011 = vmatpush.msra.mxu0 0.0
      %1012 = vmatpush.msra.mxu0 0.0
      %1013 = vmatpush.msra.mxu0 0.0
      %1014 = vmatpush.msra.mxu0 0.0
      %1015 = vmatpush.msra.mxu0 0.0
      %1016 = vmatpush.msra.mxu0 0.0
      %1017 = vmatpush.msra.mxu0 0.0
      %1018 = vmatpush.msra.mxu0 0.0
      %1019 = vmatpush.msra.mxu0 0.0
      %1020 = vmatpush.msra.mxu0 0.0
      %1021 = vmatpush.msra.mxu0 0.0
      %1022 = vmatpush.msra.mxu0 0.0
      %1023 = vmatpush.msra.mxu0 0.0
      %1024 = vmatpush.msra.mxu0 0.0
      %1025 = vmatpush.msra.mxu0 0.0
      %1026 = vmatpush.msra.mxu0 %v253
      %1027 = vmatmul.f32.gmra.mxu0 %v1009
      %v1028 = vpop.f32.mrf.mxu0
      %v1029 = vadd.f32 %v1007, %v1028
      %1030 = vdwg.mxu0
      %s1031 = scalar_lea.vmem %s214, 56
      %1032 = vst.msk [vmem:[%s1031] sm:$0xf] %vm275, %v1029
      %s1033 = scalar_lea.vmem %s204, 15
      %v1034 = vld [vmem:[%s1033] sm:$0x1]
      %v1035 = vunpack.c.l.bf16 %v1034
      %v1037 = vsel %vm223, %v1035, 0
      %1039 = vmatpush.msra.mxu0 0.0
      %1040 = vmatpush.msra.mxu0 0.0
      %1041 = vmatpush.msra.mxu0 0.0
      %1042 = vmatpush.msra.mxu0 0.0
      %1043 = vmatpush.msra.mxu0 0.0
      %1044 = vmatpush.msra.mxu0 0.0
      %1045 = vmatpush.msra.mxu0 0.0
      %1046 = vmatpush.msra.mxu0 0.0
      %1047 = vmatpush.msra.mxu0 0.0
      %1048 = vmatpush.msra.mxu0 0.0
      %1049 = vmatpush.msra.mxu0 0.0
      %1050 = vmatpush.msra.mxu0 0.0
      %1051 = vmatpush.msra.mxu0 0.0
      %1052 = vmatpush.msra.mxu0 0.0
      %1053 = vmatpush.msra.mxu0 0.0
      %1054 = vmatpush.msra.mxu0 %v1037
      %1055 = vmatmul.f32.gmra.mxu0 %v221
      %v1056 = vpop.f32.mrf.mxu0
      %v1057 = vadd.f32 0.0, %v1056
      %1058 = vdwg.mxu0
      %s1059 = scalar_lea.vmem %s209, 30
      %v1060 = vld [vmem:[%s1059] sm:$0x3]
      %v1061 = vunpack.c.l.bf16 %v1060
      %v1063 = vsel %vm219, %v1057, 0
      %1065 = vmatpush.msra.mxu0 0.0
      %1066 = vmatpush.msra.mxu0 0.0
      %1067 = vmatpush.msra.mxu0 0.0
      %1068 = vmatpush.msra.mxu0 0.0
      %1069 = vmatpush.msra.mxu0 0.0
      %1070 = vmatpush.msra.mxu0 0.0
      %1071 = vmatpush.msra.mxu0 0.0
      %1072 = vmatpush.msra.mxu0 0.0
      %1073 = vmatpush.msra.mxu0 0.0
      %1074 = vmatpush.msra.mxu0 0.0
      %1075 = vmatpush.msra.mxu0 0.0
      %1076 = vmatpush.msra.mxu0 0.0
      %1077 = vmatpush.msra.mxu0 0.0
      %1078 = vmatpush.msra.mxu0 0.0
      %1079 = vmatpush.msra.mxu0 0.0
      %1080 = vmatpush.msra.mxu0 %v253
      %1081 = vmatmul.f32.gmra.mxu0 %v1063
      %v1082 = vpop.f32.mrf.mxu0
      %v1083 = vadd.f32 %v1061, %v1082
      %1084 = vdwg.mxu0
      %s1085 = scalar_lea.vmem %s214, 60
      %1086 = vst.msk [vmem:[%s1085] sm:$0xf] %vm275, %v1083
      %p1087 = scmp.lt.s32.totalorder %s15, 1
      %s1088 = scalar_select %p1087, %s15, 1
      %s1089 = smul.addr %s1088, 16
      %s1090 = smul.addr %s1089, 4
      %s1091 = scalar_lea.vmem %s4, %s1090
      // Predicated region
      $region37: #{_lambda_.16} parent=35 // pred_check
        %p1092 = pneg %p127
      $region38: #{_lambda_.16} parent=35 // pred_check_branch
        %1094 = sbr.rel (%p1092) target = $region40
      $region39: #{_lambda_.16} parent=35 // pred_region
        _
      $region40: #{_lambda_.16} parent=35 // pred_fallthru
        _
    $region36: #{_lambda_.16} parent=5 // pred_fallthru
      _
    %p1095 = scmp.le.s32.totalorder 2, %s10
    // Predicated region
    $region41: #{_lambda_.16} parent=5 // pred_check
      %p1096 = pneg %p1095
    $region42: #{_lambda_.16} parent=5 // pred_check_branch
      %1098 = sbr.rel (%p1096) target = $region44
    $region43: #{_lambda_.16} parent=5 // pred_region
      %s1099 = ssub.s32 %s10, 2
      // Predicated region
      $region45: #{_lambda_.16} parent=43 // pred_check
        %p1100 = pneg %p133
      $region46: #{_lambda_.16} parent=43 // pred_check_branch
        %1102 = sbr.rel (%p1100) target = $region48
      $region47: #{_lambda_.16} parent=43 // pred_region
        %p1103 = scmp.lt.s32.totalorder %s16, 1
        %s1104 = scalar_select %p1103, %s16, 1
        %s1105 = smul.addr %s1104, 16
        %s1106 = smul.addr %s1105, 4
        %s1107 = scalar_lea.vmem %s4, %s1106
      $region48: #{_lambda_.16} parent=43 // pred_fallthru
        _
    $region44: #{_lambda_.16} parent=5 // pred_fallthru
      _
  $region6: #{_lambda_.16} parent=0 // loop_footer
    %s14 = sadd.s32 1, %s10
  $region7: #{_lambda_.16} parent=0 // loop_footer_branch
    %9 = sbr.rel target = $region3
  $region8: #{_lambda_.16} parent=0 // loop_exit
    _

// kernel: _lambda_.17
$region0: #{_lambda_.17}
  #allocation0 [shape = 'u32[]', space=smem, size = 0x4, offset = 0x4, fixed_abs, tag = 'smem constant byte address 0x4 - core index']
  #allocation1 [shape = 'u32[72,128]{1,0:T(1,128)}', space=vmem, size = 0x9000, scoped, tag = 'internal scratch']
  %s0 = inlined_call_operand.vmem [shape: bf16[2,16,128], index: 0, kind: input, shape index: {}]
  %s1 = inlined_call_operand.vmem [shape: bf16[9,8,16], index: 1, kind: input, shape index: {}]
  %s2 = inlined_call_operand.vmem [shape: f32[8,1], index: 2, kind: input, shape index: {}]
  %s3 = inlined_call_operand.vmem [shape: bf16[2,8,24], index: 3, kind: output, shape index: {}]
  %s4 = sld [smem:[#allocation0]]
  $region45: #{_lambda_.17} parent=0
    _
  %s6 = ssub.s32 1, %s4
  %s7 = scalar_select 0, %s6, %s4
  loop: start=0, step=1, limit=4
  $region2: #{_lambda_.17} parent=0 // loop_pre_header
    _
  $region3: #{_lambda_.17} parent=0 // loop_header
    %s9 = sphi 0, %s13
    %p10 = scmp.ge.s32.totalorder %s9, 4
    %s19 = sphi 0, %s21
    %s22 = sphi 0, %s19
    %s23 = sphi 0, %s22
    %s39 = sphi 0, %s23
    %s43 = sphi 0, %s43
    %s45 = sphi 0, %s43
    %s46 = sphi 0, %s45
    %s60 = sphi 0, %s46
    %s64 = sphi 0, %s64
    %s66 = sphi 0, %s64
    %s67 = sphi 0, %s66
    %s81 = sphi 0, %s67
    %s87 = sphi 0, %s89
    %s90 = sphi 0, %s87
    %s91 = sphi 0, %s90
    %s107 = sphi 0, %s91
  $region4: #{_lambda_.17} parent=0 // loop_header_branch
    %12 = sbr.rel (%p10) target = $region8
  $region5: #{_lambda_.17} parent=0 // loop_body
    %s14 = ssub.s32 %s9, 1
    %s15 = ssub.s32 %s9, 2
    %s16 = sadd.s32 %s9, 1
    %s17 = ssub.s32 %s9, %s16
    %p18 = scmp.eq.s32.totalorder %s17, 0
    %s20 = sadd.s32 %s19, 1
    %s21 = scalar_select %p18, %s19, %s20
    %p24 = pneg %p18
    %p25 = scmp.eq.s32.totalorder %s9, 1
    %p26 = por %p24, %p25
    %p27 = scmp.ne.s32.totalorder %s19, %s22
    %p28 = scmp.eq.s32.totalorder %s9, 0
    %p29 = por %p27, %p28
    %p30 = scmp.ne.s32.totalorder %s19, %s22
    %p31 = scmp.eq.s32.totalorder %s14, 1
    %p32 = por %p30, %p31
    %p33 = scmp.ne.s32.totalorder %s22, %s23
    %p34 = scmp.eq.s32.totalorder %s14, 0
    %p35 = por %p33, %p34
    %p36 = scmp.ne.s32.totalorder %s22, %s23
    %p37 = scmp.eq.s32.totalorder %s15, 1
    %p38 = por %p36, %p37
    %p40 = scmp.ne.s32.totalorder %s23, %s39
    %p41 = scmp.eq.s32.totalorder %s15, 0
    %p42 = por %p40, %p41
    %s44 = sadd.s32 %s43, 1
    %p47 = scmp.eq.s32.totalorder %s9, 1
    %p48 = scmp.ne.s32.totalorder %s43, %s45
    %p49 = scmp.eq.s32.totalorder %s9, 0
    %p50 = por %p48, %p49
    %p51 = scmp.ne.s32.totalorder %s43, %s45
    %p52 = scmp.eq.s32.totalorder %s14, 1
    %p53 = por %p51, %p52
    %p54 = scmp.ne.s32.totalorder %s45, %s46
    %p55 = scmp.eq.s32.totalorder %s14, 0
    %p56 = por %p54, %p55
    %p57 = scmp.ne.s32.totalorder %s45, %s46
    %p58 = scmp.eq.s32.totalorder %s15, 1
    %p59 = por %p57, %p58
    %p61 = scmp.ne.s32.totalorder %s46, %s60
    %p62 = scmp.eq.s32.totalorder %s15, 0
    %p63 = por %p61, %p62
    %s65 = sadd.s32 %s64, 1
    %p68 = scmp.eq.s32.totalorder %s9, 1
    %p69 = scmp.ne.s32.totalorder %s64, %s66
    %p70 = scmp.eq.s32.totalorder %s9, 0
    %p71 = por %p69, %p70
    %p72 = scmp.ne.s32.totalorder %s64, %s66
    %p73 = scmp.eq.s32.totalorder %s14, 1
    %p74 = por %p72, %p73
    %p75 = scmp.ne.s32.totalorder %s66, %s67
    %p76 = scmp.eq.s32.totalorder %s14, 0
    %p77 = por %p75, %p76
    %p78 = scmp.ne.s32.totalorder %s66, %s67
    %p79 = scmp.eq.s32.totalorder %s15, 1
    %p80 = por %p78, %p79
    %p82 = scmp.ne.s32.totalorder %s67, %s81
    %p83 = scmp.eq.s32.totalorder %s15, 0
    %p84 = por %p82, %p83
    %s85 = ssub.s32 %s9, %s16
    %p86 = scmp.eq.s32.totalorder %s85, 0
    %s88 = sadd.s32 %s87, 1
    %s89 = scalar_select %p86, %s87, %s88
    %p92 = pneg %p86
    %p93 = scmp.eq.s32.totalorder %s9, 1
    %p94 = por %p92, %p93
    %p95 = scmp.ne.s32.totalorder %s87, %s90
    %p96 = scmp.eq.s32.totalorder %s9, 0
    %p97 = por %p95, %p96
    %p98 = scmp.ne.s32.totalorder %s87, %s90
    %p99 = scmp.eq.s32.totalorder %s14, 1
    %p100 = por %p98, %p99
    %p101 = scmp.ne.s32.totalorder %s90, %s91
    %p102 = scmp.eq.s32.totalorder %s14, 0
    %p103 = por %p101, %p102
    %p104 = scmp.ne.s32.totalorder %s90, %s91
    %p105 = scmp.eq.s32.totalorder %s15, 1
    %p106 = por %p104, %p105
    %p108 = scmp.ne.s32.totalorder %s91, %s107
    %p109 = scmp.eq.s32.totalorder %s15, 0
    %p110 = por %p108, %p109
    %p111 = scmp.le.s32.totalorder 1, %s9
    %p112 = scmp.lt.s32.totalorder %s9, 3
    %p113 = pnand %p111, %p112
    %p114 = pneg %p113
    // Predicated region
    $region9: #{_lambda_.17} parent=5 // pred_check
      _
    $region10: #{_lambda_.17} parent=5 // pred_check_branch
      %116 = sbr.rel (%p113) target = $region12
    $region11: #{_lambda_.17} parent=5 // pred_region
      %s117 = ssub.s32 %s9, 1
      // Predicated region
      $region13: #{_lambda_.17} parent=11 // pred_check
        %p118 = pneg %p56
      $region14: #{_lambda_.17} parent=11 // pred_check_branch
        %120 = sbr.rel (%p118) target = $region16
      $region15: #{_lambda_.17} parent=11 // pred_region
        _
      $region16: #{_lambda_.17} parent=11 // pred_fallthru
        _
      // Predicated region
      $region17: #{_lambda_.17} parent=11 // pred_check
        %p121 = pneg %p77
      $region18: #{_lambda_.17} parent=11 // pred_check_branch
        %123 = sbr.rel (%p121) target = $region20
      $region19: #{_lambda_.17} parent=11 // pred_region
        _
      $region20: #{_lambda_.17} parent=11 // pred_fallthru
        _
    $region12: #{_lambda_.17} parent=5 // pred_fallthru
      _
    %p124 = scmp.lt.s32.totalorder %s9, 2
    // Predicated region
    $region21: #{_lambda_.17} parent=5 // pred_check
      %p125 = pneg %p124
    $region22: #{_lambda_.17} parent=5 // pred_check_branch
      %127 = sbr.rel (%p125) target = $region24
    $region23: #{_lambda_.17} parent=5 // pred_region
      // Predicated region
      $region25: #{_lambda_.17} parent=23 // pred_check
        %p128 = pneg %p29
      $region26: #{_lambda_.17} parent=23 // pred_check_branch
        %130 = sbr.rel (%p128) target = $region28
      $region27: #{_lambda_.17} parent=23 // pred_region
        %p131 = scmp.lt.s32.totalorder %s9, 1
        %s132 = scalar_select %p131, %s9, 1
        %s133 = smul.addr %s132, 2
        %s134 = smul.addr %s133, 4
        %s135 = scalar_lea.vmem %s0, %s134
      $region28: #{_lambda_.17} parent=23 // pred_fallthru
        _
    $region24: #{_lambda_.17} parent=5 // pred_fallthru
      _
    %p136 = scmp.le.s32.totalorder 1, %s9
    %p137 = scmp.lt.s32.totalorder %s9, 3
    %p138 = pnand %p136, %p137
    %p139 = pneg %p138
    // Predicated region
    $region29: #{_lambda_.17} parent=5 // pred_check
      _
    $region30: #{_lambda_.17} parent=5 // pred_check_branch
      %141 = sbr.rel (%p138) target = $region32
    $region31: #{_lambda_.17} parent=5 // pred_region
      %s142 = ssub.s32 %s9, 1
      %p143 = scmp.lt.s32.totalorder %s14, 1
      %s144 = scalar_select %p143, %s14, 1
      %s145 = smul.addr %s144, 2
      %s146 = smul.addr %s145, 4
      %s147 = scalar_lea.vmem %s0, %s146
      %p148 = pneg %p35
      %p149 = pneg %p32
      %p150 = pneg %p56
      %p151 = pneg %p53
      %p152 = pneg %p77
      %p153 = pneg %p74
      %p154 = pneg %p103
      %p155 = pneg %p100
      %p156 = scmp.lt.s32.totalorder %s14, 1
      %s157 = scalar_select %p156, %s14, 1
      %s158 = smul.addr %s157, 4
      %s159 = scalar_lea.vmem %s3, %s158
      %p160 = scmp.lt.s32.totalorder %s14, 1
      %s161 = scalar_select %p160, %s14, 1
      %s162 = smul.addr %s161, 2
      %s163 = smul.addr %s162, 4
      %s164 = scalar_lea.vmem %s0, %s163
      %p165 = scmp.lt.s32.totalorder %s14, 1
      %s166 = scalar_select %p165, %s14, 1
      %s167 = smul.addr %s166, 4
      %s168 = scalar_lea.vmem %s3, %s167
      %v170 = vld [vmem:[%s164] sm:$0xf]
      %v171 = vld [vmem:[%s164 + $0x4] sm:$0xf]
      %v172 = vld [vmem:[%s1] sm:$0xf]
      %s173 = scalar_lea.vmem %s1, 4
      %v174 = vld [vmem:[%s173] sm:$0xf]
      %v177 = vunpack.c.l.b16 %v170
      %v178 = vunpack.c.l.b16 %v171
      %v179 = vpack.c.b16 %v178, %v177
      %180 = vrot.lane.b32.xlu0 %v179, 127
      %v181 = vpop.permute.xlu0 %180
      %vm183 = vcmask 130048
      %v185 = vsel %vm183, %v174, 0
      %187 = vmatpush.bf16.msra.mxu0 0
      %188 = vmatpush.bf16.msra.mxu0 0
      %189 = vmatpush.bf16.msra.mxu0 0
      %190 = vmatpush.bf16.msra.mxu0 0
      %191 = vmatpush.bf16.msra.mxu0 0
      %192 = vmatpush.bf16.msra.mxu0 0
      %193 = vmatpush.bf16.msra.mxu0 0
      %194 = vmatpush.bf16.msra.mxu0 %v181
      %195 = vmatmul.bf16.gmra.mxu0 %v185
      %v196 = vpop.f32.mrf.mxu0
      %v197 = vadd.f32 0.0, %v196
      %v198 = vpop.f32.mrf.mxu0
      %199 = vdwg.mxu0
      %v202 = vsel %vm183, %v172, 0
      %204 = vmatpush.bf16.msra.mxu0 0
      %205 = vmatpush.bf16.msra.mxu0 0
      %206 = vmatpush.bf16.msra.mxu0 0
      %207 = vmatpush.bf16.msra.mxu0 0
      %208 = vmatpush.bf16.msra.mxu0 0
      %209 = vmatpush.bf16.msra.mxu0 0
      %210 = vmatpush.bf16.msra.mxu0 0
      %211 = vmatpush.bf16.msra.mxu0 %v179
      %212 = vmatmul.bf16.gmra.mxu0 %v202
      %v213 = vpop.f32.mrf.mxu0
      %v214 = vadd.f32 %v197, %v213
      %v215 = vpop.f32.mrf.mxu0
      %216 = vdwg.mxu0
      %s217 = scalar_lea.vmem %s1, 8
      %v218 = vld [vmem:[%s217] sm:$0xf]
      %219 = vrot.lane.b32.xlu0 %v179, 126
      %v220 = vpop.permute.xlu0 %219
      %v223 = vsel %vm183, %v218, 0
      %225 = vmatpush.bf16.msra.mxu0 0
      %226 = vmatpush.bf16.msra.mxu0 0
      %227 = vmatpush.bf16.msra.mxu0 0
      %228 = vmatpush.bf16.msra.mxu0 0
      %229 = vmatpush.bf16.msra.mxu0 0
      %230 = vmatpush.bf16.msra.mxu0 0
      %231 = vmatpush.bf16.msra.mxu0 0
      %232 = vmatpush.bf16.msra.mxu0 %v220
      %233 = vmatmul.bf16.gmra.mxu0 %v223
      %v234 = vpop.f32.mrf.mxu0
      %v235 = vadd.f32 0.0, %v234
      %v236 = vpop.f32.mrf.mxu0
      %237 = vdwg.mxu0
      %v238 = vadd.f32 %v214, %v235
      %s239 = scalar_lea.vmem %s1, 12
      %v240 = vld [vmem:[%s239] sm:$0xf]
      %241 = vrot.lane.b32.xlu0 %v179, 122
      %v242 = vpop.permute.xlu0 %241
      %v245 = vsel %vm183, %v240, 0
      %247 = vmatpush.bf16.msra.mxu0 0
      %248 = vmatpush.bf16.msra.mxu0 0
      %249 = vmatpush.bf16.msra.mxu0 0
      %250 = vmatpush.bf16.msra.mxu0 0
      %251 = vmatpush.bf16.msra.mxu0 0
      %252 = vmatpush.bf16.msra.mxu0 0
      %253 = vmatpush.bf16.msra.mxu0 0
      %254 = vmatpush.bf16.msra.mxu0 %v242
      %255 = vmatmul.bf16.gmra.mxu0 %v245
      %v256 = vpop.f32.mrf.mxu0
      %v257 = vadd.f32 0.0, %v256
      %v258 = vpop.f32.mrf.mxu0
      %259 = vdwg.mxu0
      %v260 = vadd.f32 %v238, %v257
      %s261 = scalar_lea.vmem %s1, 16
      %v262 = vld [vmem:[%s261] sm:$0xf]
      %263 = vrot.lane.b32.xlu0 %v179, 121
      %v264 = vpop.permute.xlu0 %263
      %v267 = vsel %vm183, %v262, 0
      %269 = vmatpush.bf16.msra.mxu0 0
      %270 = vmatpush.bf16.msra.mxu0 0
      %271 = vmatpush.bf16.msra.mxu0 0
      %272 = vmatpush.bf16.msra.mxu0 0
      %273 = vmatpush.bf16.msra.mxu0 0
      %274 = vmatpush.bf16.msra.mxu0 0
      %275 = vmatpush.bf16.msra.mxu0 0
      %276 = vmatpush.bf16.msra.mxu0 %v264
      %277 = vmatmul.bf16.gmra.mxu0 %v267
      %v278 = vpop.f32.mrf.mxu0
      %v279 = vadd.f32 0.0, %v278
      %v280 = vpop.f32.mrf.mxu0
      %281 = vdwg.mxu0
      %v282 = vadd.f32 %v260, %v279
      %s283 = scalar_lea.vmem %s1, 20
      %v284 = vld [vmem:[%s283] sm:$0xf]
      %285 = vrot.lane.b32.xlu0 %v179, 120
      %v286 = vpop.permute.xlu0 %285
      %v289 = vsel %vm183, %v284, 0
      %291 = vmatpush.bf16.msra.mxu0 0
      %292 = vmatpush.bf16.msra.mxu0 0
      %293 = vmatpush.bf16.msra.mxu0 0
      %294 = vmatpush.bf16.msra.mxu0 0
      %295 = vmatpush.bf16.msra.mxu0 0
      %296 = vmatpush.bf16.msra.mxu0 0
      %297 = vmatpush.bf16.msra.mxu0 0
      %298 = vmatpush.bf16.msra.mxu0 %v286
      %299 = vmatmul.bf16.gmra.mxu0 %v289
      %v300 = vpop.f32.mrf.mxu0
      %v301 = vadd.f32 0.0, %v300
      %v302 = vpop.f32.mrf.mxu0
      %303 = vdwg.mxu0
      %v304 = vadd.f32 %v282, %v301
      %s305 = scalar_lea.vmem %s1, 24
      %v306 = vld [vmem:[%s305] sm:$0xf]
      %307 = vrot.lane.b32.xlu0 %v179, 116
      %v308 = vpop.permute.xlu0 %307
      %v311 = vsel %vm183, %v306, 0
      %313 = vmatpush.bf16.msra.mxu0 0
      %314 = vmatpush.bf16.msra.mxu0 0
      %315 = vmatpush.bf16.msra.mxu0 0
      %316 = vmatpush.bf16.msra.mxu0 0
      %317 = vmatpush.bf16.msra.mxu0 0
      %318 = vmatpush.bf16.msra.mxu0 0
      %319 = vmatpush.bf16.msra.mxu0 0
      %320 = vmatpush.bf16.msra.mxu0 %v308
      %321 = vmatmul.bf16.gmra.mxu0 %v311
      %v322 = vpop.f32.mrf.mxu0
      %v323 = vadd.f32 0.0, %v322
      %v324 = vpop.f32.mrf.mxu0
      %325 = vdwg.mxu0
      %v326 = vadd.f32 %v304, %v323
      %s327 = scalar_lea.vmem %s1, 28
      %v328 = vld [vmem:[%s327] sm:$0xf]
      %329 = vrot.lane.b32.xlu0 %v179, 115
      %v330 = vpop.permute.xlu0 %329
      %v333 = vsel %vm183, %v328, 0
      %335 = vmatpush.bf16.msra.mxu0 0
      %336 = vmatpush.bf16.msra.mxu0 0
      %337 = vmatpush.bf16.msra.mxu0 0
      %338 = vmatpush.bf16.msra.mxu0 0
      %339 = vmatpush.bf16.msra.mxu0 0
      %340 = vmatpush.bf16.msra.mxu0 0
      %341 = vmatpush.bf16.msra.mxu0 0
      %342 = vmatpush.bf16.msra.mxu0 %v330
      %343 = vmatmul.bf16.gmra.mxu0 %v333
      %v344 = vpop.f32.mrf.mxu0
      %v345 = vadd.f32 0.0, %v344
      %v346 = vpop.f32.mrf.mxu0
      %347 = vdwg.mxu0
      %v348 = vadd.f32 %v326, %v345
      %s349 = scalar_lea.vmem %s1, 32
      %v350 = vld [vmem:[%s349] sm:$0xf]
      %351 = vrot.lane.b32.xlu0 %v179, 114
      %v352 = vpop.permute.xlu0 %351
      %v355 = vsel %vm183, %v350, 0
      %357 = vmatpush.bf16.msra.mxu0 0
      %358 = vmatpush.bf16.msra.mxu0 0
      %359 = vmatpush.bf16.msra.mxu0 0
      %360 = vmatpush.bf16.msra.mxu0 0
      %361 = vmatpush.bf16.msra.mxu0 0
      %362 = vmatpush.bf16.msra.mxu0 0
      %363 = vmatpush.bf16.msra.mxu0 0
      %364 = vmatpush.bf16.msra.mxu0 %v352
      %365 = vmatmul.bf16.gmra.mxu0 %v355
      %v366 = vpop.f32.mrf.mxu0
      %v367 = vadd.f32 0.0, %v366
      %v368 = vpop.f32.mrf.mxu0
      %369 = vdwg.mxu0
      %v370 = vadd.f32 %v348, %v367
      %v371 = vld [vmem:[%s2] sm:$0xff]
      %373 = vset.pattern.permute.xlu0 0
      %374 = vperm.xlu0 %373, %v371
      %v375 = vpop.permute.xlu0 %374
      %v377 = vadd.f32 %v370, %v375
      %v378 = vmax.f32 %v377, 0.0
      %v379 = vpack.c.bf16 %v378, %v378
      %vm380 = vcmask 191488
      %381 = vst.msk [vmem:[%s168] sm:$0xf] %vm380, %v379
      %p382 = scmp.lt.s32.totalorder %s14, 1
      %s383 = scalar_select %p382, %s14, 1
      %s384 = smul.addr %s383, 4
      %s385 = scalar_lea.vmem %s3, %s384
      // Predicated region
      $region33: #{_lambda_.17} parent=31 // pred_check
        %p386 = pneg %p100
      $region34: #{_lambda_.17} parent=31 // pred_check_branch
        %388 = sbr.rel (%p386) target = $region36
      $region35: #{_lambda_.17} parent=31 // pred_region
        _
      $region36: #{_lambda_.17} parent=31 // pred_fallthru
        _
    $region32: #{_lambda_.17} parent=5 // pred_fallthru
      _
    %p389 = scmp.le.s32.totalorder 2, %s9
    // Predicated region
    $region37: #{_lambda_.17} parent=5 // pred_check
      %p390 = pneg %p389
    $region38: #{_lambda_.17} parent=5 // pred_check_branch
      %392 = sbr.rel (%p390) target = $region40
    $region39: #{_lambda_.17} parent=5 // pred_region
      %s393 = ssub.s32 %s9, 2
      // Predicated region
      $region41: #{_lambda_.17} parent=39 // pred_check
        %p394 = pneg %p106
      $region42: #{_lambda_.17} parent=39 // pred_check_branch
        %396 = sbr.rel (%p394) target = $region44
      $region43: #{_lambda_.17} parent=39 // pred_region
        %p397 = scmp.lt.s32.totalorder %s15, 1
        %s398 = scalar_select %p397, %s15, 1
        %s399 = smul.addr %s398, 4
        %s400 = scalar_lea.vmem %s3, %s399
      $region44: #{_lambda_.17} parent=39 // pred_fallthru
        _
    $region40: #{_lambda_.17} parent=5 // pred_fallthru
      _
  $region6: #{_lambda_.17} parent=0 // loop_footer
    %s13 = sadd.s32 1, %s9
  $region7: #{_lambda_.17} parent=0 // loop_footer_branch
    %8 = sbr.rel target = $region3
  $region8: #{_lambda_.17} parent=0 // loop_exit
    _

// kernel: _lambda_.19
$region0: #{_lambda_.19}
  #allocation0 [shape = 'u32[]', space=smem, size = 0x4, offset = 0x4, fixed_abs, tag = 'smem constant byte address 0x4 - core index']
  #allocation1 [shape = 'u32[72,128]{1,0:T(1,128)}', space=vmem, size = 0x9000, scoped, tag = 'internal scratch']
  %s0 = inlined_call_operand.vmem [shape: bf16[2,8,128], index: 0, kind: input, shape index: {}]
  %s1 = inlined_call_operand.vmem [shape: bf16[9,4,8], index: 1, kind: input, shape index: {}]
  %s2 = inlined_call_operand.vmem [shape: f32[4,1], index: 2, kind: input, shape index: {}]
  %s3 = inlined_call_operand.vmem [shape: bf16[2,4,80], index: 3, kind: output, shape index: {}]
  %s4 = sld [smem:[#allocation0]]
  $region45: #{_lambda_.19} parent=0
    _
  %s6 = ssub.s32 1, %s4
  %s7 = scalar_select 0, %s6, %s4
  loop: start=0, step=1, limit=4
  $region2: #{_lambda_.19} parent=0 // loop_pre_header
    _
  $region3: #{_lambda_.19} parent=0 // loop_header
    %s9 = sphi 0, %s13
    %p10 = scmp.ge.s32.totalorder %s9, 4
    %s19 = sphi 0, %s21
    %s22 = sphi 0, %s19
    %s23 = sphi 0, %s22
    %s39 = sphi 0, %s23
    %s43 = sphi 0, %s43
    %s45 = sphi 0, %s43
    %s46 = sphi 0, %s45
    %s60 = sphi 0, %s46
    %s64 = sphi 0, %s64
    %s66 = sphi 0, %s64
    %s67 = sphi 0, %s66
    %s81 = sphi 0, %s67
    %s87 = sphi 0, %s89
    %s90 = sphi 0, %s87
    %s91 = sphi 0, %s90
    %s107 = sphi 0, %s91
  $region4: #{_lambda_.19} parent=0 // loop_header_branch
    %12 = sbr.rel (%p10) target = $region8
  $region5: #{_lambda_.19} parent=0 // loop_body
    %s14 = ssub.s32 %s9, 1
    %s15 = ssub.s32 %s9, 2
    %s16 = sadd.s32 %s9, 1
    %s17 = ssub.s32 %s9, %s16
    %p18 = scmp.eq.s32.totalorder %s17, 0
    %s20 = sadd.s32 %s19, 1
    %s21 = scalar_select %p18, %s19, %s20
    %p24 = pneg %p18
    %p25 = scmp.eq.s32.totalorder %s9, 1
    %p26 = por %p24, %p25
    %p27 = scmp.ne.s32.totalorder %s19, %s22
    %p28 = scmp.eq.s32.totalorder %s9, 0
    %p29 = por %p27, %p28
    %p30 = scmp.ne.s32.totalorder %s19, %s22
    %p31 = scmp.eq.s32.totalorder %s14, 1
    %p32 = por %p30, %p31
    %p33 = scmp.ne.s32.totalorder %s22, %s23
    %p34 = scmp.eq.s32.totalorder %s14, 0
    %p35 = por %p33, %p34
    %p36 = scmp.ne.s32.totalorder %s22, %s23
    %p37 = scmp.eq.s32.totalorder %s15, 1
    %p38 = por %p36, %p37
    %p40 = scmp.ne.s32.totalorder %s23, %s39
    %p41 = scmp.eq.s32.totalorder %s15, 0
    %p42 = por %p40, %p41
    %s44 = sadd.s32 %s43, 1
    %p47 = scmp.eq.s32.totalorder %s9, 1
    %p48 = scmp.ne.s32.totalorder %s43, %s45
    %p49 = scmp.eq.s32.totalorder %s9, 0
    %p50 = por %p48, %p49
    %p51 = scmp.ne.s32.totalorder %s43, %s45
    %p52 = scmp.eq.s32.totalorder %s14, 1
    %p53 = por %p51, %p52
    %p54 = scmp.ne.s32.totalorder %s45, %s46
    %p55 = scmp.eq.s32.totalorder %s14, 0
    %p56 = por %p54, %p55
    %p57 = scmp.ne.s32.totalorder %s45, %s46
    %p58 = scmp.eq.s32.totalorder %s15, 1
    %p59 = por %p57, %p58
    %p61 = scmp.ne.s32.totalorder %s46, %s60
    %p62 = scmp.eq.s32.totalorder %s15, 0
    %p63 = por %p61, %p62
    %s65 = sadd.s32 %s64, 1
    %p68 = scmp.eq.s32.totalorder %s9, 1
    %p69 = scmp.ne.s32.totalorder %s64, %s66
    %p70 = scmp.eq.s32.totalorder %s9, 0
    %p71 = por %p69, %p70
    %p72 = scmp.ne.s32.totalorder %s64, %s66
    %p73 = scmp.eq.s32.totalorder %s14, 1
    %p74 = por %p72, %p73
    %p75 = scmp.ne.s32.totalorder %s66, %s67
    %p76 = scmp.eq.s32.totalorder %s14, 0
    %p77 = por %p75, %p76
    %p78 = scmp.ne.s32.totalorder %s66, %s67
    %p79 = scmp.eq.s32.totalorder %s15, 1
    %p80 = por %p78, %p79
    %p82 = scmp.ne.s32.totalorder %s67, %s81
    %p83 = scmp.eq.s32.totalorder %s15, 0
    %p84 = por %p82, %p83
    %s85 = ssub.s32 %s9, %s16
    %p86 = scmp.eq.s32.totalorder %s85, 0
    %s88 = sadd.s32 %s87, 1
    %s89 = scalar_select %p86, %s87, %s88
    %p92 = pneg %p86
    %p93 = scmp.eq.s32.totalorder %s9, 1
    %p94 = por %p92, %p93
    %p95 = scmp.ne.s32.totalorder %s87, %s90
    %p96 = scmp.eq.s32.totalorder %s9, 0
    %p97 = por %p95, %p96
    %p98 = scmp.ne.s32.totalorder %s87, %s90
    %p99 = scmp.eq.s32.totalorder %s14, 1
    %p100 = por %p98, %p99
    %p101 = scmp.ne.s32.totalorder %s90, %s91
    %p102 = scmp.eq.s32.totalorder %s14, 0
    %p103 = por %p101, %p102
    %p104 = scmp.ne.s32.totalorder %s90, %s91
    %p105 = scmp.eq.s32.totalorder %s15, 1
    %p106 = por %p104, %p105
    %p108 = scmp.ne.s32.totalorder %s91, %s107
    %p109 = scmp.eq.s32.totalorder %s15, 0
    %p110 = por %p108, %p109
    %p111 = scmp.le.s32.totalorder 1, %s9
    %p112 = scmp.lt.s32.totalorder %s9, 3
    %p113 = pnand %p111, %p112
    %p114 = pneg %p113
    // Predicated region
    $region9: #{_lambda_.19} parent=5 // pred_check
      _
    $region10: #{_lambda_.19} parent=5 // pred_check_branch
      %116 = sbr.rel (%p113) target = $region12
    $region11: #{_lambda_.19} parent=5 // pred_region
      %s117 = ssub.s32 %s9, 1
      // Predicated region
      $region13: #{_lambda_.19} parent=11 // pred_check
        %p118 = pneg %p56
      $region14: #{_lambda_.19} parent=11 // pred_check_branch
        %120 = sbr.rel (%p118) target = $region16
      $region15: #{_lambda_.19} parent=11 // pred_region
        _
      $region16: #{_lambda_.19} parent=11 // pred_fallthru
        _
      // Predicated region
      $region17: #{_lambda_.19} parent=11 // pred_check
        %p121 = pneg %p77
      $region18: #{_lambda_.19} parent=11 // pred_check_branch
        %123 = sbr.rel (%p121) target = $region20
      $region19: #{_lambda_.19} parent=11 // pred_region
        _
      $region20: #{_lambda_.19} parent=11 // pred_fallthru
        _
    $region12: #{_lambda_.19} parent=5 // pred_fallthru
      _
    %p124 = scmp.lt.s32.totalorder %s9, 2
    // Predicated region
    $region21: #{_lambda_.19} parent=5 // pred_check
      %p125 = pneg %p124
    $region22: #{_lambda_.19} parent=5 // pred_check_branch
      %127 = sbr.rel (%p125) target = $region24
    $region23: #{_lambda_.19} parent=5 // pred_region
      // Predicated region
      $region25: #{_lambda_.19} parent=23 // pred_check
        %p128 = pneg %p29
      $region26: #{_lambda_.19} parent=23 // pred_check_branch
        %130 = sbr.rel (%p128) target = $region28
      $region27: #{_lambda_.19} parent=23 // pred_region
        %p131 = scmp.lt.s32.totalorder %s9, 1
        %s132 = scalar_select %p131, %s9, 1
        %s133 = smul.addr %s132, 4
        %s134 = scalar_lea.vmem %s0, %s133
      $region28: #{_lambda_.19} parent=23 // pred_fallthru
        _
    $region24: #{_lambda_.19} parent=5 // pred_fallthru
      _
    %p135 = scmp.le.s32.totalorder 1, %s9
    %p136 = scmp.lt.s32.totalorder %s9, 3
    %p137 = pnand %p135, %p136
    %p138 = pneg %p137
    // Predicated region
    $region29: #{_lambda_.19} parent=5 // pred_check
      _
    $region30: #{_lambda_.19} parent=5 // pred_check_branch
      %140 = sbr.rel (%p137) target = $region32
    $region31: #{_lambda_.19} parent=5 // pred_region
      %s141 = ssub.s32 %s9, 1
      %p142 = scmp.lt.s32.totalorder %s14, 1
      %s143 = scalar_select %p142, %s14, 1
      %s144 = smul.addr %s143, 4
      %s145 = scalar_lea.vmem %s0, %s144
      %p146 = pneg %p35
      %p147 = pneg %p32
      %p148 = pneg %p56
      %p149 = pneg %p53
      %p150 = pneg %p77
      %p151 = pneg %p74
      %p152 = pneg %p103
      %p153 = pneg %p100
      %p154 = scmp.lt.s32.totalorder %s14, 1
      %s155 = scalar_select %p154, %s14, 1
      %s156 = smul.addr %s155, 2
      %s157 = scalar_lea.vmem %s3, %s156
      %p158 = scmp.lt.s32.totalorder %s14, 1
      %s159 = scalar_select %p158, %s14, 1
      %s160 = smul.addr %s159, 4
      %s161 = scalar_lea.vmem %s0, %s160
      %p162 = scmp.lt.s32.totalorder %s14, 1
      %s163 = scalar_select %p162, %s14, 1
      %s164 = smul.addr %s163, 2
      %s165 = scalar_lea.vmem %s3, %s164
      %v167 = vld [vmem:[%s161] sm:$0xf]
      %v168 = vld [vmem:[%s1] sm:$0x3]
      %s169 = scalar_lea.vmem %s1, 2
      %v170 = vld [vmem:[%s169] sm:$0x3]
      %v172 = vunpack.c.l.b16 %v167
      %v173 = vpack.c.b16 %v172, %v172
      %174 = vrot.lane.b32.xlu0 %v173, 127
      %v175 = vpop.permute.xlu0 %174
      %vm176 = vcmask 64512
      %v178 = vsel %vm176, %v170, 0
      %vm180 = vcmask 1043456
      %v182 = vsel %vm180, %v175, 0
      %184 = vmatpush.bf16.msra.mxu0 0
      %185 = vmatpush.bf16.msra.mxu0 0
      %186 = vmatpush.bf16.msra.mxu0 0
      %187 = vmatpush.bf16.msra.mxu0 0
      %188 = vmatpush.bf16.msra.mxu0 0
      %189 = vmatpush.bf16.msra.mxu0 0
      %190 = vmatpush.bf16.msra.mxu0 0
      %191 = vmatpush.bf16.msra.mxu0 %v182
      %192 = vmatmul.bf16.gmra.mxu0 %v178
      %v193 = vpop.f32.mrf.mxu0
      %v194 = vadd.f32 0.0, %v193
      %v195 = vpop.f32.mrf.mxu0
      %196 = vdwg.mxu0
      %v198 = vsel %vm176, %v168, 0
      %v201 = vsel %vm180, %v167, 0
      %203 = vmatpush.bf16.msra.mxu0 0
      %204 = vmatpush.bf16.msra.mxu0 0
      %205 = vmatpush.bf16.msra.mxu0 0
      %206 = vmatpush.bf16.msra.mxu0 0
      %207 = vmatpush.bf16.msra.mxu0 0
      %208 = vmatpush.bf16.msra.mxu0 0
      %209 = vmatpush.bf16.msra.mxu0 0
      %210 = vmatpush.bf16.msra.mxu0 %v201
      %211 = vmatmul.bf16.gmra.mxu0 %v198
      %v212 = vpop.f32.mrf.mxu0
      %v213 = vadd.f32 %v194, %v212
      %v214 = vpop.f32.mrf.mxu0
      %215 = vdwg.mxu0
      %s216 = scalar_lea.vmem %s1, 4
      %v217 = vld [vmem:[%s216] sm:$0x3]
      %218 = vrot.lane.b32.xlu0 %v173, 126
      %v219 = vpop.permute.xlu0 %218
      %v221 = vsel %vm176, %v217, 0
      %v224 = vsel %vm180, %v219, 0
      %226 = vmatpush.bf16.msra.mxu0 0
      %227 = vmatpush.bf16.msra.mxu0 0
      %228 = vmatpush.bf16.msra.mxu0 0
      %229 = vmatpush.bf16.msra.mxu0 0
      %230 = vmatpush.bf16.msra.mxu0 0
      %231 = vmatpush.bf16.msra.mxu0 0
      %232 = vmatpush.bf16.msra.mxu0 0
      %233 = vmatpush.bf16.msra.mxu0 %v224
      %234 = vmatmul.bf16.gmra.mxu0 %v221
      %v235 = vpop.f32.mrf.mxu0
      %v236 = vadd.f32 0.0, %v235
      %v237 = vpop.f32.mrf.mxu0
      %238 = vdwg.mxu0
      %v239 = vadd.f32 %v213, %v236
      %s240 = scalar_lea.vmem %s1, 6
      %v241 = vld [vmem:[%s240] sm:$0x3]
      %242 = vrot.lane.b32.xlu0 %v173, 118
      %v243 = vpop.permute.xlu0 %242
      %v245 = vsel %vm176, %v241, 0
      %v248 = vsel %vm180, %v243, 0
      %250 = vmatpush.bf16.msra.mxu0 0
      %251 = vmatpush.bf16.msra.mxu0 0
      %252 = vmatpush.bf16.msra.mxu0 0
      %253 = vmatpush.bf16.msra.mxu0 0
      %254 = vmatpush.bf16.msra.mxu0 0
      %255 = vmatpush.bf16.msra.mxu0 0
      %256 = vmatpush.bf16.msra.mxu0 0
      %257 = vmatpush.bf16.msra.mxu0 %v248
      %258 = vmatmul.bf16.gmra.mxu0 %v245
      %v259 = vpop.f32.mrf.mxu0
      %v260 = vadd.f32 0.0, %v259
      %v261 = vpop.f32.mrf.mxu0
      %262 = vdwg.mxu0
      %v263 = vadd.f32 %v239, %v260
      %s264 = scalar_lea.vmem %s1, 8
      %v265 = vld [vmem:[%s264] sm:$0x3]
      %266 = vrot.lane.b32.xlu0 %v173, 117
      %v267 = vpop.permute.xlu0 %266
      %v269 = vsel %vm176, %v265, 0
      %v272 = vsel %vm180, %v267, 0
      %274 = vmatpush.bf16.msra.mxu0 0
      %275 = vmatpush.bf16.msra.mxu0 0
      %276 = vmatpush.bf16.msra.mxu0 0
      %277 = vmatpush.bf16.msra.mxu0 0
      %278 = vmatpush.bf16.msra.mxu0 0
      %279 = vmatpush.bf16.msra.mxu0 0
      %280 = vmatpush.bf16.msra.mxu0 0
      %281 = vmatpush.bf16.msra.mxu0 %v272
      %282 = vmatmul.bf16.gmra.mxu0 %v269
      %v283 = vpop.f32.mrf.mxu0
      %v284 = vadd.f32 0.0, %v283
      %v285 = vpop.f32.mrf.mxu0
      %286 = vdwg.mxu0
      %v287 = vadd.f32 %v263, %v284
      %s288 = scalar_lea.vmem %s1, 10
      %v289 = vld [vmem:[%s288] sm:$0x3]
      %290 = vrot.lane.b32.xlu0 %v173, 116
      %v291 = vpop.permute.xlu0 %290
      %v293 = vsel %vm176, %v289, 0
      %v296 = vsel %vm180, %v291, 0
      %298 = vmatpush.bf16.msra.mxu0 0
      %299 = vmatpush.bf16.msra.mxu0 0
      %300 = vmatpush.bf16.msra.mxu0 0
      %301 = vmatpush.bf16.msra.mxu0 0
      %302 = vmatpush.bf16.msra.mxu0 0
      %303 = vmatpush.bf16.msra.mxu0 0
      %304 = vmatpush.bf16.msra.mxu0 0
      %305 = vmatpush.bf16.msra.mxu0 %v296
      %306 = vmatmul.bf16.gmra.mxu0 %v293
      %v307 = vpop.f32.mrf.mxu0
      %v308 = vadd.f32 0.0, %v307
      %v309 = vpop.f32.mrf.mxu0
      %310 = vdwg.mxu0
      %v311 = vadd.f32 %v287, %v308
      %s312 = scalar_lea.vmem %s1, 12
      %v313 = vld [vmem:[%s312] sm:$0x3]
      %314 = vrot.lane.b32.xlu0 %v173, 108
      %v315 = vpop.permute.xlu0 %314
      %v317 = vsel %vm176, %v313, 0
      %v320 = vsel %vm180, %v315, 0
      %322 = vmatpush.bf16.msra.mxu0 0
      %323 = vmatpush.bf16.msra.mxu0 0
      %324 = vmatpush.bf16.msra.mxu0 0
      %325 = vmatpush.bf16.msra.mxu0 0
      %326 = vmatpush.bf16.msra.mxu0 0
      %327 = vmatpush.bf16.msra.mxu0 0
      %328 = vmatpush.bf16.msra.mxu0 0
      %329 = vmatpush.bf16.msra.mxu0 %v320
      %330 = vmatmul.bf16.gmra.mxu0 %v317
      %v331 = vpop.f32.mrf.mxu0
      %v332 = vadd.f32 0.0, %v331
      %v333 = vpop.f32.mrf.mxu0
      %334 = vdwg.mxu0
      %v335 = vadd.f32 %v311, %v332
      %s336 = scalar_lea.vmem %s1, 14
      %v337 = vld [vmem:[%s336] sm:$0x3]
      %338 = vrot.lane.b32.xlu0 %v173, 107
      %v339 = vpop.permute.xlu0 %338
      %v341 = vsel %vm176, %v337, 0
      %v344 = vsel %vm180, %v339, 0
      %346 = vmatpush.bf16.msra.mxu0 0
      %347 = vmatpush.bf16.msra.mxu0 0
      %348 = vmatpush.bf16.msra.mxu0 0
      %349 = vmatpush.bf16.msra.mxu0 0
      %350 = vmatpush.bf16.msra.mxu0 0
      %351 = vmatpush.bf16.msra.mxu0 0
      %352 = vmatpush.bf16.msra.mxu0 0
      %353 = vmatpush.bf16.msra.mxu0 %v344
      %354 = vmatmul.bf16.gmra.mxu0 %v341
      %v355 = vpop.f32.mrf.mxu0
      %v356 = vadd.f32 0.0, %v355
      %v357 = vpop.f32.mrf.mxu0
      %358 = vdwg.mxu0
      %v359 = vadd.f32 %v335, %v356
      %s360 = scalar_lea.vmem %s1, 16
      %v361 = vld [vmem:[%s360] sm:$0x3]
      %362 = vrot.lane.b32.xlu0 %v173, 106
      %v363 = vpop.permute.xlu0 %362
      %v365 = vsel %vm176, %v361, 0
      %v368 = vsel %vm180, %v363, 0
      %370 = vmatpush.bf16.msra.mxu0 0
      %371 = vmatpush.bf16.msra.mxu0 0
      %372 = vmatpush.bf16.msra.mxu0 0
      %373 = vmatpush.bf16.msra.mxu0 0
      %374 = vmatpush.bf16.msra.mxu0 0
      %375 = vmatpush.bf16.msra.mxu0 0
      %376 = vmatpush.bf16.msra.mxu0 0
      %377 = vmatpush.bf16.msra.mxu0 %v368
      %378 = vmatmul.bf16.gmra.mxu0 %v365
      %v379 = vpop.f32.mrf.mxu0
      %v380 = vadd.f32 0.0, %v379
      %v381 = vpop.f32.mrf.mxu0
      %382 = vdwg.mxu0
      %v383 = vadd.f32 %v359, %v380
      %v384 = vld [vmem:[%s2] sm:$0xf]
      %386 = vset.pattern.permute.xlu0 0
      %387 = vperm.xlu0 %386, %v384
      %v388 = vpop.permute.xlu0 %387
      %v390 = vadd.f32 %v383, %v388
      %v391 = vmax.f32 %v390, 0.0
      %v392 = vpack.c.bf16 %v391, %v391
      %vm393 = vcmask 648192
      %394 = vst.msk [vmem:[%s165] sm:$0x3] %vm393, %v392
      %p395 = scmp.lt.s32.totalorder %s14, 1
      %s396 = scalar_select %p395, %s14, 1
      %s397 = smul.addr %s396, 2
      %s398 = scalar_lea.vmem %s3, %s397
      // Predicated region
      $region33: #{_lambda_.19} parent=31 // pred_check
        %p399 = pneg %p100
      $region34: #{_lambda_.19} parent=31 // pred_check_branch
        %401 = sbr.rel (%p399) target = $region36
      $region35: #{_lambda_.19} parent=31 // pred_region
        _
      $region36: #{_lambda_.19} parent=31 // pred_fallthru
        _
    $region32: #{_lambda_.19} parent=5 // pred_fallthru
      _
    %p402 = scmp.le.s32.totalorder 2, %s9
    // Predicated region
    $region37: #{_lambda_.19} parent=5 // pred_check
      %p403 = pneg %p402
    $region38: #{_lambda_.19} parent=5 // pred_check_branch
      %405 = sbr.rel (%p403) target = $region40
    $region39: #{_lambda_.19} parent=5 // pred_region
      %s406 = ssub.s32 %s9, 2
      // Predicated region
      $region41: #{_lambda_.19} parent=39 // pred_check
        %p407 = pneg %p106
      $region42: #{_lambda_.19} parent=39 // pred_check_branch
        %409 = sbr.rel (%p407) target = $region44
      $region43: #{_lambda_.19} parent=39 // pred_region
        %p410 = scmp.lt.s32.totalorder %s15, 1
        %s411 = scalar_select %p410, %s15, 1
        %s412 = smul.addr %s411, 2
        %s413 = scalar_lea.vmem %s3, %s412
      $region44: #{_lambda_.19} parent=39 // pred_fallthru
        _
    $region40: #{_lambda_.19} parent=5 // pred_fallthru
      _
  $region6: #{_lambda_.19} parent=0 // loop_footer
    %s13 = sadd.s32 1, %s9
  $region7: #{_lambda_.19} parent=0 // loop_footer_branch
    %8 = sbr.rel target = $region3
  $region8: #{_lambda_.19} parent=0 // loop_exit
    _

// kernel: _lambda_.18
$region0: #{_lambda_.18}
  #allocation0 [shape = 'u32[]', space=smem, size = 0x4, offset = 0x4, fixed_abs, tag = 'smem constant byte address 0x4 - core index']
  #allocation1 [shape = 'u32[72,128]{1,0:T(1,128)}', space=vmem, size = 0x9000, scoped, tag = 'internal scratch']
  %s0 = inlined_call_operand.vmem [shape: bf16[2,8,4,6], index: 0, kind: input, shape index: {}]
  %s1 = inlined_call_operand.vmem [shape: f32[8,4], index: 1, kind: input, shape index: {}]
  %s2 = inlined_call_operand.vmem [shape: f32[4,8], index: 2, kind: input, shape index: {}]
  %s3 = inlined_call_operand.vmem [shape: bf16[2,8,8,8], index: 3, kind: input, shape index: {}]
  %s4 = inlined_call_operand.vmem [shape: f32[2,8,8,8], index: 4, kind: output, shape index: {}]
  %s5 = sld [smem:[#allocation0]]
  $region49: #{_lambda_.18} parent=0
    _
  %s7 = ssub.s32 1, %s5
  %s8 = scalar_select 0, %s7, %s5
  loop: start=0, step=1, limit=4
  $region2: #{_lambda_.18} parent=0 // loop_pre_header
    _
  $region3: #{_lambda_.18} parent=0 // loop_header
    %s10 = sphi 0, %s14
    %p11 = scmp.ge.s32.totalorder %s10, 4
    %s20 = sphi 0, %s22
    %s23 = sphi 0, %s20
    %s24 = sphi 0, %s23
    %s40 = sphi 0, %s24
    %s44 = sphi 0, %s44
    %s46 = sphi 0, %s44
    %s47 = sphi 0, %s46
    %s61 = sphi 0, %s47
    %s65 = sphi 0, %s65
    %s67 = sphi 0, %s65
    %s68 = sphi 0, %s67
    %s82 = sphi 0, %s68
    %s88 = sphi 0, %s90
    %s91 = sphi 0, %s88
    %s92 = sphi 0, %s91
    %s108 = sphi 0, %s92
    %s114 = sphi 0, %s116
    %s117 = sphi 0, %s114
    %s118 = sphi 0, %s117
    %s134 = sphi 0, %s118
  $region4: #{_lambda_.18} parent=0 // loop_header_branch
    %13 = sbr.rel (%p11) target = $region8
  $region5: #{_lambda_.18} parent=0 // loop_body
    %s15 = ssub.s32 %s10, 1
    %s16 = ssub.s32 %s10, 2
    %s17 = sadd.s32 %s10, 1
    %s18 = ssub.s32 %s10, %s17
    %p19 = scmp.eq.s32.totalorder %s18, 0
    %s21 = sadd.s32 %s20, 1
    %s22 = scalar_select %p19, %s20, %s21
    %p25 = pneg %p19
    %p26 = scmp.eq.s32.totalorder %s10, 1
    %p27 = por %p25, %p26
    %p28 = scmp.ne.s32.totalorder %s20, %s23
    %p29 = scmp.eq.s32.totalorder %s10, 0
    %p30 = por %p28, %p29
    %p31 = scmp.ne.s32.totalorder %s20, %s23
    %p32 = scmp.eq.s32.totalorder %s15, 1
    %p33 = por %p31, %p32
    %p34 = scmp.ne.s32.totalorder %s23, %s24
    %p35 = scmp.eq.s32.totalorder %s15, 0
    %p36 = por %p34, %p35
    %p37 = scmp.ne.s32.totalorder %s23, %s24
    %p38 = scmp.eq.s32.totalorder %s16, 1
    %p39 = por %p37, %p38
    %p41 = scmp.ne.s32.totalorder %s24, %s40
    %p42 = scmp.eq.s32.totalorder %s16, 0
    %p43 = por %p41, %p42
    %s45 = sadd.s32 %s44, 1
    %p48 = scmp.eq.s32.totalorder %s10, 1
    %p49 = scmp.ne.s32.totalorder %s44, %s46
    %p50 = scmp.eq.s32.totalorder %s10, 0
    %p51 = por %p49, %p50
    %p52 = scmp.ne.s32.totalorder %s44, %s46
    %p53 = scmp.eq.s32.totalorder %s15, 1
    %p54 = por %p52, %p53
    %p55 = scmp.ne.s32.totalorder %s46, %s47
    %p56 = scmp.eq.s32.totalorder %s15, 0
    %p57 = por %p55, %p56
    %p58 = scmp.ne.s32.totalorder %s46, %s47
    %p59 = scmp.eq.s32.totalorder %s16, 1
    %p60 = por %p58, %p59
    %p62 = scmp.ne.s32.totalorder %s47, %s61
    %p63 = scmp.eq.s32.totalorder %s16, 0
    %p64 = por %p62, %p63
    %s66 = sadd.s32 %s65, 1
    %p69 = scmp.eq.s32.totalorder %s10, 1
    %p70 = scmp.ne.s32.totalorder %s65, %s67
    %p71 = scmp.eq.s32.totalorder %s10, 0
    %p72 = por %p70, %p71
    %p73 = scmp.ne.s32.totalorder %s65, %s67
    %p74 = scmp.eq.s32.totalorder %s15, 1
    %p75 = por %p73, %p74
    %p76 = scmp.ne.s32.totalorder %s67, %s68
    %p77 = scmp.eq.s32.totalorder %s15, 0
    %p78 = por %p76, %p77
    %p79 = scmp.ne.s32.totalorder %s67, %s68
    %p80 = scmp.eq.s32.totalorder %s16, 1
    %p81 = por %p79, %p80
    %p83 = scmp.ne.s32.totalorder %s68, %s82
    %p84 = scmp.eq.s32.totalorder %s16, 0
    %p85 = por %p83, %p84
    %s86 = ssub.s32 %s10, %s17
    %p87 = scmp.eq.s32.totalorder %s86, 0
    %s89 = sadd.s32 %s88, 1
    %s90 = scalar_select %p87, %s88, %s89
    %p93 = pneg %p87
    %p94 = scmp.eq.s32.totalorder %s10, 1
    %p95 = por %p93, %p94
    %p96 = scmp.ne.s32.totalorder %s88, %s91
    %p97 = scmp.eq.s32.totalorder %s10, 0
    %p98 = por %p96, %p97
    %p99 = scmp.ne.s32.totalorder %s88, %s91
    %p100 = scmp.eq.s32.totalorder %s15, 1
    %p101 = por %p99, %p100
    %p102 = scmp.ne.s32.totalorder %s91, %s92
    %p103 = scmp.eq.s32.totalorder %s15, 0
    %p104 = por %p102, %p103
    %p105 = scmp.ne.s32.totalorder %s91, %s92
    %p106 = scmp.eq.s32.totalorder %s16, 1
    %p107 = por %p105, %p106
    %p109 = scmp.ne.s32.totalorder %s92, %s108
    %p110 = scmp.eq.s32.totalorder %s16, 0
    %p111 = por %p109, %p110
    %s112 = ssub.s32 %s10, %s17
    %p113 = scmp.eq.s32.totalorder %s112, 0
    %s115 = sadd.s32 %s114, 1
    %s116 = scalar_select %p113, %s114, %s115
    %p119 = pneg %p113
    %p120 = scmp.eq.s32.totalorder %s10, 1
    %p121 = por %p119, %p120
    %p122 = scmp.ne.s32.totalorder %s114, %s117
    %p123 = scmp.eq.s32.totalorder %s10, 0
    %p124 = por %p122, %p123
    %p125 = scmp.ne.s32.totalorder %s114, %s117
    %p126 = scmp.eq.s32.totalorder %s15, 1
    %p127 = por %p125, %p126
    %p128 = scmp.ne.s32.totalorder %s117, %s118
    %p129 = scmp.eq.s32.totalorder %s15, 0
    %p130 = por %p128, %p129
    %p131 = scmp.ne.s32.totalorder %s117, %s118
    %p132 = scmp.eq.s32.totalorder %s16, 1
    %p133 = por %p131, %p132
    %p135 = scmp.ne.s32.totalorder %s118, %s134
    %p136 = scmp.eq.s32.totalorder %s16, 0
    %p137 = por %p135, %p136
    %p138 = scmp.le.s32.totalorder 1, %s10
    %p139 = scmp.lt.s32.totalorder %s10, 3
    %p140 = pnand %p138, %p139
    %p141 = pneg %p140
    // Predicated region
    $region9: #{_lambda_.18} parent=5 // pred_check
      _
    $region10: #{_lambda_.18} parent=5 // pred_check_branch
      %143 = sbr.rel (%p140) target = $region12
    $region11: #{_lambda_.18} parent=5 // pred_region
      %s144 = ssub.s32 %s10, 1
      // Predicated region
      $region13: #{_lambda_.18} parent=11 // pred_check
        %p145 = pneg %p57
      $region14: #{_lambda_.18} parent=11 // pred_check_branch
        %147 = sbr.rel (%p145) target = $region16
      $region15: #{_lambda_.18} parent=11 // pred_region
        _
      $region16: #{_lambda_.18} parent=11 // pred_fallthru
        _
      // Predicated region
      $region17: #{_lambda_.18} parent=11 // pred_check
        %p148 = pneg %p78
      $region18: #{_lambda_.18} parent=11 // pred_check_branch
        %150 = sbr.rel (%p148) target = $region20
      $region19: #{_lambda_.18} parent=11 // pred_region
        _
      $region20: #{_lambda_.18} parent=11 // pred_fallthru
        _
    $region12: #{_lambda_.18} parent=5 // pred_fallthru
      _
    %p151 = scmp.lt.s32.totalorder %s10, 2
    // Predicated region
    $region21: #{_lambda_.18} parent=5 // pred_check
      %p152 = pneg %p151
    $region22: #{_lambda_.18} parent=5 // pred_check_branch
      %154 = sbr.rel (%p152) target = $region24
    $region23: #{_lambda_.18} parent=5 // pred_region
      // Predicated region
      $region25: #{_lambda_.18} parent=23 // pred_check
        %p155 = pneg %p30
      $region26: #{_lambda_.18} parent=23 // pred_check_branch
        %157 = sbr.rel (%p155) target = $region28
      $region27: #{_lambda_.18} parent=23 // pred_region
        %p158 = scmp.lt.s32.totalorder %s10, 1
        %s159 = scalar_select %p158, %s10, 1
        %s160 = smul.addr %s159, 8
        %s161 = smul.addr %s160, 2
        %s162 = scalar_lea.vmem %s0, %s161
      $region28: #{_lambda_.18} parent=23 // pred_fallthru
        _
      // Predicated region
      $region29: #{_lambda_.18} parent=23 // pred_check
        %p163 = pneg %p98
      $region30: #{_lambda_.18} parent=23 // pred_check_branch
        %165 = sbr.rel (%p163) target = $region32
      $region31: #{_lambda_.18} parent=23 // pred_region
        %p166 = scmp.lt.s32.totalorder %s10, 1
        %s167 = scalar_select %p166, %s10, 1
        %s168 = smul.addr %s167, 8
        %s169 = smul.addr %s168, 4
        %s170 = scalar_lea.vmem %s3, %s169
      $region32: #{_lambda_.18} parent=23 // pred_fallthru
        _
    $region24: #{_lambda_.18} parent=5 // pred_fallthru
      _
    %p171 = scmp.le.s32.totalorder 1, %s10
    %p172 = scmp.lt.s32.totalorder %s10, 3
    %p173 = pnand %p171, %p172
    %p174 = pneg %p173
    // Predicated region
    $region33: #{_lambda_.18} parent=5 // pred_check
      _
    $region34: #{_lambda_.18} parent=5 // pred_check_branch
      %176 = sbr.rel (%p173) target = $region36
    $region35: #{_lambda_.18} parent=5 // pred_region
      %s177 = ssub.s32 %s10, 1
      %p178 = scmp.lt.s32.totalorder %s15, 1
      %s179 = scalar_select %p178, %s15, 1
      %s180 = smul.addr %s179, 8
      %s181 = smul.addr %s180, 2
      %s182 = scalar_lea.vmem %s0, %s181
      %p183 = pneg %p36
      %p184 = pneg %p33
      %p185 = pneg %p57
      %p186 = pneg %p54
      %p187 = pneg %p78
      %p188 = pneg %p75
      %p189 = scmp.lt.s32.totalorder %s15, 1
      %s190 = scalar_select %p189, %s15, 1
      %s191 = smul.addr %s190, 8
      %s192 = smul.addr %s191, 4
      %s193 = scalar_lea.vmem %s3, %s192
      %p194 = pneg %p104
      %p195 = pneg %p101
      %p196 = pneg %p130
      %p197 = pneg %p127
      %p198 = scmp.lt.s32.totalorder %s15, 1
      %s199 = scalar_select %p198, %s15, 1
      %s200 = smul.addr %s199, 8
      %s201 = smul.addr %s200, 8
      %s202 = scalar_lea.vmem %s4, %s201
      %p203 = scmp.lt.s32.totalorder %s15, 1
      %s204 = scalar_select %p203, %s15, 1
      %s205 = smul.addr %s204, 8
      %s206 = smul.addr %s205, 2
      %s207 = scalar_lea.vmem %s0, %s206
      %p208 = scmp.lt.s32.totalorder %s15, 1
      %s209 = scalar_select %p208, %s15, 1
      %s210 = smul.addr %s209, 8
      %s211 = smul.addr %s210, 4
      %s212 = scalar_lea.vmem %s3, %s211
      %p213 = scmp.lt.s32.totalorder %s15, 1
      %s214 = scalar_select %p213, %s15, 1
      %s215 = smul.addr %s214, 8
      %s216 = smul.addr %s215, 8
      %s217 = scalar_lea.vmem %s4, %s216
      %v218 = vld [vmem:[%s1] sm:$0xff]
      %v219 = vld [vmem:[%s2] sm:$0xf]
      %v220 = vld [vmem:[%s207] sm:$0x3]
      %v221 = vunpack.c.l.bf16 %v220
      %vm222 = vcmask 31744
      %v224 = vsel %vm222, %v218, 0
      %vm226 = vcmask 1043456
      %v228 = vsel %vm226, %v221, 0
      %230 = vmatpush.msra.mxu0 0.0
      %231 = vmatpush.msra.mxu0 0.0
      %232 = vmatpush.msra.mxu0 0.0
      %233 = vmatpush.msra.mxu0 0.0
      %234 = vmatpush.msra.mxu0 0.0
      %235 = vmatpush.msra.mxu0 0.0
      %236 = vmatpush.msra.mxu0 0.0
      %237 = vmatpush.msra.mxu0 0.0
      %238 = vmatpush.msra.mxu0 0.0
      %239 = vmatpush.msra.mxu0 0.0
      %240 = vmatpush.msra.mxu0 0.0
      %241 = vmatpush.msra.mxu0 0.0
      %242 = vmatpush.msra.mxu0 0.0
      %243 = vmatpush.msra.mxu0 0.0
      %244 = vmatpush.msra.mxu0 0.0
      %245 = vmatpush.msra.mxu0 %v228
      %246 = vmatmul.f32.gmra.mxu0 %v224
      %v247 = vpop.f32.mrf.mxu0
      %v248 = vadd.f32 0.0, %v247
      %249 = vdwg.mxu0
      %v250 = vld [vmem:[%s212] sm:$0xf]
      %v251 = vunpack.c.l.bf16 %v250
      %v253 = vsel %vm222, %v248, 0
      %v256 = vsel %vm226, %v219, 0
      %258 = vmatpush.msra.mxu0 0.0
      %259 = vmatpush.msra.mxu0 0.0
      %260 = vmatpush.msra.mxu0 0.0
      %261 = vmatpush.msra.mxu0 0.0
      %262 = vmatpush.msra.mxu0 0.0
      %263 = vmatpush.msra.mxu0 0.0
      %264 = vmatpush.msra.mxu0 0.0
      %265 = vmatpush.msra.mxu0 0.0
      %266 = vmatpush.msra.mxu0 0.0
      %267 = vmatpush.msra.mxu0 0.0
      %268 = vmatpush.msra.mxu0 0.0
      %269 = vmatpush.msra.mxu0 0.0
      %270 = vmatpush.msra.mxu0 0.0
      %271 = vmatpush.msra.mxu0 0.0
      %272 = vmatpush.msra.mxu0 0.0
      %273 = vmatpush.msra.mxu0 %v256
      %274 = vmatmul.f32.gmra.mxu0 %v253
      %v275 = vpop.f32.mrf.mxu0
      %v276 = vadd.f32 %v251, %v275
      %277 = vdwg.mxu0
      %vm278 = vcmask 64512
      %279 = vst.msk [vmem:[%s217] sm:$0xff] %vm278, %v276
      %s280 = scalar_lea.vmem %s207, 2
      %v281 = vld [vmem:[%s280] sm:$0x3]
      %v282 = vunpack.c.l.bf16 %v281
      %v284 = vsel %vm226, %v282, 0
      %286 = vmatpush.msra.mxu0 0.0
      %287 = vmatpush.msra.mxu0 0.0
      %288 = vmatpush.msra.mxu0 0.0
      %289 = vmatpush.msra.mxu0 0.0
      %290 = vmatpush.msra.mxu0 0.0
      %291 = vmatpush.msra.mxu0 0.0
      %292 = vmatpush.msra.mxu0 0.0
      %293 = vmatpush.msra.mxu0 0.0
      %294 = vmatpush.msra.mxu0 0.0
      %295 = vmatpush.msra.mxu0 0.0
      %296 = vmatpush.msra.mxu0 0.0
      %297 = vmatpush.msra.mxu0 0.0
      %298 = vmatpush.msra.mxu0 0.0
      %299 = vmatpush.msra.mxu0 0.0
      %300 = vmatpush.msra.mxu0 0.0
      %301 = vmatpush.msra.mxu0 %v284
      %302 = vmatmul.f32.gmra.mxu0 %v224
      %v303 = vpop.f32.mrf.mxu0
      %v304 = vadd.f32 0.0, %v303
      %305 = vdwg.mxu0
      %s306 = scalar_lea.vmem %s212, 4
      %v307 = vld [vmem:[%s306] sm:$0xf]
      %v308 = vunpack.c.l.bf16 %v307
      %v310 = vsel %vm222, %v304, 0
      %312 = vmatpush.msra.mxu0 0.0
      %313 = vmatpush.msra.mxu0 0.0
      %314 = vmatpush.msra.mxu0 0.0
      %315 = vmatpush.msra.mxu0 0.0
      %316 = vmatpush.msra.mxu0 0.0
      %317 = vmatpush.msra.mxu0 0.0
      %318 = vmatpush.msra.mxu0 0.0
      %319 = vmatpush.msra.mxu0 0.0
      %320 = vmatpush.msra.mxu0 0.0
      %321 = vmatpush.msra.mxu0 0.0
      %322 = vmatpush.msra.mxu0 0.0
      %323 = vmatpush.msra.mxu0 0.0
      %324 = vmatpush.msra.mxu0 0.0
      %325 = vmatpush.msra.mxu0 0.0
      %326 = vmatpush.msra.mxu0 0.0
      %327 = vmatpush.msra.mxu0 %v256
      %328 = vmatmul.f32.gmra.mxu0 %v310
      %v329 = vpop.f32.mrf.mxu0
      %v330 = vadd.f32 %v308, %v329
      %331 = vdwg.mxu0
      %s332 = scalar_lea.vmem %s217, 8
      %333 = vst.msk [vmem:[%s332] sm:$0xff] %vm278, %v330
      %s334 = scalar_lea.vmem %s207, 4
      %v335 = vld [vmem:[%s334] sm:$0x3]
      %v336 = vunpack.c.l.bf16 %v335
      %v338 = vsel %vm226, %v336, 0
      %340 = vmatpush.msra.mxu0 0.0
      %341 = vmatpush.msra.mxu0 0.0
      %342 = vmatpush.msra.mxu0 0.0
      %343 = vmatpush.msra.mxu0 0.0
      %344 = vmatpush.msra.mxu0 0.0
      %345 = vmatpush.msra.mxu0 0.0
      %346 = vmatpush.msra.mxu0 0.0
      %347 = vmatpush.msra.mxu0 0.0
      %348 = vmatpush.msra.mxu0 0.0
      %349 = vmatpush.msra.mxu0 0.0
      %350 = vmatpush.msra.mxu0 0.0
      %351 = vmatpush.msra.mxu0 0.0
      %352 = vmatpush.msra.mxu0 0.0
      %353 = vmatpush.msra.mxu0 0.0
      %354 = vmatpush.msra.mxu0 0.0
      %355 = vmatpush.msra.mxu0 %v338
      %356 = vmatmul.f32.gmra.mxu0 %v224
      %v357 = vpop.f32.mrf.mxu0
      %v358 = vadd.f32 0.0, %v357
      %359 = vdwg.mxu0
      %s360 = scalar_lea.vmem %s212, 8
      %v361 = vld [vmem:[%s360] sm:$0xf]
      %v362 = vunpack.c.l.bf16 %v361
      %v364 = vsel %vm222, %v358, 0
      %366 = vmatpush.msra.mxu0 0.0
      %367 = vmatpush.msra.mxu0 0.0
      %368 = vmatpush.msra.mxu0 0.0
      %369 = vmatpush.msra.mxu0 0.0
      %370 = vmatpush.msra.mxu0 0.0
      %371 = vmatpush.msra.mxu0 0.0
      %372 = vmatpush.msra.mxu0 0.0
      %373 = vmatpush.msra.mxu0 0.0
      %374 = vmatpush.msra.mxu0 0.0
      %375 = vmatpush.msra.mxu0 0.0
      %376 = vmatpush.msra.mxu0 0.0
      %377 = vmatpush.msra.mxu0 0.0
      %378 = vmatpush.msra.mxu0 0.0
      %379 = vmatpush.msra.mxu0 0.0
      %380 = vmatpush.msra.mxu0 0.0
      %381 = vmatpush.msra.mxu0 %v256
      %382 = vmatmul.f32.gmra.mxu0 %v364
      %v383 = vpop.f32.mrf.mxu0
      %v384 = vadd.f32 %v362, %v383
      %385 = vdwg.mxu0
      %s386 = scalar_lea.vmem %s217, 16
      %387 = vst.msk [vmem:[%s386] sm:$0xff] %vm278, %v384
      %s388 = scalar_lea.vmem %s207, 6
      %v389 = vld [vmem:[%s388] sm:$0x3]
      %v390 = vunpack.c.l.bf16 %v389
      %v392 = vsel %vm226, %v390, 0
      %394 = vmatpush.msra.mxu0 0.0
      %395 = vmatpush.msra.mxu0 0.0
      %396 = vmatpush.msra.mxu0 0.0
      %397 = vmatpush.msra.mxu0 0.0
      %398 = vmatpush.msra.mxu0 0.0
      %399 = vmatpush.msra.mxu0 0.0
      %400 = vmatpush.msra.mxu0 0.0
      %401 = vmatpush.msra.mxu0 0.0
      %402 = vmatpush.msra.mxu0 0.0
      %403 = vmatpush.msra.mxu0 0.0
      %404 = vmatpush.msra.mxu0 0.0
      %405 = vmatpush.msra.mxu0 0.0
      %406 = vmatpush.msra.mxu0 0.0
      %407 = vmatpush.msra.mxu0 0.0
      %408 = vmatpush.msra.mxu0 0.0
      %409 = vmatpush.msra.mxu0 %v392
      %410 = vmatmul.f32.gmra.mxu0 %v224
      %v411 = vpop.f32.mrf.mxu0
      %v412 = vadd.f32 0.0, %v411
      %413 = vdwg.mxu0
      %s414 = scalar_lea.vmem %s212, 12
      %v415 = vld [vmem:[%s414] sm:$0xf]
      %v416 = vunpack.c.l.bf16 %v415
      %v418 = vsel %vm222, %v412, 0
      %420 = vmatpush.msra.mxu0 0.0
      %421 = vmatpush.msra.mxu0 0.0
      %422 = vmatpush.msra.mxu0 0.0
      %423 = vmatpush.msra.mxu0 0.0
      %424 = vmatpush.msra.mxu0 0.0
      %425 = vmatpush.msra.mxu0 0.0
      %426 = vmatpush.msra.mxu0 0.0
      %427 = vmatpush.msra.mxu0 0.0
      %428 = vmatpush.msra.mxu0 0.0
      %429 = vmatpush.msra.mxu0 0.0
      %430 = vmatpush.msra.mxu0 0.0
      %431 = vmatpush.msra.mxu0 0.0
      %432 = vmatpush.msra.mxu0 0.0
      %433 = vmatpush.msra.mxu0 0.0
      %434 = vmatpush.msra.mxu0 0.0
      %435 = vmatpush.msra.mxu0 %v256
      %436 = vmatmul.f32.gmra.mxu0 %v418
      %v437 = vpop.f32.mrf.mxu0
      %v438 = vadd.f32 %v416, %v437
      %439 = vdwg.mxu0
      %s440 = scalar_lea.vmem %s217, 24
      %441 = vst.msk [vmem:[%s440] sm:$0xff] %vm278, %v438
      %s442 = scalar_lea.vmem %s207, 8
      %v443 = vld [vmem:[%s442] sm:$0x3]
      %v444 = vunpack.c.l.bf16 %v443
      %v446 = vsel %vm226, %v444, 0
      %448 = vmatpush.msra.mxu0 0.0
      %449 = vmatpush.msra.mxu0 0.0
      %450 = vmatpush.msra.mxu0 0.0
      %451 = vmatpush.msra.mxu0 0.0
      %452 = vmatpush.msra.mxu0 0.0
      %453 = vmatpush.msra.mxu0 0.0
      %454 = vmatpush.msra.mxu0 0.0
      %455 = vmatpush.msra.mxu0 0.0
      %456 = vmatpush.msra.mxu0 0.0
      %457 = vmatpush.msra.mxu0 0.0
      %458 = vmatpush.msra.mxu0 0.0
      %459 = vmatpush.msra.mxu0 0.0
      %460 = vmatpush.msra.mxu0 0.0
      %461 = vmatpush.msra.mxu0 0.0
      %462 = vmatpush.msra.mxu0 0.0
      %463 = vmatpush.msra.mxu0 %v446
      %464 = vmatmul.f32.gmra.mxu0 %v224
      %v465 = vpop.f32.mrf.mxu0
      %v466 = vadd.f32 0.0, %v465
      %467 = vdwg.mxu0
      %s468 = scalar_lea.vmem %s212, 16
      %v469 = vld [vmem:[%s468] sm:$0xf]
      %v470 = vunpack.c.l.bf16 %v469
      %v472 = vsel %vm222, %v466, 0
      %474 = vmatpush.msra.mxu0 0.0
      %475 = vmatpush.msra.mxu0 0.0
      %476 = vmatpush.msra.mxu0 0.0
      %477 = vmatpush.msra.mxu0 0.0
      %478 = vmatpush.msra.mxu0 0.0
      %479 = vmatpush.msra.mxu0 0.0
      %480 = vmatpush.msra.mxu0 0.0
      %481 = vmatpush.msra.mxu0 0.0
      %482 = vmatpush.msra.mxu0 0.0
      %483 = vmatpush.msra.mxu0 0.0
      %484 = vmatpush.msra.mxu0 0.0
      %485 = vmatpush.msra.mxu0 0.0
      %486 = vmatpush.msra.mxu0 0.0
      %487 = vmatpush.msra.mxu0 0.0
      %488 = vmatpush.msra.mxu0 0.0
      %489 = vmatpush.msra.mxu0 %v256
      %490 = vmatmul.f32.gmra.mxu0 %v472
      %v491 = vpop.f32.mrf.mxu0
      %v492 = vadd.f32 %v470, %v491
      %493 = vdwg.mxu0
      %s494 = scalar_lea.vmem %s217, 32
      %495 = vst.msk [vmem:[%s494] sm:$0xff] %vm278, %v492
      %s496 = scalar_lea.vmem %s207, 10
      %v497 = vld [vmem:[%s496] sm:$0x3]
      %v498 = vunpack.c.l.bf16 %v497
      %v500 = vsel %vm226, %v498, 0
      %502 = vmatpush.msra.mxu0 0.0
      %503 = vmatpush.msra.mxu0 0.0
      %504 = vmatpush.msra.mxu0 0.0
      %505 = vmatpush.msra.mxu0 0.0
      %506 = vmatpush.msra.mxu0 0.0
      %507 = vmatpush.msra.mxu0 0.0
      %508 = vmatpush.msra.mxu0 0.0
      %509 = vmatpush.msra.mxu0 0.0
      %510 = vmatpush.msra.mxu0 0.0
      %511 = vmatpush.msra.mxu0 0.0
      %512 = vmatpush.msra.mxu0 0.0
      %513 = vmatpush.msra.mxu0 0.0
      %514 = vmatpush.msra.mxu0 0.0
      %515 = vmatpush.msra.mxu0 0.0
      %516 = vmatpush.msra.mxu0 0.0
      %517 = vmatpush.msra.mxu0 %v500
      %518 = vmatmul.f32.gmra.mxu0 %v224
      %v519 = vpop.f32.mrf.mxu0
      %v520 = vadd.f32 0.0, %v519
      %521 = vdwg.mxu0
      %s522 = scalar_lea.vmem %s212, 20
      %v523 = vld [vmem:[%s522] sm:$0xf]
      %v524 = vunpack.c.l.bf16 %v523
      %v526 = vsel %vm222, %v520, 0
      %528 = vmatpush.msra.mxu0 0.0
      %529 = vmatpush.msra.mxu0 0.0
      %530 = vmatpush.msra.mxu0 0.0
      %531 = vmatpush.msra.mxu0 0.0
      %532 = vmatpush.msra.mxu0 0.0
      %533 = vmatpush.msra.mxu0 0.0
      %534 = vmatpush.msra.mxu0 0.0
      %535 = vmatpush.msra.mxu0 0.0
      %536 = vmatpush.msra.mxu0 0.0
      %537 = vmatpush.msra.mxu0 0.0
      %538 = vmatpush.msra.mxu0 0.0
      %539 = vmatpush.msra.mxu0 0.0
      %540 = vmatpush.msra.mxu0 0.0
      %541 = vmatpush.msra.mxu0 0.0
      %542 = vmatpush.msra.mxu0 0.0
      %543 = vmatpush.msra.mxu0 %v256
      %544 = vmatmul.f32.gmra.mxu0 %v526
      %v545 = vpop.f32.mrf.mxu0
      %v546 = vadd.f32 %v524, %v545
      %547 = vdwg.mxu0
      %s548 = scalar_lea.vmem %s217, 40
      %549 = vst.msk [vmem:[%s548] sm:$0xff] %vm278, %v546
      %s550 = scalar_lea.vmem %s207, 12
      %v551 = vld [vmem:[%s550] sm:$0x3]
      %v552 = vunpack.c.l.bf16 %v551
      %v554 = vsel %vm226, %v552, 0
      %556 = vmatpush.msra.mxu0 0.0
      %557 = vmatpush.msra.mxu0 0.0
      %558 = vmatpush.msra.mxu0 0.0
      %559 = vmatpush.msra.mxu0 0.0
      %560 = vmatpush.msra.mxu0 0.0
      %561 = vmatpush.msra.mxu0 0.0
      %562 = vmatpush.msra.mxu0 0.0
      %563 = vmatpush.msra.mxu0 0.0
      %564 = vmatpush.msra.mxu0 0.0
      %565 = vmatpush.msra.mxu0 0.0
      %566 = vmatpush.msra.mxu0 0.0
      %567 = vmatpush.msra.mxu0 0.0
      %568 = vmatpush.msra.mxu0 0.0
      %569 = vmatpush.msra.mxu0 0.0
      %570 = vmatpush.msra.mxu0 0.0
      %571 = vmatpush.msra.mxu0 %v554
      %572 = vmatmul.f32.gmra.mxu0 %v224
      %v573 = vpop.f32.mrf.mxu0
      %v574 = vadd.f32 0.0, %v573
      %575 = vdwg.mxu0
      %s576 = scalar_lea.vmem %s212, 24
      %v577 = vld [vmem:[%s576] sm:$0xf]
      %v578 = vunpack.c.l.bf16 %v577
      %v580 = vsel %vm222, %v574, 0
      %582 = vmatpush.msra.mxu0 0.0
      %583 = vmatpush.msra.mxu0 0.0
      %584 = vmatpush.msra.mxu0 0.0
      %585 = vmatpush.msra.mxu0 0.0
      %586 = vmatpush.msra.mxu0 0.0
      %587 = vmatpush.msra.mxu0 0.0
      %588 = vmatpush.msra.mxu0 0.0
      %589 = vmatpush.msra.mxu0 0.0
      %590 = vmatpush.msra.mxu0 0.0
      %591 = vmatpush.msra.mxu0 0.0
      %592 = vmatpush.msra.mxu0 0.0
      %593 = vmatpush.msra.mxu0 0.0
      %594 = vmatpush.msra.mxu0 0.0
      %595 = vmatpush.msra.mxu0 0.0
      %596 = vmatpush.msra.mxu0 0.0
      %597 = vmatpush.msra.mxu0 %v256
      %598 = vmatmul.f32.gmra.mxu0 %v580
      %v599 = vpop.f32.mrf.mxu0
      %v600 = vadd.f32 %v578, %v599
      %601 = vdwg.mxu0
      %s602 = scalar_lea.vmem %s217, 48
      %603 = vst.msk [vmem:[%s602] sm:$0xff] %vm278, %v600
      %s604 = scalar_lea.vmem %s207, 14
      %v605 = vld [vmem:[%s604] sm:$0x3]
      %v606 = vunpack.c.l.bf16 %v605
      %v608 = vsel %vm226, %v606, 0
      %610 = vmatpush.msra.mxu0 0.0
      %611 = vmatpush.msra.mxu0 0.0
      %612 = vmatpush.msra.mxu0 0.0
      %613 = vmatpush.msra.mxu0 0.0
      %614 = vmatpush.msra.mxu0 0.0
      %615 = vmatpush.msra.mxu0 0.0
      %616 = vmatpush.msra.mxu0 0.0
      %617 = vmatpush.msra.mxu0 0.0
      %618 = vmatpush.msra.mxu0 0.0
      %619 = vmatpush.msra.mxu0 0.0
      %620 = vmatpush.msra.mxu0 0.0
      %621 = vmatpush.msra.mxu0 0.0
      %622 = vmatpush.msra.mxu0 0.0
      %623 = vmatpush.msra.mxu0 0.0
      %624 = vmatpush.msra.mxu0 0.0
      %625 = vmatpush.msra.mxu0 %v608
      %626 = vmatmul.f32.gmra.mxu0 %v224
      %v627 = vpop.f32.mrf.mxu0
      %v628 = vadd.f32 0.0, %v627
      %629 = vdwg.mxu0
      %s630 = scalar_lea.vmem %s212, 28
      %v631 = vld [vmem:[%s630] sm:$0xf]
      %v632 = vunpack.c.l.bf16 %v631
      %v634 = vsel %vm222, %v628, 0
      %636 = vmatpush.msra.mxu0 0.0
      %637 = vmatpush.msra.mxu0 0.0
      %638 = vmatpush.msra.mxu0 0.0
      %639 = vmatpush.msra.mxu0 0.0
      %640 = vmatpush.msra.mxu0 0.0
      %641 = vmatpush.msra.mxu0 0.0
      %642 = vmatpush.msra.mxu0 0.0
      %643 = vmatpush.msra.mxu0 0.0
      %644 = vmatpush.msra.mxu0 0.0
      %645 = vmatpush.msra.mxu0 0.0
      %646 = vmatpush.msra.mxu0 0.0
      %647 = vmatpush.msra.mxu0 0.0
      %648 = vmatpush.msra.mxu0 0.0
      %649 = vmatpush.msra.mxu0 0.0
      %650 = vmatpush.msra.mxu0 0.0
      %651 = vmatpush.msra.mxu0 %v256
      %652 = vmatmul.f32.gmra.mxu0 %v634
      %v653 = vpop.f32.mrf.mxu0
      %v654 = vadd.f32 %v632, %v653
      %655 = vdwg.mxu0
      %s656 = scalar_lea.vmem %s217, 56
      %657 = vst.msk [vmem:[%s656] sm:$0xff] %vm278, %v654
      %p658 = scmp.lt.s32.totalorder %s15, 1
      %s659 = scalar_select %p658, %s15, 1
      %s660 = smul.addr %s659, 8
      %s661 = smul.addr %s660, 8
      %s662 = scalar_lea.vmem %s4, %s661
      // Predicated region
      $region37: #{_lambda_.18} parent=35 // pred_check
        %p663 = pneg %p127
      $region38: #{_lambda_.18} parent=35 // pred_check_branch
        %665 = sbr.rel (%p663) target = $region40
      $region39: #{_lambda_.18} parent=35 // pred_region
        _
      $region40: #{_lambda_.18} parent=35 // pred_fallthru
        _
    $region36: #{_lambda_.18} parent=5 // pred_fallthru
      _
    %p666 = scmp.le.s32.totalorder 2, %s10
    // Predicated region
    $region41: #{_lambda_.18} parent=5 // pred_check
      %p667 = pneg %p666
    $region42: #{_lambda_.18} parent=5 // pred_check_branch
      %669 = sbr.rel (%p667) target = $region44
    $region43: #{_lambda_.18} parent=5 // pred_region
      %s670 = ssub.s32 %s10, 2
      // Predicated region
      $region45: #{_lambda_.18} parent=43 // pred_check
        %p671 = pneg %p133
      $region46: #{_lambda_.18} parent=43 // pred_check_branch
        %673 = sbr.rel (%p671) target = $region48
      $region47: #{_lambda_.18} parent=43 // pred_region
        %p674 = scmp.lt.s32.totalorder %s16, 1
        %s675 = scalar_select %p674, %s16, 1
        %s676 = smul.addr %s675, 8
        %s677 = smul.addr %s676, 8
        %s678 = scalar_lea.vmem %s4, %s677
      $region48: #{_lambda_.18} parent=43 // pred_fallthru
        _
    $region44: #{_lambda_.18} parent=5 // pred_fallthru
      _
  $region6: #{_lambda_.18} parent=0 // loop_footer
    %s14 = sadd.s32 1, %s10
  $region7: #{_lambda_.18} parent=0 // loop_footer_branch
    %9 = sbr.rel target = $region3
  $region8: #{_lambda_.18} parent=0 // loop_exit
    _

// kernel: _lambda_.20
$region0: #{_lambda_.20}
  #allocation0 [shape = 'u32[]', space=smem, size = 0x4, offset = 0x4, fixed_abs, tag = 'smem constant byte address 0x4 - core index']
  #allocation1 [shape = 'u32[72,128]{1,0:T(1,128)}', space=vmem, size = 0x9000, scoped, tag = 'internal scratch']
  %s0 = inlined_call_operand.vmem [shape: bf16[2,4,8,10], index: 0, kind: input, shape index: {}]
  %s1 = inlined_call_operand.vmem [shape: f32[16,8], index: 1, kind: input, shape index: {}]
  %s2 = inlined_call_operand.vmem [shape: f32[8,16], index: 2, kind: input, shape index: {}]
  %s3 = inlined_call_operand.vmem [shape: bf16[2,4,16,16], index: 3, kind: input, shape index: {}]
  %s4 = inlined_call_operand.vmem [shape: f32[2,4,16,16], index: 4, kind: output, shape index: {}]
  %s5 = sld [smem:[#allocation0]]
  $region49: #{_lambda_.20} parent=0
    _
  %s7 = ssub.s32 1, %s5
  %s8 = scalar_select 0, %s7, %s5
  loop: start=0, step=1, limit=4
  $region2: #{_lambda_.20} parent=0 // loop_pre_header
    _
  $region3: #{_lambda_.20} parent=0 // loop_header
    %s10 = sphi 0, %s14
    %p11 = scmp.ge.s32.totalorder %s10, 4
    %s20 = sphi 0, %s22
    %s23 = sphi 0, %s20
    %s24 = sphi 0, %s23
    %s40 = sphi 0, %s24
    %s44 = sphi 0, %s44
    %s46 = sphi 0, %s44
    %s47 = sphi 0, %s46
    %s61 = sphi 0, %s47
    %s65 = sphi 0, %s65
    %s67 = sphi 0, %s65
    %s68 = sphi 0, %s67
    %s82 = sphi 0, %s68
    %s88 = sphi 0, %s90
    %s91 = sphi 0, %s88
    %s92 = sphi 0, %s91
    %s108 = sphi 0, %s92
    %s114 = sphi 0, %s116
    %s117 = sphi 0, %s114
    %s118 = sphi 0, %s117
    %s134 = sphi 0, %s118
  $region4: #{_lambda_.20} parent=0 // loop_header_branch
    %13 = sbr.rel (%p11) target = $region8
  $region5: #{_lambda_.20} parent=0 // loop_body
    %s15 = ssub.s32 %s10, 1
    %s16 = ssub.s32 %s10, 2
    %s17 = sadd.s32 %s10, 1
    %s18 = ssub.s32 %s10, %s17
    %p19 = scmp.eq.s32.totalorder %s18, 0
    %s21 = sadd.s32 %s20, 1
    %s22 = scalar_select %p19, %s20, %s21
    %p25 = pneg %p19
    %p26 = scmp.eq.s32.totalorder %s10, 1
    %p27 = por %p25, %p26
    %p28 = scmp.ne.s32.totalorder %s20, %s23
    %p29 = scmp.eq.s32.totalorder %s10, 0
    %p30 = por %p28, %p29
    %p31 = scmp.ne.s32.totalorder %s20, %s23
    %p32 = scmp.eq.s32.totalorder %s15, 1
    %p33 = por %p31, %p32
    %p34 = scmp.ne.s32.totalorder %s23, %s24
    %p35 = scmp.eq.s32.totalorder %s15, 0
    %p36 = por %p34, %p35
    %p37 = scmp.ne.s32.totalorder %s23, %s24
    %p38 = scmp.eq.s32.totalorder %s16, 1
    %p39 = por %p37, %p38
    %p41 = scmp.ne.s32.totalorder %s24, %s40
    %p42 = scmp.eq.s32.totalorder %s16, 0
    %p43 = por %p41, %p42
    %s45 = sadd.s32 %s44, 1
    %p48 = scmp.eq.s32.totalorder %s10, 1
    %p49 = scmp.ne.s32.totalorder %s44, %s46
    %p50 = scmp.eq.s32.totalorder %s10, 0
    %p51 = por %p49, %p50
    %p52 = scmp.ne.s32.totalorder %s44, %s46
    %p53 = scmp.eq.s32.totalorder %s15, 1
    %p54 = por %p52, %p53
    %p55 = scmp.ne.s32.totalorder %s46, %s47
    %p56 = scmp.eq.s32.totalorder %s15, 0
    %p57 = por %p55, %p56
    %p58 = scmp.ne.s32.totalorder %s46, %s47
    %p59 = scmp.eq.s32.totalorder %s16, 1
    %p60 = por %p58, %p59
    %p62 = scmp.ne.s32.totalorder %s47, %s61
    %p63 = scmp.eq.s32.totalorder %s16, 0
    %p64 = por %p62, %p63
    %s66 = sadd.s32 %s65, 1
    %p69 = scmp.eq.s32.totalorder %s10, 1
    %p70 = scmp.ne.s32.totalorder %s65, %s67
    %p71 = scmp.eq.s32.totalorder %s10, 0
    %p72 = por %p70, %p71
    %p73 = scmp.ne.s32.totalorder %s65, %s67
    %p74 = scmp.eq.s32.totalorder %s15, 1
    %p75 = por %p73, %p74
    %p76 = scmp.ne.s32.totalorder %s67, %s68
    %p77 = scmp.eq.s32.totalorder %s15, 0
    %p78 = por %p76, %p77
    %p79 = scmp.ne.s32.totalorder %s67, %s68
    %p80 = scmp.eq.s32.totalorder %s16, 1
    %p81 = por %p79, %p80
    %p83 = scmp.ne.s32.totalorder %s68, %s82
    %p84 = scmp.eq.s32.totalorder %s16, 0
    %p85 = por %p83, %p84
    %s86 = ssub.s32 %s10, %s17
    %p87 = scmp.eq.s32.totalorder %s86, 0
    %s89 = sadd.s32 %s88, 1
    %s90 = scalar_select %p87, %s88, %s89
    %p93 = pneg %p87
    %p94 = scmp.eq.s32.totalorder %s10, 1
    %p95 = por %p93, %p94
    %p96 = scmp.ne.s32.totalorder %s88, %s91
    %p97 = scmp.eq.s32.totalorder %s10, 0
    %p98 = por %p96, %p97
    %p99 = scmp.ne.s32.totalorder %s88, %s91
    %p100 = scmp.eq.s32.totalorder %s15, 1
    %p101 = por %p99, %p100
    %p102 = scmp.ne.s32.totalorder %s91, %s92
    %p103 = scmp.eq.s32.totalorder %s15, 0
    %p104 = por %p102, %p103
    %p105 = scmp.ne.s32.totalorder %s91, %s92
    %p106 = scmp.eq.s32.totalorder %s16, 1
    %p107 = por %p105, %p106
    %p109 = scmp.ne.s32.totalorder %s92, %s108
    %p110 = scmp.eq.s32.totalorder %s16, 0
    %p111 = por %p109, %p110
    %s112 = ssub.s32 %s10, %s17
    %p113 = scmp.eq.s32.totalorder %s112, 0
    %s115 = sadd.s32 %s114, 1
    %s116 = scalar_select %p113, %s114, %s115
    %p119 = pneg %p113
    %p120 = scmp.eq.s32.totalorder %s10, 1
    %p121 = por %p119, %p120
    %p122 = scmp.ne.s32.totalorder %s114, %s117
    %p123 = scmp.eq.s32.totalorder %s10, 0
    %p124 = por %p122, %p123
    %p125 = scmp.ne.s32.totalorder %s114, %s117
    %p126 = scmp.eq.s32.totalorder %s15, 1
    %p127 = por %p125, %p126
    %p128 = scmp.ne.s32.totalorder %s117, %s118
    %p129 = scmp.eq.s32.totalorder %s15, 0
    %p130 = por %p128, %p129
    %p131 = scmp.ne.s32.totalorder %s117, %s118
    %p132 = scmp.eq.s32.totalorder %s16, 1
    %p133 = por %p131, %p132
    %p135 = scmp.ne.s32.totalorder %s118, %s134
    %p136 = scmp.eq.s32.totalorder %s16, 0
    %p137 = por %p135, %p136
    %p138 = scmp.le.s32.totalorder 1, %s10
    %p139 = scmp.lt.s32.totalorder %s10, 3
    %p140 = pnand %p138, %p139
    %p141 = pneg %p140
    // Predicated region
    $region9: #{_lambda_.20} parent=5 // pred_check
      _
    $region10: #{_lambda_.20} parent=5 // pred_check_branch
      %143 = sbr.rel (%p140) target = $region12
    $region11: #{_lambda_.20} parent=5 // pred_region
      %s144 = ssub.s32 %s10, 1
      // Predicated region
      $region13: #{_lambda_.20} parent=11 // pred_check
        %p145 = pneg %p57
      $region14: #{_lambda_.20} parent=11 // pred_check_branch
        %147 = sbr.rel (%p145) target = $region16
      $region15: #{_lambda_.20} parent=11 // pred_region
        _
      $region16: #{_lambda_.20} parent=11 // pred_fallthru
        _
      // Predicated region
      $region17: #{_lambda_.20} parent=11 // pred_check
        %p148 = pneg %p78
      $region18: #{_lambda_.20} parent=11 // pred_check_branch
        %150 = sbr.rel (%p148) target = $region20
      $region19: #{_lambda_.20} parent=11 // pred_region
        _
      $region20: #{_lambda_.20} parent=11 // pred_fallthru
        _
    $region12: #{_lambda_.20} parent=5 // pred_fallthru
      _
    %p151 = scmp.lt.s32.totalorder %s10, 2
    // Predicated region
    $region21: #{_lambda_.20} parent=5 // pred_check
      %p152 = pneg %p151
    $region22: #{_lambda_.20} parent=5 // pred_check_branch
      %154 = sbr.rel (%p152) target = $region24
    $region23: #{_lambda_.20} parent=5 // pred_region
      // Predicated region
      $region25: #{_lambda_.20} parent=23 // pred_check
        %p155 = pneg %p30
      $region26: #{_lambda_.20} parent=23 // pred_check_branch
        %157 = sbr.rel (%p155) target = $region28
      $region27: #{_lambda_.20} parent=23 // pred_region
        %p158 = scmp.lt.s32.totalorder %s10, 1
        %s159 = scalar_select %p158, %s10, 1
        %s160 = smul.addr %s159, 4
        %s161 = smul.addr %s160, 4
        %s162 = scalar_lea.vmem %s0, %s161
      $region28: #{_lambda_.20} parent=23 // pred_fallthru
        _
      // Predicated region
      $region29: #{_lambda_.20} parent=23 // pred_check
        %p163 = pneg %p98
      $region30: #{_lambda_.20} parent=23 // pred_check_branch
        %165 = sbr.rel (%p163) target = $region32
      $region31: #{_lambda_.20} parent=23 // pred_region
        %p166 = scmp.lt.s32.totalorder %s10, 1
        %s167 = scalar_select %p166, %s10, 1
        %s168 = smul.addr %s167, 8
        %s169 = smul.addr %s168, 4
        %s170 = scalar_lea.vmem %s3, %s169
      $region32: #{_lambda_.20} parent=23 // pred_fallthru
        _
    $region24: #{_lambda_.20} parent=5 // pred_fallthru
      _
    %p171 = scmp.le.s32.totalorder 1, %s10
    %p172 = scmp.lt.s32.totalorder %s10, 3
    %p173 = pnand %p171, %p172
    %p174 = pneg %p173
    // Predicated region
    $region33: #{_lambda_.20} parent=5 // pred_check
      _
    $region34: #{_lambda_.20} parent=5 // pred_check_branch
      %176 = sbr.rel (%p173) target = $region36
    $region35: #{_lambda_.20} parent=5 // pred_region
      %s177 = ssub.s32 %s10, 1
      %p178 = scmp.lt.s32.totalorder %s15, 1
      %s179 = scalar_select %p178, %s15, 1
      %s180 = smul.addr %s179, 4
      %s181 = smul.addr %s180, 4
      %s182 = scalar_lea.vmem %s0, %s181
      %p183 = pneg %p36
      %p184 = pneg %p33
      %p185 = pneg %p57
      %p186 = pneg %p54
      %p187 = pneg %p78
      %p188 = pneg %p75
      %p189 = scmp.lt.s32.totalorder %s15, 1
      %s190 = scalar_select %p189, %s15, 1
      %s191 = smul.addr %s190, 8
      %s192 = smul.addr %s191, 4
      %s193 = scalar_lea.vmem %s3, %s192
      %p194 = pneg %p104
      %p195 = pneg %p101
      %p196 = pneg %p130
      %p197 = pneg %p127
      %p198 = scmp.lt.s32.totalorder %s15, 1
      %s199 = scalar_select %p198, %s15, 1
      %s200 = smul.addr %s199, 8
      %s201 = smul.addr %s200, 8
      %s202 = scalar_lea.vmem %s4, %s201
      %p203 = scmp.lt.s32.totalorder %s15, 1
      %s204 = scalar_select %p203, %s15, 1
      %s205 = smul.addr %s204, 4
      %s206 = smul.addr %s205, 4
      %s207 = scalar_lea.vmem %s0, %s206
      %p208 = scmp.lt.s32.totalorder %s15, 1
      %s209 = scalar_select %p208, %s15, 1
      %s210 = smul.addr %s209, 8
      %s211 = smul.addr %s210, 4
      %s212 = scalar_lea.vmem %s3, %s211
      %p213 = scmp.lt.s32.totalorder %s15, 1
      %s214 = scalar_select %p213, %s15, 1
      %s215 = smul.addr %s214, 8
      %s216 = smul.addr %s215, 8
      %s217 = scalar_lea.vmem %s4, %s216
      %v218 = vld [vmem:[%s1] sm:$0xff]
      %v219 = vld [vmem:[%s1 + $0x8] sm:$0xff]
      %v220 = vld [vmem:[%s2] sm:$0xff]
      %v221 = vld [vmem:[%s207] sm:$0xf]
      %v222 = vunpack.c.l.bf16 %v221
      %vm223 = vcmask 64512
      %v225 = vsel %vm223, %v218, 0
      %v228 = vsel %vm223, %v219, 0
      %230 = vmatpush.msra.mxu0 0.0
      %231 = vmatpush.msra.mxu0 0.0
      %232 = vmatpush.msra.mxu0 0.0
      %233 = vmatpush.msra.mxu0 0.0
      %234 = vmatpush.msra.mxu0 0.0
      %235 = vmatpush.msra.mxu0 0.0
      %236 = vmatpush.msra.mxu0 0.0
      %237 = vmatpush.msra.mxu0 0.0
      %238 = vmatpush.msra.mxu0 0.0
      %239 = vmatpush.msra.mxu0 0.0
      %240 = vmatpush.msra.mxu0 0.0
      %241 = vmatpush.msra.mxu0 0.0
      %242 = vmatpush.msra.mxu0 0.0
      %243 = vmatpush.msra.mxu0 0.0
      %244 = vmatpush.msra.mxu0 0.0
      %245 = vmatpush.msra.mxu0 %v222
      %246 = vmatmul.f32.gmra.mxu0 %v225
      %v247 = vpop.f32.mrf.mxu0
      %v248 = vadd.f32 0.0, %v247
      %249 = vmatmul.f32.gmra.mxu0 %v228
      %v250 = vpop.f32.mrf.mxu0
      %v251 = vadd.f32 0.0, %v250
      %252 = vdwg.mxu0
      %v253 = vld [vmem:[%s212] sm:$0xf]
      %v254 = vld [vmem:[%s212 + $0x4] sm:$0xf]
      %v255 = vunpack.c.l.bf16 %v253
      %v256 = vunpack.c.l.bf16 %v254
      %v258 = vsel %vm223, %v248, 0
      %v261 = vsel %vm223, %v251, 0
      %263 = vmatpush.msra.mxu0 0.0
      %264 = vmatpush.msra.mxu0 0.0
      %265 = vmatpush.msra.mxu0 0.0
      %266 = vmatpush.msra.mxu0 0.0
      %267 = vmatpush.msra.mxu0 0.0
      %268 = vmatpush.msra.mxu0 0.0
      %269 = vmatpush.msra.mxu0 0.0
      %270 = vmatpush.msra.mxu0 0.0
      %271 = vmatpush.msra.mxu0 0.0
      %272 = vmatpush.msra.mxu0 0.0
      %273 = vmatpush.msra.mxu0 0.0
      %274 = vmatpush.msra.mxu0 0.0
      %275 = vmatpush.msra.mxu0 0.0
      %276 = vmatpush.msra.mxu0 0.0
      %277 = vmatpush.msra.mxu0 0.0
      %278 = vmatpush.msra.mxu0 %v220
      %279 = vmatmul.f32.gmra.mxu0 %v258
      %v280 = vpop.f32.mrf.mxu0
      %v281 = vadd.f32 %v255, %v280
      %282 = vmatmul.f32.gmra.mxu0 %v261
      %v283 = vpop.f32.mrf.mxu0
      %v284 = vadd.f32 %v256, %v283
      %285 = vdwg.mxu0
      %vm286 = vcmask 130048
      %287 = vst.msk [vmem:[%s217] sm:$0xff] %vm286, %v281
      %288 = vst.msk [vmem:[%s217 + $0x8] sm:$0xff] %vm286, %v284
      %s289 = scalar_lea.vmem %s207, 4
      %v290 = vld [vmem:[%s289] sm:$0xf]
      %v291 = vunpack.c.l.bf16 %v290
      %292 = vmatpush.msra.mxu0 0.0
      %293 = vmatpush.msra.mxu0 0.0
      %294 = vmatpush.msra.mxu0 0.0
      %295 = vmatpush.msra.mxu0 0.0
      %296 = vmatpush.msra.mxu0 0.0
      %297 = vmatpush.msra.mxu0 0.0
      %298 = vmatpush.msra.mxu0 0.0
      %299 = vmatpush.msra.mxu0 0.0
      %300 = vmatpush.msra.mxu0 0.0
      %301 = vmatpush.msra.mxu0 0.0
      %302 = vmatpush.msra.mxu0 0.0
      %303 = vmatpush.msra.mxu0 0.0
      %304 = vmatpush.msra.mxu0 0.0
      %305 = vmatpush.msra.mxu0 0.0
      %306 = vmatpush.msra.mxu0 0.0
      %307 = vmatpush.msra.mxu0 %v291
      %308 = vmatmul.f32.gmra.mxu0 %v225
      %v309 = vpop.f32.mrf.mxu0
      %v310 = vadd.f32 0.0, %v309
      %311 = vmatmul.f32.gmra.mxu0 %v228
      %v312 = vpop.f32.mrf.mxu0
      %v313 = vadd.f32 0.0, %v312
      %314 = vdwg.mxu0
      %s315 = scalar_lea.vmem %s212, 8
      %v316 = vld [vmem:[%s315] sm:$0xf]
      %v317 = vld [vmem:[%s315 + $0x4] sm:$0xf]
      %v318 = vunpack.c.l.bf16 %v316
      %v319 = vunpack.c.l.bf16 %v317
      %v321 = vsel %vm223, %v310, 0
      %v324 = vsel %vm223, %v313, 0
      %326 = vmatpush.msra.mxu0 0.0
      %327 = vmatpush.msra.mxu0 0.0
      %328 = vmatpush.msra.mxu0 0.0
      %329 = vmatpush.msra.mxu0 0.0
      %330 = vmatpush.msra.mxu0 0.0
      %331 = vmatpush.msra.mxu0 0.0
      %332 = vmatpush.msra.mxu0 0.0
      %333 = vmatpush.msra.mxu0 0.0
      %334 = vmatpush.msra.mxu0 0.0
      %335 = vmatpush.msra.mxu0 0.0
      %336 = vmatpush.msra.mxu0 0.0
      %337 = vmatpush.msra.mxu0 0.0
      %338 = vmatpush.msra.mxu0 0.0
      %339 = vmatpush.msra.mxu0 0.0
      %340 = vmatpush.msra.mxu0 0.0
      %341 = vmatpush.msra.mxu0 %v220
      %342 = vmatmul.f32.gmra.mxu0 %v321
      %v343 = vpop.f32.mrf.mxu0
      %v344 = vadd.f32 %v318, %v343
      %345 = vmatmul.f32.gmra.mxu0 %v324
      %v346 = vpop.f32.mrf.mxu0
      %v347 = vadd.f32 %v319, %v346
      %348 = vdwg.mxu0
      %s349 = scalar_lea.vmem %s217, 16
      %350 = vst.msk [vmem:[%s349] sm:$0xff] %vm286, %v344
      %351 = vst.msk [vmem:[%s349 + $0x8] sm:$0xff] %vm286, %v347
      %s352 = scalar_lea.vmem %s207, 8
      %v353 = vld [vmem:[%s352] sm:$0xf]
      %v354 = vunpack.c.l.bf16 %v353
      %355 = vmatpush.msra.mxu0 0.0
      %356 = vmatpush.msra.mxu0 0.0
      %357 = vmatpush.msra.mxu0 0.0
      %358 = vmatpush.msra.mxu0 0.0
      %359 = vmatpush.msra.mxu0 0.0
      %360 = vmatpush.msra.mxu0 0.0
      %361 = vmatpush.msra.mxu0 0.0
      %362 = vmatpush.msra.mxu0 0.0
      %363 = vmatpush.msra.mxu0 0.0
      %364 = vmatpush.msra.mxu0 0.0
      %365 = vmatpush.msra.mxu0 0.0
      %366 = vmatpush.msra.mxu0 0.0
      %367 = vmatpush.msra.mxu0 0.0
      %368 = vmatpush.msra.mxu0 0.0
      %369 = vmatpush.msra.mxu0 0.0
      %370 = vmatpush.msra.mxu0 %v354
      %371 = vmatmul.f32.gmra.mxu0 %v225
      %v372 = vpop.f32.mrf.mxu0
      %v373 = vadd.f32 0.0, %v372
      %374 = vmatmul.f32.gmra.mxu0 %v228
      %v375 = vpop.f32.mrf.mxu0
      %v376 = vadd.f32 0.0, %v375
      %377 = vdwg.mxu0
      %s378 = scalar_lea.vmem %s212, 16
      %v379 = vld [vmem:[%s378] sm:$0xf]
      %v380 = vld [vmem:[%s378 + $0x4] sm:$0xf]
      %v381 = vunpack.c.l.bf16 %v379
      %v382 = vunpack.c.l.bf16 %v380
      %v384 = vsel %vm223, %v373, 0
      %v387 = vsel %vm223, %v376, 0
      %389 = vmatpush.msra.mxu0 0.0
      %390 = vmatpush.msra.mxu0 0.0
      %391 = vmatpush.msra.mxu0 0.0
      %392 = vmatpush.msra.mxu0 0.0
      %393 = vmatpush.msra.mxu0 0.0
      %394 = vmatpush.msra.mxu0 0.0
      %395 = vmatpush.msra.mxu0 0.0
      %396 = vmatpush.msra.mxu0 0.0
      %397 = vmatpush.msra.mxu0 0.0
      %398 = vmatpush.msra.mxu0 0.0
      %399 = vmatpush.msra.mxu0 0.0
      %400 = vmatpush.msra.mxu0 0.0
      %401 = vmatpush.msra.mxu0 0.0
      %402 = vmatpush.msra.mxu0 0.0
      %403 = vmatpush.msra.mxu0 0.0
      %404 = vmatpush.msra.mxu0 %v220
      %405 = vmatmul.f32.gmra.mxu0 %v384
      %v406 = vpop.f32.mrf.mxu0
      %v407 = vadd.f32 %v381, %v406
      %408 = vmatmul.f32.gmra.mxu0 %v387
      %v409 = vpop.f32.mrf.mxu0
      %v410 = vadd.f32 %v382, %v409
      %411 = vdwg.mxu0
      %s412 = scalar_lea.vmem %s217, 32
      %413 = vst.msk [vmem:[%s412] sm:$0xff] %vm286, %v407
      %414 = vst.msk [vmem:[%s412 + $0x8] sm:$0xff] %vm286, %v410
      %s415 = scalar_lea.vmem %s207, 12
      %v416 = vld [vmem:[%s415] sm:$0xf]
      %v417 = vunpack.c.l.bf16 %v416
      %418 = vmatpush.msra.mxu0 0.0
      %419 = vmatpush.msra.mxu0 0.0
      %420 = vmatpush.msra.mxu0 0.0
      %421 = vmatpush.msra.mxu0 0.0
      %422 = vmatpush.msra.mxu0 0.0
      %423 = vmatpush.msra.mxu0 0.0
      %424 = vmatpush.msra.mxu0 0.0
      %425 = vmatpush.msra.mxu0 0.0
      %426 = vmatpush.msra.mxu0 0.0
      %427 = vmatpush.msra.mxu0 0.0
      %428 = vmatpush.msra.mxu0 0.0
      %429 = vmatpush.msra.mxu0 0.0
      %430 = vmatpush.msra.mxu0 0.0
      %431 = vmatpush.msra.mxu0 0.0
      %432 = vmatpush.msra.mxu0 0.0
      %433 = vmatpush.msra.mxu0 %v417
      %434 = vmatmul.f32.gmra.mxu0 %v225
      %v435 = vpop.f32.mrf.mxu0
      %v436 = vadd.f32 0.0, %v435
      %437 = vmatmul.f32.gmra.mxu0 %v228
      %v438 = vpop.f32.mrf.mxu0
      %v439 = vadd.f32 0.0, %v438
      %440 = vdwg.mxu0
      %s441 = scalar_lea.vmem %s212, 24
      %v442 = vld [vmem:[%s441] sm:$0xf]
      %v443 = vld [vmem:[%s441 + $0x4] sm:$0xf]
      %v444 = vunpack.c.l.bf16 %v442
      %v445 = vunpack.c.l.bf16 %v443
      %v447 = vsel %vm223, %v436, 0
      %v450 = vsel %vm223, %v439, 0
      %452 = vmatpush.msra.mxu0 0.0
      %453 = vmatpush.msra.mxu0 0.0
      %454 = vmatpush.msra.mxu0 0.0
      %455 = vmatpush.msra.mxu0 0.0
      %456 = vmatpush.msra.mxu0 0.0
      %457 = vmatpush.msra.mxu0 0.0
      %458 = vmatpush.msra.mxu0 0.0
      %459 = vmatpush.msra.mxu0 0.0
      %460 = vmatpush.msra.mxu0 0.0
      %461 = vmatpush.msra.mxu0 0.0
      %462 = vmatpush.msra.mxu0 0.0
      %463 = vmatpush.msra.mxu0 0.0
      %464 = vmatpush.msra.mxu0 0.0
      %465 = vmatpush.msra.mxu0 0.0
      %466 = vmatpush.msra.mxu0 0.0
      %467 = vmatpush.msra.mxu0 %v220
      %468 = vmatmul.f32.gmra.mxu0 %v447
      %v469 = vpop.f32.mrf.mxu0
      %v470 = vadd.f32 %v444, %v469
      %471 = vmatmul.f32.gmra.mxu0 %v450
      %v472 = vpop.f32.mrf.mxu0
      %v473 = vadd.f32 %v445, %v472
      %474 = vdwg.mxu0
      %s475 = scalar_lea.vmem %s217, 48
      %476 = vst.msk [vmem:[%s475] sm:$0xff] %vm286, %v470
      %477 = vst.msk [vmem:[%s475 + $0x8] sm:$0xff] %vm286, %v473
      %p478 = scmp.lt.s32.totalorder %s15, 1
      %s479 = scalar_select %p478, %s15, 1
      %s480 = smul.addr %s479, 8
      %s481 = smul.addr %s480, 8
      %s482 = scalar_lea.vmem %s4, %s481
      // Predicated region
      $region37: #{_lambda_.20} parent=35 // pred_check
        %p483 = pneg %p127
      $region38: #{_lambda_.20} parent=35 // pred_check_branch
        %485 = sbr.rel (%p483) target = $region40
      $region39: #{_lambda_.20} parent=35 // pred_region
        _
      $region40: #{_lambda_.20} parent=35 // pred_fallthru
        _
    $region36: #{_lambda_.20} parent=5 // pred_fallthru
      _
    %p486 = scmp.le.s32.totalorder 2, %s10
    // Predicated region
    $region41: #{_lambda_.20} parent=5 // pred_check
      %p487 = pneg %p486
    $region42: #{_lambda_.20} parent=5 // pred_check_branch
      %489 = sbr.rel (%p487) target = $region44
    $region43: #{_lambda_.20} parent=5 // pred_region
      %s490 = ssub.s32 %s10, 2
      // Predicated region
      $region45: #{_lambda_.20} parent=43 // pred_check
        %p491 = pneg %p133
      $region46: #{_lambda_.20} parent=43 // pred_check_branch
        %493 = sbr.rel (%p491) target = $region48
      $region47: #{_lambda_.20} parent=43 // pred_region
        %p494 = scmp.lt.s32.totalorder %s16, 1
        %s495 = scalar_select %p494, %s16, 1
        %s496 = smul.addr %s495, 8
        %s497 = smul.addr %s496, 8
        %s498 = scalar_lea.vmem %s4, %s497
      $region48: #{_lambda_.20} parent=43 // pred_fallthru
        _
    $region44: #{_lambda_.20} parent=5 // pred_fallthru
      _
  $region6: #{_lambda_.20} parent=0 // loop_footer
    %s14 = sadd.s32 1, %s10
  $region7: #{_lambda_.20} parent=0 // loop_footer_branch
    %9 = sbr.rel target = $region3
  $region8: #{_lambda_.20} parent=0 // loop_exit
    _

// kernel: _lambda_.21
$region0: #{_lambda_.21}
  #allocation0 [shape = 'u32[]', space=smem, size = 0x4, offset = 0x4, fixed_abs, tag = 'smem constant byte address 0x4 - core index']
  #allocation1 [shape = 'u32[72,128]{1,0:T(1,128)}', space=vmem, size = 0x9000, scoped, tag = 'internal scratch']
  %s0 = inlined_call_operand.vmem [shape: f32[2,4,16,16], index: 0, kind: input, shape index: {}]
  %s1 = inlined_call_operand.vmem [shape: f32[2,4], index: 1, kind: input, shape index: {}]
  %s2 = inlined_call_operand.vmem [shape: f32[2], index: 2, kind: input, shape index: {}]
  %s3 = inlined_call_operand.vmem [shape: f32[32,16], index: 3, kind: input, shape index: {}]
  %s4 = inlined_call_operand.vmem [shape: f32[16,32], index: 4, kind: input, shape index: {}]
  %s5 = inlined_call_operand.hbm [shape: f32[2,2,32,32], index: 5, kind: output, shape index: {}]
  %s6 = sld [smem:[#allocation0]]
  $region61: #{_lambda_.21} parent=0
    _
  %s8 = ssub.s32 1, %s6
  %s9 = scalar_select 0, %s8, %s6
  $region1: #{_lambda_.21} parent=0
    #allocation2 [shape = 'u8[1024]{0}', space=smem, size = 0x400, scoped, tag = 'input window, operand 1, single buffered']
    #allocation3 [shape = 's32[2]{0}', space=sflag, size = 0x8, scoped, tag = 'scoped memory for _lambda_.21']
    #allocation4 [shape = 's32[2]{0}', space=sflag, size = 0x8, scoped, tag = 'scoped memory for _lambda_.21']
    #allocation5 [shape = 'u8[512]{0}', space=smem, size = 0x200, scoped, tag = 'input window, operand 2, single buffered']
    #allocation6 [shape = 's32[1]{0}', space=sflag, size = 0x4, scoped, tag = 'scoped memory for _lambda_.21']
    #allocation7 [shape = 'u8[65536]{0}', space=vmem, size = 0x10000, scoped, tag = 'output window, operand 0']
    %10 = vsyncpa [#allocation4], 0
    %11 = vsyncpa [#allocation6], 0
    %12 = vsyncpa [#allocation3], 0
    %s13 = scalar_lea.sflag [#allocation3], 1
    %14 = vsyncpa %s13, 0
    loop: start=0, step=1, limit=4
    $region2: #{_lambda_.21} parent=1 // loop_pre_header
      _
    $region3: #{_lambda_.21} parent=1 // loop_header
      %s16 = sphi 0, %s20
      %p17 = scmp.ge.s32.totalorder %s16, 4
      %s26 = sphi 0, %s28
      %s29 = sphi 0, %s26
      %s30 = sphi 0, %s29
      %s46 = sphi 0, %s30
      %s50 = sphi 0, %s50
      %s52 = sphi 0, %s50
      %s53 = sphi 0, %s52
      %s67 = sphi 0, %s53
      %s71 = sphi 0, %s71
      %s73 = sphi 0, %s71
      %s74 = sphi 0, %s73
      %s88 = sphi 0, %s74
      %s92 = sphi 0, %s92
      %s94 = sphi 0, %s92
      %s95 = sphi 0, %s94
      %s109 = sphi 0, %s95
      %s113 = sphi 0, %s113
      %s115 = sphi 0, %s113
      %s116 = sphi 0, %s115
      %s130 = sphi 0, %s116
      %s136 = sphi 0, %s138
      %s139 = sphi 0, %s136
      %s140 = sphi 0, %s139
      %s156 = sphi 0, %s140
    $region4: #{_lambda_.21} parent=1 // loop_header_branch
      %19 = sbr.rel (%p17) target = $region8
    $region5: #{_lambda_.21} parent=1 // loop_body
      %s21 = ssub.s32 %s16, 1
      %s22 = ssub.s32 %s16, 2
      %s23 = sadd.s32 %s16, 1
      %s24 = ssub.s32 %s16, %s23
      %p25 = scmp.eq.s32.totalorder %s24, 0
      %s27 = sadd.s32 %s26, 1
      %s28 = scalar_select %p25, %s26, %s27
      %p31 = pneg %p25
      %p32 = scmp.eq.s32.totalorder %s16, 1
      %p33 = por %p31, %p32
      %p34 = scmp.ne.s32.totalorder %s26, %s29
      %p35 = scmp.eq.s32.totalorder %s16, 0
      %p36 = por %p34, %p35
      %p37 = scmp.ne.s32.totalorder %s26, %s29
      %p38 = scmp.eq.s32.totalorder %s21, 1
      %p39 = por %p37, %p38
      %p40 = scmp.ne.s32.totalorder %s29, %s30
      %p41 = scmp.eq.s32.totalorder %s21, 0
      %p42 = por %p40, %p41
      %p43 = scmp.ne.s32.totalorder %s29, %s30
      %p44 = scmp.eq.s32.totalorder %s22, 1
      %p45 = por %p43, %p44
      %p47 = scmp.ne.s32.totalorder %s30, %s46
      %p48 = scmp.eq.s32.totalorder %s22, 0
      %p49 = por %p47, %p48
      %s51 = sadd.s32 %s50, 1
      %p54 = scmp.eq.s32.totalorder %s16, 1
      %p55 = scmp.ne.s32.totalorder %s50, %s52
      %p56 = scmp.eq.s32.totalorder %s16, 0
      %p57 = por %p55, %p56
      %p58 = scmp.ne.s32.totalorder %s50, %s52
      %p59 = scmp.eq.s32.totalorder %s21, 1
      %p60 = por %p58, %p59
      %p61 = scmp.ne.s32.totalorder %s52, %s53
      %p62 = scmp.eq.s32.totalorder %s21, 0
      %p63 = por %p61, %p62
      %p64 = scmp.ne.s32.totalorder %s52, %s53
      %p65 = scmp.eq.s32.totalorder %s22, 1
      %p66 = por %p64, %p65
      %p68 = scmp.ne.s32.totalorder %s53, %s67
      %p69 = scmp.eq.s32.totalorder %s22, 0
      %p70 = por %p68, %p69
      %s72 = sadd.s32 %s71, 1
      %p75 = scmp.eq.s32.totalorder %s16, 1
      %p76 = scmp.ne.s32.totalorder %s71, %s73
      %p77 = scmp.eq.s32.totalorder %s16, 0
      %p78 = por %p76, %p77
      %p79 = scmp.ne.s32.totalorder %s71, %s73
      %p80 = scmp.eq.s32.totalorder %s21, 1
      %p81 = por %p79, %p80
      %p82 = scmp.ne.s32.totalorder %s73, %s74
      %p83 = scmp.eq.s32.totalorder %s21, 0
      %p84 = por %p82, %p83
      %p85 = scmp.ne.s32.totalorder %s73, %s74
      %p86 = scmp.eq.s32.totalorder %s22, 1
      %p87 = por %p85, %p86
      %p89 = scmp.ne.s32.totalorder %s74, %s88
      %p90 = scmp.eq.s32.totalorder %s22, 0
      %p91 = por %p89, %p90
      %s93 = sadd.s32 %s92, 1
      %p96 = scmp.eq.s32.totalorder %s16, 1
      %p97 = scmp.ne.s32.totalorder %s92, %s94
      %p98 = scmp.eq.s32.totalorder %s16, 0
      %p99 = por %p97, %p98
      %p100 = scmp.ne.s32.totalorder %s92, %s94
      %p101 = scmp.eq.s32.totalorder %s21, 1
      %p102 = por %p100, %p101
      %p103 = scmp.ne.s32.totalorder %s94, %s95
      %p104 = scmp.eq.s32.totalorder %s21, 0
      %p105 = por %p103, %p104
      %p106 = scmp.ne.s32.totalorder %s94, %s95
      %p107 = scmp.eq.s32.totalorder %s22, 1
      %p108 = por %p106, %p107
      %p110 = scmp.ne.s32.totalorder %s95, %s109
      %p111 = scmp.eq.s32.totalorder %s22, 0
      %p112 = por %p110, %p111
      %s114 = sadd.s32 %s113, 1
      %p117 = scmp.eq.s32.totalorder %s16, 1
      %p118 = scmp.ne.s32.totalorder %s113, %s115
      %p119 = scmp.eq.s32.totalorder %s16, 0
      %p120 = por %p118, %p119
      %p121 = scmp.ne.s32.totalorder %s113, %s115
      %p122 = scmp.eq.s32.totalorder %s21, 1
      %p123 = por %p121, %p122
      %p124 = scmp.ne.s32.totalorder %s115, %s116
      %p125 = scmp.eq.s32.totalorder %s21, 0
      %p126 = por %p124, %p125
      %p127 = scmp.ne.s32.totalorder %s115, %s116
      %p128 = scmp.eq.s32.totalorder %s22, 1
      %p129 = por %p127, %p128
      %p131 = scmp.ne.s32.totalorder %s116, %s130
      %p132 = scmp.eq.s32.totalorder %s22, 0
      %p133 = por %p131, %p132
      %s134 = ssub.s32 %s16, %s23
      %p135 = scmp.eq.s32.totalorder %s134, 0
      %s137 = sadd.s32 %s136, 1
      %s138 = scalar_select %p135, %s136, %s137
      %p141 = pneg %p135
      %p142 = scmp.eq.s32.totalorder %s16, 1
      %p143 = por %p141, %p142
      %p144 = scmp.ne.s32.totalorder %s136, %s139
      %p145 = scmp.eq.s32.totalorder %s16, 0
      %p146 = por %p144, %p145
      %p147 = scmp.ne.s32.totalorder %s136, %s139
      %p148 = scmp.eq.s32.totalorder %s21, 1
      %p149 = por %p147, %p148
      %p150 = scmp.ne.s32.totalorder %s139, %s140
      %p151 = scmp.eq.s32.totalorder %s21, 0
      %p152 = por %p150, %p151
      %p153 = scmp.ne.s32.totalorder %s139, %s140
      %p154 = scmp.eq.s32.totalorder %s22, 1
      %p155 = por %p153, %p154
      %p157 = scmp.ne.s32.totalorder %s140, %s156
      %p158 = scmp.eq.s32.totalorder %s22, 0
      %p159 = por %p157, %p158
      %p160 = scmp.le.s32.totalorder 1, %s16
      %p161 = scmp.lt.s32.totalorder %s16, 3
      %p162 = pnand %p160, %p161
      %p163 = pneg %p162
      // Predicated region
      $region9: #{_lambda_.21} parent=5 // pred_check
        _
      $region10: #{_lambda_.21} parent=5 // pred_check_branch
        %165 = sbr.rel (%p162) target = $region12
      $region11: #{_lambda_.21} parent=5 // pred_region
        %s166 = ssub.s32 %s16, 1
        // Predicated region
        $region13: #{_lambda_.21} parent=11 // pred_check
          %p167 = pneg %p63
        $region14: #{_lambda_.21} parent=11 // pred_check_branch
          %169 = sbr.rel (%p167) target = $region16
        $region15: #{_lambda_.21} parent=11 // pred_region
          %171 = vsyncadd [#allocation4], 0
          %s173 = sshll.u32 %s1, 4
          %s174 = int_to_ptr.vmem [resolvable:$true] %s173
          %176 = dma.vmem_to_smem %s174, 32, [#allocation2], [#allocation4]
        $region16: #{_lambda_.21} parent=11 // pred_fallthru
          _
        // Predicated region
        $region17: #{_lambda_.21} parent=11 // pred_check
          %p177 = pneg %p84
        $region18: #{_lambda_.21} parent=11 // pred_check_branch
          %179 = sbr.rel (%p177) target = $region20
        $region19: #{_lambda_.21} parent=11 // pred_region
          %181 = vsyncadd [#allocation6], 0
          %s183 = sshll.u32 %s2, 4
          %s184 = int_to_ptr.vmem [resolvable:$true] %s183
          %186 = dma.vmem_to_smem %s184, 16, [#allocation5], [#allocation6]
        $region20: #{_lambda_.21} parent=11 // pred_fallthru
          _
        // Predicated region
        $region21: #{_lambda_.21} parent=11 // pred_check
          %p187 = pneg %p105
        $region22: #{_lambda_.21} parent=11 // pred_check_branch
          %189 = sbr.rel (%p187) target = $region24
        $region23: #{_lambda_.21} parent=11 // pred_region
          _
        $region24: #{_lambda_.21} parent=11 // pred_fallthru
          _
        // Predicated region
        $region25: #{_lambda_.21} parent=11 // pred_check
          %p190 = pneg %p126
        $region26: #{_lambda_.21} parent=11 // pred_check_branch
          %192 = sbr.rel (%p190) target = $region28
        $region27: #{_lambda_.21} parent=11 // pred_region
          _
        $region28: #{_lambda_.21} parent=11 // pred_fallthru
          _
      $region12: #{_lambda_.21} parent=5 // pred_fallthru
        _
      %p193 = scmp.lt.s32.totalorder %s16, 2
      // Predicated region
      $region29: #{_lambda_.21} parent=5 // pred_check
        %p194 = pneg %p193
      $region30: #{_lambda_.21} parent=5 // pred_check_branch
        %196 = sbr.rel (%p194) target = $region32
      $region31: #{_lambda_.21} parent=5 // pred_region
        // Predicated region
        $region33: #{_lambda_.21} parent=31 // pred_check
          %p197 = pneg %p36
        $region34: #{_lambda_.21} parent=31 // pred_check_branch
          %199 = sbr.rel (%p197) target = $region36
        $region35: #{_lambda_.21} parent=31 // pred_region
          %p200 = scmp.lt.s32.totalorder %s16, 1
          %s201 = scalar_select %p200, %s16, 1
          %s202 = smul.addr %s201, 8
          %s203 = smul.addr %s202, 8
          %s204 = scalar_lea.vmem %s0, %s203
        $region36: #{_lambda_.21} parent=31 // pred_fallthru
          _
      $region32: #{_lambda_.21} parent=5 // pred_fallthru
        _
      %p205 = scmp.le.s32.totalorder 1, %s16
      %p206 = scmp.lt.s32.totalorder %s16, 3
      %p207 = pnand %p205, %p206
      %p208 = pneg %p207
      // Predicated region
      $region37: #{_lambda_.21} parent=5 // pred_check
        _
      $region38: #{_lambda_.21} parent=5 // pred_check_branch
        %210 = sbr.rel (%p207) target = $region40
      $region39: #{_lambda_.21} parent=5 // pred_region
        %s211 = ssub.s32 %s16, 1
        // Predicated region
        $region41: #{_lambda_.21} parent=39 // pred_check
          %p212 = pneg %p63
        $region42: #{_lambda_.21} parent=39 // pred_check_branch
          %214 = sbr.rel (%p212) target = $region44
        $region43: #{_lambda_.21} parent=39 // pred_region
          %216 = dma.done [#allocation4], 32
        $region44: #{_lambda_.21} parent=39 // pred_fallthru
          _
        // Predicated region
        $region45: #{_lambda_.21} parent=39 // pred_check
          %p217 = pneg %p84
        $region46: #{_lambda_.21} parent=39 // pred_check_branch
          %219 = sbr.rel (%p217) target = $region48
        $region47: #{_lambda_.21} parent=39 // pred_region
          %221 = dma.done [#allocation6], 16
        $region48: #{_lambda_.21} parent=39 // pred_fallthru
          _
        %222 = sfence
        %p223 = scmp.lt.s32.totalorder %s21, 1
        %s224 = scalar_select %p223, %s21, 1
        %s225 = smul.addr %s224, 8
        %s226 = smul.addr %s225, 8
        %s227 = scalar_lea.vmem %s0, %s226
        %p228 = pneg %p42
        %p229 = pneg %p39
        %p230 = pneg %p63
        %p231 = pneg %p60
        %p232 = pneg %p84
        %p233 = pneg %p81
        %p234 = pneg %p105
        %p235 = pneg %p102
        %p236 = pneg %p126
        %p237 = pneg %p123
        %p238 = pneg %p152
        %p239 = pneg %p149
        %s240 = sand.u32 %s139, 1
        %s241 = scalar_lea.sflag [#allocation3], %s240
        %s242 = sand.u32 %s139, 1
        %s243 = smul.addr %s242, 64
        %s244 = scalar_lea.vmem [#allocation7], %s243
        %p245 = scmp.lt.s32.totalorder %s21, 1
        %s246 = scalar_select %p245, %s21, 1
        %s247 = smul.addr %s246, 8
        %s248 = smul.addr %s247, 8
        %s249 = scalar_lea.vmem %s0, %s248
        %v250 = vld [vmem:[%s3] sm:$0xff]
        %v251 = vld [vmem:[%s3 + $0x8] sm:$0xff]
        %v252 = vld [vmem:[%s3 + $0x10] sm:$0xff]
        %v253 = vld [vmem:[%s3 + $0x18] sm:$0xff]
        %v254 = vld [vmem:[%s4] sm:$0xff]
        %v255 = vld [vmem:[%s4 + $0x8] sm:$0xff]
        %v256 = vld [vmem:[%s249] sm:$0xff]
        %v257 = vld [vmem:[%s249 + $0x8] sm:$0xff]
        %s258 = scalar_lea.vmem %s249, 16
        %v259 = vld [vmem:[%s258] sm:$0xff]
        %v260 = vld [vmem:[%s258 + $0x8] sm:$0xff]
        %s261 = scalar_lea.vmem %s249, 32
        %v262 = vld [vmem:[%s261] sm:$0xff]
        %v263 = vld [vmem:[%s261 + $0x8] sm:$0xff]
        %s264 = scalar_lea.vmem %s249, 48
        %v265 = vld [vmem:[%s264] sm:$0xff]
        %v266 = vld [vmem:[%s264 + $0x8] sm:$0xff]
        %s267 = sld [smem:[#allocation2]]
        %v268 = vstv %s267
        %v269 = vmul.f32 %v268, %v256
        %v270 = vmul.f32 %v268, %v257
        %s271 = sld [smem:[#allocation2 + $0x1]]
        %v272 = vstv %s271
        %v273 = vmul.f32 %v272, %v259
        %v274 = vmul.f32 %v272, %v260
        %v275 = vadd.f32 %v269, %v273
        %v276 = vadd.f32 %v270, %v274
        %s277 = sld [smem:[#allocation2 + $0x2]]
        %v278 = vstv %s277
        %v279 = vmul.f32 %v278, %v262
        %v280 = vmul.f32 %v278, %v263
        %v281 = vadd.f32 %v275, %v279
        %v282 = vadd.f32 %v276, %v280
        %s283 = sld [smem:[#allocation2 + $0x3]]
        %v284 = vstv %s283
        %v285 = vmul.f32 %v284, %v265
        %v286 = vmul.f32 %v284, %v266
        %v287 = vadd.f32 %v281, %v285
        %v288 = vadd.f32 %v282, %v286
        %vm289 = vcmask 130048
        %v291 = vsel %vm289, %v250, 0
        %v294 = vsel %vm289, %v251, 0
        %v297 = vsel %vm289, %v252, 0
        %v300 = vsel %vm289, %v253, 0
        %302 = vmatpush.msra.mxu0 0.0
        %303 = vmatpush.msra.mxu0 0.0
        %304 = vmatpush.msra.mxu0 0.0
        %305 = vmatpush.msra.mxu0 0.0
        %306 = vmatpush.msra.mxu0 0.0
        %307 = vmatpush.msra.mxu0 0.0
        %308 = vmatpush.msra.mxu0 0.0
        %309 = vmatpush.msra.mxu0 0.0
        %310 = vmatpush.msra.mxu0 0.0
        %311 = vmatpush.msra.mxu0 0.0
        %312 = vmatpush.msra.mxu0 0.0
        %313 = vmatpush.msra.mxu0 0.0
        %314 = vmatpush.msra.mxu0 0.0
        %315 = vmatpush.msra.mxu0 0.0
        %316 = vmatpush.msra.mxu0 %v288
        %317 = vmatpush.msra.mxu0 %v287
        %318 = vmatmul.f32.gmra.mxu0 %v291
        %v319 = vpop.f32.mrf.mxu0
        %v320 = vadd.f32 0.0, %v319
        %321 = vmatmul.f32.gmra.mxu0 %v294
        %v322 = vpop.f32.mrf.mxu0
        %v323 = vadd.f32 0.0, %v322
        %324 = vmatmul.f32.gmra.mxu0 %v297
        %v325 = vpop.f32.mrf.mxu0
        %v326 = vadd.f32 0.0, %v325
        %327 = vmatmul.f32.gmra.mxu0 %v300
        %v328 = vpop.f32.mrf.mxu0
        %v329 = vadd.f32 0.0, %v328
        %330 = vdwg.mxu0
        %s331 = sld [smem:[#allocation5]]
        %v332 = vstv %s331
        %v334 = vsel %vm289, %v320, 0
        %v337 = vsel %vm289, %v323, 0
        %v340 = vsel %vm289, %v326, 0
        %v343 = vsel %vm289, %v329, 0
        %345 = vmatpush.msra.mxu0 0.0
        %346 = vmatpush.msra.mxu0 0.0
        %347 = vmatpush.msra.mxu0 0.0
        %348 = vmatpush.msra.mxu0 0.0
        %349 = vmatpush.msra.mxu0 0.0
        %350 = vmatpush.msra.mxu0 0.0
        %351 = vmatpush.msra.mxu0 0.0
        %352 = vmatpush.msra.mxu0 0.0
        %353 = vmatpush.msra.mxu0 0.0
        %354 = vmatpush.msra.mxu0 0.0
        %355 = vmatpush.msra.mxu0 0.0
        %356 = vmatpush.msra.mxu0 0.0
        %357 = vmatpush.msra.mxu0 0.0
        %358 = vmatpush.msra.mxu0 0.0
        %359 = vmatpush.msra.mxu0 %v255
        %360 = vmatpush.msra.mxu0 %v254
        %361 = vmatmul.f32.gmra.mxu0 %v334
        %v362 = vpop.f32.mrf.mxu0
        %v363 = vadd.f32 %v332, %v362
        %364 = vmatmul.f32.gmra.mxu0 %v337
        %v365 = vpop.f32.mrf.mxu0
        %v366 = vadd.f32 %v332, %v365
        %367 = vmatmul.f32.gmra.mxu0 %v340
        %v368 = vpop.f32.mrf.mxu0
        %v369 = vadd.f32 %v332, %v368
        %370 = vmatmul.f32.gmra.mxu0 %v343
        %v371 = vpop.f32.mrf.mxu0
        %v372 = vadd.f32 %v332, %v371
        %373 = vdwg.mxu0
        %s374 = sld [smem:[#allocation2 + $0x80]]
        %v375 = vstv %s374
        %v376 = vmul.f32 %v375, %v256
        %v377 = vmul.f32 %v375, %v257
        %s378 = sld [smem:[#allocation2 + $0x81]]
        %v379 = vstv %s378
        %v380 = vmul.f32 %v379, %v259
        %v381 = vmul.f32 %v379, %v260
        %v382 = vadd.f32 %v376, %v380
        %v383 = vadd.f32 %v377, %v381
        %s384 = sld [smem:[#allocation2 + $0x82]]
        %v385 = vstv %s384
        %v386 = vmul.f32 %v385, %v262
        %v387 = vmul.f32 %v385, %v263
        %v388 = vadd.f32 %v382, %v386
        %v389 = vadd.f32 %v383, %v387
        %s390 = sld [smem:[#allocation2 + $0x83]]
        %v391 = vstv %s390
        %v392 = vmul.f32 %v391, %v265
        %v393 = vmul.f32 %v391, %v266
        %v394 = vadd.f32 %v388, %v392
        %v395 = vadd.f32 %v389, %v393
        %396 = vmatpush.msra.mxu0 0.0
        %397 = vmatpush.msra.mxu0 0.0
        %398 = vmatpush.msra.mxu0 0.0
        %399 = vmatpush.msra.mxu0 0.0
        %400 = vmatpush.msra.mxu0 0.0
        %401 = vmatpush.msra.mxu0 0.0
        %402 = vmatpush.msra.mxu0 0.0
        %403 = vmatpush.msra.mxu0 0.0
        %404 = vmatpush.msra.mxu0 0.0
        %405 = vmatpush.msra.mxu0 0.0
        %406 = vmatpush.msra.mxu0 0.0
        %407 = vmatpush.msra.mxu0 0.0
        %408 = vmatpush.msra.mxu0 0.0
        %409 = vmatpush.msra.mxu0 0.0
        %410 = vmatpush.msra.mxu0 %v395
        %411 = vmatpush.msra.mxu0 %v394
        %412 = vmatmul.f32.gmra.mxu0 %v291
        %v413 = vpop.f32.mrf.mxu0
        %v414 = vadd.f32 0.0, %v413
        %415 = vmatmul.f32.gmra.mxu0 %v294
        %v416 = vpop.f32.mrf.mxu0
        %v417 = vadd.f32 0.0, %v416
        %418 = vmatmul.f32.gmra.mxu0 %v297
        %v419 = vpop.f32.mrf.mxu0
        %v420 = vadd.f32 0.0, %v419
        %421 = vmatmul.f32.gmra.mxu0 %v300
        %v422 = vpop.f32.mrf.mxu0
        %v423 = vadd.f32 0.0, %v422
        %424 = vdwg.mxu0
        %s425 = sld [smem:[#allocation5 + $0x1]]
        %v426 = vstv %s425
        %v428 = vsel %vm289, %v414, 0
        %v431 = vsel %vm289, %v417, 0
        %v434 = vsel %vm289, %v420, 0
        %v437 = vsel %vm289, %v423, 0
        %439 = vmatpush.msra.mxu0 0.0
        %440 = vmatpush.msra.mxu0 0.0
        %441 = vmatpush.msra.mxu0 0.0
        %442 = vmatpush.msra.mxu0 0.0
        %443 = vmatpush.msra.mxu0 0.0
        %444 = vmatpush.msra.mxu0 0.0
        %445 = vmatpush.msra.mxu0 0.0
        %446 = vmatpush.msra.mxu0 0.0
        %447 = vmatpush.msra.mxu0 0.0
        %448 = vmatpush.msra.mxu0 0.0
        %449 = vmatpush.msra.mxu0 0.0
        %450 = vmatpush.msra.mxu0 0.0
        %451 = vmatpush.msra.mxu0 0.0
        %452 = vmatpush.msra.mxu0 0.0
        %453 = vmatpush.msra.mxu0 %v255
        %454 = vmatpush.msra.mxu0 %v254
        %455 = vmatmul.f32.gmra.mxu0 %v428
        %v456 = vpop.f32.mrf.mxu0
        %v457 = vadd.f32 %v426, %v456
        %458 = vmatmul.f32.gmra.mxu0 %v431
        %v459 = vpop.f32.mrf.mxu0
        %v460 = vadd.f32 %v426, %v459
        %461 = vmatmul.f32.gmra.mxu0 %v434
        %v462 = vpop.f32.mrf.mxu0
        %v463 = vadd.f32 %v426, %v462
        %464 = vmatmul.f32.gmra.mxu0 %v437
        %v465 = vpop.f32.mrf.mxu0
        %v466 = vadd.f32 %v426, %v465
        %467 = vdwg.mxu0
        %v468 = vmul.f32 %v363, %v363
        %v469 = vmul.f32 %v366, %v366
        %v470 = vmul.f32 %v369, %v369
        %v471 = vmul.f32 %v372, %v372
        %v472 = vmul.f32 %v457, %v457
        %v473 = vmul.f32 %v460, %v460
        %v474 = vmul.f32 %v463, %v463
        %v475 = vmul.f32 %v466, %v466
        %v476 = vadd.f32 %v468, %v472
        %v477 = vadd.f32 %v469, %v473
        %v478 = vadd.f32 %v470, %v474
        %v479 = vadd.f32 %v471, %v475
        %v480 = vmax.f32 %v476, 1e-24
        %v481 = vmax.f32 %v477, 1e-24
        %v482 = vmax.f32 %v478, 1e-24
        %v483 = vmax.f32 %v479, 1e-24
        %v484 = vrsqrt.pop %v480
        %v485 = vmul.f32 %v484, %v480
        %v486 = vmul.f32 %v485, %v484
        %v487 = vmul.f32 0.5, %v486
        %v488 = vsub.f32 1.5, %v487
        %v489 = vmul.f32 %v484, %v488
        %vm490 = vweird.f32 %v480
        %vm491 = vweird.f32 %v484
        %vm492 = vmor %vm490, %vm491
        %v493 = vsel %vm492, %v484, %v489
        %v494 = vrsqrt.pop %v481
        %v495 = vmul.f32 %v494, %v481
        %v496 = vmul.f32 %v495, %v494
        %v497 = vmul.f32 0.5, %v496
        %v498 = vsub.f32 1.5, %v497
        %v499 = vmul.f32 %v494, %v498
        %vm500 = vweird.f32 %v481
        %vm501 = vweird.f32 %v494
        %vm502 = vmor %vm500, %vm501
        %v503 = vsel %vm502, %v494, %v499
        %v504 = vrsqrt.pop %v482
        %v505 = vmul.f32 %v504, %v482
        %v506 = vmul.f32 %v505, %v504
        %v507 = vmul.f32 0.5, %v506
        %v508 = vsub.f32 1.5, %v507
        %v509 = vmul.f32 %v504, %v508
        %vm510 = vweird.f32 %v482
        %vm511 = vweird.f32 %v504
        %vm512 = vmor %vm510, %vm511
        %v513 = vsel %vm512, %v504, %v509
        %v514 = vrsqrt.pop %v483
        %v515 = vmul.f32 %v514, %v483
        %v516 = vmul.f32 %v515, %v514
        %v517 = vmul.f32 0.5, %v516
        %v518 = vsub.f32 1.5, %v517
        %v519 = vmul.f32 %v514, %v518
        %vm520 = vweird.f32 %v483
        %vm521 = vweird.f32 %v514
        %vm522 = vmor %vm520, %vm521
        %v523 = vsel %vm522, %v514, %v519
        %v524 = vmul.f32 %v363, %v493
        %v525 = vmul.f32 %v366, %v503
        %v526 = vmul.f32 %v369, %v513
        %v527 = vmul.f32 %v372, %v523
        %vm528 = vcmask 261120
        %529 = vst.msk [vmem:[%s244] sm:$0xff] %vm528, %v524
        %530 = vst.msk [vmem:[%s244 + $0x8] sm:$0xff] %vm528, %v525
        %531 = vst.msk [vmem:[%s244 + $0x10] sm:$0xff] %vm528, %v526
        %532 = vst.msk [vmem:[%s244 + $0x18] sm:$0xff] %vm528, %v527
        %v533 = vmul.f32 %v457, %v493
        %v534 = vmul.f32 %v460, %v503
        %v535 = vmul.f32 %v463, %v513
        %v536 = vmul.f32 %v466, %v523
        %s537 = scalar_lea.vmem %s244, 32 [#allocation7]
        %538 = vst.msk [vmem:[%s537] sm:$0xff] %vm528, %v533
        %539 = vst.msk [vmem:[%s537 + $0x8] sm:$0xff] %vm528, %v534
        %540 = vst.msk [vmem:[%s537 + $0x10] sm:$0xff] %vm528, %v535
        %541 = vst.msk [vmem:[%s537 + $0x18] sm:$0xff] %vm528, %v536
        %s542 = sand.u32 %s139, 1
        %s543 = scalar_lea.sflag [#allocation3], %s542
        %s544 = sand.u32 %s139, 1
        %s545 = smul.addr %s544, 64
        %s546 = scalar_lea.vmem [#allocation7], %s545
        // Predicated region
        $region49: #{_lambda_.21} parent=39 // pred_check
          %p547 = pneg %p149
        $region50: #{_lambda_.21} parent=39 // pred_check_branch
          %549 = sbr.rel (%p547) target = $region52
        $region51: #{_lambda_.21} parent=39 // pred_region
          %551 = vsyncadd %s543, 0
          %s552 = smul.addr %s21, 8
          %s553 = smul.addr %s552, 8
          %s554 = scalar_lea.hbm %s5, %s553
          %s555 = sshll.u32 %s546, 4
          %s556 = int_to_ptr.vmem [resolvable:$true] %s555
          %s557 = sshll.u32 %s554, 4
          %s558 = int_to_ptr.hbm [resolvable:$true] %s557
          %563 = dma.vmem_to_hbm [thread:$0]  %s556, 1024, %s558, %s543, 128, 128, 8
        $region52: #{_lambda_.21} parent=39 // pred_fallthru
          _
      $region40: #{_lambda_.21} parent=5 // pred_fallthru
        _
      %p564 = scmp.le.s32.totalorder 2, %s16
      // Predicated region
      $region53: #{_lambda_.21} parent=5 // pred_check
        %p565 = pneg %p564
      $region54: #{_lambda_.21} parent=5 // pred_check_branch
        %567 = sbr.rel (%p565) target = $region56
      $region55: #{_lambda_.21} parent=5 // pred_region
        %s568 = ssub.s32 %s16, 2
        // Predicated region
        $region57: #{_lambda_.21} parent=55 // pred_check
          %p569 = pneg %p155
        $region58: #{_lambda_.21} parent=55 // pred_check_branch
          %571 = sbr.rel (%p569) target = $region60
        $region59: #{_lambda_.21} parent=55 // pred_region
          %s572 = sand.u32 %s140, 1
          %s573 = scalar_lea.sflag [#allocation3], %s572
          %s574 = sand.u32 %s140, 1
          %s575 = smul.addr %s574, 64
          %s576 = scalar_lea.vmem [#allocation7], %s575
          %578 = dma.done %s573, 1024
        $region60: #{_lambda_.21} parent=55 // pred_fallthru
          _
      $region56: #{_lambda_.21} parent=5 // pred_fallthru
        _
    $region6: #{_lambda_.21} parent=1 // loop_footer
      %s20 = sadd.s32 1, %s16
    $region7: #{_lambda_.21} parent=1 // loop_footer_branch
      %15 = sbr.rel target = $region3
    $region8: #{_lambda_.21} parent=1 // loop_exit
      _
    %579 = vsyncpa [#allocation3], 1
    %s580 = scalar_lea.sflag [#allocation3], 1
    %581 = vsyncpa %s580, 1
    %582 = vsyncpa [#allocation4], 1
    %s583 = scalar_lea.sflag [#allocation4], 1
    %584 = vsyncpa %s583, 1
    %585 = vsyncpa [#allocation6], 1

</llo_original>
